<compile_context>
chip_gen: v7x
topology: tpu7x:2x2x1
jax: 0.10.0
libtpu: 0.0.40
codegen_flags: <defaults>
</compile_context>

<pallas_src>
import functools

import jax
import jax.numpy as jnp
from jax import lax
from jax.experimental import pallas as pl
from jax.experimental.pallas import tpu as pltpu

_EPS = 1e-5                 # nn.InstanceNorm2d default eps
_MXU_MIN_CHANNELS = 32      # below this the MXU is badly underfilled -> VPU path

_LANE_ROLL_FN = None        # cached lane-roll implementation
_SINGLE_BUFFER_OK = None    # cached "whole-array VMEM weight refs supported?"


def _get_lane_roll():
    """Static-shift roll along the last (lane) axis with np.roll semantics.

    Prefers pltpu.roll (lowers to an XLU rotate in the vector-extended slot,
    which is otherwise idle while the conv occupies VALU/MXU).  A tiny
    one-time probe pins the rotation convention; if pltpu.roll is unavailable
    or surprises us we fall back to jnp.roll (known-good, slightly slower).
    """
    global _LANE_ROLL_FN
    if _LANE_ROLL_FN is not None:
        return _LANE_ROLL_FN

    roll_fn = lambda a, k: jnp.roll(a, k, axis=1)          # safe fallback
    try:
        def _probe(x_ref, o_ref):
            o_ref[...] = pltpu.roll(x_ref[...], 1, axis=1)

        xp = jnp.arange(8 * 128, dtype=jnp.float32).reshape(8, 128)
        yp = pl.pallas_call(
            _probe, out_shape=jax.ShapeDtypeStruct((8, 128), jnp.float32))(xp)
        if bool(jnp.array_equal(yp, jnp.roll(xp, 1, axis=1))):
            roll_fn = lambda a, k: pltpu.roll(a, k % a.shape[1], axis=1)
        elif bool(jnp.array_equal(yp, jnp.roll(xp, -1, axis=1))):
            roll_fn = lambda a, k: pltpu.roll(a, (-k) % a.shape[1], axis=1)
    except Exception:
        pass
    _LANE_ROLL_FN = roll_fn
    return roll_fn


def _residual_block_kernel(x_ref, w1_ref, b1_ref, w2_ref, b2_ref, o_ref, *,
                           width, use_mxu, lane_roll):
    # x_ref : (1, C, H*W) block -- one sample, channels on sublanes, flattened
    #         spatial on lanes (lane dense when H*W % 128 == 0, e.g. 256).
    # w*_ref: (9, C, C)   -- [kh*3+kw, c_out, c_in] tap matrices.
    # b*_ref: (C, 1)
    _, C, HW = x_ref.shape
    W = width

    x = x_ref[0].astype(jnp.float32)                        # (C, HW)

    # Channel-invariant reflection masks, (1, HW); broadcast over sublanes.
    lane = lax.broadcasted_iota(jnp.int32, (1, HW), 1)
    col_first = (lane % W) == 0                             # w == 0
    col_last = (lane % W) == (W - 1)                        # w == W-1
    row_first = lane < W                                    # h == 0
    row_last = lane >= (HW - W)                             # h == H-1

    def vshift(p, kh):
        # result[h] = p[reflect(h + kh - 1)] for all channels at once.
        if kh == 1:
            return p
        up = lane_roll(p, W)        # value from row h-1 (wrap fixed by mask)
        dn = lane_roll(p, -W)       # value from row h+1
        if kh == 0:
            return jnp.where(row_first, dn, up)             # reflect(-1) = 1
        return jnp.where(row_last, up, dn)                  # reflect(H) = H-2

    def taps(a, kh):
        # Lazily yield the 3 reflection-padded taps of kernel row kh; the
        # caller consumes each immediately so only a few planes stay live.
        v = vshift(a, kh)
        vp = lane_roll(v, 1)        # value from col w-1
        vm = lane_roll(v, -1)       # value from col w+1
        yield jnp.where(col_first, vm, vp)                  # kw = 0
        yield v                                             # kw = 1
        yield jnp.where(col_last, vp, vm)                   # kw = 2

    def conv3x3(a, w_ref, b_ref):
        bias = b_ref[...].astype(jnp.float32)               # (C, 1), folded in
        if use_mxu:
            # Per-tap MXU matmul; single chained f32 accumulator (MRB on v7x).
            acc = bias                                       # broadcasts on 1st add
            for kh in range(3):
                for kw, tap in enumerate(taps(a, kh)):
                    w_t = w_ref[3 * kh + kw]                 # (C_out, C_in)
                    acc = acc + jnp.dot(w_t, tap.astype(w_t.dtype),
                                        preferred_element_type=jnp.float32)
            return acc
        # Small-C VPU path: broadcast MACs; one partial accumulator per kernel
        # row breaks the serial VALU chain.  Only used for C < 32 so the fully
        # unrolled ci loop stays small (no fori_loop needed).
        partials = []
        for kh in range(3):
            pacc = None
            for kw, tap in enumerate(taps(a, kh)):
                w_t = w_ref[3 * kh + kw]                     # (C_out, C_in) f32
                for ci in range(C):
                    term = w_t[:, ci:ci + 1] * tap[ci:ci + 1, :]   # (C,1)*(1,HW)
                    pacc = term if pacc is None else pacc + term
            partials.append(pacc)
        return bias + partials[0] + partials[1] + partials[2]

    inv_hw = 1.0 / HW

    def instance_norm(a):
        # Two-pass (cancellation-safe) biased variance, all in f32.
        mu = jnp.sum(a, axis=1, keepdims=True) * inv_hw
        d = a - mu
        var = jnp.sum(d * d, axis=1, keepdims=True) * inv_hw
        return d * lax.rsqrt(var + _EPS)

    # pad -> conv1 -> IN -> ReLU -> pad -> conv2 -> IN -> residual add
    h = jnp.maximum(instance_norm(conv3x3(x, w1_ref, b1_ref)), 0.0)
    h = instance_norm(conv3x3(h, w2_ref, b2_ref))
    o_ref[0] = (x + h).astype(o_ref.dtype)                  # lane-dense store


def residual_block(x, w1, b1, w2, b2, *, conv_dtype=jnp.float32):
    """CycleGAN ResidualBlock forward.  conv_dtype: MXU matmul input dtype
    (use jnp.bfloat16 on v6e/v7x at production sizes; accumulation is f32)."""
    N, C, H, W = x.shape
    assert H >= 2 and W >= 2, "ReflectionPad2d(1) needs spatial dims >= 2"
    HW = H * W

    # Pad channels to a multiple of 8 (aligned sublanes).  Padded channels
    # have zero weights/bias, so the real outputs are bit-identical.
    C_pad = max(8, -(-C // 8) * 8)
    pc = C_pad - C
    if pc:
        x_p = jnp.pad(x, ((0, 0), (0, pc), (0, 0), (0, 0)))
        w1_p = jnp.pad(w1, ((0, pc), (0, pc), (0, 0), (0, 0)))
        w2_p = jnp.pad(w2, ((0, pc), (0, pc), (0, 0), (0, 0)))
        b1_p = jnp.pad(b1, ((0, pc),))
        b2_p = jnp.pad(b2, ((0, pc),))
    else:
        x_p, w1_p, w2_p, b1_p, b2_p = x, w1, w2, b1, b2

    use_mxu = C_pad >= _MXU_MIN_CHANNELS
    w_dtype = conv_dtype if use_mxu else jnp.float32    # VPU math stays f32

    # Lane-dense activations and 9 lane-dense (C_out, C_in) weight taps.
    x_flat = x_p.reshape(N, C_pad, HW)

    def to_taps(w):  # (C_out, C_in, 3, 3) -> (9, C_out, C_in), t = kh*3 + kw
        return jnp.transpose(w, (2, 3, 0, 1)).reshape(9, C_pad, C_pad).astype(w_dtype)

    w1t, w2t = to_taps(w1_p), to_taps(w2_p)
    b1c = b1_p.reshape(C_pad, 1).astype(jnp.float32)
    b2c = b2_p.reshape(C_pad, 1).astype(jnp.float32)

    kernel = functools.partial(_residual_block_kernel, width=W,
                               use_mxu=use_mxu, lane_roll=_get_lane_roll())

    def call(single_buffer_weights):
        if single_buffer_weights:
            # Grid-invariant operands as whole-array VMEM refs: staged once,
            # no double buffering (matters inside v7x's 64 MiB VMEM).
            w_spec = pl.BlockSpec(memory_space=pltpu.MemorySpace.VMEM)
            b_spec = w_spec
        else:
            # Safe fallback: blocked full-array specs with constant index
            # maps (pipeline elides the redundant per-step re-copy).
            w_spec = pl.BlockSpec((9, C_pad, C_pad), lambda n: (0, 0, 0))
            b_spec = pl.BlockSpec((C_pad, 1), lambda n: (0, 0))
        return pl.pallas_call(
            kernel,
            out_shape=jax.ShapeDtypeStruct((N, C_pad, HW), x.dtype),
            grid_spec=pltpu.PrefetchScalarGridSpec(
                num_scalar_prefetch=0,
                grid=(N,),
                in_specs=[
                    pl.BlockSpec((1, C_pad, HW), lambda n: (n, 0, 0)),   # x
                    w_spec, b_spec,                                      # w1, b1
                    w_spec, b_spec,                                      # w2, b2
                ],
                out_specs=pl.BlockSpec((1, C_pad, HW), lambda n: (n, 0, 0)),
            ),
            compiler_params=pltpu.CompilerParams(
                dimension_semantics=("parallel",),
                vmem_limit_bytes=48 * 1024 * 1024,
            ),
        )(x_flat, w1t, b1c, w2t, b2c)

    global _SINGLE_BUFFER_OK
    if _SINGLE_BUFFER_OK is None:
        try:
            out_flat = jax.block_until_ready(call(True))
            _SINGLE_BUFFER_OK = True
        except Exception:
            _SINGLE_BUFFER_OK = False
            out_flat = call(False)
    else:
        out_flat = call(_SINGLE_BUFFER_OK)

    out = out_flat.reshape(N, C_pad, H, W)
    return out[:, :C] if pc else out


def _reference(x, w1, b1, w2, b2):
    # Pure-JAX reference mirroring the PyTorch module exactly.
    def conv(y, w, b):
        yp = jnp.pad(y, ((0, 0), (0, 0), (1, 1), (1, 1)), mode="reflect")
        out = lax.conv_general_dilated(
            yp, w, window_strides=(1, 1), padding="VALID",
            dimension_numbers=("NCHW", "OIHW", "NCHW"))
        return out + b[None, :, None, None]

    def inorm(y):
        mu = jnp.mean(y, axis=(2, 3), keepdims=True)
        var = jnp.mean((y - mu) ** 2, axis=(2, 3), keepdims=True)
        return (y - mu) * lax.rsqrt(var + _EPS)

    h = jnp.maximum(inorm(conv(x, w1, b1)), 0.0)
    return x + inorm(conv(h, w2, b2))


def _run_case(tag, C, conv_dtype, rtol, atol):
    N, H, W = 2, 16, 16
    key = jax.random.PRNGKey(0)
    kx, k1, k2, k3, k4 = jax.random.split(key, 5)
    x = jax.random.normal(kx, (N, C, H, W), jnp.float32)
    w1 = jax.random.normal(k1, (C, C, 3, 3), jnp.float32) * 0.2
    b1 = jax.random.normal(k2, (C,), jnp.float32) * 0.1
    w2 = jax.random.normal(k3, (C, C, 3, 3), jnp.float32) * 0.2
    b2 = jax.random.normal(k4, (C,), jnp.float32) * 0.1

    out = jax.block_until_ready(
        residual_block(x, w1, b1, w2, b2, conv_dtype=conv_dtype))
    ref = _reference(x, w1, b1, w2, b2)
    assert out.shape == x.shape and out.dtype == x.dtype
    max_err = float(jnp.max(jnp.abs(out - ref)))
    if not jnp.allclose(out, ref, rtol=rtol, atol=atol):
        raise AssertionError(f"{tag}: mismatch vs reference, max_err={max_err}")


if __name__ == "__main__":
    # 1) Module-spec size (in_features=4): VPU broadcast-MAC path, exact f32.
    _run_case("C=4 VPU path", C=4, conv_dtype=jnp.float32, rtol=1e-4, atol=1e-4)
    # 2) Production-like channel count: MXU tap-matmul path, f32 in / f32 acc.
    #    Tolerance allows for reduced-precision f32 passes on the MXU.
    _run_case("C=128 MXU f32 path", C=128, conv_dtype=jnp.float32,
              rtol=5e-2, atol=5e-2)
    # 3) bf16 matmul inputs / f32 accumulation (v6e/v7x recommendation).
    _run_case("C=128 MXU bf16 path", C=128, conv_dtype=jnp.bfloat16,
              rtol=1e-1, atol=1e-1)
    print("KERNEL_OK")
</pallas_src>

<mosaic_0001>
module attributes {stable_mosaic.version = 11 : i64} {
  func.func @_probe(%arg0: memref<8x128xf32, #tpu.memory_space<vmem>>, %arg1: memref<8x128xf32, #tpu.memory_space<vmem>>) attributes {dimension_semantics = [], scalar_prefetch = 0 : i64, scratch_operands = 0 : i64, tpu.core_type = #tpu.core_type<tc>} {
    %c0 = arith.constant 0 : index
    %c0_0 = arith.constant 0 : index
    %0 = vector.load %arg0[%c0, %c0_0] : memref<8x128xf32, #tpu.memory_space<vmem>>, vector<8x128xf32>
    %c1_i32 = arith.constant 1 : i32
    %1 = tpu.dynamic_rotate %0 by %c1_i32 dim 1 : vector<8x128xf32>, i32 -> vector<8x128xf32>
    %c0_1 = arith.constant 0 : index
    %c0_2 = arith.constant 0 : index
    %2 = vector.load %arg1[%c0_1, %c0_2] : memref<8x128xf32, #tpu.memory_space<vmem>>, vector<8x128xf32>
    tpu.vector_store %arg1[%c0_1, %c0_2], %1 {strides = array<i32>} : memref<8x128xf32, #tpu.memory_space<vmem>>, vector<8x128xf32>,
    return
  }
}

module attributes {stable_mosaic.version = 11 : i64} {
  func.func @_residual_block_kernel(%arg0: i32, %arg1: memref<1x8x256xf32, #tpu.memory_space<vmem>>, %arg2: memref<9x8x8xf32, #tpu.memory_space<vmem>>, %arg3: memref<8x1xf32, #tpu.memory_space<vmem>>, %arg4: memref<9x8x8xf32, #tpu.memory_space<vmem>>, %arg5: memref<8x1xf32, #tpu.memory_space<vmem>>, %arg6: memref<1x8x256xf32, #tpu.memory_space<vmem>>) attributes {dimension_semantics = [#tpu.dimension_semantics<parallel>], iteration_bounds = array<i64: 2>, scalar_prefetch = 0 : i64, scratch_operands = 0 : i64, tpu.core_type = #tpu.core_type<tc>, window_params = [{transform_indices = @transform_0, window_bounds = array<i64: 1, 8, 256>}, {pipeline_mode = #tpu.pipeline_mode<synchronous>, transform_indices = @transform_1, window_bounds = array<i64: 9, 8, 8>}, {pipeline_mode = #tpu.pipeline_mode<synchronous>, transform_indices = @transform_2, window_bounds = array<i64: 8, 1>}, {pipeline_mode = #tpu.pipeline_mode<synchronous>, transform_indices = @transform_3, window_bounds = array<i64: 9, 8, 8>}, {pipeline_mode = #tpu.pipeline_mode<synchronous>, transform_indices = @transform_4, window_bounds = array<i64: 8, 1>}, {transform_indices = @transform_5, window_bounds = array<i64: 1, 8, 256>}]} {
    %c0 = arith.constant 0 : index
    %c0_0 = arith.constant 0 : index
    %c0_1 = arith.constant 0 : index
    %0 = vector.load %arg1[%c0, %c0_0, %c0_1] : memref<1x8x256xf32, #tpu.memory_space<vmem>>, vector<1x8x256xf32>
    %1 = vector.shape_cast %0 : vector<1x8x256xf32> to vector<8x256xf32>
    %2 = tpu.iota {dimensions = array<i32: 1>} : vector<1x256xi32>
    %c16_i32 = arith.constant 16 : i32
    %c0_i32 = arith.constant 0 : i32
    %3 = arith.cmpi eq, %c16_i32, %c0_i32 : i32
    %c1_i32 = arith.constant 1 : i32
    %4 = arith.select %3, %c1_i32, %c16_i32 : i32
    %5 = vector.broadcast %4 : i32 to vector<1x256xi32>
    %6 = arith.remsi %2, %5 : vector<1x256xi32>
    %c0_i32_2 = arith.constant 0 : i32
    %7 = vector.broadcast %c0_i32_2 : i32 to vector<1x256xi32>
    %8 = arith.cmpi ne, %6, %7 : vector<1x256xi32>
    %c0_i32_3 = arith.constant 0 : i32
    %9 = vector.broadcast %c0_i32_3 : i32 to vector<1x256xi32>
    %10 = arith.cmpi slt, %6, %9 : vector<1x256xi32>
    %c0_i32_4 = arith.constant 0 : i32
    %11 = arith.cmpi slt, %4, %c0_i32_4 : i32
    %12 = vector.broadcast %11 : i1 to vector<1x256xi1>
    %13 = vector.broadcast %12 : vector<1x256xi1> to vector<1x256xi1>
    %14 = arith.xori %10, %13 : vector<1x256xi1>
    %15 = arith.andi %14, %8 : vector<1x256xi1>
    %16 = vector.broadcast %4 : i32 to vector<1x256xi32>
    %17 = arith.addi %6, %16 : vector<1x256xi32>
    %18 = arith.select %15, %17, %6 : vector<1x256xi1>, vector<1x256xi32>
    %c0_i32_5 = arith.constant 0 : i32
    %19 = vector.broadcast %c0_i32_5 : i32 to vector<1x256xi32>
    %20 = arith.cmpi eq, %18, %19 : vector<1x256xi32>
    %c16_i32_6 = arith.constant 16 : i32
    %c0_i32_7 = arith.constant 0 : i32
    %21 = arith.cmpi eq, %c16_i32_6, %c0_i32_7 : i32
    %c1_i32_8 = arith.constant 1 : i32
    %22 = arith.select %21, %c1_i32_8, %c16_i32_6 : i32
    %23 = vector.broadcast %22 : i32 to vector<1x256xi32>
    %24 = arith.remsi %2, %23 : vector<1x256xi32>
    %c0_i32_9 = arith.constant 0 : i32
    %25 = vector.broadcast %c0_i32_9 : i32 to vector<1x256xi32>
    %26 = arith.cmpi ne, %24, %25 : vector<1x256xi32>
    %c0_i32_10 = arith.constant 0 : i32
    %27 = vector.broadcast %c0_i32_10 : i32 to vector<1x256xi32>
    %28 = arith.cmpi slt, %24, %27 : vector<1x256xi32>
    %c0_i32_11 = arith.constant 0 : i32
    %29 = arith.cmpi slt, %22, %c0_i32_11 : i32
    %30 = vector.broadcast %29 : i1 to vector<1x256xi1>
    %31 = vector.broadcast %30 : vector<1x256xi1> to vector<1x256xi1>
    %32 = arith.xori %28, %31 : vector<1x256xi1>
    %33 = arith.andi %32, %26 : vector<1x256xi1>
    %34 = vector.broadcast %22 : i32 to vector<1x256xi32>
    %35 = arith.addi %24, %34 : vector<1x256xi32>
    %36 = arith.select %33, %35, %24 : vector<1x256xi1>, vector<1x256xi32>
    %c15_i32 = arith.constant 15 : i32
    %37 = vector.broadcast %c15_i32 : i32 to vector<1x256xi32>
    %38 = arith.cmpi eq, %36, %37 : vector<1x256xi32>
    %c16_i32_12 = arith.constant 16 : i32
    %39 = vector.broadcast %c16_i32_12 : i32 to vector<1x256xi32>
    %40 = arith.cmpi slt, %2, %39 : vector<1x256xi32>
    %c240_i32 = arith.constant 240 : i32
    %41 = vector.broadcast %c240_i32 : i32 to vector<1x256xi32>
    %42 = arith.cmpi sge, %2, %41 : vector<1x256xi32>
    %c0_13 = arith.constant 0 : index
    %c0_14 = arith.constant 0 : index
    %43 = vector.load %arg3[%c0_13, %c0_14] : memref<8x1xf32, #tpu.memory_space<vmem>>, vector<8x1xf32>
    %44 = vector.extract_strided_slice %1 {offsets = [0, 240], sizes = [8, 16], strides = [1, 1]} : vector<8x256xf32> to vector<8x16xf32>
    %45 = vector.extract_strided_slice %1 {offsets = [0, 0], sizes = [8, 240], strides = [1, 1]} : vector<8x256xf32> to vector<8x240xf32>
    %46 = tpu.concatenate %44, %45 in 1 : vector<8x16xf32>, vector<8x240xf32> -> vector<8x256xf32>
    %47 = vector.extract_strided_slice %1 {offsets = [0, 16], sizes = [8, 240], strides = [1, 1]} : vector<8x256xf32> to vector<8x240xf32>
    %48 = vector.extract_strided_slice %1 {offsets = [0, 0], sizes = [8, 16], strides = [1, 1]} : vector<8x256xf32> to vector<8x16xf32>
    %49 = tpu.concatenate %47, %48 in 1 : vector<8x240xf32>, vector<8x16xf32> -> vector<8x256xf32>
    %50 = vector.shape_cast %40 : vector<1x256xi1> to vector<1x256xi1>
    %51 = vector.broadcast %50 : vector<1x256xi1> to vector<8x256xi1>
    %52 = arith.select %51, %49, %46 : vector<8x256xi1>, vector<8x256xf32>
    %53 = vector.extract_strided_slice %52 {offsets = [0, 255], sizes = [8, 1], strides = [1, 1]} : vector<8x256xf32> to vector<8x1xf32>
    %54 = vector.extract_strided_slice %52 {offsets = [0, 0], sizes = [8, 255], strides = [1, 1]} : vector<8x256xf32> to vector<8x255xf32>
    %55 = tpu.concatenate %53, %54 in 1 : vector<8x1xf32>, vector<8x255xf32> -> vector<8x256xf32>
    %56 = vector.extract_strided_slice %52 {offsets = [0, 1], sizes = [8, 255], strides = [1, 1]} : vector<8x256xf32> to vector<8x255xf32>
    %57 = vector.extract_strided_slice %52 {offsets = [0, 0], sizes = [8, 1], strides = [1, 1]} : vector<8x256xf32> to vector<8x1xf32>
    %58 = tpu.concatenate %56, %57 in 1 : vector<8x255xf32>, vector<8x1xf32> -> vector<8x256xf32>
    %59 = vector.shape_cast %20 : vector<1x256xi1> to vector<1x256xi1>
    %60 = vector.broadcast %59 : vector<1x256xi1> to vector<8x256xi1>
    %61 = arith.select %60, %58, %55 : vector<8x256xi1>, vector<8x256xf32>
    %c0_15 = arith.constant 0 : index
    %c0_16 = arith.constant 0 : index
    %c0_17 = arith.constant 0 : index
    %62 = vector.load %arg2[%c0_15, %c0_16, %c0_17] : memref<9x8x8xf32, #tpu.memory_space<vmem>>, vector<1x8x8xf32>
    %63 = vector.shape_cast %62 : vector<1x8x8xf32> to vector<8x8xf32>
    %64 = vector.extract_strided_slice %63 {offsets = [0, 0], sizes = [8, 1], strides = [1, 1]} : vector<8x8xf32> to vector<8x1xf32>
    %65 = vector.extract_strided_slice %61 {offsets = [0, 0], sizes = [1, 256], strides = [1, 1]} : vector<8x256xf32> to vector<1x256xf32>
    %66 = vector.broadcast %64 : vector<8x1xf32> to vector<8x256xf32>
    %67 = vector.broadcast %65 : vector<1x256xf32> to vector<8x256xf32>
    %68 = arith.mulf %66, %67 : vector<8x256xf32>
    %69 = vector.extract_strided_slice %63 {offsets = [0, 1], sizes = [8, 1], strides = [1, 1]} : vector<8x8xf32> to vector<8x1xf32>
    %70 = vector.extract_strided_slice %61 {offsets = [1, 0], sizes = [1, 256], strides = [1, 1]} : vector<8x256xf32> to vector<1x256xf32>
    %71 = vector.broadcast %69 : vector<8x1xf32> to vector<8x256xf32>
    %72 = vector.broadcast %70 : vector<1x256xf32> to vector<8x256xf32>
    %73 = arith.mulf %71, %72 : vector<8x256xf32>
    %74 = arith.addf %68, %73 : vector<8x256xf32>
    %75 = vector.extract_strided_slice %63 {offsets = [0, 2], sizes = [8, 1], strides = [1, 1]} : vector<8x8xf32> to vector<8x1xf32>
    %76 = vector.extract_strided_slice %61 {offsets = [2, 0], sizes = [1, 256], strides = [1, 1]} : vector<8x256xf32> to vector<1x256xf32>
    %77 = vector.broadcast %75 : vector<8x1xf32> to vector<8x256xf32>
    %78 = vector.broadcast %76 : vector<1x256xf32> to vector<8x256xf32>
    %79 = arith.mulf %77, %78 : vector<8x256xf32>
    %80 = arith.addf %74, %79 : vector<8x256xf32>
    %81 = vector.extract_strided_slice %63 {offsets = [0, 3], sizes = [8, 1], strides = [1, 1]} : vector<8x8xf32> to vector<8x1xf32>
    %82 = vector.extract_strided_slice %61 {offsets = [3, 0], sizes = [1, 256], strides = [1, 1]} : vector<8x256xf32> to vector<1x256xf32>
    %83 = vector.broadcast %81 : vector<8x1xf32> to vector<8x256xf32>
    %84 = vector.broadcast %82 : vector<1x256xf32> to vector<8x256xf32>
    %85 = arith.mulf %83, %84 : vector<8x256xf32>
    %86 = arith.addf %80, %85 : vector<8x256xf32>
    %87 = vector.extract_strided_slice %63 {offsets = [0, 4], sizes = [8, 1], strides = [1, 1]} : vector<8x8xf32> to vector<8x1xf32>
    %88 = vector.extract_strided_slice %61 {offsets = [4, 0], sizes = [1, 256], strides = [1, 1]} : vector<8x256xf32> to vector<1x256xf32>
    %89 = vector.broadcast %87 : vector<8x1xf32> to vector<8x256xf32>
    %90 = vector.broadcast %88 : vector<1x256xf32> to vector<8x256xf32>
    %91 = arith.mulf %89, %90 : vector<8x256xf32>
    %92 = arith.addf %86, %91 : vector<8x256xf32>
    %93 = vector.extract_strided_slice %63 {offsets = [0, 5], sizes = [8, 1], strides = [1, 1]} : vector<8x8xf32> to vector<8x1xf32>
    %94 = vector.extract_strided_slice %61 {offsets = [5, 0], sizes = [1, 256], strides = [1, 1]} : vector<8x256xf32> to vector<1x256xf32>
    %95 = vector.broadcast %93 : vector<8x1xf32> to vector<8x256xf32>
    %96 = vector.broadcast %94 : vector<1x256xf32> to vector<8x256xf32>
    %97 = arith.mulf %95, %96 : vector<8x256xf32>
    %98 = arith.addf %92, %97 : vector<8x256xf32>
    %99 = vector.extract_strided_slice %63 {offsets = [0, 6], sizes = [8, 1], strides = [1, 1]} : vector<8x8xf32> to vector<8x1xf32>
    %100 = vector.extract_strided_slice %61 {offsets = [6, 0], sizes = [1, 256], strides = [1, 1]} : vector<8x256xf32> to vector<1x256xf32>
    %101 = vector.broadcast %99 : vector<8x1xf32> to vector<8x256xf32>
    %102 = vector.broadcast %100 : vector<1x256xf32> to vector<8x256xf32>
    %103 = arith.mulf %101, %102 : vector<8x256xf32>
    %104 = arith.addf %98, %103 : vector<8x256xf32>
    %105 = vector.extract_strided_slice %63 {offsets = [0, 7], sizes = [8, 1], strides = [1, 1]} : vector<8x8xf32> to vector<8x1xf32>
    %106 = vector.extract_strided_slice %61 {offsets = [7, 0], sizes = [1, 256], strides = [1, 1]} : vector<8x256xf32> to vector<1x256xf32>
    %107 = vector.broadcast %105 : vector<8x1xf32> to vector<8x256xf32>
    %108 = vector.broadcast %106 : vector<1x256xf32> to vector<8x256xf32>
    %109 = arith.mulf %107, %108 : vector<8x256xf32>
    %110 = arith.addf %104, %109 : vector<8x256xf32>
    %c1 = arith.constant 1 : index
    %c0_18 = arith.constant 0 : index
    %c0_19 = arith.constant 0 : index
    %111 = vector.load %arg2[%c1, %c0_18, %c0_19] : memref<9x8x8xf32, #tpu.memory_space<vmem>>, vector<1x8x8xf32>
    %112 = vector.shape_cast %111 : vector<1x8x8xf32> to vector<8x8xf32>
    %113 = vector.extract_strided_slice %112 {offsets = [0, 0], sizes = [8, 1], strides = [1, 1]} : vector<8x8xf32> to vector<8x1xf32>
    %114 = vector.extract_strided_slice %52 {offsets = [0, 0], sizes = [1, 256], strides = [1, 1]} : vector<8x256xf32> to vector<1x256xf32>
    %115 = vector.broadcast %113 : vector<8x1xf32> to vector<8x256xf32>
    %116 = vector.broadcast %114 : vector<1x256xf32> to vector<8x256xf32>
    %117 = arith.mulf %115, %116 : vector<8x256xf32>
    %118 = arith.addf %110, %117 : vector<8x256xf32>
    %119 = vector.extract_strided_slice %112 {offsets = [0, 1], sizes = [8, 1], strides = [1, 1]} : vector<8x8xf32> to vector<8x1xf32>
    %120 = vector.extract_strided_slice %52 {offsets = [1, 0], sizes = [1, 256], strides = [1, 1]} : vector<8x256xf32> to vector<1x256xf32>
    %121 = vector.broadcast %119 : vector<8x1xf32> to vector<8x256xf32>
    %122 = vector.broadcast %120 : vector<1x256xf32> to vector<8x256xf32>
    %123 = arith.mulf %121, %122 : vector<8x256xf32>
    %124 = arith.addf %118, %123 : vector<8x256xf32>
    %125 = vector.extract_strided_slice %112 {offsets = [0, 2], sizes = [8, 1], strides = [1, 1]} : vector<8x8xf32> to vector<8x1xf32>
    %126 = vector.extract_strided_slice %52 {offsets = [2, 0], sizes = [1, 256], strides = [1, 1]} : vector<8x256xf32> to vector<1x256xf32>
    %127 = vector.broadcast %125 : vector<8x1xf32> to vector<8x256xf32>
    %128 = vector.broadcast %126 : vector<1x256xf32> to vector<8x256xf32>
    %129 = arith.mulf %127, %128 : vector<8x256xf32>
    %130 = arith.addf %124, %129 : vector<8x256xf32>
    %131 = vector.extract_strided_slice %112 {offsets = [0, 3], sizes = [8, 1], strides = [1, 1]} : vector<8x8xf32> to vector<8x1xf32>
    %132 = vector.extract_strided_slice %52 {offsets = [3, 0], sizes = [1, 256], strides = [1, 1]} : vector<8x256xf32> to vector<1x256xf32>
    %133 = vector.broadcast %131 : vector<8x1xf32> to vector<8x256xf32>
    %134 = vector.broadcast %132 : vector<1x256xf32> to vector<8x256xf32>
    %135 = arith.mulf %133, %134 : vector<8x256xf32>
    %136 = arith.addf %130, %135 : vector<8x256xf32>
    %137 = vector.extract_strided_slice %112 {offsets = [0, 4], sizes = [8, 1], strides = [1, 1]} : vector<8x8xf32> to vector<8x1xf32>
    %138 = vector.extract_strided_slice %52 {offsets = [4, 0], sizes = [1, 256], strides = [1, 1]} : vector<8x256xf32> to vector<1x256xf32>
    %139 = vector.broadcast %137 : vector<8x1xf32> to vector<8x256xf32>
    %140 = vector.broadcast %138 : vector<1x256xf32> to vector<8x256xf32>
    %141 = arith.mulf %139, %140 : vector<8x256xf32>
    %142 = arith.addf %136, %141 : vector<8x256xf32>
    %143 = vector.extract_strided_slice %112 {offsets = [0, 5], sizes = [8, 1], strides = [1, 1]} : vector<8x8xf32> to vector<8x1xf32>
    %144 = vector.extract_strided_slice %52 {offsets = [5, 0], sizes = [1, 256], strides = [1, 1]} : vector<8x256xf32> to vector<1x256xf32>
    %145 = vector.broadcast %143 : vector<8x1xf32> to vector<8x256xf32>
    %146 = vector.broadcast %144 : vector<1x256xf32> to vector<8x256xf32>
    %147 = arith.mulf %145, %146 : vector<8x256xf32>
    %148 = arith.addf %142, %147 : vector<8x256xf32>
    %149 = vector.extract_strided_slice %112 {offsets = [0, 6], sizes = [8, 1], strides = [1, 1]} : vector<8x8xf32> to vector<8x1xf32>
    %150 = vector.extract_strided_slice %52 {offsets = [6, 0], sizes = [1, 256], strides = [1, 1]} : vector<8x256xf32> to vector<1x256xf32>
    %151 = vector.broadcast %149 : vector<8x1xf32> to vector<8x256xf32>
    %152 = vector.broadcast %150 : vector<1x256xf32> to vector<8x256xf32>
    %153 = arith.mulf %151, %152 : vector<8x256xf32>
    %154 = arith.addf %148, %153 : vector<8x256xf32>
    %155 = vector.extract_strided_slice %112 {offsets = [0, 7], sizes = [8, 1], strides = [1, 1]} : vector<8x8xf32> to vector<8x1xf32>
    %156 = vector.extract_strided_slice %52 {offsets = [7, 0], sizes = [1, 256], strides = [1, 1]} : vector<8x256xf32> to vector<1x256xf32>
    %157 = vector.broadcast %155 : vector<8x1xf32> to vector<8x256xf32>
    %158 = vector.broadcast %156 : vector<1x256xf32> to vector<8x256xf32>
    %159 = arith.mulf %157, %158 : vector<8x256xf32>
    %160 = arith.addf %154, %159 : vector<8x256xf32>
    %161 = vector.shape_cast %38 : vector<1x256xi1> to vector<1x256xi1>
    %162 = vector.broadcast %161 : vector<1x256xi1> to vector<8x256xi1>
    %163 = arith.select %162, %55, %58 : vector<8x256xi1>, vector<8x256xf32>
    %c2 = arith.constant 2 : index
    %c0_20 = arith.constant 0 : index
    %c0_21 = arith.constant 0 : index
    %164 = vector.load %arg2[%c2, %c0_20, %c0_21] : memref<9x8x8xf32, #tpu.memory_space<vmem>>, vector<1x8x8xf32>
    %165 = vector.shape_cast %164 : vector<1x8x8xf32> to vector<8x8xf32>
    %166 = vector.extract_strided_slice %165 {offsets = [0, 0], sizes = [8, 1], strides = [1, 1]} : vector<8x8xf32> to vector<8x1xf32>
    %167 = vector.extract_strided_slice %163 {offsets = [0, 0], sizes = [1, 256], strides = [1, 1]} : vector<8x256xf32> to vector<1x256xf32>
    %168 = vector.broadcast %166 : vector<8x1xf32> to vector<8x256xf32>
    %169 = vector.broadcast %167 : vector<1x256xf32> to vector<8x256xf32>
    %170 = arith.mulf %168, %169 : vector<8x256xf32>
    %171 = arith.addf %160, %170 : vector<8x256xf32>
    %172 = vector.extract_strided_slice %165 {offsets = [0, 1], sizes = [8, 1], strides = [1, 1]} : vector<8x8xf32> to vector<8x1xf32>
    %173 = vector.extract_strided_slice %163 {offsets = [1, 0], sizes = [1, 256], strides = [1, 1]} : vector<8x256xf32> to vector<1x256xf32>
    %174 = vector.broadcast %172 : vector<8x1xf32> to vector<8x256xf32>
    %175 = vector.broadcast %173 : vector<1x256xf32> to vector<8x256xf32>
    %176 = arith.mulf %174, %175 : vector<8x256xf32>
    %177 = arith.addf %171, %176 : vector<8x256xf32>
    %178 = vector.extract_strided_slice %165 {offsets = [0, 2], sizes = [8, 1], strides = [1, 1]} : vector<8x8xf32> to vector<8x1xf32>
    %179 = vector.extract_strided_slice %163 {offsets = [2, 0], sizes = [1, 256], strides = [1, 1]} : vector<8x256xf32> to vector<1x256xf32>
    %180 = vector.broadcast %178 : vector<8x1xf32> to vector<8x256xf32>
    %181 = vector.broadcast %179 : vector<1x256xf32> to vector<8x256xf32>
    %182 = arith.mulf %180, %181 : vector<8x256xf32>
    %183 = arith.addf %177, %182 : vector<8x256xf32>
    %184 = vector.extract_strided_slice %165 {offsets = [0, 3], sizes = [8, 1], strides = [1, 1]} : vector<8x8xf32> to vector<8x1xf32>
    %185 = vector.extract_strided_slice %163 {offsets = [3, 0], sizes = [1, 256], strides = [1, 1]} : vector<8x256xf32> to vector<1x256xf32>
    %186 = vector.broadcast %184 : vector<8x1xf32> to vector<8x256xf32>
    %187 = vector.broadcast %185 : vector<1x256xf32> to vector<8x256xf32>
    %188 = arith.mulf %186, %187 : vector<8x256xf32>
    %189 = arith.addf %183, %188 : vector<8x256xf32>
    %190 = vector.extract_strided_slice %165 {offsets = [0, 4], sizes = [8, 1], strides = [1, 1]} : vector<8x8xf32> to vector<8x1xf32>
    %191 = vector.extract_strided_slice %163 {offsets = [4, 0], sizes = [1, 256], strides = [1, 1]} : vector<8x256xf32> to vector<1x256xf32>
    %192 = vector.broadcast %190 : vector<8x1xf32> to vector<8x256xf32>
    %193 = vector.broadcast %191 : vector<1x256xf32> to vector<8x256xf32>
    %194 = arith.mulf %192, %193 : vector<8x256xf32>
    %195 = arith.addf %189, %194 : vector<8x256xf32>
    %196 = vector.extract_strided_slice %165 {offsets = [0, 5], sizes = [8, 1], strides = [1, 1]} : vector<8x8xf32> to vector<8x1xf32>
    %197 = vector.extract_strided_slice %163 {offsets = [5, 0], sizes = [1, 256], strides = [1, 1]} : vector<8x256xf32> to vector<1x256xf32>
    %198 = vector.broadcast %196 : vector<8x1xf32> to vector<8x256xf32>
    %199 = vector.broadcast %197 : vector<1x256xf32> to vector<8x256xf32>
    %200 = arith.mulf %198, %199 : vector<8x256xf32>
    %201 = arith.addf %195, %200 : vector<8x256xf32>
    %202 = vector.extract_strided_slice %165 {offsets = [0, 6], sizes = [8, 1], strides = [1, 1]} : vector<8x8xf32> to vector<8x1xf32>
    %203 = vector.extract_strided_slice %163 {offsets = [6, 0], sizes = [1, 256], strides = [1, 1]} : vector<8x256xf32> to vector<1x256xf32>
    %204 = vector.broadcast %202 : vector<8x1xf32> to vector<8x256xf32>
    %205 = vector.broadcast %203 : vector<1x256xf32> to vector<8x256xf32>
    %206 = arith.mulf %204, %205 : vector<8x256xf32>
    %207 = arith.addf %201, %206 : vector<8x256xf32>
    %208 = vector.extract_strided_slice %165 {offsets = [0, 7], sizes = [8, 1], strides = [1, 1]} : vector<8x8xf32> to vector<8x1xf32>
    %209 = vector.extract_strided_slice %163 {offsets = [7, 0], sizes = [1, 256], strides = [1, 1]} : vector<8x256xf32> to vector<1x256xf32>
    %210 = vector.broadcast %208 : vector<8x1xf32> to vector<8x256xf32>
    %211 = vector.broadcast %209 : vector<1x256xf32> to vector<8x256xf32>
    %212 = arith.mulf %210, %211 : vector<8x256xf32>
    %213 = arith.addf %207, %212 : vector<8x256xf32>
    %214 = vector.extract_strided_slice %1 {offsets = [0, 255], sizes = [8, 1], strides = [1, 1]} : vector<8x256xf32> to vector<8x1xf32>
    %215 = vector.extract_strided_slice %1 {offsets = [0, 0], sizes = [8, 255], strides = [1, 1]} : vector<8x256xf32> to vector<8x255xf32>
    %216 = tpu.concatenate %214, %215 in 1 : vector<8x1xf32>, vector<8x255xf32> -> vector<8x256xf32>
    %217 = vector.extract_strided_slice %1 {offsets = [0, 1], sizes = [8, 255], strides = [1, 1]} : vector<8x256xf32> to vector<8x255xf32>
    %218 = vector.extract_strided_slice %1 {offsets = [0, 0], sizes = [8, 1], strides = [1, 1]} : vector<8x256xf32> to vector<8x1xf32>
    %219 = tpu.concatenate %217, %218 in 1 : vector<8x255xf32>, vector<8x1xf32> -> vector<8x256xf32>
    %220 = vector.shape_cast %20 : vector<1x256xi1> to vector<1x256xi1>
    %221 = vector.broadcast %220 : vector<1x256xi1> to vector<8x256xi1>
    %222 = arith.select %221, %219, %216 : vector<8x256xi1>, vector<8x256xf32>
    %c3 = arith.constant 3 : index
    %c0_22 = arith.constant 0 : index
    %c0_23 = arith.constant 0 : index
    %223 = vector.load %arg2[%c3, %c0_22, %c0_23] : memref<9x8x8xf32, #tpu.memory_space<vmem>>, vector<1x8x8xf32>
    %224 = vector.shape_cast %223 : vector<1x8x8xf32> to vector<8x8xf32>
    %225 = vector.extract_strided_slice %224 {offsets = [0, 0], sizes = [8, 1], strides = [1, 1]} : vector<8x8xf32> to vector<8x1xf32>
    %226 = vector.extract_strided_slice %222 {offsets = [0, 0], sizes = [1, 256], strides = [1, 1]} : vector<8x256xf32> to vector<1x256xf32>
    %227 = vector.broadcast %225 : vector<8x1xf32> to vector<8x256xf32>
    %228 = vector.broadcast %226 : vector<1x256xf32> to vector<8x256xf32>
    %229 = arith.mulf %227, %228 : vector<8x256xf32>
    %230 = vector.extract_strided_slice %224 {offsets = [0, 1], sizes = [8, 1], strides = [1, 1]} : vector<8x8xf32> to vector<8x1xf32>
    %231 = vector.extract_strided_slice %222 {offsets = [1, 0], sizes = [1, 256], strides = [1, 1]} : vector<8x256xf32> to vector<1x256xf32>
    %232 = vector.broadcast %230 : vector<8x1xf32> to vector<8x256xf32>
    %233 = vector.broadcast %231 : vector<1x256xf32> to vector<8x256xf32>
    %234 = arith.mulf %232, %233 : vector<8x256xf32>
    %235 = arith.addf %229, %234 : vector<8x256xf32>
    %236 = vector.extract_strided_slice %224 {offsets = [0, 2], sizes = [8, 1], strides = [1, 1]} : vector<8x8xf32> to vector<8x1xf32>
    %237 = vector.extract_strided_slice %222 {offsets = [2, 0], sizes = [1, 256], strides = [1, 1]} : vector<8x256xf32> to vector<1x256xf32>
    %238 = vector.broadcast %236 : vector<8x1xf32> to vector<8x256xf32>
    %239 = vector.broadcast %237 : vector<1x256xf32> to vector<8x256xf32>
    %240 = arith.mulf %238, %239 : vector<8x256xf32>
    %241 = arith.addf %235, %240 : vector<8x256xf32>
    %242 = vector.extract_strided_slice %224 {offsets = [0, 3], sizes = [8, 1], strides = [1, 1]} : vector<8x8xf32> to vector<8x1xf32>
    %243 = vector.extract_strided_slice %222 {offsets = [3, 0], sizes = [1, 256], strides = [1, 1]} : vector<8x256xf32> to vector<1x256xf32>
    %244 = vector.broadcast %242 : vector<8x1xf32> to vector<8x256xf32>
    %245 = vector.broadcast %243 : vector<1x256xf32> to vector<8x256xf32>
    %246 = arith.mulf %244, %245 : vector<8x256xf32>
    %247 = arith.addf %241, %246 : vector<8x256xf32>
    %248 = vector.extract_strided_slice %224 {offsets = [0, 4], sizes = [8, 1], strides = [1, 1]} : vector<8x8xf32> to vector<8x1xf32>
    %249 = vector.extract_strided_slice %222 {offsets = [4, 0], sizes = [1, 256], strides = [1, 1]} : vector<8x256xf32> to vector<1x256xf32>
    %250 = vector.broadcast %248 : vector<8x1xf32> to vector<8x256xf32>
    %251 = vector.broadcast %249 : vector<1x256xf32> to vector<8x256xf32>
    %252 = arith.mulf %250, %251 : vector<8x256xf32>
    %253 = arith.addf %247, %252 : vector<8x256xf32>
    %254 = vector.extract_strided_slice %224 {offsets = [0, 5], sizes = [8, 1], strides = [1, 1]} : vector<8x8xf32> to vector<8x1xf32>
    %255 = vector.extract_strided_slice %222 {offsets = [5, 0], sizes = [1, 256], strides = [1, 1]} : vector<8x256xf32> to vector<1x256xf32>
    %256 = vector.broadcast %254 : vector<8x1xf32> to vector<8x256xf32>
    %257 = vector.broadcast %255 : vector<1x256xf32> to vector<8x256xf32>
    %258 = arith.mulf %256, %257 : vector<8x256xf32>
    %259 = arith.addf %253, %258 : vector<8x256xf32>
    %260 = vector.extract_strided_slice %224 {offsets = [0, 6], sizes = [8, 1], strides = [1, 1]} : vector<8x8xf32> to vector<8x1xf32>
    %261 = vector.extract_strided_slice %222 {offsets = [6, 0], sizes = [1, 256], strides = [1, 1]} : vector<8x256xf32> to vector<1x256xf32>
    %262 = vector.broadcast %260 : vector<8x1xf32> to vector<8x256xf32>
    %263 = vector.broadcast %261 : vector<1x256xf32> to vector<8x256xf32>
    %264 = arith.mulf %262, %263 : vector<8x256xf32>
    %265 = arith.addf %259, %264 : vector<8x256xf32>
    %266 = vector.extract_strided_slice %224 {offsets = [0, 7], sizes = [8, 1], strides = [1, 1]} : vector<8x8xf32> to vector<8x1xf32>
    %267 = vector.extract_strided_slice %222 {offsets = [7, 0], sizes = [1, 256], strides = [1, 1]} : vector<8x256xf32> to vector<1x256xf32>
    %268 = vector.broadcast %266 : vector<8x1xf32> to vector<8x256xf32>
    %269 = vector.broadcast %267 : vector<1x256xf32> to vector<8x256xf32>
    %270 = arith.mulf %268, %269 : vector<8x256xf32>
    %271 = arith.addf %265, %270 : vector<8x256xf32>
    %c4 = arith.constant 4 : index
    %c0_24 = arith.constant 0 : index
    %c0_25 = arith.constant 0 : index
    %272 = vector.load %arg2[%c4, %c0_24, %c0_25] : memref<9x8x8xf32, #tpu.memory_space<vmem>>, vector<1x8x8xf32>
    %273 = vector.shape_cast %272 : vector<1x8x8xf32> to vector<8x8xf32>
    %274 = vector.extract_strided_slice %273 {offsets = [0, 0], sizes = [8, 1], strides = [1, 1]} : vector<8x8xf32> to vector<8x1xf32>
    %275 = vector.extract_strided_slice %1 {offsets = [0, 0], sizes = [1, 256], strides = [1, 1]} : vector<8x256xf32> to vector<1x256xf32>
    %276 = vector.broadcast %274 : vector<8x1xf32> to vector<8x256xf32>
    %277 = vector.broadcast %275 : vector<1x256xf32> to vector<8x256xf32>
    %278 = arith.mulf %276, %277 : vector<8x256xf32>
    %279 = arith.addf %271, %278 : vector<8x256xf32>
    %280 = vector.extract_strided_slice %273 {offsets = [0, 1], sizes = [8, 1], strides = [1, 1]} : vector<8x8xf32> to vector<8x1xf32>
    %281 = vector.extract_strided_slice %1 {offsets = [1, 0], sizes = [1, 256], strides = [1, 1]} : vector<8x256xf32> to vector<1x256xf32>
    %282 = vector.broadcast %280 : vector<8x1xf32> to vector<8x256xf32>
    %283 = vector.broadcast %281 : vector<1x256xf32> to vector<8x256xf32>
    %284 = arith.mulf %282, %283 : vector<8x256xf32>
    %285 = arith.addf %279, %284 : vector<8x256xf32>
    %286 = vector.extract_strided_slice %273 {offsets = [0, 2], sizes = [8, 1], strides = [1, 1]} : vector<8x8xf32> to vector<8x1xf32>
    %287 = vector.extract_strided_slice %1 {offsets = [2, 0], sizes = [1, 256], strides = [1, 1]} : vector<8x256xf32> to vector<1x256xf32>
    %288 = vector.broadcast %286 : vector<8x1xf32> to vector<8x256xf32>
    %289 = vector.broadcast %287 : vector<1x256xf32> to vector<8x256xf32>
    %290 = arith.mulf %288, %289 : vector<8x256xf32>
    %291 = arith.addf %285, %290 : vector<8x256xf32>
    %292 = vector.extract_strided_slice %273 {offsets = [0, 3], sizes = [8, 1], strides = [1, 1]} : vector<8x8xf32> to vector<8x1xf32>
    %293 = vector.extract_strided_slice %1 {offsets = [3, 0], sizes = [1, 256], strides = [1, 1]} : vector<8x256xf32> to vector<1x256xf32>
    %294 = vector.broadcast %292 : vector<8x1xf32> to vector<8x256xf32>
    %295 = vector.broadcast %293 : vector<1x256xf32> to vector<8x256xf32>
    %296 = arith.mulf %294, %295 : vector<8x256xf32>
    %297 = arith.addf %291, %296 : vector<8x256xf32>
    %298 = vector.extract_strided_slice %273 {offsets = [0, 4], sizes = [8, 1], strides = [1, 1]} : vector<8x8xf32> to vector<8x1xf32>
    %299 = vector.extract_strided_slice %1 {offsets = [4, 0], sizes = [1, 256], strides = [1, 1]} : vector<8x256xf32> to vector<1x256xf32>
    %300 = vector.broadcast %298 : vector<8x1xf32> to vector<8x256xf32>
    %301 = vector.broadcast %299 : vector<1x256xf32> to vector<8x256xf32>
    %302 = arith.mulf %300, %301 : vector<8x256xf32>
    %303 = arith.addf %297, %302 : vector<8x256xf32>
    %304 = vector.extract_strided_slice %273 {offsets = [0, 5], sizes = [8, 1], strides = [1, 1]} : vector<8x8xf32> to vector<8x1xf32>
    %305 = vector.extract_strided_slice %1 {offsets = [5, 0], sizes = [1, 256], strides = [1, 1]} : vector<8x256xf32> to vector<1x256xf32>
    %306 = vector.broadcast %304 : vector<8x1xf32> to vector<8x256xf32>
    %307 = vector.broadcast %305 : vector<1x256xf32> to vector<8x256xf32>
    %308 = arith.mulf %306, %307 : vector<8x256xf32>
    %309 = arith.addf %303, %308 : vector<8x256xf32>
    %310 = vector.extract_strided_slice %273 {offsets = [0, 6], sizes = [8, 1], strides = [1, 1]} : vector<8x8xf32> to vector<8x1xf32>
    %311 = vector.extract_strided_slice %1 {offsets = [6, 0], sizes = [1, 256], strides = [1, 1]} : vector<8x256xf32> to vector<1x256xf32>
    %312 = vector.broadcast %310 : vector<8x1xf32> to vector<8x256xf32>
    %313 = vector.broadcast %311 : vector<1x256xf32> to vector<8x256xf32>
    %314 = arith.mulf %312, %313 : vector<8x256xf32>
    %315 = arith.addf %309, %314 : vector<8x256xf32>
    %316 = vector.extract_strided_slice %273 {offsets = [0, 7], sizes = [8, 1], strides = [1, 1]} : vector<8x8xf32> to vector<8x1xf32>
    %317 = vector.extract_strided_slice %1 {offsets = [7, 0], sizes = [1, 256], strides = [1, 1]} : vector<8x256xf32> to vector<1x256xf32>
    %318 = vector.broadcast %316 : vector<8x1xf32> to vector<8x256xf32>
    %319 = vector.broadcast %317 : vector<1x256xf32> to vector<8x256xf32>
    %320 = arith.mulf %318, %319 : vector<8x256xf32>
    %321 = arith.addf %315, %320 : vector<8x256xf32>
    %322 = vector.shape_cast %38 : vector<1x256xi1> to vector<1x256xi1>
    %323 = vector.broadcast %322 : vector<1x256xi1> to vector<8x256xi1>
    %324 = arith.select %323, %216, %219 : vector<8x256xi1>, vector<8x256xf32>
    %c5 = arith.constant 5 : index
    %c0_26 = arith.constant 0 : index
    %c0_27 = arith.constant 0 : index
    %325 = vector.load %arg2[%c5, %c0_26, %c0_27] : memref<9x8x8xf32, #tpu.memory_space<vmem>>, vector<1x8x8xf32>
    %326 = vector.shape_cast %325 : vector<1x8x8xf32> to vector<8x8xf32>
    %327 = vector.extract_strided_slice %326 {offsets = [0, 0], sizes = [8, 1], strides = [1, 1]} : vector<8x8xf32> to vector<8x1xf32>
    %328 = vector.extract_strided_slice %324 {offsets = [0, 0], sizes = [1, 256], strides = [1, 1]} : vector<8x256xf32> to vector<1x256xf32>
    %329 = vector.broadcast %327 : vector<8x1xf32> to vector<8x256xf32>
    %330 = vector.broadcast %328 : vector<1x256xf32> to vector<8x256xf32>
    %331 = arith.mulf %329, %330 : vector<8x256xf32>
    %332 = arith.addf %321, %331 : vector<8x256xf32>
    %333 = vector.extract_strided_slice %326 {offsets = [0, 1], sizes = [8, 1], strides = [1, 1]} : vector<8x8xf32> to vector<8x1xf32>
    %334 = vector.extract_strided_slice %324 {offsets = [1, 0], sizes = [1, 256], strides = [1, 1]} : vector<8x256xf32> to vector<1x256xf32>
    %335 = vector.broadcast %333 : vector<8x1xf32> to vector<8x256xf32>
    %336 = vector.broadcast %334 : vector<1x256xf32> to vector<8x256xf32>
    %337 = arith.mulf %335, %336 : vector<8x256xf32>
    %338 = arith.addf %332, %337 : vector<8x256xf32>
    %339 = vector.extract_strided_slice %326 {offsets = [0, 2], sizes = [8, 1], strides = [1, 1]} : vector<8x8xf32> to vector<8x1xf32>
    %340 = vector.extract_strided_slice %324 {offsets = [2, 0], sizes = [1, 256], strides = [1, 1]} : vector<8x256xf32> to vector<1x256xf32>
    %341 = vector.broadcast %339 : vector<8x1xf32> to vector<8x256xf32>
    %342 = vector.broadcast %340 : vector<1x256xf32> to vector<8x256xf32>
    %343 = arith.mulf %341, %342 : vector<8x256xf32>
    %344 = arith.addf %338, %343 : vector<8x256xf32>
    %345 = vector.extract_strided_slice %326 {offsets = [0, 3], sizes = [8, 1], strides = [1, 1]} : vector<8x8xf32> to vector<8x1xf32>
    %346 = vector.extract_strided_slice %324 {offsets = [3, 0], sizes = [1, 256], strides = [1, 1]} : vector<8x256xf32> to vector<1x256xf32>
    %347 = vector.broadcast %345 : vector<8x1xf32> to vector<8x256xf32>
    %348 = vector.broadcast %346 : vector<1x256xf32> to vector<8x256xf32>
    %349 = arith.mulf %347, %348 : vector<8x256xf32>
    %350 = arith.addf %344, %349 : vector<8x256xf32>
    %351 = vector.extract_strided_slice %326 {offsets = [0, 4], sizes = [8, 1], strides = [1, 1]} : vector<8x8xf32> to vector<8x1xf32>
    %352 = vector.extract_strided_slice %324 {offsets = [4, 0], sizes = [1, 256], strides = [1, 1]} : vector<8x256xf32> to vector<1x256xf32>
    %353 = vector.broadcast %351 : vector<8x1xf32> to vector<8x256xf32>
    %354 = vector.broadcast %352 : vector<1x256xf32> to vector<8x256xf32>
    %355 = arith.mulf %353, %354 : vector<8x256xf32>
    %356 = arith.addf %350, %355 : vector<8x256xf32>
    %357 = vector.extract_strided_slice %326 {offsets = [0, 5], sizes = [8, 1], strides = [1, 1]} : vector<8x8xf32> to vector<8x1xf32>
    %358 = vector.extract_strided_slice %324 {offsets = [5, 0], sizes = [1, 256], strides = [1, 1]} : vector<8x256xf32> to vector<1x256xf32>
    %359 = vector.broadcast %357 : vector<8x1xf32> to vector<8x256xf32>
    %360 = vector.broadcast %358 : vector<1x256xf32> to vector<8x256xf32>
    %361 = arith.mulf %359, %360 : vector<8x256xf32>
    %362 = arith.addf %356, %361 : vector<8x256xf32>
    %363 = vector.extract_strided_slice %326 {offsets = [0, 6], sizes = [8, 1], strides = [1, 1]} : vector<8x8xf32> to vector<8x1xf32>
    %364 = vector.extract_strided_slice %324 {offsets = [6, 0], sizes = [1, 256], strides = [1, 1]} : vector<8x256xf32> to vector<1x256xf32>
    %365 = vector.broadcast %363 : vector<8x1xf32> to vector<8x256xf32>
    %366 = vector.broadcast %364 : vector<1x256xf32> to vector<8x256xf32>
    %367 = arith.mulf %365, %366 : vector<8x256xf32>
    %368 = arith.addf %362, %367 : vector<8x256xf32>
    %369 = vector.extract_strided_slice %326 {offsets = [0, 7], sizes = [8, 1], strides = [1, 1]} : vector<8x8xf32> to vector<8x1xf32>
    %370 = vector.extract_strided_slice %324 {offsets = [7, 0], sizes = [1, 256], strides = [1, 1]} : vector<8x256xf32> to vector<1x256xf32>
    %371 = vector.broadcast %369 : vector<8x1xf32> to vector<8x256xf32>
    %372 = vector.broadcast %370 : vector<1x256xf32> to vector<8x256xf32>
    %373 = arith.mulf %371, %372 : vector<8x256xf32>
    %374 = arith.addf %368, %373 : vector<8x256xf32>
    %375 = vector.extract_strided_slice %1 {offsets = [0, 240], sizes = [8, 16], strides = [1, 1]} : vector<8x256xf32> to vector<8x16xf32>
    %376 = vector.extract_strided_slice %1 {offsets = [0, 0], sizes = [8, 240], strides = [1, 1]} : vector<8x256xf32> to vector<8x240xf32>
    %377 = tpu.concatenate %375, %376 in 1 : vector<8x16xf32>, vector<8x240xf32> -> vector<8x256xf32>
    %378 = vector.extract_strided_slice %1 {offsets = [0, 16], sizes = [8, 240], strides = [1, 1]} : vector<8x256xf32> to vector<8x240xf32>
    %379 = vector.extract_strided_slice %1 {offsets = [0, 0], sizes = [8, 16], strides = [1, 1]} : vector<8x256xf32> to vector<8x16xf32>
    %380 = tpu.concatenate %378, %379 in 1 : vector<8x240xf32>, vector<8x16xf32> -> vector<8x256xf32>
    %381 = vector.shape_cast %42 : vector<1x256xi1> to vector<1x256xi1>
    %382 = vector.broadcast %381 : vector<1x256xi1> to vector<8x256xi1>
    %383 = arith.select %382, %377, %380 : vector<8x256xi1>, vector<8x256xf32>
    %384 = vector.extract_strided_slice %383 {offsets = [0, 255], sizes = [8, 1], strides = [1, 1]} : vector<8x256xf32> to vector<8x1xf32>
    %385 = vector.extract_strided_slice %383 {offsets = [0, 0], sizes = [8, 255], strides = [1, 1]} : vector<8x256xf32> to vector<8x255xf32>
    %386 = tpu.concatenate %384, %385 in 1 : vector<8x1xf32>, vector<8x255xf32> -> vector<8x256xf32>
    %387 = vector.extract_strided_slice %383 {offsets = [0, 1], sizes = [8, 255], strides = [1, 1]} : vector<8x256xf32> to vector<8x255xf32>
    %388 = vector.extract_strided_slice %383 {offsets = [0, 0], sizes = [8, 1], strides = [1, 1]} : vector<8x256xf32> to vector<8x1xf32>
    %389 = tpu.concatenate %387, %388 in 1 : vector<8x255xf32>, vector<8x1xf32> -> vector<8x256xf32>
    %390 = vector.shape_cast %20 : vector<1x256xi1> to vector<1x256xi1>
    %391 = vector.broadcast %390 : vector<1x256xi1> to vector<8x256xi1>
    %392 = arith.select %391, %389, %386 : vector<8x256xi1>, vector<8x256xf32>
    %c6 = arith.constant 6 : index
    %c0_28 = arith.constant 0 : index
    %c0_29 = arith.constant 0 : index
    %393 = vector.load %arg2[%c6, %c0_28, %c0_29] : memref<9x8x8xf32, #tpu.memory_space<vmem>>, vector<1x8x8xf32>
    %394 = vector.shape_cast %393 : vector<1x8x8xf32> to vector<8x8xf32>
    %395 = vector.extract_strided_slice %394 {offsets = [0, 0], sizes = [8, 1], strides = [1, 1]} : vector<8x8xf32> to vector<8x1xf32>
    %396 = vector.extract_strided_slice %392 {offsets = [0, 0], sizes = [1, 256], strides = [1, 1]} : vector<8x256xf32> to vector<1x256xf32>
    %397 = vector.broadcast %395 : vector<8x1xf32> to vector<8x256xf32>
    %398 = vector.broadcast %396 : vector<1x256xf32> to vector<8x256xf32>
    %399 = arith.mulf %397, %398 : vector<8x256xf32>
    %400 = vector.extract_strided_slice %394 {offsets = [0, 1], sizes = [8, 1], strides = [1, 1]} : vector<8x8xf32> to vector<8x1xf32>
    %401 = vector.extract_strided_slice %392 {offsets = [1, 0], sizes = [1, 256], strides = [1, 1]} : vector<8x256xf32> to vector<1x256xf32>
    %402 = vector.broadcast %400 : vector<8x1xf32> to vector<8x256xf32>
    %403 = vector.broadcast %401 : vector<1x256xf32> to vector<8x256xf32>
    %404 = arith.mulf %402, %403 : vector<8x256xf32>
    %405 = arith.addf %399, %404 : vector<8x256xf32>
    %406 = vector.extract_strided_slice %394 {offsets = [0, 2], sizes = [8, 1], strides = [1, 1]} : vector<8x8xf32> to vector<8x1xf32>
    %407 = vector.extract_strided_slice %392 {offsets = [2, 0], sizes = [1, 256], strides = [1, 1]} : vector<8x256xf32> to vector<1x256xf32>
    %408 = vector.broadcast %406 : vector<8x1xf32> to vector<8x256xf32>
    %409 = vector.broadcast %407 : vector<1x256xf32> to vector<8x256xf32>
    %410 = arith.mulf %408, %409 : vector<8x256xf32>
    %411 = arith.addf %405, %410 : vector<8x256xf32>
    %412 = vector.extract_strided_slice %394 {offsets = [0, 3], sizes = [8, 1], strides = [1, 1]} : vector<8x8xf32> to vector<8x1xf32>
    %413 = vector.extract_strided_slice %392 {offsets = [3, 0], sizes = [1, 256], strides = [1, 1]} : vector<8x256xf32> to vector<1x256xf32>
    %414 = vector.broadcast %412 : vector<8x1xf32> to vector<8x256xf32>
    %415 = vector.broadcast %413 : vector<1x256xf32> to vector<8x256xf32>
    %416 = arith.mulf %414, %415 : vector<8x256xf32>
    %417 = arith.addf %411, %416 : vector<8x256xf32>
    %418 = vector.extract_strided_slice %394 {offsets = [0, 4], sizes = [8, 1], strides = [1, 1]} : vector<8x8xf32> to vector<8x1xf32>
    %419 = vector.extract_strided_slice %392 {offsets = [4, 0], sizes = [1, 256], strides = [1, 1]} : vector<8x256xf32> to vector<1x256xf32>
    %420 = vector.broadcast %418 : vector<8x1xf32> to vector<8x256xf32>
    %421 = vector.broadcast %419 : vector<1x256xf32> to vector<8x256xf32>
    %422 = arith.mulf %420, %421 : vector<8x256xf32>
    %423 = arith.addf %417, %422 : vector<8x256xf32>
    %424 = vector.extract_strided_slice %394 {offsets = [0, 5], sizes = [8, 1], strides = [1, 1]} : vector<8x8xf32> to vector<8x1xf32>
    %425 = vector.extract_strided_slice %392 {offsets = [5, 0], sizes = [1, 256], strides = [1, 1]} : vector<8x256xf32> to vector<1x256xf32>
    %426 = vector.broadcast %424 : vector<8x1xf32> to vector<8x256xf32>
    %427 = vector.broadcast %425 : vector<1x256xf32> to vector<8x256xf32>
    %428 = arith.mulf %426, %427 : vector<8x256xf32>
    %429 = arith.addf %423, %428 : vector<8x256xf32>
    %430 = vector.extract_strided_slice %394 {offsets = [0, 6], sizes = [8, 1], strides = [1, 1]} : vector<8x8xf32> to vector<8x1xf32>
    %431 = vector.extract_strided_slice %392 {offsets = [6, 0], sizes = [1, 256], strides = [1, 1]} : vector<8x256xf32> to vector<1x256xf32>
    %432 = vector.broadcast %430 : vector<8x1xf32> to vector<8x256xf32>
    %433 = vector.broadcast %431 : vector<1x256xf32> to vector<8x256xf32>
    %434 = arith.mulf %432, %433 : vector<8x256xf32>
    %435 = arith.addf %429, %434 : vector<8x256xf32>
    %436 = vector.extract_strided_slice %394 {offsets = [0, 7], sizes = [8, 1], strides = [1, 1]} : vector<8x8xf32> to vector<8x1xf32>
    %437 = vector.extract_strided_slice %392 {offsets = [7, 0], sizes = [1, 256], strides = [1, 1]} : vector<8x256xf32> to vector<1x256xf32>
    %438 = vector.broadcast %436 : vector<8x1xf32> to vector<8x256xf32>
    %439 = vector.broadcast %437 : vector<1x256xf32> to vector<8x256xf32>
    %440 = arith.mulf %438, %439 : vector<8x256xf32>
    %441 = arith.addf %435, %440 : vector<8x256xf32>
    %c7 = arith.constant 7 : index
    %c0_30 = arith.constant 0 : index
    %c0_31 = arith.constant 0 : index
    %442 = vector.load %arg2[%c7, %c0_30, %c0_31] : memref<9x8x8xf32, #tpu.memory_space<vmem>>, vector<1x8x8xf32>
    %443 = vector.shape_cast %442 : vector<1x8x8xf32> to vector<8x8xf32>
    %444 = vector.extract_strided_slice %443 {offsets = [0, 0], sizes = [8, 1], strides = [1, 1]} : vector<8x8xf32> to vector<8x1xf32>
    %445 = vector.extract_strided_slice %383 {offsets = [0, 0], sizes = [1, 256], strides = [1, 1]} : vector<8x256xf32> to vector<1x256xf32>
    %446 = vector.broadcast %444 : vector<8x1xf32> to vector<8x256xf32>
    %447 = vector.broadcast %445 : vector<1x256xf32> to vector<8x256xf32>
    %448 = arith.mulf %446, %447 : vector<8x256xf32>
    %449 = arith.addf %441, %448 : vector<8x256xf32>
    %450 = vector.extract_strided_slice %443 {offsets = [0, 1], sizes = [8, 1], strides = [1, 1]} : vector<8x8xf32> to vector<8x1xf32>
    %451 = vector.extract_strided_slice %383 {offsets = [1, 0], sizes = [1, 256], strides = [1, 1]} : vector<8x256xf32> to vector<1x256xf32>
    %452 = vector.broadcast %450 : vector<8x1xf32> to vector<8x256xf32>
    %453 = vector.broadcast %451 : vector<1x256xf32> to vector<8x256xf32>
    %454 = arith.mulf %452, %453 : vector<8x256xf32>
    %455 = arith.addf %449, %454 : vector<8x256xf32>
    %456 = vector.extract_strided_slice %443 {offsets = [0, 2], sizes = [8, 1], strides = [1, 1]} : vector<8x8xf32> to vector<8x1xf32>
    %457 = vector.extract_strided_slice %383 {offsets = [2, 0], sizes = [1, 256], strides = [1, 1]} : vector<8x256xf32> to vector<1x256xf32>
    %458 = vector.broadcast %456 : vector<8x1xf32> to vector<8x256xf32>
    %459 = vector.broadcast %457 : vector<1x256xf32> to vector<8x256xf32>
    %460 = arith.mulf %458, %459 : vector<8x256xf32>
    %461 = arith.addf %455, %460 : vector<8x256xf32>
    %462 = vector.extract_strided_slice %443 {offsets = [0, 3], sizes = [8, 1], strides = [1, 1]} : vector<8x8xf32> to vector<8x1xf32>
    %463 = vector.extract_strided_slice %383 {offsets = [3, 0], sizes = [1, 256], strides = [1, 1]} : vector<8x256xf32> to vector<1x256xf32>
    %464 = vector.broadcast %462 : vector<8x1xf32> to vector<8x256xf32>
    %465 = vector.broadcast %463 : vector<1x256xf32> to vector<8x256xf32>
    %466 = arith.mulf %464, %465 : vector<8x256xf32>
    %467 = arith.addf %461, %466 : vector<8x256xf32>
    %468 = vector.extract_strided_slice %443 {offsets = [0, 4], sizes = [8, 1], strides = [1, 1]} : vector<8x8xf32> to vector<8x1xf32>
    %469 = vector.extract_strided_slice %383 {offsets = [4, 0], sizes = [1, 256], strides = [1, 1]} : vector<8x256xf32> to vector<1x256xf32>
    %470 = vector.broadcast %468 : vector<8x1xf32> to vector<8x256xf32>
    %471 = vector.broadcast %469 : vector<1x256xf32> to vector<8x256xf32>
    %472 = arith.mulf %470, %471 : vector<8x256xf32>
    %473 = arith.addf %467, %472 : vector<8x256xf32>
    %474 = vector.extract_strided_slice %443 {offsets = [0, 5], sizes = [8, 1], strides = [1, 1]} : vector<8x8xf32> to vector<8x1xf32>
    %475 = vector.extract_strided_slice %383 {offsets = [5, 0], sizes = [1, 256], strides = [1, 1]} : vector<8x256xf32> to vector<1x256xf32>
    %476 = vector.broadcast %474 : vector<8x1xf32> to vector<8x256xf32>
    %477 = vector.broadcast %475 : vector<1x256xf32> to vector<8x256xf32>
    %478 = arith.mulf %476, %477 : vector<8x256xf32>
    %479 = arith.addf %473, %478 : vector<8x256xf32>
    %480 = vector.extract_strided_slice %443 {offsets = [0, 6], sizes = [8, 1], strides = [1, 1]} : vector<8x8xf32> to vector<8x1xf32>
    %481 = vector.extract_strided_slice %383 {offsets = [6, 0], sizes = [1, 256], strides = [1, 1]} : vector<8x256xf32> to vector<1x256xf32>
    %482 = vector.broadcast %480 : vector<8x1xf32> to vector<8x256xf32>
    %483 = vector.broadcast %481 : vector<1x256xf32> to vector<8x256xf32>
    %484 = arith.mulf %482, %483 : vector<8x256xf32>
    %485 = arith.addf %479, %484 : vector<8x256xf32>
    %486 = vector.extract_strided_slice %443 {offsets = [0, 7], sizes = [8, 1], strides = [1, 1]} : vector<8x8xf32> to vector<8x1xf32>
    %487 = vector.extract_strided_slice %383 {offsets = [7, 0], sizes = [1, 256], strides = [1, 1]} : vector<8x256xf32> to vector<1x256xf32>
    %488 = vector.broadcast %486 : vector<8x1xf32> to vector<8x256xf32>
    %489 = vector.broadcast %487 : vector<1x256xf32> to vector<8x256xf32>
    %490 = arith.mulf %488, %489 : vector<8x256xf32>
    %491 = arith.addf %485, %490 : vector<8x256xf32>
    %492 = vector.shape_cast %38 : vector<1x256xi1> to vector<1x256xi1>
    %493 = vector.broadcast %492 : vector<1x256xi1> to vector<8x256xi1>
    %494 = arith.select %493, %386, %389 : vector<8x256xi1>, vector<8x256xf32>
    %c8 = arith.constant 8 : index
    %c0_32 = arith.constant 0 : index
    %c0_33 = arith.constant 0 : index
    %495 = vector.load %arg2[%c8, %c0_32, %c0_33] : memref<9x8x8xf32, #tpu.memory_space<vmem>>, vector<1x8x8xf32>
    %496 = vector.shape_cast %495 : vector<1x8x8xf32> to vector<8x8xf32>
    %497 = vector.extract_strided_slice %496 {offsets = [0, 0], sizes = [8, 1], strides = [1, 1]} : vector<8x8xf32> to vector<8x1xf32>
    %498 = vector.extract_strided_slice %494 {offsets = [0, 0], sizes = [1, 256], strides = [1, 1]} : vector<8x256xf32> to vector<1x256xf32>
    %499 = vector.broadcast %497 : vector<8x1xf32> to vector<8x256xf32>
    %500 = vector.broadcast %498 : vector<1x256xf32> to vector<8x256xf32>
    %501 = arith.mulf %499, %500 : vector<8x256xf32>
    %502 = arith.addf %491, %501 : vector<8x256xf32>
    %503 = vector.extract_strided_slice %496 {offsets = [0, 1], sizes = [8, 1], strides = [1, 1]} : vector<8x8xf32> to vector<8x1xf32>
    %504 = vector.extract_strided_slice %494 {offsets = [1, 0], sizes = [1, 256], strides = [1, 1]} : vector<8x256xf32> to vector<1x256xf32>
    %505 = vector.broadcast %503 : vector<8x1xf32> to vector<8x256xf32>
    %506 = vector.broadcast %504 : vector<1x256xf32> to vector<8x256xf32>
    %507 = arith.mulf %505, %506 : vector<8x256xf32>
    %508 = arith.addf %502, %507 : vector<8x256xf32>
    %509 = vector.extract_strided_slice %496 {offsets = [0, 2], sizes = [8, 1], strides = [1, 1]} : vector<8x8xf32> to vector<8x1xf32>
    %510 = vector.extract_strided_slice %494 {offsets = [2, 0], sizes = [1, 256], strides = [1, 1]} : vector<8x256xf32> to vector<1x256xf32>
    %511 = vector.broadcast %509 : vector<8x1xf32> to vector<8x256xf32>
    %512 = vector.broadcast %510 : vector<1x256xf32> to vector<8x256xf32>
    %513 = arith.mulf %511, %512 : vector<8x256xf32>
    %514 = arith.addf %508, %513 : vector<8x256xf32>
    %515 = vector.extract_strided_slice %496 {offsets = [0, 3], sizes = [8, 1], strides = [1, 1]} : vector<8x8xf32> to vector<8x1xf32>
    %516 = vector.extract_strided_slice %494 {offsets = [3, 0], sizes = [1, 256], strides = [1, 1]} : vector<8x256xf32> to vector<1x256xf32>
    %517 = vector.broadcast %515 : vector<8x1xf32> to vector<8x256xf32>
    %518 = vector.broadcast %516 : vector<1x256xf32> to vector<8x256xf32>
    %519 = arith.mulf %517, %518 : vector<8x256xf32>
    %520 = arith.addf %514, %519 : vector<8x256xf32>
    %521 = vector.extract_strided_slice %496 {offsets = [0, 4], sizes = [8, 1], strides = [1, 1]} : vector<8x8xf32> to vector<8x1xf32>
    %522 = vector.extract_strided_slice %494 {offsets = [4, 0], sizes = [1, 256], strides = [1, 1]} : vector<8x256xf32> to vector<1x256xf32>
    %523 = vector.broadcast %521 : vector<8x1xf32> to vector<8x256xf32>
    %524 = vector.broadcast %522 : vector<1x256xf32> to vector<8x256xf32>
    %525 = arith.mulf %523, %524 : vector<8x256xf32>
    %526 = arith.addf %520, %525 : vector<8x256xf32>
    %527 = vector.extract_strided_slice %496 {offsets = [0, 5], sizes = [8, 1], strides = [1, 1]} : vector<8x8xf32> to vector<8x1xf32>
    %528 = vector.extract_strided_slice %494 {offsets = [5, 0], sizes = [1, 256], strides = [1, 1]} : vector<8x256xf32> to vector<1x256xf32>
    %529 = vector.broadcast %527 : vector<8x1xf32> to vector<8x256xf32>
    %530 = vector.broadcast %528 : vector<1x256xf32> to vector<8x256xf32>
    %531 = arith.mulf %529, %530 : vector<8x256xf32>
    %532 = arith.addf %526, %531 : vector<8x256xf32>
    %533 = vector.extract_strided_slice %496 {offsets = [0, 6], sizes = [8, 1], strides = [1, 1]} : vector<8x8xf32> to vector<8x1xf32>
    %534 = vector.extract_strided_slice %494 {offsets = [6, 0], sizes = [1, 256], strides = [1, 1]} : vector<8x256xf32> to vector<1x256xf32>
    %535 = vector.broadcast %533 : vector<8x1xf32> to vector<8x256xf32>
    %536 = vector.broadcast %534 : vector<1x256xf32> to vector<8x256xf32>
    %537 = arith.mulf %535, %536 : vector<8x256xf32>
    %538 = arith.addf %532, %537 : vector<8x256xf32>
    %539 = vector.extract_strided_slice %496 {offsets = [0, 7], sizes = [8, 1], strides = [1, 1]} : vector<8x8xf32> to vector<8x1xf32>
    %540 = vector.extract_strided_slice %494 {offsets = [7, 0], sizes = [1, 256], strides = [1, 1]} : vector<8x256xf32> to vector<1x256xf32>
    %541 = vector.broadcast %539 : vector<8x1xf32> to vector<8x256xf32>
    %542 = vector.broadcast %540 : vector<1x256xf32> to vector<8x256xf32>
    %543 = arith.mulf %541, %542 : vector<8x256xf32>
    %544 = arith.addf %538, %543 : vector<8x256xf32>
    %545 = vector.broadcast %43 : vector<8x1xf32> to vector<8x256xf32>
    %546 = arith.addf %545, %213 : vector<8x256xf32>
    %547 = arith.addf %546, %374 : vector<8x256xf32>
    %548 = arith.addf %547, %544 : vector<8x256xf32>
    %cst = arith.constant dense<0.000000e+00> : vector<8xf32>
    %549 = vector.multi_reduction <add>, %548, %cst [1] : vector<8x256xf32> to vector<8xf32>
    %550 = vector.shape_cast %549 : vector<8xf32> to vector<8x1xf32>
    %cst_34 = arith.constant 3.906250e-03 : f32
    %551 = vector.broadcast %cst_34 : f32 to vector<8x1xf32>
    %552 = arith.mulf %550, %551 : vector<8x1xf32>
    %553 = vector.broadcast %552 : vector<8x1xf32> to vector<8x256xf32>
    %554 = arith.subf %548, %553 : vector<8x256xf32>
    %555 = arith.mulf %554, %554 : vector<8x256xf32>
    %cst_35 = arith.constant dense<0.000000e+00> : vector<8xf32>
    %556 = vector.multi_reduction <add>, %555, %cst_35 [1] : vector<8x256xf32> to vector<8xf32>
    %557 = vector.shape_cast %556 : vector<8xf32> to vector<8x1xf32>
    %cst_36 = arith.constant 3.906250e-03 : f32
    %558 = vector.broadcast %cst_36 : f32 to vector<8x1xf32>
    %559 = arith.mulf %557, %558 : vector<8x1xf32>
    %cst_37 = arith.constant 9.99999974E-6 : f32
    %560 = vector.broadcast %cst_37 : f32 to vector<8x1xf32>
    %561 = arith.addf %559, %560 : vector<8x1xf32>
    %562 = math.rsqrt %561 : vector<8x1xf32>
    %563 = vector.broadcast %562 : vector<8x1xf32> to vector<8x256xf32>
    %564 = arith.mulf %554, %563 : vector<8x256xf32>
    %cst_38 = arith.constant 0.000000e+00 : f32
    %565 = vector.broadcast %cst_38 : f32 to vector<8x256xf32>
    %566 = arith.maximumf %564, %565 : vector<8x256xf32>
    %c0_39 = arith.constant 0 : index
    %c0_40 = arith.constant 0 : index
    %567 = vector.load %arg5[%c0_39, %c0_40] : memref<8x1xf32, #tpu.memory_space<vmem>>, vector<8x1xf32>
    %568 = vector.extract_strided_slice %566 {offsets = [0, 240], sizes = [8, 16], strides = [1, 1]} : vector<8x256xf32> to vector<8x16xf32>
    %569 = vector.extract_strided_slice %566 {offsets = [0, 0], sizes = [8, 240], strides = [1, 1]} : vector<8x256xf32> to vector<8x240xf32>
    %570 = tpu.concatenate %568, %569 in 1 : vector<8x16xf32>, vector<8x240xf32> -> vector<8x256xf32>
    %571 = vector.extract_strided_slice %566 {offsets = [0, 16], sizes = [8, 240], strides = [1, 1]} : vector<8x256xf32> to vector<8x240xf32>
    %572 = vector.extract_strided_slice %566 {offsets = [0, 0], sizes = [8, 16], strides = [1, 1]} : vector<8x256xf32> to vector<8x16xf32>
    %573 = tpu.concatenate %571, %572 in 1 : vector<8x240xf32>, vector<8x16xf32> -> vector<8x256xf32>
    %574 = vector.shape_cast %40 : vector<1x256xi1> to vector<1x256xi1>
    %575 = vector.broadcast %574 : vector<1x256xi1> to vector<8x256xi1>
    %576 = arith.select %575, %573, %570 : vector<8x256xi1>, vector<8x256xf32>
    %577 = vector.extract_strided_slice %576 {offsets = [0, 255], sizes = [8, 1], strides = [1, 1]} : vector<8x256xf32> to vector<8x1xf32>
    %578 = vector.extract_strided_slice %576 {offsets = [0, 0], sizes = [8, 255], strides = [1, 1]} : vector<8x256xf32> to vector<8x255xf32>
    %579 = tpu.concatenate %577, %578 in 1 : vector<8x1xf32>, vector<8x255xf32> -> vector<8x256xf32>
    %580 = vector.extract_strided_slice %576 {offsets = [0, 1], sizes = [8, 255], strides = [1, 1]} : vector<8x256xf32> to vector<8x255xf32>
    %581 = vector.extract_strided_slice %576 {offsets = [0, 0], sizes = [8, 1], strides = [1, 1]} : vector<8x256xf32> to vector<8x1xf32>
    %582 = tpu.concatenate %580, %581 in 1 : vector<8x255xf32>, vector<8x1xf32> -> vector<8x256xf32>
    %583 = vector.shape_cast %20 : vector<1x256xi1> to vector<1x256xi1>
    %584 = vector.broadcast %583 : vector<1x256xi1> to vector<8x256xi1>
    %585 = arith.select %584, %582, %579 : vector<8x256xi1>, vector<8x256xf32>
    %c0_41 = arith.constant 0 : index
    %c0_42 = arith.constant 0 : index
    %c0_43 = arith.constant 0 : index
    %586 = vector.load %arg4[%c0_41, %c0_42, %c0_43] : memref<9x8x8xf32, #tpu.memory_space<vmem>>, vector<1x8x8xf32>
    %587 = vector.shape_cast %586 : vector<1x8x8xf32> to vector<8x8xf32>
    %588 = vector.extract_strided_slice %587 {offsets = [0, 0], sizes = [8, 1], strides = [1, 1]} : vector<8x8xf32> to vector<8x1xf32>
    %589 = vector.extract_strided_slice %585 {offsets = [0, 0], sizes = [1, 256], strides = [1, 1]} : vector<8x256xf32> to vector<1x256xf32>
    %590 = vector.broadcast %588 : vector<8x1xf32> to vector<8x256xf32>
    %591 = vector.broadcast %589 : vector<1x256xf32> to vector<8x256xf32>
    %592 = arith.mulf %590, %591 : vector<8x256xf32>
    %593 = vector.extract_strided_slice %587 {offsets = [0, 1], sizes = [8, 1], strides = [1, 1]} : vector<8x8xf32> to vector<8x1xf32>
    %594 = vector.extract_strided_slice %585 {offsets = [1, 0], sizes = [1, 256], strides = [1, 1]} : vector<8x256xf32> to vector<1x256xf32>
    %595 = vector.broadcast %593 : vector<8x1xf32> to vector<8x256xf32>
    %596 = vector.broadcast %594 : vector<1x256xf32> to vector<8x256xf32>
    %597 = arith.mulf %595, %596 : vector<8x256xf32>
    %598 = arith.addf %592, %597 : vector<8x256xf32>
    %599 = vector.extract_strided_slice %587 {offsets = [0, 2], sizes = [8, 1], strides = [1, 1]} : vector<8x8xf32> to vector<8x1xf32>
    %600 = vector.extract_strided_slice %585 {offsets = [2, 0], sizes = [1, 256], strides = [1, 1]} : vector<8x256xf32> to vector<1x256xf32>
    %601 = vector.broadcast %599 : vector<8x1xf32> to vector<8x256xf32>
    %602 = vector.broadcast %600 : vector<1x256xf32> to vector<8x256xf32>
    %603 = arith.mulf %601, %602 : vector<8x256xf32>
    %604 = arith.addf %598, %603 : vector<8x256xf32>
    %605 = vector.extract_strided_slice %587 {offsets = [0, 3], sizes = [8, 1], strides = [1, 1]} : vector<8x8xf32> to vector<8x1xf32>
    %606 = vector.extract_strided_slice %585 {offsets = [3, 0], sizes = [1, 256], strides = [1, 1]} : vector<8x256xf32> to vector<1x256xf32>
    %607 = vector.broadcast %605 : vector<8x1xf32> to vector<8x256xf32>
    %608 = vector.broadcast %606 : vector<1x256xf32> to vector<8x256xf32>
    %609 = arith.mulf %607, %608 : vector<8x256xf32>
    %610 = arith.addf %604, %609 : vector<8x256xf32>
    %611 = vector.extract_strided_slice %587 {offsets = [0, 4], sizes = [8, 1], strides = [1, 1]} : vector<8x8xf32> to vector<8x1xf32>
    %612 = vector.extract_strided_slice %585 {offsets = [4, 0], sizes = [1, 256], strides = [1, 1]} : vector<8x256xf32> to vector<1x256xf32>
    %613 = vector.broadcast %611 : vector<8x1xf32> to vector<8x256xf32>
    %614 = vector.broadcast %612 : vector<1x256xf32> to vector<8x256xf32>
    %615 = arith.mulf %613, %614 : vector<8x256xf32>
    %616 = arith.addf %610, %615 : vector<8x256xf32>
    %617 = vector.extract_strided_slice %587 {offsets = [0, 5], sizes = [8, 1], strides = [1, 1]} : vector<8x8xf32> to vector<8x1xf32>
    %618 = vector.extract_strided_slice %585 {offsets = [5, 0], sizes = [1, 256], strides = [1, 1]} : vector<8x256xf32> to vector<1x256xf32>
    %619 = vector.broadcast %617 : vector<8x1xf32> to vector<8x256xf32>
    %620 = vector.broadcast %618 : vector<1x256xf32> to vector<8x256xf32>
    %621 = arith.mulf %619, %620 : vector<8x256xf32>
    %622 = arith.addf %616, %621 : vector<8x256xf32>
    %623 = vector.extract_strided_slice %587 {offsets = [0, 6], sizes = [8, 1], strides = [1, 1]} : vector<8x8xf32> to vector<8x1xf32>
    %624 = vector.extract_strided_slice %585 {offsets = [6, 0], sizes = [1, 256], strides = [1, 1]} : vector<8x256xf32> to vector<1x256xf32>
    %625 = vector.broadcast %623 : vector<8x1xf32> to vector<8x256xf32>
    %626 = vector.broadcast %624 : vector<1x256xf32> to vector<8x256xf32>
    %627 = arith.mulf %625, %626 : vector<8x256xf32>
    %628 = arith.addf %622, %627 : vector<8x256xf32>
    %629 = vector.extract_strided_slice %587 {offsets = [0, 7], sizes = [8, 1], strides = [1, 1]} : vector<8x8xf32> to vector<8x1xf32>
    %630 = vector.extract_strided_slice %585 {offsets = [7, 0], sizes = [1, 256], strides = [1, 1]} : vector<8x256xf32> to vector<1x256xf32>
    %631 = vector.broadcast %629 : vector<8x1xf32> to vector<8x256xf32>
    %632 = vector.broadcast %630 : vector<1x256xf32> to vector<8x256xf32>
    %633 = arith.mulf %631, %632 : vector<8x256xf32>
    %634 = arith.addf %628, %633 : vector<8x256xf32>
    %c1_44 = arith.constant 1 : index
    %c0_45 = arith.constant 0 : index
    %c0_46 = arith.constant 0 : index
    %635 = vector.load %arg4[%c1_44, %c0_45, %c0_46] : memref<9x8x8xf32, #tpu.memory_space<vmem>>, vector<1x8x8xf32>
    %636 = vector.shape_cast %635 : vector<1x8x8xf32> to vector<8x8xf32>
    %637 = vector.extract_strided_slice %636 {offsets = [0, 0], sizes = [8, 1], strides = [1, 1]} : vector<8x8xf32> to vector<8x1xf32>
    %638 = vector.extract_strided_slice %576 {offsets = [0, 0], sizes = [1, 256], strides = [1, 1]} : vector<8x256xf32> to vector<1x256xf32>
    %639 = vector.broadcast %637 : vector<8x1xf32> to vector<8x256xf32>
    %640 = vector.broadcast %638 : vector<1x256xf32> to vector<8x256xf32>
    %641 = arith.mulf %639, %640 : vector<8x256xf32>
    %642 = arith.addf %634, %641 : vector<8x256xf32>
    %643 = vector.extract_strided_slice %636 {offsets = [0, 1], sizes = [8, 1], strides = [1, 1]} : vector<8x8xf32> to vector<8x1xf32>
    %644 = vector.extract_strided_slice %576 {offsets = [1, 0], sizes = [1, 256], strides = [1, 1]} : vector<8x256xf32> to vector<1x256xf32>
    %645 = vector.broadcast %643 : vector<8x1xf32> to vector<8x256xf32>
    %646 = vector.broadcast %644 : vector<1x256xf32> to vector<8x256xf32>
    %647 = arith.mulf %645, %646 : vector<8x256xf32>
    %648 = arith.addf %642, %647 : vector<8x256xf32>
    %649 = vector.extract_strided_slice %636 {offsets = [0, 2], sizes = [8, 1], strides = [1, 1]} : vector<8x8xf32> to vector<8x1xf32>
    %650 = vector.extract_strided_slice %576 {offsets = [2, 0], sizes = [1, 256], strides = [1, 1]} : vector<8x256xf32> to vector<1x256xf32>
    %651 = vector.broadcast %649 : vector<8x1xf32> to vector<8x256xf32>
    %652 = vector.broadcast %650 : vector<1x256xf32> to vector<8x256xf32>
    %653 = arith.mulf %651, %652 : vector<8x256xf32>
    %654 = arith.addf %648, %653 : vector<8x256xf32>
    %655 = vector.extract_strided_slice %636 {offsets = [0, 3], sizes = [8, 1], strides = [1, 1]} : vector<8x8xf32> to vector<8x1xf32>
    %656 = vector.extract_strided_slice %576 {offsets = [3, 0], sizes = [1, 256], strides = [1, 1]} : vector<8x256xf32> to vector<1x256xf32>
    %657 = vector.broadcast %655 : vector<8x1xf32> to vector<8x256xf32>
    %658 = vector.broadcast %656 : vector<1x256xf32> to vector<8x256xf32>
    %659 = arith.mulf %657, %658 : vector<8x256xf32>
    %660 = arith.addf %654, %659 : vector<8x256xf32>
    %661 = vector.extract_strided_slice %636 {offsets = [0, 4], sizes = [8, 1], strides = [1, 1]} : vector<8x8xf32> to vector<8x1xf32>
    %662 = vector.extract_strided_slice %576 {offsets = [4, 0], sizes = [1, 256], strides = [1, 1]} : vector<8x256xf32> to vector<1x256xf32>
    %663 = vector.broadcast %661 : vector<8x1xf32> to vector<8x256xf32>
    %664 = vector.broadcast %662 : vector<1x256xf32> to vector<8x256xf32>
    %665 = arith.mulf %663, %664 : vector<8x256xf32>
    %666 = arith.addf %660, %665 : vector<8x256xf32>
    %667 = vector.extract_strided_slice %636 {offsets = [0, 5], sizes = [8, 1], strides = [1, 1]} : vector<8x8xf32> to vector<8x1xf32>
    %668 = vector.extract_strided_slice %576 {offsets = [5, 0], sizes = [1, 256], strides = [1, 1]} : vector<8x256xf32> to vector<1x256xf32>
    %669 = vector.broadcast %667 : vector<8x1xf32> to vector<8x256xf32>
    %670 = vector.broadcast %668 : vector<1x256xf32> to vector<8x256xf32>
    %671 = arith.mulf %669, %670 : vector<8x256xf32>
    %672 = arith.addf %666, %671 : vector<8x256xf32>
    %673 = vector.extract_strided_slice %636 {offsets = [0, 6], sizes = [8, 1], strides = [1, 1]} : vector<8x8xf32> to vector<8x1xf32>
    %674 = vector.extract_strided_slice %576 {offsets = [6, 0], sizes = [1, 256], strides = [1, 1]} : vector<8x256xf32> to vector<1x256xf32>
    %675 = vector.broadcast %673 : vector<8x1xf32> to vector<8x256xf32>
    %676 = vector.broadcast %674 : vector<1x256xf32> to vector<8x256xf32>
    %677 = arith.mulf %675, %676 : vector<8x256xf32>
    %678 = arith.addf %672, %677 : vector<8x256xf32>
    %679 = vector.extract_strided_slice %636 {offsets = [0, 7], sizes = [8, 1], strides = [1, 1]} : vector<8x8xf32> to vector<8x1xf32>
    %680 = vector.extract_strided_slice %576 {offsets = [7, 0], sizes = [1, 256], strides = [1, 1]} : vector<8x256xf32> to vector<1x256xf32>
    %681 = vector.broadcast %679 : vector<8x1xf32> to vector<8x256xf32>
    %682 = vector.broadcast %680 : vector<1x256xf32> to vector<8x256xf32>
    %683 = arith.mulf %681, %682 : vector<8x256xf32>
    %684 = arith.addf %678, %683 : vector<8x256xf32>
    %685 = vector.shape_cast %38 : vector<1x256xi1> to vector<1x256xi1>
    %686 = vector.broadcast %685 : vector<1x256xi1> to vector<8x256xi1>
    %687 = arith.select %686, %579, %582 : vector<8x256xi1>, vector<8x256xf32>
    %c2_47 = arith.constant 2 : index
    %c0_48 = arith.constant 0 : index
    %c0_49 = arith.constant 0 : index
    %688 = vector.load %arg4[%c2_47, %c0_48, %c0_49] : memref<9x8x8xf32, #tpu.memory_space<vmem>>, vector<1x8x8xf32>
    %689 = vector.shape_cast %688 : vector<1x8x8xf32> to vector<8x8xf32>
    %690 = vector.extract_strided_slice %689 {offsets = [0, 0], sizes = [8, 1], strides = [1, 1]} : vector<8x8xf32> to vector<8x1xf32>
    %691 = vector.extract_strided_slice %687 {offsets = [0, 0], sizes = [1, 256], strides = [1, 1]} : vector<8x256xf32> to vector<1x256xf32>
    %692 = vector.broadcast %690 : vector<8x1xf32> to vector<8x256xf32>
    %693 = vector.broadcast %691 : vector<1x256xf32> to vector<8x256xf32>
    %694 = arith.mulf %692, %693 : vector<8x256xf32>
    %695 = arith.addf %684, %694 : vector<8x256xf32>
    %696 = vector.extract_strided_slice %689 {offsets = [0, 1], sizes = [8, 1], strides = [1, 1]} : vector<8x8xf32> to vector<8x1xf32>
    %697 = vector.extract_strided_slice %687 {offsets = [1, 0], sizes = [1, 256], strides = [1, 1]} : vector<8x256xf32> to vector<1x256xf32>
    %698 = vector.broadcast %696 : vector<8x1xf32> to vector<8x256xf32>
    %699 = vector.broadcast %697 : vector<1x256xf32> to vector<8x256xf32>
    %700 = arith.mulf %698, %699 : vector<8x256xf32>
    %701 = arith.addf %695, %700 : vector<8x256xf32>
    %702 = vector.extract_strided_slice %689 {offsets = [0, 2], sizes = [8, 1], strides = [1, 1]} : vector<8x8xf32> to vector<8x1xf32>
    %703 = vector.extract_strided_slice %687 {offsets = [2, 0], sizes = [1, 256], strides = [1, 1]} : vector<8x256xf32> to vector<1x256xf32>
    %704 = vector.broadcast %702 : vector<8x1xf32> to vector<8x256xf32>
    %705 = vector.broadcast %703 : vector<1x256xf32> to vector<8x256xf32>
    %706 = arith.mulf %704, %705 : vector<8x256xf32>
    %707 = arith.addf %701, %706 : vector<8x256xf32>
    %708 = vector.extract_strided_slice %689 {offsets = [0, 3], sizes = [8, 1], strides = [1, 1]} : vector<8x8xf32> to vector<8x1xf32>
    %709 = vector.extract_strided_slice %687 {offsets = [3, 0], sizes = [1, 256], strides = [1, 1]} : vector<8x256xf32> to vector<1x256xf32>
    %710 = vector.broadcast %708 : vector<8x1xf32> to vector<8x256xf32>
    %711 = vector.broadcast %709 : vector<1x256xf32> to vector<8x256xf32>
    %712 = arith.mulf %710, %711 : vector<8x256xf32>
    %713 = arith.addf %707, %712 : vector<8x256xf32>
    %714 = vector.extract_strided_slice %689 {offsets = [0, 4], sizes = [8, 1], strides = [1, 1]} : vector<8x8xf32> to vector<8x1xf32>
    %715 = vector.extract_strided_slice %687 {offsets = [4, 0], sizes = [1, 256], strides = [1, 1]} : vector<8x256xf32> to vector<1x256xf32>
    %716 = vector.broadcast %714 : vector<8x1xf32> to vector<8x256xf32>
    %717 = vector.broadcast %715 : vector<1x256xf32> to vector<8x256xf32>
    %718 = arith.mulf %716, %717 : vector<8x256xf32>
    %719 = arith.addf %713, %718 : vector<8x256xf32>
    %720 = vector.extract_strided_slice %689 {offsets = [0, 5], sizes = [8, 1], strides = [1, 1]} : vector<8x8xf32> to vector<8x1xf32>
    %721 = vector.extract_strided_slice %687 {offsets = [5, 0], sizes = [1, 256], strides = [1, 1]} : vector<8x256xf32> to vector<1x256xf32>
    %722 = vector.broadcast %720 : vector<8x1xf32> to vector<8x256xf32>
    %723 = vector.broadcast %721 : vector<1x256xf32> to vector<8x256xf32>
    %724 = arith.mulf %722, %723 : vector<8x256xf32>
    %725 = arith.addf %719, %724 : vector<8x256xf32>
    %726 = vector.extract_strided_slice %689 {offsets = [0, 6], sizes = [8, 1], strides = [1, 1]} : vector<8x8xf32> to vector<8x1xf32>
    %727 = vector.extract_strided_slice %687 {offsets = [6, 0], sizes = [1, 256], strides = [1, 1]} : vector<8x256xf32> to vector<1x256xf32>
    %728 = vector.broadcast %726 : vector<8x1xf32> to vector<8x256xf32>
    %729 = vector.broadcast %727 : vector<1x256xf32> to vector<8x256xf32>
    %730 = arith.mulf %728, %729 : vector<8x256xf32>
    %731 = arith.addf %725, %730 : vector<8x256xf32>
    %732 = vector.extract_strided_slice %689 {offsets = [0, 7], sizes = [8, 1], strides = [1, 1]} : vector<8x8xf32> to vector<8x1xf32>
    %733 = vector.extract_strided_slice %687 {offsets = [7, 0], sizes = [1, 256], strides = [1, 1]} : vector<8x256xf32> to vector<1x256xf32>
    %734 = vector.broadcast %732 : vector<8x1xf32> to vector<8x256xf32>
    %735 = vector.broadcast %733 : vector<1x256xf32> to vector<8x256xf32>
    %736 = arith.mulf %734, %735 : vector<8x256xf32>
    %737 = arith.addf %731, %736 : vector<8x256xf32>
    %738 = vector.extract_strided_slice %566 {offsets = [0, 255], sizes = [8, 1], strides = [1, 1]} : vector<8x256xf32> to vector<8x1xf32>
    %739 = vector.extract_strided_slice %566 {offsets = [0, 0], sizes = [8, 255], strides = [1, 1]} : vector<8x256xf32> to vector<8x255xf32>
    %740 = tpu.concatenate %738, %739 in 1 : vector<8x1xf32>, vector<8x255xf32> -> vector<8x256xf32>
    %741 = vector.extract_strided_slice %566 {offsets = [0, 1], sizes = [8, 255], strides = [1, 1]} : vector<8x256xf32> to vector<8x255xf32>
    %742 = vector.extract_strided_slice %566 {offsets = [0, 0], sizes = [8, 1], strides = [1, 1]} : vector<8x256xf32> to vector<8x1xf32>
    %743 = tpu.concatenate %741, %742 in 1 : vector<8x255xf32>, vector<8x1xf32> -> vector<8x256xf32>
    %744 = vector.shape_cast %20 : vector<1x256xi1> to vector<1x256xi1>
    %745 = vector.broadcast %744 : vector<1x256xi1> to vector<8x256xi1>
    %746 = arith.select %745, %743, %740 : vector<8x256xi1>, vector<8x256xf32>
    %c3_50 = arith.constant 3 : index
    %c0_51 = arith.constant 0 : index
    %c0_52 = arith.constant 0 : index
    %747 = vector.load %arg4[%c3_50, %c0_51, %c0_52] : memref<9x8x8xf32, #tpu.memory_space<vmem>>, vector<1x8x8xf32>
    %748 = vector.shape_cast %747 : vector<1x8x8xf32> to vector<8x8xf32>
    %749 = vector.extract_strided_slice %748 {offsets = [0, 0], sizes = [8, 1], strides = [1, 1]} : vector<8x8xf32> to vector<8x1xf32>
    %750 = vector.extract_strided_slice %746 {offsets = [0, 0], sizes = [1, 256], strides = [1, 1]} : vector<8x256xf32> to vector<1x256xf32>
    %751 = vector.broadcast %749 : vector<8x1xf32> to vector<8x256xf32>
    %752 = vector.broadcast %750 : vector<1x256xf32> to vector<8x256xf32>
    %753 = arith.mulf %751, %752 : vector<8x256xf32>
    %754 = vector.extract_strided_slice %748 {offsets = [0, 1], sizes = [8, 1], strides = [1, 1]} : vector<8x8xf32> to vector<8x1xf32>
    %755 = vector.extract_strided_slice %746 {offsets = [1, 0], sizes = [1, 256], strides = [1, 1]} : vector<8x256xf32> to vector<1x256xf32>
    %756 = vector.broadcast %754 : vector<8x1xf32> to vector<8x256xf32>
    %757 = vector.broadcast %755 : vector<1x256xf32> to vector<8x256xf32>
    %758 = arith.mulf %756, %757 : vector<8x256xf32>
    %759 = arith.addf %753, %758 : vector<8x256xf32>
    %760 = vector.extract_strided_slice %748 {offsets = [0, 2], sizes = [8, 1], strides = [1, 1]} : vector<8x8xf32> to vector<8x1xf32>
    %761 = vector.extract_strided_slice %746 {offsets = [2, 0], sizes = [1, 256], strides = [1, 1]} : vector<8x256xf32> to vector<1x256xf32>
    %762 = vector.broadcast %760 : vector<8x1xf32> to vector<8x256xf32>
    %763 = vector.broadcast %761 : vector<1x256xf32> to vector<8x256xf32>
    %764 = arith.mulf %762, %763 : vector<8x256xf32>
    %765 = arith.addf %759, %764 : vector<8x256xf32>
    %766 = vector.extract_strided_slice %748 {offsets = [0, 3], sizes = [8, 1], strides = [1, 1]} : vector<8x8xf32> to vector<8x1xf32>
    %767 = vector.extract_strided_slice %746 {offsets = [3, 0], sizes = [1, 256], strides = [1, 1]} : vector<8x256xf32> to vector<1x256xf32>
    %768 = vector.broadcast %766 : vector<8x1xf32> to vector<8x256xf32>
    %769 = vector.broadcast %767 : vector<1x256xf32> to vector<8x256xf32>
    %770 = arith.mulf %768, %769 : vector<8x256xf32>
    %771 = arith.addf %765, %770 : vector<8x256xf32>
    %772 = vector.extract_strided_slice %748 {offsets = [0, 4], sizes = [8, 1], strides = [1, 1]} : vector<8x8xf32> to vector<8x1xf32>
    %773 = vector.extract_strided_slice %746 {offsets = [4, 0], sizes = [1, 256], strides = [1, 1]} : vector<8x256xf32> to vector<1x256xf32>
    %774 = vector.broadcast %772 : vector<8x1xf32> to vector<8x256xf32>
    %775 = vector.broadcast %773 : vector<1x256xf32> to vector<8x256xf32>
    %776 = arith.mulf %774, %775 : vector<8x256xf32>
    %777 = arith.addf %771, %776 : vector<8x256xf32>
    %778 = vector.extract_strided_slice %748 {offsets = [0, 5], sizes = [8, 1], strides = [1, 1]} : vector<8x8xf32> to vector<8x1xf32>
    %779 = vector.extract_strided_slice %746 {offsets = [5, 0], sizes = [1, 256], strides = [1, 1]} : vector<8x256xf32> to vector<1x256xf32>
    %780 = vector.broadcast %778 : vector<8x1xf32> to vector<8x256xf32>
    %781 = vector.broadcast %779 : vector<1x256xf32> to vector<8x256xf32>
    %782 = arith.mulf %780, %781 : vector<8x256xf32>
    %783 = arith.addf %777, %782 : vector<8x256xf32>
    %784 = vector.extract_strided_slice %748 {offsets = [0, 6], sizes = [8, 1], strides = [1, 1]} : vector<8x8xf32> to vector<8x1xf32>
    %785 = vector.extract_strided_slice %746 {offsets = [6, 0], sizes = [1, 256], strides = [1, 1]} : vector<8x256xf32> to vector<1x256xf32>
    %786 = vector.broadcast %784 : vector<8x1xf32> to vector<8x256xf32>
    %787 = vector.broadcast %785 : vector<1x256xf32> to vector<8x256xf32>
    %788 = arith.mulf %786, %787 : vector<8x256xf32>
    %789 = arith.addf %783, %788 : vector<8x256xf32>
    %790 = vector.extract_strided_slice %748 {offsets = [0, 7], sizes = [8, 1], strides = [1, 1]} : vector<8x8xf32> to vector<8x1xf32>
    %791 = vector.extract_strided_slice %746 {offsets = [7, 0], sizes = [1, 256], strides = [1, 1]} : vector<8x256xf32> to vector<1x256xf32>
    %792 = vector.broadcast %790 : vector<8x1xf32> to vector<8x256xf32>
    %793 = vector.broadcast %791 : vector<1x256xf32> to vector<8x256xf32>
    %794 = arith.mulf %792, %793 : vector<8x256xf32>
    %795 = arith.addf %789, %794 : vector<8x256xf32>
    %c4_53 = arith.constant 4 : index
    %c0_54 = arith.constant 0 : index
    %c0_55 = arith.constant 0 : index
    %796 = vector.load %arg4[%c4_53, %c0_54, %c0_55] : memref<9x8x8xf32, #tpu.memory_space<vmem>>, vector<1x8x8xf32>
    %797 = vector.shape_cast %796 : vector<1x8x8xf32> to vector<8x8xf32>
    %798 = vector.extract_strided_slice %797 {offsets = [0, 0], sizes = [8, 1], strides = [1, 1]} : vector<8x8xf32> to vector<8x1xf32>
    %799 = vector.extract_strided_slice %566 {offsets = [0, 0], sizes = [1, 256], strides = [1, 1]} : vector<8x256xf32> to vector<1x256xf32>
    %800 = vector.broadcast %798 : vector<8x1xf32> to vector<8x256xf32>
    %801 = vector.broadcast %799 : vector<1x256xf32> to vector<8x256xf32>
    %802 = arith.mulf %800, %801 : vector<8x256xf32>
    %803 = arith.addf %795, %802 : vector<8x256xf32>
    %804 = vector.extract_strided_slice %797 {offsets = [0, 1], sizes = [8, 1], strides = [1, 1]} : vector<8x8xf32> to vector<8x1xf32>
    %805 = vector.extract_strided_slice %566 {offsets = [1, 0], sizes = [1, 256], strides = [1, 1]} : vector<8x256xf32> to vector<1x256xf32>
    %806 = vector.broadcast %804 : vector<8x1xf32> to vector<8x256xf32>
    %807 = vector.broadcast %805 : vector<1x256xf32> to vector<8x256xf32>
    %808 = arith.mulf %806, %807 : vector<8x256xf32>
    %809 = arith.addf %803, %808 : vector<8x256xf32>
    %810 = vector.extract_strided_slice %797 {offsets = [0, 2], sizes = [8, 1], strides = [1, 1]} : vector<8x8xf32> to vector<8x1xf32>
    %811 = vector.extract_strided_slice %566 {offsets = [2, 0], sizes = [1, 256], strides = [1, 1]} : vector<8x256xf32> to vector<1x256xf32>
    %812 = vector.broadcast %810 : vector<8x1xf32> to vector<8x256xf32>
    %813 = vector.broadcast %811 : vector<1x256xf32> to vector<8x256xf32>
    %814 = arith.mulf %812, %813 : vector<8x256xf32>
    %815 = arith.addf %809, %814 : vector<8x256xf32>
    %816 = vector.extract_strided_slice %797 {offsets = [0, 3], sizes = [8, 1], strides = [1, 1]} : vector<8x8xf32> to vector<8x1xf32>
    %817 = vector.extract_strided_slice %566 {offsets = [3, 0], sizes = [1, 256], strides = [1, 1]} : vector<8x256xf32> to vector<1x256xf32>
    %818 = vector.broadcast %816 : vector<8x1xf32> to vector<8x256xf32>
    %819 = vector.broadcast %817 : vector<1x256xf32> to vector<8x256xf32>
    %820 = arith.mulf %818, %819 : vector<8x256xf32>
    %821 = arith.addf %815, %820 : vector<8x256xf32>
    %822 = vector.extract_strided_slice %797 {offsets = [0, 4], sizes = [8, 1], strides = [1, 1]} : vector<8x8xf32> to vector<8x1xf32>
    %823 = vector.extract_strided_slice %566 {offsets = [4, 0], sizes = [1, 256], strides = [1, 1]} : vector<8x256xf32> to vector<1x256xf32>
    %824 = vector.broadcast %822 : vector<8x1xf32> to vector<8x256xf32>
    %825 = vector.broadcast %823 : vector<1x256xf32> to vector<8x256xf32>
    %826 = arith.mulf %824, %825 : vector<8x256xf32>
    %827 = arith.addf %821, %826 : vector<8x256xf32>
    %828 = vector.extract_strided_slice %797 {offsets = [0, 5], sizes = [8, 1], strides = [1, 1]} : vector<8x8xf32> to vector<8x1xf32>
    %829 = vector.extract_strided_slice %566 {offsets = [5, 0], sizes = [1, 256], strides = [1, 1]} : vector<8x256xf32> to vector<1x256xf32>
    %830 = vector.broadcast %828 : vector<8x1xf32> to vector<8x256xf32>
    %831 = vector.broadcast %829 : vector<1x256xf32> to vector<8x256xf32>
    %832 = arith.mulf %830, %831 : vector<8x256xf32>
    %833 = arith.addf %827, %832 : vector<8x256xf32>
    %834 = vector.extract_strided_slice %797 {offsets = [0, 6], sizes = [8, 1], strides = [1, 1]} : vector<8x8xf32> to vector<8x1xf32>
    %835 = vector.extract_strided_slice %566 {offsets = [6, 0], sizes = [1, 256], strides = [1, 1]} : vector<8x256xf32> to vector<1x256xf32>
    %836 = vector.broadcast %834 : vector<8x1xf32> to vector<8x256xf32>
    %837 = vector.broadcast %835 : vector<1x256xf32> to vector<8x256xf32>
    %838 = arith.mulf %836, %837 : vector<8x256xf32>
    %839 = arith.addf %833, %838 : vector<8x256xf32>
    %840 = vector.extract_strided_slice %797 {offsets = [0, 7], sizes = [8, 1], strides = [1, 1]} : vector<8x8xf32> to vector<8x1xf32>
    %841 = vector.extract_strided_slice %566 {offsets = [7, 0], sizes = [1, 256], strides = [1, 1]} : vector<8x256xf32> to vector<1x256xf32>
    %842 = vector.broadcast %840 : vector<8x1xf32> to vector<8x256xf32>
    %843 = vector.broadcast %841 : vector<1x256xf32> to vector<8x256xf32>
    %844 = arith.mulf %842, %843 : vector<8x256xf32>
    %845 = arith.addf %839, %844 : vector<8x256xf32>
    %846 = vector.shape_cast %38 : vector<1x256xi1> to vector<1x256xi1>
    %847 = vector.broadcast %846 : vector<1x256xi1> to vector<8x256xi1>
    %848 = arith.select %847, %740, %743 : vector<8x256xi1>, vector<8x256xf32>
    %c5_56 = arith.constant 5 : index
    %c0_57 = arith.constant 0 : index
    %c0_58 = arith.constant 0 : index
    %849 = vector.load %arg4[%c5_56, %c0_57, %c0_58] : memref<9x8x8xf32, #tpu.memory_space<vmem>>, vector<1x8x8xf32>
    %850 = vector.shape_cast %849 : vector<1x8x8xf32> to vector<8x8xf32>
    %851 = vector.extract_strided_slice %850 {offsets = [0, 0], sizes = [8, 1], strides = [1, 1]} : vector<8x8xf32> to vector<8x1xf32>
    %852 = vector.extract_strided_slice %848 {offsets = [0, 0], sizes = [1, 256], strides = [1, 1]} : vector<8x256xf32> to vector<1x256xf32>
    %853 = vector.broadcast %851 : vector<8x1xf32> to vector<8x256xf32>
    %854 = vector.broadcast %852 : vector<1x256xf32> to vector<8x256xf32>
    %855 = arith.mulf %853, %854 : vector<8x256xf32>
    %856 = arith.addf %845, %855 : vector<8x256xf32>
    %857 = vector.extract_strided_slice %850 {offsets = [0, 1], sizes = [8, 1], strides = [1, 1]} : vector<8x8xf32> to vector<8x1xf32>
    %858 = vector.extract_strided_slice %848 {offsets = [1, 0], sizes = [1, 256], strides = [1, 1]} : vector<8x256xf32> to vector<1x256xf32>
    %859 = vector.broadcast %857 : vector<8x1xf32> to vector<8x256xf32>
    %860 = vector.broadcast %858 : vector<1x256xf32> to vector<8x256xf32>
    %861 = arith.mulf %859, %860 : vector<8x256xf32>
    %862 = arith.addf %856, %861 : vector<8x256xf32>
    %863 = vector.extract_strided_slice %850 {offsets = [0, 2], sizes = [8, 1], strides = [1, 1]} : vector<8x8xf32> to vector<8x1xf32>
    %864 = vector.extract_strided_slice %848 {offsets = [2, 0], sizes = [1, 256], strides = [1, 1]} : vector<8x256xf32> to vector<1x256xf32>
    %865 = vector.broadcast %863 : vector<8x1xf32> to vector<8x256xf32>
    %866 = vector.broadcast %864 : vector<1x256xf32> to vector<8x256xf32>
    %867 = arith.mulf %865, %866 : vector<8x256xf32>
    %868 = arith.addf %862, %867 : vector<8x256xf32>
    %869 = vector.extract_strided_slice %850 {offsets = [0, 3], sizes = [8, 1], strides = [1, 1]} : vector<8x8xf32> to vector<8x1xf32>
    %870 = vector.extract_strided_slice %848 {offsets = [3, 0], sizes = [1, 256], strides = [1, 1]} : vector<8x256xf32> to vector<1x256xf32>
    %871 = vector.broadcast %869 : vector<8x1xf32> to vector<8x256xf32>
    %872 = vector.broadcast %870 : vector<1x256xf32> to vector<8x256xf32>
    %873 = arith.mulf %871, %872 : vector<8x256xf32>
    %874 = arith.addf %868, %873 : vector<8x256xf32>
    %875 = vector.extract_strided_slice %850 {offsets = [0, 4], sizes = [8, 1], strides = [1, 1]} : vector<8x8xf32> to vector<8x1xf32>
    %876 = vector.extract_strided_slice %848 {offsets = [4, 0], sizes = [1, 256], strides = [1, 1]} : vector<8x256xf32> to vector<1x256xf32>
    %877 = vector.broadcast %875 : vector<8x1xf32> to vector<8x256xf32>
    %878 = vector.broadcast %876 : vector<1x256xf32> to vector<8x256xf32>
    %879 = arith.mulf %877, %878 : vector<8x256xf32>
    %880 = arith.addf %874, %879 : vector<8x256xf32>
    %881 = vector.extract_strided_slice %850 {offsets = [0, 5], sizes = [8, 1], strides = [1, 1]} : vector<8x8xf32> to vector<8x1xf32>
    %882 = vector.extract_strided_slice %848 {offsets = [5, 0], sizes = [1, 256], strides = [1, 1]} : vector<8x256xf32> to vector<1x256xf32>
    %883 = vector.broadcast %881 : vector<8x1xf32> to vector<8x256xf32>
    %884 = vector.broadcast %882 : vector<1x256xf32> to vector<8x256xf32>
    %885 = arith.mulf %883, %884 : vector<8x256xf32>
    %886 = arith.addf %880, %885 : vector<8x256xf32>
    %887 = vector.extract_strided_slice %850 {offsets = [0, 6], sizes = [8, 1], strides = [1, 1]} : vector<8x8xf32> to vector<8x1xf32>
    %888 = vector.extract_strided_slice %848 {offsets = [6, 0], sizes = [1, 256], strides = [1, 1]} : vector<8x256xf32> to vector<1x256xf32>
    %889 = vector.broadcast %887 : vector<8x1xf32> to vector<8x256xf32>
    %890 = vector.broadcast %888 : vector<1x256xf32> to vector<8x256xf32>
    %891 = arith.mulf %889, %890 : vector<8x256xf32>
    %892 = arith.addf %886, %891 : vector<8x256xf32>
    %893 = vector.extract_strided_slice %850 {offsets = [0, 7], sizes = [8, 1], strides = [1, 1]} : vector<8x8xf32> to vector<8x1xf32>
    %894 = vector.extract_strided_slice %848 {offsets = [7, 0], sizes = [1, 256], strides = [1, 1]} : vector<8x256xf32> to vector<1x256xf32>
    %895 = vector.broadcast %893 : vector<8x1xf32> to vector<8x256xf32>
    %896 = vector.broadcast %894 : vector<1x256xf32> to vector<8x256xf32>
    %897 = arith.mulf %895, %896 : vector<8x256xf32>
    %898 = arith.addf %892, %897 : vector<8x256xf32>
    %899 = vector.extract_strided_slice %566 {offsets = [0, 240], sizes = [8, 16], strides = [1, 1]} : vector<8x256xf32> to vector<8x16xf32>
    %900 = vector.extract_strided_slice %566 {offsets = [0, 0], sizes = [8, 240], strides = [1, 1]} : vector<8x256xf32> to vector<8x240xf32>
    %901 = tpu.concatenate %899, %900 in 1 : vector<8x16xf32>, vector<8x240xf32> -> vector<8x256xf32>
    %902 = vector.extract_strided_slice %566 {offsets = [0, 16], sizes = [8, 240], strides = [1, 1]} : vector<8x256xf32> to vector<8x240xf32>
    %903 = vector.extract_strided_slice %566 {offsets = [0, 0], sizes = [8, 16], strides = [1, 1]} : vector<8x256xf32> to vector<8x16xf32>
    %904 = tpu.concatenate %902, %903 in 1 : vector<8x240xf32>, vector<8x16xf32> -> vector<8x256xf32>
    %905 = vector.shape_cast %42 : vector<1x256xi1> to vector<1x256xi1>
    %906 = vector.broadcast %905 : vector<1x256xi1> to vector<8x256xi1>
    %907 = arith.select %906, %901, %904 : vector<8x256xi1>, vector<8x256xf32>
    %908 = vector.extract_strided_slice %907 {offsets = [0, 255], sizes = [8, 1], strides = [1, 1]} : vector<8x256xf32> to vector<8x1xf32>
    %909 = vector.extract_strided_slice %907 {offsets = [0, 0], sizes = [8, 255], strides = [1, 1]} : vector<8x256xf32> to vector<8x255xf32>
    %910 = tpu.concatenate %908, %909 in 1 : vector<8x1xf32>, vector<8x255xf32> -> vector<8x256xf32>
    %911 = vector.extract_strided_slice %907 {offsets = [0, 1], sizes = [8, 255], strides = [1, 1]} : vector<8x256xf32> to vector<8x255xf32>
    %912 = vector.extract_strided_slice %907 {offsets = [0, 0], sizes = [8, 1], strides = [1, 1]} : vector<8x256xf32> to vector<8x1xf32>
    %913 = tpu.concatenate %911, %912 in 1 : vector<8x255xf32>, vector<8x1xf32> -> vector<8x256xf32>
    %914 = vector.shape_cast %20 : vector<1x256xi1> to vector<1x256xi1>
    %915 = vector.broadcast %914 : vector<1x256xi1> to vector<8x256xi1>
    %916 = arith.select %915, %913, %910 : vector<8x256xi1>, vector<8x256xf32>
    %c6_59 = arith.constant 6 : index
    %c0_60 = arith.constant 0 : index
    %c0_61 = arith.constant 0 : index
    %917 = vector.load %arg4[%c6_59, %c0_60, %c0_61] : memref<9x8x8xf32, #tpu.memory_space<vmem>>, vector<1x8x8xf32>
    %918 = vector.shape_cast %917 : vector<1x8x8xf32> to vector<8x8xf32>
    %919 = vector.extract_strided_slice %918 {offsets = [0, 0], sizes = [8, 1], strides = [1, 1]} : vector<8x8xf32> to vector<8x1xf32>
    %920 = vector.extract_strided_slice %916 {offsets = [0, 0], sizes = [1, 256], strides = [1, 1]} : vector<8x256xf32> to vector<1x256xf32>
    %921 = vector.broadcast %919 : vector<8x1xf32> to vector<8x256xf32>
    %922 = vector.broadcast %920 : vector<1x256xf32> to vector<8x256xf32>
    %923 = arith.mulf %921, %922 : vector<8x256xf32>
    %924 = vector.extract_strided_slice %918 {offsets = [0, 1], sizes = [8, 1], strides = [1, 1]} : vector<8x8xf32> to vector<8x1xf32>
    %925 = vector.extract_strided_slice %916 {offsets = [1, 0], sizes = [1, 256], strides = [1, 1]} : vector<8x256xf32> to vector<1x256xf32>
    %926 = vector.broadcast %924 : vector<8x1xf32> to vector<8x256xf32>
    %927 = vector.broadcast %925 : vector<1x256xf32> to vector<8x256xf32>
    %928 = arith.mulf %926, %927 : vector<8x256xf32>
    %929 = arith.addf %923, %928 : vector<8x256xf32>
    %930 = vector.extract_strided_slice %918 {offsets = [0, 2], sizes = [8, 1], strides = [1, 1]} : vector<8x8xf32> to vector<8x1xf32>
    %931 = vector.extract_strided_slice %916 {offsets = [2, 0], sizes = [1, 256], strides = [1, 1]} : vector<8x256xf32> to vector<1x256xf32>
    %932 = vector.broadcast %930 : vector<8x1xf32> to vector<8x256xf32>
    %933 = vector.broadcast %931 : vector<1x256xf32> to vector<8x256xf32>
    %934 = arith.mulf %932, %933 : vector<8x256xf32>
    %935 = arith.addf %929, %934 : vector<8x256xf32>
    %936 = vector.extract_strided_slice %918 {offsets = [0, 3], sizes = [8, 1], strides = [1, 1]} : vector<8x8xf32> to vector<8x1xf32>
    %937 = vector.extract_strided_slice %916 {offsets = [3, 0], sizes = [1, 256], strides = [1, 1]} : vector<8x256xf32> to vector<1x256xf32>
    %938 = vector.broadcast %936 : vector<8x1xf32> to vector<8x256xf32>
    %939 = vector.broadcast %937 : vector<1x256xf32> to vector<8x256xf32>
    %940 = arith.mulf %938, %939 : vector<8x256xf32>
    %941 = arith.addf %935, %940 : vector<8x256xf32>
    %942 = vector.extract_strided_slice %918 {offsets = [0, 4], sizes = [8, 1], strides = [1, 1]} : vector<8x8xf32> to vector<8x1xf32>
    %943 = vector.extract_strided_slice %916 {offsets = [4, 0], sizes = [1, 256], strides = [1, 1]} : vector<8x256xf32> to vector<1x256xf32>
    %944 = vector.broadcast %942 : vector<8x1xf32> to vector<8x256xf32>
    %945 = vector.broadcast %943 : vector<1x256xf32> to vector<8x256xf32>
    %946 = arith.mulf %944, %945 : vector<8x256xf32>
    %947 = arith.addf %941, %946 : vector<8x256xf32>
    %948 = vector.extract_strided_slice %918 {offsets = [0, 5], sizes = [8, 1], strides = [1, 1]} : vector<8x8xf32> to vector<8x1xf32>
    %949 = vector.extract_strided_slice %916 {offsets = [5, 0], sizes = [1, 256], strides = [1, 1]} : vector<8x256xf32> to vector<1x256xf32>
    %950 = vector.broadcast %948 : vector<8x1xf32> to vector<8x256xf32>
    %951 = vector.broadcast %949 : vector<1x256xf32> to vector<8x256xf32>
    %952 = arith.mulf %950, %951 : vector<8x256xf32>
    %953 = arith.addf %947, %952 : vector<8x256xf32>
    %954 = vector.extract_strided_slice %918 {offsets = [0, 6], sizes = [8, 1], strides = [1, 1]} : vector<8x8xf32> to vector<8x1xf32>
    %955 = vector.extract_strided_slice %916 {offsets = [6, 0], sizes = [1, 256], strides = [1, 1]} : vector<8x256xf32> to vector<1x256xf32>
    %956 = vector.broadcast %954 : vector<8x1xf32> to vector<8x256xf32>
    %957 = vector.broadcast %955 : vector<1x256xf32> to vector<8x256xf32>
    %958 = arith.mulf %956, %957 : vector<8x256xf32>
    %959 = arith.addf %953, %958 : vector<8x256xf32>
    %960 = vector.extract_strided_slice %918 {offsets = [0, 7], sizes = [8, 1], strides = [1, 1]} : vector<8x8xf32> to vector<8x1xf32>
    %961 = vector.extract_strided_slice %916 {offsets = [7, 0], sizes = [1, 256], strides = [1, 1]} : vector<8x256xf32> to vector<1x256xf32>
    %962 = vector.broadcast %960 : vector<8x1xf32> to vector<8x256xf32>
    %963 = vector.broadcast %961 : vector<1x256xf32> to vector<8x256xf32>
    %964 = arith.mulf %962, %963 : vector<8x256xf32>
    %965 = arith.addf %959, %964 : vector<8x256xf32>
    %c7_62 = arith.constant 7 : index
    %c0_63 = arith.constant 0 : index
    %c0_64 = arith.constant 0 : index
    %966 = vector.load %arg4[%c7_62, %c0_63, %c0_64] : memref<9x8x8xf32, #tpu.memory_space<vmem>>, vector<1x8x8xf32>
    %967 = vector.shape_cast %966 : vector<1x8x8xf32> to vector<8x8xf32>
    %968 = vector.extract_strided_slice %967 {offsets = [0, 0], sizes = [8, 1], strides = [1, 1]} : vector<8x8xf32> to vector<8x1xf32>
    %969 = vector.extract_strided_slice %907 {offsets = [0, 0], sizes = [1, 256], strides = [1, 1]} : vector<8x256xf32> to vector<1x256xf32>
    %970 = vector.broadcast %968 : vector<8x1xf32> to vector<8x256xf32>
    %971 = vector.broadcast %969 : vector<1x256xf32> to vector<8x256xf32>
    %972 = arith.mulf %970, %971 : vector<8x256xf32>
    %973 = arith.addf %965, %972 : vector<8x256xf32>
    %974 = vector.extract_strided_slice %967 {offsets = [0, 1], sizes = [8, 1], strides = [1, 1]} : vector<8x8xf32> to vector<8x1xf32>
    %975 = vector.extract_strided_slice %907 {offsets = [1, 0], sizes = [1, 256], strides = [1, 1]} : vector<8x256xf32> to vector<1x256xf32>
    %976 = vector.broadcast %974 : vector<8x1xf32> to vector<8x256xf32>
    %977 = vector.broadcast %975 : vector<1x256xf32> to vector<8x256xf32>
    %978 = arith.mulf %976, %977 : vector<8x256xf32>
    %979 = arith.addf %973, %978 : vector<8x256xf32>
    %980 = vector.extract_strided_slice %967 {offsets = [0, 2], sizes = [8, 1], strides = [1, 1]} : vector<8x8xf32> to vector<8x1xf32>
    %981 = vector.extract_strided_slice %907 {offsets = [2, 0], sizes = [1, 256], strides = [1, 1]} : vector<8x256xf32> to vector<1x256xf32>
    %982 = vector.broadcast %980 : vector<8x1xf32> to vector<8x256xf32>
    %983 = vector.broadcast %981 : vector<1x256xf32> to vector<8x256xf32>
    %984 = arith.mulf %982, %983 : vector<8x256xf32>
    %985 = arith.addf %979, %984 : vector<8x256xf32>
    %986 = vector.extract_strided_slice %967 {offsets = [0, 3], sizes = [8, 1], strides = [1, 1]} : vector<8x8xf32> to vector<8x1xf32>
    %987 = vector.extract_strided_slice %907 {offsets = [3, 0], sizes = [1, 256], strides = [1, 1]} : vector<8x256xf32> to vector<1x256xf32>
    %988 = vector.broadcast %986 : vector<8x1xf32> to vector<8x256xf32>
    %989 = vector.broadcast %987 : vector<1x256xf32> to vector<8x256xf32>
    %990 = arith.mulf %988, %989 : vector<8x256xf32>
    %991 = arith.addf %985, %990 : vector<8x256xf32>
    %992 = vector.extract_strided_slice %967 {offsets = [0, 4], sizes = [8, 1], strides = [1, 1]} : vector<8x8xf32> to vector<8x1xf32>
    %993 = vector.extract_strided_slice %907 {offsets = [4, 0], sizes = [1, 256], strides = [1, 1]} : vector<8x256xf32> to vector<1x256xf32>
    %994 = vector.broadcast %992 : vector<8x1xf32> to vector<8x256xf32>
    %995 = vector.broadcast %993 : vector<1x256xf32> to vector<8x256xf32>
    %996 = arith.mulf %994, %995 : vector<8x256xf32>
    %997 = arith.addf %991, %996 : vector<8x256xf32>
    %998 = vector.extract_strided_slice %967 {offsets = [0, 5], sizes = [8, 1], strides = [1, 1]} : vector<8x8xf32> to vector<8x1xf32>
    %999 = vector.extract_strided_slice %907 {offsets = [5, 0], sizes = [1, 256], strides = [1, 1]} : vector<8x256xf32> to vector<1x256xf32>
    %1000 = vector.broadcast %998 : vector<8x1xf32> to vector<8x256xf32>
    %1001 = vector.broadcast %999 : vector<1x256xf32> to vector<8x256xf32>
    %1002 = arith.mulf %1000, %1001 : vector<8x256xf32>
    %1003 = arith.addf %997, %1002 : vector<8x256xf32>
    %1004 = vector.extract_strided_slice %967 {offsets = [0, 6], sizes = [8, 1], strides = [1, 1]} : vector<8x8xf32> to vector<8x1xf32>
    %1005 = vector.extract_strided_slice %907 {offsets = [6, 0], sizes = [1, 256], strides = [1, 1]} : vector<8x256xf32> to vector<1x256xf32>
    %1006 = vector.broadcast %1004 : vector<8x1xf32> to vector<8x256xf32>
    %1007 = vector.broadcast %1005 : vector<1x256xf32> to vector<8x256xf32>
    %1008 = arith.mulf %1006, %1007 : vector<8x256xf32>
    %1009 = arith.addf %1003, %1008 : vector<8x256xf32>
    %1010 = vector.extract_strided_slice %967 {offsets = [0, 7], sizes = [8, 1], strides = [1, 1]} : vector<8x8xf32> to vector<8x1xf32>
    %1011 = vector.extract_strided_slice %907 {offsets = [7, 0], sizes = [1, 256], strides = [1, 1]} : vector<8x256xf32> to vector<1x256xf32>
    %1012 = vector.broadcast %1010 : vector<8x1xf32> to vector<8x256xf32>
    %1013 = vector.broadcast %1011 : vector<1x256xf32> to vector<8x256xf32>
    %1014 = arith.mulf %1012, %1013 : vector<8x256xf32>
    %1015 = arith.addf %1009, %1014 : vector<8x256xf32>
    %1016 = vector.shape_cast %38 : vector<1x256xi1> to vector<1x256xi1>
    %1017 = vector.broadcast %1016 : vector<1x256xi1> to vector<8x256xi1>
    %1018 = arith.select %1017, %910, %913 : vector<8x256xi1>, vector<8x256xf32>
    %c8_65 = arith.constant 8 : index
    %c0_66 = arith.constant 0 : index
    %c0_67 = arith.constant 0 : index
    %1019 = vector.load %arg4[%c8_65, %c0_66, %c0_67] : memref<9x8x8xf32, #tpu.memory_space<vmem>>, vector<1x8x8xf32>
    %1020 = vector.shape_cast %1019 : vector<1x8x8xf32> to vector<8x8xf32>
    %1021 = vector.extract_strided_slice %1020 {offsets = [0, 0], sizes = [8, 1], strides = [1, 1]} : vector<8x8xf32> to vector<8x1xf32>
    %1022 = vector.extract_strided_slice %1018 {offsets = [0, 0], sizes = [1, 256], strides = [1, 1]} : vector<8x256xf32> to vector<1x256xf32>
    %1023 = vector.broadcast %1021 : vector<8x1xf32> to vector<8x256xf32>
    %1024 = vector.broadcast %1022 : vector<1x256xf32> to vector<8x256xf32>
    %1025 = arith.mulf %1023, %1024 : vector<8x256xf32>
    %1026 = arith.addf %1015, %1025 : vector<8x256xf32>
    %1027 = vector.extract_strided_slice %1020 {offsets = [0, 1], sizes = [8, 1], strides = [1, 1]} : vector<8x8xf32> to vector<8x1xf32>
    %1028 = vector.extract_strided_slice %1018 {offsets = [1, 0], sizes = [1, 256], strides = [1, 1]} : vector<8x256xf32> to vector<1x256xf32>
    %1029 = vector.broadcast %1027 : vector<8x1xf32> to vector<8x256xf32>
    %1030 = vector.broadcast %1028 : vector<1x256xf32> to vector<8x256xf32>
    %1031 = arith.mulf %1029, %1030 : vector<8x256xf32>
    %1032 = arith.addf %1026, %1031 : vector<8x256xf32>
    %1033 = vector.extract_strided_slice %1020 {offsets = [0, 2], sizes = [8, 1], strides = [1, 1]} : vector<8x8xf32> to vector<8x1xf32>
    %1034 = vector.extract_strided_slice %1018 {offsets = [2, 0], sizes = [1, 256], strides = [1, 1]} : vector<8x256xf32> to vector<1x256xf32>
    %1035 = vector.broadcast %1033 : vector<8x1xf32> to vector<8x256xf32>
    %1036 = vector.broadcast %1034 : vector<1x256xf32> to vector<8x256xf32>
    %1037 = arith.mulf %1035, %1036 : vector<8x256xf32>
    %1038 = arith.addf %1032, %1037 : vector<8x256xf32>
    %1039 = vector.extract_strided_slice %1020 {offsets = [0, 3], sizes = [8, 1], strides = [1, 1]} : vector<8x8xf32> to vector<8x1xf32>
    %1040 = vector.extract_strided_slice %1018 {offsets = [3, 0], sizes = [1, 256], strides = [1, 1]} : vector<8x256xf32> to vector<1x256xf32>
    %1041 = vector.broadcast %1039 : vector<8x1xf32> to vector<8x256xf32>
    %1042 = vector.broadcast %1040 : vector<1x256xf32> to vector<8x256xf32>
    %1043 = arith.mulf %1041, %1042 : vector<8x256xf32>
    %1044 = arith.addf %1038, %1043 : vector<8x256xf32>
    %1045 = vector.extract_strided_slice %1020 {offsets = [0, 4], sizes = [8, 1], strides = [1, 1]} : vector<8x8xf32> to vector<8x1xf32>
    %1046 = vector.extract_strided_slice %1018 {offsets = [4, 0], sizes = [1, 256], strides = [1, 1]} : vector<8x256xf32> to vector<1x256xf32>
    %1047 = vector.broadcast %1045 : vector<8x1xf32> to vector<8x256xf32>
    %1048 = vector.broadcast %1046 : vector<1x256xf32> to vector<8x256xf32>
    %1049 = arith.mulf %1047, %1048 : vector<8x256xf32>
    %1050 = arith.addf %1044, %1049 : vector<8x256xf32>
    %1051 = vector.extract_strided_slice %1020 {offsets = [0, 5], sizes = [8, 1], strides = [1, 1]} : vector<8x8xf32> to vector<8x1xf32>
    %1052 = vector.extract_strided_slice %1018 {offsets = [5, 0], sizes = [1, 256], strides = [1, 1]} : vector<8x256xf32> to vector<1x256xf32>
    %1053 = vector.broadcast %1051 : vector<8x1xf32> to vector<8x256xf32>
    %1054 = vector.broadcast %1052 : vector<1x256xf32> to vector<8x256xf32>
    %1055 = arith.mulf %1053, %1054 : vector<8x256xf32>
    %1056 = arith.addf %1050, %1055 : vector<8x256xf32>
    %1057 = vector.extract_strided_slice %1020 {offsets = [0, 6], sizes = [8, 1], strides = [1, 1]} : vector<8x8xf32> to vector<8x1xf32>
    %1058 = vector.extract_strided_slice %1018 {offsets = [6, 0], sizes = [1, 256], strides = [1, 1]} : vector<8x256xf32> to vector<1x256xf32>
    %1059 = vector.broadcast %1057 : vector<8x1xf32> to vector<8x256xf32>
    %1060 = vector.broadcast %1058 : vector<1x256xf32> to vector<8x256xf32>
    %1061 = arith.mulf %1059, %1060 : vector<8x256xf32>
    %1062 = arith.addf %1056, %1061 : vector<8x256xf32>
    %1063 = vector.extract_strided_slice %1020 {offsets = [0, 7], sizes = [8, 1], strides = [1, 1]} : vector<8x8xf32> to vector<8x1xf32>
    %1064 = vector.extract_strided_slice %1018 {offsets = [7, 0], sizes = [1, 256], strides = [1, 1]} : vector<8x256xf32> to vector<1x256xf32>
    %1065 = vector.broadcast %1063 : vector<8x1xf32> to vector<8x256xf32>
    %1066 = vector.broadcast %1064 : vector<1x256xf32> to vector<8x256xf32>
    %1067 = arith.mulf %1065, %1066 : vector<8x256xf32>
    %1068 = arith.addf %1062, %1067 : vector<8x256xf32>
    %1069 = vector.broadcast %567 : vector<8x1xf32> to vector<8x256xf32>
    %1070 = arith.addf %1069, %737 : vector<8x256xf32>
    %1071 = arith.addf %1070, %898 : vector<8x256xf32>
    %1072 = arith.addf %1071, %1068 : vector<8x256xf32>
    %cst_68 = arith.constant dense<0.000000e+00> : vector<8xf32>
    %1073 = vector.multi_reduction <add>, %1072, %cst_68 [1] : vector<8x256xf32> to vector<8xf32>
    %1074 = vector.shape_cast %1073 : vector<8xf32> to vector<8x1xf32>
    %cst_69 = arith.constant 3.906250e-03 : f32
    %1075 = vector.broadcast %cst_69 : f32 to vector<8x1xf32>
    %1076 = arith.mulf %1074, %1075 : vector<8x1xf32>
    %1077 = vector.broadcast %1076 : vector<8x1xf32> to vector<8x256xf32>
    %1078 = arith.subf %1072, %1077 : vector<8x256xf32>
    %1079 = arith.mulf %1078, %1078 : vector<8x256xf32>
    %cst_70 = arith.constant dense<0.000000e+00> : vector<8xf32>
    %1080 = vector.multi_reduction <add>, %1079, %cst_70 [1] : vector<8x256xf32> to vector<8xf32>
    %1081 = vector.shape_cast %1080 : vector<8xf32> to vector<8x1xf32>
    %cst_71 = arith.constant 3.906250e-03 : f32
    %1082 = vector.broadcast %cst_71 : f32 to vector<8x1xf32>
    %1083 = arith.mulf %1081, %1082 : vector<8x1xf32>
    %cst_72 = arith.constant 9.99999974E-6 : f32
    %1084 = vector.broadcast %cst_72 : f32 to vector<8x1xf32>
    %1085 = arith.addf %1083, %1084 : vector<8x1xf32>
    %1086 = math.rsqrt %1085 : vector<8x1xf32>
    %1087 = vector.broadcast %1086 : vector<8x1xf32> to vector<8x256xf32>
    %1088 = arith.mulf %1078, %1087 : vector<8x256xf32>
    %1089 = arith.addf %1, %1088 : vector<8x256xf32>
    %c0_73 = arith.constant 0 : index
    %c0_74 = arith.constant 0 : index
    %c0_75 = arith.constant 0 : index
    %1090 = vector.load %arg6[%c0_73, %c0_74, %c0_75] : memref<1x8x256xf32, #tpu.memory_space<vmem>>, vector<1x8x256xf32>
    %1091 = vector.shape_cast %1090 : vector<1x8x256xf32> to vector<8x256xf32>
    %1092 = vector.shape_cast %1089 : vector<8x256xf32> to vector<1x8x256xf32>
    tpu.vector_store %arg6[%c0_73, %c0_74, %c0_75], %1092 {strides = array<i32>} : memref<1x8x256xf32, #tpu.memory_space<vmem>>, vector<1x8x256xf32>,
    return
  }
  func.func @transform_0(%arg0: i32) -> (i32, i32, i32) {
    %c0_i32 = arith.constant 0 : i32
    %c0_i32_0 = arith.constant 0 : i32
    %c0_i32_1 = arith.constant 0 : i32
    return %arg0, %c0_i32, %c0_i32_0 : i32, i32, i32
  }
  func.func @transform_1(%arg0: i32) -> (i32, i32, i32) {
    %c0_i32 = arith.constant 0 : i32
    %c0_i32_0 = arith.constant 0 : i32
    %c0_i32_1 = arith.constant 0 : i32
    %c0_i32_2 = arith.constant 0 : i32
    return %c0_i32, %c0_i32_0, %c0_i32_1 : i32, i32, i32
  }
  func.func @transform_2(%arg0: i32) -> (i32, i32) {
    %c0_i32 = arith.constant 0 : i32
    %c0_i32_0 = arith.constant 0 : i32
    %c0_i32_1 = arith.constant 0 : i32
    return %c0_i32, %c0_i32_0 : i32, i32
  }
  func.func @transform_3(%arg0: i32) -> (i32, i32, i32) {
    %c0_i32 = arith.constant 0 : i32
    %c0_i32_0 = arith.constant 0 : i32
    %c0_i32_1 = arith.constant 0 : i32
    %c0_i32_2 = arith.constant 0 : i32
    return %c0_i32, %c0_i32_0, %c0_i32_1 : i32, i32, i32
  }
  func.func @transform_4(%arg0: i32) -> (i32, i32) {
    %c0_i32 = arith.constant 0 : i32
    %c0_i32_0 = arith.constant 0 : i32
    %c0_i32_1 = arith.constant 0 : i32
    return %c0_i32, %c0_i32_0 : i32, i32
  }
  func.func @transform_5(%arg0: i32) -> (i32, i32, i32) {
    %c0_i32 = arith.constant 0 : i32
    %c0_i32_0 = arith.constant 0 : i32
    %c0_i32_1 = arith.constant 0 : i32
    return %arg0, %c0_i32, %c0_i32_0 : i32, i32, i32
  }
}

module attributes {stable_mosaic.version = 11 : i64} {
  func.func @_residual_block_kernel(%arg0: i32, %arg1: memref<1x8x256xf32, #tpu.memory_space<vmem>>, %arg2: memref<9x8x8xf32, #tpu.memory_space<vmem>>, %arg3: memref<8x1xf32, #tpu.memory_space<vmem>>, %arg4: memref<9x8x8xf32, #tpu.memory_space<vmem>>, %arg5: memref<8x1xf32, #tpu.memory_space<vmem>>, %arg6: memref<1x8x256xf32, #tpu.memory_space<vmem>>) attributes {dimension_semantics = [#tpu.dimension_semantics<parallel>], iteration_bounds = array<i64: 2>, scalar_prefetch = 0 : i64, scratch_operands = 0 : i64, tpu.core_type = #tpu.core_type<tc>, window_params = [{transform_indices = @transform_0, window_bounds = array<i64: 1, 8, 256>}, {pipeline_mode = #tpu.pipeline_mode<synchronous>, transform_indices = @transform_1, window_bounds = array<i64: 9, 8, 8>}, {pipeline_mode = #tpu.pipeline_mode<synchronous>, transform_indices = @transform_2, window_bounds = array<i64: 8, 1>}, {pipeline_mode = #tpu.pipeline_mode<synchronous>, transform_indices = @transform_3, window_bounds = array<i64: 9, 8, 8>}, {pipeline_mode = #tpu.pipeline_mode<synchronous>, transform_indices = @transform_4, window_bounds = array<i64: 8, 1>}, {transform_indices = @transform_5, window_bounds = array<i64: 1, 8, 256>}]} {
    %c0 = arith.constant 0 : index
    %c0_0 = arith.constant 0 : index
    %c0_1 = arith.constant 0 : index
    %0 = vector.load %arg1[%c0, %c0_0, %c0_1] : memref<1x8x256xf32, #tpu.memory_space<vmem>>, vector<1x8x256xf32>
    %1 = vector.shape_cast %0 : vector<1x8x256xf32> to vector<8x256xf32>
    %2 = tpu.iota {dimensions = array<i32: 1>} : vector<1x256xi32>
    %c16_i32 = arith.constant 16 : i32
    %c0_i32 = arith.constant 0 : i32
    %3 = arith.cmpi eq, %c16_i32, %c0_i32 : i32
    %c1_i32 = arith.constant 1 : i32
    %4 = arith.select %3, %c1_i32, %c16_i32 : i32
    %5 = vector.broadcast %4 : i32 to vector<1x256xi32>
    %6 = arith.remsi %2, %5 : vector<1x256xi32>
    %c0_i32_2 = arith.constant 0 : i32
    %7 = vector.broadcast %c0_i32_2 : i32 to vector<1x256xi32>
    %8 = arith.cmpi ne, %6, %7 : vector<1x256xi32>
    %c0_i32_3 = arith.constant 0 : i32
    %9 = vector.broadcast %c0_i32_3 : i32 to vector<1x256xi32>
    %10 = arith.cmpi slt, %6, %9 : vector<1x256xi32>
    %c0_i32_4 = arith.constant 0 : i32
    %11 = arith.cmpi slt, %4, %c0_i32_4 : i32
    %12 = vector.broadcast %11 : i1 to vector<1x256xi1>
    %13 = vector.broadcast %12 : vector<1x256xi1> to vector<1x256xi1>
    %14 = arith.xori %10, %13 : vector<1x256xi1>
    %15 = arith.andi %14, %8 : vector<1x256xi1>
    %16 = vector.broadcast %4 : i32 to vector<1x256xi32>
    %17 = arith.addi %6, %16 : vector<1x256xi32>
    %18 = arith.select %15, %17, %6 : vector<1x256xi1>, vector<1x256xi32>
    %c0_i32_5 = arith.constant 0 : i32
    %19 = vector.broadcast %c0_i32_5 : i32 to vector<1x256xi32>
    %20 = arith.cmpi eq, %18, %19 : vector<1x256xi32>
    %c16_i32_6 = arith.constant 16 : i32
    %c0_i32_7 = arith.constant 0 : i32
    %21 = arith.cmpi eq, %c16_i32_6, %c0_i32_7 : i32
    %c1_i32_8 = arith.constant 1 : i32
    %22 = arith.select %21, %c1_i32_8, %c16_i32_6 : i32
    %23 = vector.broadcast %22 : i32 to vector<1x256xi32>
    %24 = arith.remsi %2, %23 : vector<1x256xi32>
    %c0_i32_9 = arith.constant 0 : i32
    %25 = vector.broadcast %c0_i32_9 : i32 to vector<1x256xi32>
    %26 = arith.cmpi ne, %24, %25 : vector<1x256xi32>
    %c0_i32_10 = arith.constant 0 : i32
    %27 = vector.broadcast %c0_i32_10 : i32 to vector<1x256xi32>
    %28 = arith.cmpi slt, %24, %27 : vector<1x256xi32>
    %c0_i32_11 = arith.constant 0 : i32
    %29 = arith.cmpi slt, %22, %c0_i32_11 : i32
    %30 = vector.broadcast %29 : i1 to vector<1x256xi1>
    %31 = vector.broadcast %30 : vector<1x256xi1> to vector<1x256xi1>
    %32 = arith.xori %28, %31 : vector<1x256xi1>
    %33 = arith.andi %32, %26 : vector<1x256xi1>
    %34 = vector.broadcast %22 : i32 to vector<1x256xi32>
    %35 = arith.addi %24, %34 : vector<1x256xi32>
    %36 = arith.select %33, %35, %24 : vector<1x256xi1>, vector<1x256xi32>
    %c15_i32 = arith.constant 15 : i32
    %37 = vector.broadcast %c15_i32 : i32 to vector<1x256xi32>
    %38 = arith.cmpi eq, %36, %37 : vector<1x256xi32>
    %c16_i32_12 = arith.constant 16 : i32
    %39 = vector.broadcast %c16_i32_12 : i32 to vector<1x256xi32>
    %40 = arith.cmpi slt, %2, %39 : vector<1x256xi32>
    %c240_i32 = arith.constant 240 : i32
    %41 = vector.broadcast %c240_i32 : i32 to vector<1x256xi32>
    %42 = arith.cmpi sge, %2, %41 : vector<1x256xi32>
    %c0_13 = arith.constant 0 : index
    %c0_14 = arith.constant 0 : index
    %43 = vector.load %arg3[%c0_13, %c0_14] : memref<8x1xf32, #tpu.memory_space<vmem>>, vector<8x1xf32>
    %44 = vector.extract_strided_slice %1 {offsets = [0, 240], sizes = [8, 16], strides = [1, 1]} : vector<8x256xf32> to vector<8x16xf32>
    %45 = vector.extract_strided_slice %1 {offsets = [0, 0], sizes = [8, 240], strides = [1, 1]} : vector<8x256xf32> to vector<8x240xf32>
    %46 = tpu.concatenate %44, %45 in 1 : vector<8x16xf32>, vector<8x240xf32> -> vector<8x256xf32>
    %47 = vector.extract_strided_slice %1 {offsets = [0, 16], sizes = [8, 240], strides = [1, 1]} : vector<8x256xf32> to vector<8x240xf32>
    %48 = vector.extract_strided_slice %1 {offsets = [0, 0], sizes = [8, 16], strides = [1, 1]} : vector<8x256xf32> to vector<8x16xf32>
    %49 = tpu.concatenate %47, %48 in 1 : vector<8x240xf32>, vector<8x16xf32> -> vector<8x256xf32>
    %50 = vector.shape_cast %40 : vector<1x256xi1> to vector<1x256xi1>
    %51 = vector.broadcast %50 : vector<1x256xi1> to vector<8x256xi1>
    %52 = arith.select %51, %49, %46 : vector<8x256xi1>, vector<8x256xf32>
    %53 = vector.extract_strided_slice %52 {offsets = [0, 255], sizes = [8, 1], strides = [1, 1]} : vector<8x256xf32> to vector<8x1xf32>
    %54 = vector.extract_strided_slice %52 {offsets = [0, 0], sizes = [8, 255], strides = [1, 1]} : vector<8x256xf32> to vector<8x255xf32>
    %55 = tpu.concatenate %53, %54 in 1 : vector<8x1xf32>, vector<8x255xf32> -> vector<8x256xf32>
    %56 = vector.extract_strided_slice %52 {offsets = [0, 1], sizes = [8, 255], strides = [1, 1]} : vector<8x256xf32> to vector<8x255xf32>
    %57 = vector.extract_strided_slice %52 {offsets = [0, 0], sizes = [8, 1], strides = [1, 1]} : vector<8x256xf32> to vector<8x1xf32>
    %58 = tpu.concatenate %56, %57 in 1 : vector<8x255xf32>, vector<8x1xf32> -> vector<8x256xf32>
    %59 = vector.shape_cast %20 : vector<1x256xi1> to vector<1x256xi1>
    %60 = vector.broadcast %59 : vector<1x256xi1> to vector<8x256xi1>
    %61 = arith.select %60, %58, %55 : vector<8x256xi1>, vector<8x256xf32>
    %c0_15 = arith.constant 0 : index
    %c0_16 = arith.constant 0 : index
    %c0_17 = arith.constant 0 : index
    %62 = vector.load %arg2[%c0_15, %c0_16, %c0_17] : memref<9x8x8xf32, #tpu.memory_space<vmem>>, vector<1x8x8xf32>
    %63 = vector.shape_cast %62 : vector<1x8x8xf32> to vector<8x8xf32>
    %64 = vector.extract_strided_slice %63 {offsets = [0, 0], sizes = [8, 1], strides = [1, 1]} : vector<8x8xf32> to vector<8x1xf32>
    %65 = vector.extract_strided_slice %61 {offsets = [0, 0], sizes = [1, 256], strides = [1, 1]} : vector<8x256xf32> to vector<1x256xf32>
    %66 = vector.broadcast %64 : vector<8x1xf32> to vector<8x256xf32>
    %67 = vector.broadcast %65 : vector<1x256xf32> to vector<8x256xf32>
    %68 = arith.mulf %66, %67 : vector<8x256xf32>
    %69 = vector.extract_strided_slice %63 {offsets = [0, 1], sizes = [8, 1], strides = [1, 1]} : vector<8x8xf32> to vector<8x1xf32>
    %70 = vector.extract_strided_slice %61 {offsets = [1, 0], sizes = [1, 256], strides = [1, 1]} : vector<8x256xf32> to vector<1x256xf32>
    %71 = vector.broadcast %69 : vector<8x1xf32> to vector<8x256xf32>
    %72 = vector.broadcast %70 : vector<1x256xf32> to vector<8x256xf32>
    %73 = arith.mulf %71, %72 : vector<8x256xf32>
    %74 = arith.addf %68, %73 : vector<8x256xf32>
    %75 = vector.extract_strided_slice %63 {offsets = [0, 2], sizes = [8, 1], strides = [1, 1]} : vector<8x8xf32> to vector<8x1xf32>
    %76 = vector.extract_strided_slice %61 {offsets = [2, 0], sizes = [1, 256], strides = [1, 1]} : vector<8x256xf32> to vector<1x256xf32>
    %77 = vector.broadcast %75 : vector<8x1xf32> to vector<8x256xf32>
    %78 = vector.broadcast %76 : vector<1x256xf32> to vector<8x256xf32>
    %79 = arith.mulf %77, %78 : vector<8x256xf32>
    %80 = arith.addf %74, %79 : vector<8x256xf32>
    %81 = vector.extract_strided_slice %63 {offsets = [0, 3], sizes = [8, 1], strides = [1, 1]} : vector<8x8xf32> to vector<8x1xf32>
    %82 = vector.extract_strided_slice %61 {offsets = [3, 0], sizes = [1, 256], strides = [1, 1]} : vector<8x256xf32> to vector<1x256xf32>
    %83 = vector.broadcast %81 : vector<8x1xf32> to vector<8x256xf32>
    %84 = vector.broadcast %82 : vector<1x256xf32> to vector<8x256xf32>
    %85 = arith.mulf %83, %84 : vector<8x256xf32>
    %86 = arith.addf %80, %85 : vector<8x256xf32>
    %87 = vector.extract_strided_slice %63 {offsets = [0, 4], sizes = [8, 1], strides = [1, 1]} : vector<8x8xf32> to vector<8x1xf32>
    %88 = vector.extract_strided_slice %61 {offsets = [4, 0], sizes = [1, 256], strides = [1, 1]} : vector<8x256xf32> to vector<1x256xf32>
    %89 = vector.broadcast %87 : vector<8x1xf32> to vector<8x256xf32>
    %90 = vector.broadcast %88 : vector<1x256xf32> to vector<8x256xf32>
    %91 = arith.mulf %89, %90 : vector<8x256xf32>
    %92 = arith.addf %86, %91 : vector<8x256xf32>
    %93 = vector.extract_strided_slice %63 {offsets = [0, 5], sizes = [8, 1], strides = [1, 1]} : vector<8x8xf32> to vector<8x1xf32>
    %94 = vector.extract_strided_slice %61 {offsets = [5, 0], sizes = [1, 256], strides = [1, 1]} : vector<8x256xf32> to vector<1x256xf32>
    %95 = vector.broadcast %93 : vector<8x1xf32> to vector<8x256xf32>
    %96 = vector.broadcast %94 : vector<1x256xf32> to vector<8x256xf32>
    %97 = arith.mulf %95, %96 : vector<8x256xf32>
    %98 = arith.addf %92, %97 : vector<8x256xf32>
    %99 = vector.extract_strided_slice %63 {offsets = [0, 6], sizes = [8, 1], strides = [1, 1]} : vector<8x8xf32> to vector<8x1xf32>
    %100 = vector.extract_strided_slice %61 {offsets = [6, 0], sizes = [1, 256], strides = [1, 1]} : vector<8x256xf32> to vector<1x256xf32>
    %101 = vector.broadcast %99 : vector<8x1xf32> to vector<8x256xf32>
    %102 = vector.broadcast %100 : vector<1x256xf32> to vector<8x256xf32>
    %103 = arith.mulf %101, %102 : vector<8x256xf32>
    %104 = arith.addf %98, %103 : vector<8x256xf32>
    %105 = vector.extract_strided_slice %63 {offsets = [0, 7], sizes = [8, 1], strides = [1, 1]} : vector<8x8xf32> to vector<8x1xf32>
    %106 = vector.extract_strided_slice %61 {offsets = [7, 0], sizes = [1, 256], strides = [1, 1]} : vector<8x256xf32> to vector<1x256xf32>
    %107 = vector.broadcast %105 : vector<8x1xf32> to vector<8x256xf32>
    %108 = vector.broadcast %106 : vector<1x256xf32> to vector<8x256xf32>
    %109 = arith.mulf %107, %108 : vector<8x256xf32>
    %110 = arith.addf %104, %109 : vector<8x256xf32>
    %c1 = arith.constant 1 : index
    %c0_18 = arith.constant 0 : index
    %c0_19 = arith.constant 0 : index
    %111 = vector.load %arg2[%c1, %c0_18, %c0_19] : memref<9x8x8xf32, #tpu.memory_space<vmem>>, vector<1x8x8xf32>
    %112 = vector.shape_cast %111 : vector<1x8x8xf32> to vector<8x8xf32>
    %113 = vector.extract_strided_slice %112 {offsets = [0, 0], sizes = [8, 1], strides = [1, 1]} : vector<8x8xf32> to vector<8x1xf32>
    %114 = vector.extract_strided_slice %52 {offsets = [0, 0], sizes = [1, 256], strides = [1, 1]} : vector<8x256xf32> to vector<1x256xf32>
    %115 = vector.broadcast %113 : vector<8x1xf32> to vector<8x256xf32>
    %116 = vector.broadcast %114 : vector<1x256xf32> to vector<8x256xf32>
    %117 = arith.mulf %115, %116 : vector<8x256xf32>
    %118 = arith.addf %110, %117 : vector<8x256xf32>
    %119 = vector.extract_strided_slice %112 {offsets = [0, 1], sizes = [8, 1], strides = [1, 1]} : vector<8x8xf32> to vector<8x1xf32>
    %120 = vector.extract_strided_slice %52 {offsets = [1, 0], sizes = [1, 256], strides = [1, 1]} : vector<8x256xf32> to vector<1x256xf32>
    %121 = vector.broadcast %119 : vector<8x1xf32> to vector<8x256xf32>
    %122 = vector.broadcast %120 : vector<1x256xf32> to vector<8x256xf32>
    %123 = arith.mulf %121, %122 : vector<8x256xf32>
    %124 = arith.addf %118, %123 : vector<8x256xf32>
    %125 = vector.extract_strided_slice %112 {offsets = [0, 2], sizes = [8, 1], strides = [1, 1]} : vector<8x8xf32> to vector<8x1xf32>
    %126 = vector.extract_strided_slice %52 {offsets = [2, 0], sizes = [1, 256], strides = [1, 1]} : vector<8x256xf32> to vector<1x256xf32>
    %127 = vector.broadcast %125 : vector<8x1xf32> to vector<8x256xf32>
    %128 = vector.broadcast %126 : vector<1x256xf32> to vector<8x256xf32>
    %129 = arith.mulf %127, %128 : vector<8x256xf32>
    %130 = arith.addf %124, %129 : vector<8x256xf32>
    %131 = vector.extract_strided_slice %112 {offsets = [0, 3], sizes = [8, 1], strides = [1, 1]} : vector<8x8xf32> to vector<8x1xf32>
    %132 = vector.extract_strided_slice %52 {offsets = [3, 0], sizes = [1, 256], strides = [1, 1]} : vector<8x256xf32> to vector<1x256xf32>
    %133 = vector.broadcast %131 : vector<8x1xf32> to vector<8x256xf32>
    %134 = vector.broadcast %132 : vector<1x256xf32> to vector<8x256xf32>
    %135 = arith.mulf %133, %134 : vector<8x256xf32>
    %136 = arith.addf %130, %135 : vector<8x256xf32>
    %137 = vector.extract_strided_slice %112 {offsets = [0, 4], sizes = [8, 1], strides = [1, 1]} : vector<8x8xf32> to vector<8x1xf32>
    %138 = vector.extract_strided_slice %52 {offsets = [4, 0], sizes = [1, 256], strides = [1, 1]} : vector<8x256xf32> to vector<1x256xf32>
    %139 = vector.broadcast %137 : vector<8x1xf32> to vector<8x256xf32>
    %140 = vector.broadcast %138 : vector<1x256xf32> to vector<8x256xf32>
    %141 = arith.mulf %139, %140 : vector<8x256xf32>
    %142 = arith.addf %136, %141 : vector<8x256xf32>
    %143 = vector.extract_strided_slice %112 {offsets = [0, 5], sizes = [8, 1], strides = [1, 1]} : vector<8x8xf32> to vector<8x1xf32>
    %144 = vector.extract_strided_slice %52 {offsets = [5, 0], sizes = [1, 256], strides = [1, 1]} : vector<8x256xf32> to vector<1x256xf32>
    %145 = vector.broadcast %143 : vector<8x1xf32> to vector<8x256xf32>
    %146 = vector.broadcast %144 : vector<1x256xf32> to vector<8x256xf32>
    %147 = arith.mulf %145, %146 : vector<8x256xf32>
    %148 = arith.addf %142, %147 : vector<8x256xf32>
    %149 = vector.extract_strided_slice %112 {offsets = [0, 6], sizes = [8, 1], strides = [1, 1]} : vector<8x8xf32> to vector<8x1xf32>
    %150 = vector.extract_strided_slice %52 {offsets = [6, 0], sizes = [1, 256], strides = [1, 1]} : vector<8x256xf32> to vector<1x256xf32>
    %151 = vector.broadcast %149 : vector<8x1xf32> to vector<8x256xf32>
    %152 = vector.broadcast %150 : vector<1x256xf32> to vector<8x256xf32>
    %153 = arith.mulf %151, %152 : vector<8x256xf32>
    %154 = arith.addf %148, %153 : vector<8x256xf32>
    %155 = vector.extract_strided_slice %112 {offsets = [0, 7], sizes = [8, 1], strides = [1, 1]} : vector<8x8xf32> to vector<8x1xf32>
    %156 = vector.extract_strided_slice %52 {offsets = [7, 0], sizes = [1, 256], strides = [1, 1]} : vector<8x256xf32> to vector<1x256xf32>
    %157 = vector.broadcast %155 : vector<8x1xf32> to vector<8x256xf32>
    %158 = vector.broadcast %156 : vector<1x256xf32> to vector<8x256xf32>
    %159 = arith.mulf %157, %158 : vector<8x256xf32>
    %160 = arith.addf %154, %159 : vector<8x256xf32>
    %161 = vector.shape_cast %38 : vector<1x256xi1> to vector<1x256xi1>
    %162 = vector.broadcast %161 : vector<1x256xi1> to vector<8x256xi1>
    %163 = arith.select %162, %55, %58 : vector<8x256xi1>, vector<8x256xf32>
    %c2 = arith.constant 2 : index
    %c0_20 = arith.constant 0 : index
    %c0_21 = arith.constant 0 : index
    %164 = vector.load %arg2[%c2, %c0_20, %c0_21] : memref<9x8x8xf32, #tpu.memory_space<vmem>>, vector<1x8x8xf32>
    %165 = vector.shape_cast %164 : vector<1x8x8xf32> to vector<8x8xf32>
    %166 = vector.extract_strided_slice %165 {offsets = [0, 0], sizes = [8, 1], strides = [1, 1]} : vector<8x8xf32> to vector<8x1xf32>
    %167 = vector.extract_strided_slice %163 {offsets = [0, 0], sizes = [1, 256], strides = [1, 1]} : vector<8x256xf32> to vector<1x256xf32>
    %168 = vector.broadcast %166 : vector<8x1xf32> to vector<8x256xf32>
    %169 = vector.broadcast %167 : vector<1x256xf32> to vector<8x256xf32>
    %170 = arith.mulf %168, %169 : vector<8x256xf32>
    %171 = arith.addf %160, %170 : vector<8x256xf32>
    %172 = vector.extract_strided_slice %165 {offsets = [0, 1], sizes = [8, 1], strides = [1, 1]} : vector<8x8xf32> to vector<8x1xf32>
    %173 = vector.extract_strided_slice %163 {offsets = [1, 0], sizes = [1, 256], strides = [1, 1]} : vector<8x256xf32> to vector<1x256xf32>
    %174 = vector.broadcast %172 : vector<8x1xf32> to vector<8x256xf32>
    %175 = vector.broadcast %173 : vector<1x256xf32> to vector<8x256xf32>
    %176 = arith.mulf %174, %175 : vector<8x256xf32>
    %177 = arith.addf %171, %176 : vector<8x256xf32>
    %178 = vector.extract_strided_slice %165 {offsets = [0, 2], sizes = [8, 1], strides = [1, 1]} : vector<8x8xf32> to vector<8x1xf32>
    %179 = vector.extract_strided_slice %163 {offsets = [2, 0], sizes = [1, 256], strides = [1, 1]} : vector<8x256xf32> to vector<1x256xf32>
    %180 = vector.broadcast %178 : vector<8x1xf32> to vector<8x256xf32>
    %181 = vector.broadcast %179 : vector<1x256xf32> to vector<8x256xf32>
    %182 = arith.mulf %180, %181 : vector<8x256xf32>
    %183 = arith.addf %177, %182 : vector<8x256xf32>
    %184 = vector.extract_strided_slice %165 {offsets = [0, 3], sizes = [8, 1], strides = [1, 1]} : vector<8x8xf32> to vector<8x1xf32>
    %185 = vector.extract_strided_slice %163 {offsets = [3, 0], sizes = [1, 256], strides = [1, 1]} : vector<8x256xf32> to vector<1x256xf32>
    %186 = vector.broadcast %184 : vector<8x1xf32> to vector<8x256xf32>
    %187 = vector.broadcast %185 : vector<1x256xf32> to vector<8x256xf32>
    %188 = arith.mulf %186, %187 : vector<8x256xf32>
    %189 = arith.addf %183, %188 : vector<8x256xf32>
    %190 = vector.extract_strided_slice %165 {offsets = [0, 4], sizes = [8, 1], strides = [1, 1]} : vector<8x8xf32> to vector<8x1xf32>
    %191 = vector.extract_strided_slice %163 {offsets = [4, 0], sizes = [1, 256], strides = [1, 1]} : vector<8x256xf32> to vector<1x256xf32>
    %192 = vector.broadcast %190 : vector<8x1xf32> to vector<8x256xf32>
    %193 = vector.broadcast %191 : vector<1x256xf32> to vector<8x256xf32>
    %194 = arith.mulf %192, %193 : vector<8x256xf32>
    %195 = arith.addf %189, %194 : vector<8x256xf32>
    %196 = vector.extract_strided_slice %165 {offsets = [0, 5], sizes = [8, 1], strides = [1, 1]} : vector<8x8xf32> to vector<8x1xf32>
    %197 = vector.extract_strided_slice %163 {offsets = [5, 0], sizes = [1, 256], strides = [1, 1]} : vector<8x256xf32> to vector<1x256xf32>
    %198 = vector.broadcast %196 : vector<8x1xf32> to vector<8x256xf32>
    %199 = vector.broadcast %197 : vector<1x256xf32> to vector<8x256xf32>
    %200 = arith.mulf %198, %199 : vector<8x256xf32>
    %201 = arith.addf %195, %200 : vector<8x256xf32>
    %202 = vector.extract_strided_slice %165 {offsets = [0, 6], sizes = [8, 1], strides = [1, 1]} : vector<8x8xf32> to vector<8x1xf32>
    %203 = vector.extract_strided_slice %163 {offsets = [6, 0], sizes = [1, 256], strides = [1, 1]} : vector<8x256xf32> to vector<1x256xf32>
    %204 = vector.broadcast %202 : vector<8x1xf32> to vector<8x256xf32>
    %205 = vector.broadcast %203 : vector<1x256xf32> to vector<8x256xf32>
    %206 = arith.mulf %204, %205 : vector<8x256xf32>
    %207 = arith.addf %201, %206 : vector<8x256xf32>
    %208 = vector.extract_strided_slice %165 {offsets = [0, 7], sizes = [8, 1], strides = [1, 1]} : vector<8x8xf32> to vector<8x1xf32>
    %209 = vector.extract_strided_slice %163 {offsets = [7, 0], sizes = [1, 256], strides = [1, 1]} : vector<8x256xf32> to vector<1x256xf32>
    %210 = vector.broadcast %208 : vector<8x1xf32> to vector<8x256xf32>
    %211 = vector.broadcast %209 : vector<1x256xf32> to vector<8x256xf32>
    %212 = arith.mulf %210, %211 : vector<8x256xf32>
    %213 = arith.addf %207, %212 : vector<8x256xf32>
    %214 = vector.extract_strided_slice %1 {offsets = [0, 255], sizes = [8, 1], strides = [1, 1]} : vector<8x256xf32> to vector<8x1xf32>
    %215 = vector.extract_strided_slice %1 {offsets = [0, 0], sizes = [8, 255], strides = [1, 1]} : vector<8x256xf32> to vector<8x255xf32>
    %216 = tpu.concatenate %214, %215 in 1 : vector<8x1xf32>, vector<8x255xf32> -> vector<8x256xf32>
    %217 = vector.extract_strided_slice %1 {offsets = [0, 1], sizes = [8, 255], strides = [1, 1]} : vector<8x256xf32> to vector<8x255xf32>
    %218 = vector.extract_strided_slice %1 {offsets = [0, 0], sizes = [8, 1], strides = [1, 1]} : vector<8x256xf32> to vector<8x1xf32>
    %219 = tpu.concatenate %217, %218 in 1 : vector<8x255xf32>, vector<8x1xf32> -> vector<8x256xf32>
    %220 = vector.shape_cast %20 : vector<1x256xi1> to vector<1x256xi1>
    %221 = vector.broadcast %220 : vector<1x256xi1> to vector<8x256xi1>
    %222 = arith.select %221, %219, %216 : vector<8x256xi1>, vector<8x256xf32>
    %c3 = arith.constant 3 : index
    %c0_22 = arith.constant 0 : index
    %c0_23 = arith.constant 0 : index
    %223 = vector.load %arg2[%c3, %c0_22, %c0_23] : memref<9x8x8xf32, #tpu.memory_space<vmem>>, vector<1x8x8xf32>
    %224 = vector.shape_cast %223 : vector<1x8x8xf32> to vector<8x8xf32>
    %225 = vector.extract_strided_slice %224 {offsets = [0, 0], sizes = [8, 1], strides = [1, 1]} : vector<8x8xf32> to vector<8x1xf32>
    %226 = vector.extract_strided_slice %222 {offsets = [0, 0], sizes = [1, 256], strides = [1, 1]} : vector<8x256xf32> to vector<1x256xf32>
    %227 = vector.broadcast %225 : vector<8x1xf32> to vector<8x256xf32>
    %228 = vector.broadcast %226 : vector<1x256xf32> to vector<8x256xf32>
    %229 = arith.mulf %227, %228 : vector<8x256xf32>
    %230 = vector.extract_strided_slice %224 {offsets = [0, 1], sizes = [8, 1], strides = [1, 1]} : vector<8x8xf32> to vector<8x1xf32>
    %231 = vector.extract_strided_slice %222 {offsets = [1, 0], sizes = [1, 256], strides = [1, 1]} : vector<8x256xf32> to vector<1x256xf32>
    %232 = vector.broadcast %230 : vector<8x1xf32> to vector<8x256xf32>
    %233 = vector.broadcast %231 : vector<1x256xf32> to vector<8x256xf32>
    %234 = arith.mulf %232, %233 : vector<8x256xf32>
    %235 = arith.addf %229, %234 : vector<8x256xf32>
    %236 = vector.extract_strided_slice %224 {offsets = [0, 2], sizes = [8, 1], strides = [1, 1]} : vector<8x8xf32> to vector<8x1xf32>
    %237 = vector.extract_strided_slice %222 {offsets = [2, 0], sizes = [1, 256], strides = [1, 1]} : vector<8x256xf32> to vector<1x256xf32>
    %238 = vector.broadcast %236 : vector<8x1xf32> to vector<8x256xf32>
    %239 = vector.broadcast %237 : vector<1x256xf32> to vector<8x256xf32>
    %240 = arith.mulf %238, %239 : vector<8x256xf32>
    %241 = arith.addf %235, %240 : vector<8x256xf32>
    %242 = vector.extract_strided_slice %224 {offsets = [0, 3], sizes = [8, 1], strides = [1, 1]} : vector<8x8xf32> to vector<8x1xf32>
    %243 = vector.extract_strided_slice %222 {offsets = [3, 0], sizes = [1, 256], strides = [1, 1]} : vector<8x256xf32> to vector<1x256xf32>
    %244 = vector.broadcast %242 : vector<8x1xf32> to vector<8x256xf32>
    %245 = vector.broadcast %243 : vector<1x256xf32> to vector<8x256xf32>
    %246 = arith.mulf %244, %245 : vector<8x256xf32>
    %247 = arith.addf %241, %246 : vector<8x256xf32>
    %248 = vector.extract_strided_slice %224 {offsets = [0, 4], sizes = [8, 1], strides = [1, 1]} : vector<8x8xf32> to vector<8x1xf32>
    %249 = vector.extract_strided_slice %222 {offsets = [4, 0], sizes = [1, 256], strides = [1, 1]} : vector<8x256xf32> to vector<1x256xf32>
    %250 = vector.broadcast %248 : vector<8x1xf32> to vector<8x256xf32>
    %251 = vector.broadcast %249 : vector<1x256xf32> to vector<8x256xf32>
    %252 = arith.mulf %250, %251 : vector<8x256xf32>
    %253 = arith.addf %247, %252 : vector<8x256xf32>
    %254 = vector.extract_strided_slice %224 {offsets = [0, 5], sizes = [8, 1], strides = [1, 1]} : vector<8x8xf32> to vector<8x1xf32>
    %255 = vector.extract_strided_slice %222 {offsets = [5, 0], sizes = [1, 256], strides = [1, 1]} : vector<8x256xf32> to vector<1x256xf32>
    %256 = vector.broadcast %254 : vector<8x1xf32> to vector<8x256xf32>
    %257 = vector.broadcast %255 : vector<1x256xf32> to vector<8x256xf32>
    %258 = arith.mulf %256, %257 : vector<8x256xf32>
    %259 = arith.addf %253, %258 : vector<8x256xf32>
    %260 = vector.extract_strided_slice %224 {offsets = [0, 6], sizes = [8, 1], strides = [1, 1]} : vector<8x8xf32> to vector<8x1xf32>
    %261 = vector.extract_strided_slice %222 {offsets = [6, 0], sizes = [1, 256], strides = [1, 1]} : vector<8x256xf32> to vector<1x256xf32>
    %262 = vector.broadcast %260 : vector<8x1xf32> to vector<8x256xf32>
    %263 = vector.broadcast %261 : vector<1x256xf32> to vector<8x256xf32>
    %264 = arith.mulf %262, %263 : vector<8x256xf32>
    %265 = arith.addf %259, %264 : vector<8x256xf32>
    %266 = vector.extract_strided_slice %224 {offsets = [0, 7], sizes = [8, 1], strides = [1, 1]} : vector<8x8xf32> to vector<8x1xf32>
    %267 = vector.extract_strided_slice %222 {offsets = [7, 0], sizes = [1, 256], strides = [1, 1]} : vector<8x256xf32> to vector<1x256xf32>
    %268 = vector.broadcast %266 : vector<8x1xf32> to vector<8x256xf32>
    %269 = vector.broadcast %267 : vector<1x256xf32> to vector<8x256xf32>
    %270 = arith.mulf %268, %269 : vector<8x256xf32>
    %271 = arith.addf %265, %270 : vector<8x256xf32>
    %c4 = arith.constant 4 : index
    %c0_24 = arith.constant 0 : index
    %c0_25 = arith.constant 0 : index
    %272 = vector.load %arg2[%c4, %c0_24, %c0_25] : memref<9x8x8xf32, #tpu.memory_space<vmem>>, vector<1x8x8xf32>
    %273 = vector.shape_cast %272 : vector<1x8x8xf32> to vector<8x8xf32>
    %274 = vector.extract_strided_slice %273 {offsets = [0, 0], sizes = [8, 1], strides = [1, 1]} : vector<8x8xf32> to vector<8x1xf32>
    %275 = vector.extract_strided_slice %1 {offsets = [0, 0], sizes = [1, 256], strides = [1, 1]} : vector<8x256xf32> to vector<1x256xf32>
    %276 = vector.broadcast %274 : vector<8x1xf32> to vector<8x256xf32>
    %277 = vector.broadcast %275 : vector<1x256xf32> to vector<8x256xf32>
    %278 = arith.mulf %276, %277 : vector<8x256xf32>
    %279 = arith.addf %271, %278 : vector<8x256xf32>
    %280 = vector.extract_strided_slice %273 {offsets = [0, 1], sizes = [8, 1], strides = [1, 1]} : vector<8x8xf32> to vector<8x1xf32>
    %281 = vector.extract_strided_slice %1 {offsets = [1, 0], sizes = [1, 256], strides = [1, 1]} : vector<8x256xf32> to vector<1x256xf32>
    %282 = vector.broadcast %280 : vector<8x1xf32> to vector<8x256xf32>
    %283 = vector.broadcast %281 : vector<1x256xf32> to vector<8x256xf32>
    %284 = arith.mulf %282, %283 : vector<8x256xf32>
    %285 = arith.addf %279, %284 : vector<8x256xf32>
    %286 = vector.extract_strided_slice %273 {offsets = [0, 2], sizes = [8, 1], strides = [1, 1]} : vector<8x8xf32> to vector<8x1xf32>
    %287 = vector.extract_strided_slice %1 {offsets = [2, 0], sizes = [1, 256], strides = [1, 1]} : vector<8x256xf32> to vector<1x256xf32>
    %288 = vector.broadcast %286 : vector<8x1xf32> to vector<8x256xf32>
    %289 = vector.broadcast %287 : vector<1x256xf32> to vector<8x256xf32>
    %290 = arith.mulf %288, %289 : vector<8x256xf32>
    %291 = arith.addf %285, %290 : vector<8x256xf32>
    %292 = vector.extract_strided_slice %273 {offsets = [0, 3], sizes = [8, 1], strides = [1, 1]} : vector<8x8xf32> to vector<8x1xf32>
    %293 = vector.extract_strided_slice %1 {offsets = [3, 0], sizes = [1, 256], strides = [1, 1]} : vector<8x256xf32> to vector<1x256xf32>
    %294 = vector.broadcast %292 : vector<8x1xf32> to vector<8x256xf32>
    %295 = vector.broadcast %293 : vector<1x256xf32> to vector<8x256xf32>
    %296 = arith.mulf %294, %295 : vector<8x256xf32>
    %297 = arith.addf %291, %296 : vector<8x256xf32>
    %298 = vector.extract_strided_slice %273 {offsets = [0, 4], sizes = [8, 1], strides = [1, 1]} : vector<8x8xf32> to vector<8x1xf32>
    %299 = vector.extract_strided_slice %1 {offsets = [4, 0], sizes = [1, 256], strides = [1, 1]} : vector<8x256xf32> to vector<1x256xf32>
    %300 = vector.broadcast %298 : vector<8x1xf32> to vector<8x256xf32>
    %301 = vector.broadcast %299 : vector<1x256xf32> to vector<8x256xf32>
    %302 = arith.mulf %300, %301 : vector<8x256xf32>
    %303 = arith.addf %297, %302 : vector<8x256xf32>
    %304 = vector.extract_strided_slice %273 {offsets = [0, 5], sizes = [8, 1], strides = [1, 1]} : vector<8x8xf32> to vector<8x1xf32>
    %305 = vector.extract_strided_slice %1 {offsets = [5, 0], sizes = [1, 256], strides = [1, 1]} : vector<8x256xf32> to vector<1x256xf32>
    %306 = vector.broadcast %304 : vector<8x1xf32> to vector<8x256xf32>
    %307 = vector.broadcast %305 : vector<1x256xf32> to vector<8x256xf32>
    %308 = arith.mulf %306, %307 : vector<8x256xf32>
    %309 = arith.addf %303, %308 : vector<8x256xf32>
    %310 = vector.extract_strided_slice %273 {offsets = [0, 6], sizes = [8, 1], strides = [1, 1]} : vector<8x8xf32> to vector<8x1xf32>
    %311 = vector.extract_strided_slice %1 {offsets = [6, 0], sizes = [1, 256], strides = [1, 1]} : vector<8x256xf32> to vector<1x256xf32>
    %312 = vector.broadcast %310 : vector<8x1xf32> to vector<8x256xf32>
    %313 = vector.broadcast %311 : vector<1x256xf32> to vector<8x256xf32>
    %314 = arith.mulf %312, %313 : vector<8x256xf32>
    %315 = arith.addf %309, %314 : vector<8x256xf32>
    %316 = vector.extract_strided_slice %273 {offsets = [0, 7], sizes = [8, 1], strides = [1, 1]} : vector<8x8xf32> to vector<8x1xf32>
    %317 = vector.extract_strided_slice %1 {offsets = [7, 0], sizes = [1, 256], strides = [1, 1]} : vector<8x256xf32> to vector<1x256xf32>
    %318 = vector.broadcast %316 : vector<8x1xf32> to vector<8x256xf32>
    %319 = vector.broadcast %317 : vector<1x256xf32> to vector<8x256xf32>
    %320 = arith.mulf %318, %319 : vector<8x256xf32>
    %321 = arith.addf %315, %320 : vector<8x256xf32>
    %322 = vector.shape_cast %38 : vector<1x256xi1> to vector<1x256xi1>
    %323 = vector.broadcast %322 : vector<1x256xi1> to vector<8x256xi1>
    %324 = arith.select %323, %216, %219 : vector<8x256xi1>, vector<8x256xf32>
    %c5 = arith.constant 5 : index
    %c0_26 = arith.constant 0 : index
    %c0_27 = arith.constant 0 : index
    %325 = vector.load %arg2[%c5, %c0_26, %c0_27] : memref<9x8x8xf32, #tpu.memory_space<vmem>>, vector<1x8x8xf32>
    %326 = vector.shape_cast %325 : vector<1x8x8xf32> to vector<8x8xf32>
    %327 = vector.extract_strided_slice %326 {offsets = [0, 0], sizes = [8, 1], strides = [1, 1]} : vector<8x8xf32> to vector<8x1xf32>
    %328 = vector.extract_strided_slice %324 {offsets = [0, 0], sizes = [1, 256], strides = [1, 1]} : vector<8x256xf32> to vector<1x256xf32>
    %329 = vector.broadcast %327 : vector<8x1xf32> to vector<8x256xf32>
    %330 = vector.broadcast %328 : vector<1x256xf32> to vector<8x256xf32>
    %331 = arith.mulf %329, %330 : vector<8x256xf32>
    %332 = arith.addf %321, %331 : vector<8x256xf32>
    %333 = vector.extract_strided_slice %326 {offsets = [0, 1], sizes = [8, 1], strides = [1, 1]} : vector<8x8xf32> to vector<8x1xf32>
    %334 = vector.extract_strided_slice %324 {offsets = [1, 0], sizes = [1, 256], strides = [1, 1]} : vector<8x256xf32> to vector<1x256xf32>
    %335 = vector.broadcast %333 : vector<8x1xf32> to vector<8x256xf32>
    %336 = vector.broadcast %334 : vector<1x256xf32> to vector<8x256xf32>
    %337 = arith.mulf %335, %336 : vector<8x256xf32>
    %338 = arith.addf %332, %337 : vector<8x256xf32>
    %339 = vector.extract_strided_slice %326 {offsets = [0, 2], sizes = [8, 1], strides = [1, 1]} : vector<8x8xf32> to vector<8x1xf32>
    %340 = vector.extract_strided_slice %324 {offsets = [2, 0], sizes = [1, 256], strides = [1, 1]} : vector<8x256xf32> to vector<1x256xf32>
    %341 = vector.broadcast %339 : vector<8x1xf32> to vector<8x256xf32>
    %342 = vector.broadcast %340 : vector<1x256xf32> to vector<8x256xf32>
    %343 = arith.mulf %341, %342 : vector<8x256xf32>
    %344 = arith.addf %338, %343 : vector<8x256xf32>
    %345 = vector.extract_strided_slice %326 {offsets = [0, 3], sizes = [8, 1], strides = [1, 1]} : vector<8x8xf32> to vector<8x1xf32>
    %346 = vector.extract_strided_slice %324 {offsets = [3, 0], sizes = [1, 256], strides = [1, 1]} : vector<8x256xf32> to vector<1x256xf32>
    %347 = vector.broadcast %345 : vector<8x1xf32> to vector<8x256xf32>
    %348 = vector.broadcast %346 : vector<1x256xf32> to vector<8x256xf32>
    %349 = arith.mulf %347, %348 : vector<8x256xf32>
    %350 = arith.addf %344, %349 : vector<8x256xf32>
    %351 = vector.extract_strided_slice %326 {offsets = [0, 4], sizes = [8, 1], strides = [1, 1]} : vector<8x8xf32> to vector<8x1xf32>
    %352 = vector.extract_strided_slice %324 {offsets = [4, 0], sizes = [1, 256], strides = [1, 1]} : vector<8x256xf32> to vector<1x256xf32>
    %353 = vector.broadcast %351 : vector<8x1xf32> to vector<8x256xf32>
    %354 = vector.broadcast %352 : vector<1x256xf32> to vector<8x256xf32>
    %355 = arith.mulf %353, %354 : vector<8x256xf32>
    %356 = arith.addf %350, %355 : vector<8x256xf32>
    %357 = vector.extract_strided_slice %326 {offsets = [0, 5], sizes = [8, 1], strides = [1, 1]} : vector<8x8xf32> to vector<8x1xf32>
    %358 = vector.extract_strided_slice %324 {offsets = [5, 0], sizes = [1, 256], strides = [1, 1]} : vector<8x256xf32> to vector<1x256xf32>
    %359 = vector.broadcast %357 : vector<8x1xf32> to vector<8x256xf32>
    %360 = vector.broadcast %358 : vector<1x256xf32> to vector<8x256xf32>
    %361 = arith.mulf %359, %360 : vector<8x256xf32>
    %362 = arith.addf %356, %361 : vector<8x256xf32>
    %363 = vector.extract_strided_slice %326 {offsets = [0, 6], sizes = [8, 1], strides = [1, 1]} : vector<8x8xf32> to vector<8x1xf32>
    %364 = vector.extract_strided_slice %324 {offsets = [6, 0], sizes = [1, 256], strides = [1, 1]} : vector<8x256xf32> to vector<1x256xf32>
    %365 = vector.broadcast %363 : vector<8x1xf32> to vector<8x256xf32>
    %366 = vector.broadcast %364 : vector<1x256xf32> to vector<8x256xf32>
    %367 = arith.mulf %365, %366 : vector<8x256xf32>
    %368 = arith.addf %362, %367 : vector<8x256xf32>
    %369 = vector.extract_strided_slice %326 {offsets = [0, 7], sizes = [8, 1], strides = [1, 1]} : vector<8x8xf32> to vector<8x1xf32>
    %370 = vector.extract_strided_slice %324 {offsets = [7, 0], sizes = [1, 256], strides = [1, 1]} : vector<8x256xf32> to vector<1x256xf32>
    %371 = vector.broadcast %369 : vector<8x1xf32> to vector<8x256xf32>
    %372 = vector.broadcast %370 : vector<1x256xf32> to vector<8x256xf32>
    %373 = arith.mulf %371, %372 : vector<8x256xf32>
    %374 = arith.addf %368, %373 : vector<8x256xf32>
    %375 = vector.extract_strided_slice %1 {offsets = [0, 240], sizes = [8, 16], strides = [1, 1]} : vector<8x256xf32> to vector<8x16xf32>
    %376 = vector.extract_strided_slice %1 {offsets = [0, 0], sizes = [8, 240], strides = [1, 1]} : vector<8x256xf32> to vector<8x240xf32>
    %377 = tpu.concatenate %375, %376 in 1 : vector<8x16xf32>, vector<8x240xf32> -> vector<8x256xf32>
    %378 = vector.extract_strided_slice %1 {offsets = [0, 16], sizes = [8, 240], strides = [1, 1]} : vector<8x256xf32> to vector<8x240xf32>
    %379 = vector.extract_strided_slice %1 {offsets = [0, 0], sizes = [8, 16], strides = [1, 1]} : vector<8x256xf32> to vector<8x16xf32>
    %380 = tpu.concatenate %378, %379 in 1 : vector<8x240xf32>, vector<8x16xf32> -> vector<8x256xf32>
    %381 = vector.shape_cast %42 : vector<1x256xi1> to vector<1x256xi1>
    %382 = vector.broadcast %381 : vector<1x256xi1> to vector<8x256xi1>
    %383 = arith.select %382, %377, %380 : vector<8x256xi1>, vector<8x256xf32>
    %384 = vector.extract_strided_slice %383 {offsets = [0, 255], sizes = [8, 1], strides = [1, 1]} : vector<8x256xf32> to vector<8x1xf32>
    %385 = vector.extract_strided_slice %383 {offsets = [0, 0], sizes = [8, 255], strides = [1, 1]} : vector<8x256xf32> to vector<8x255xf32>
    %386 = tpu.concatenate %384, %385 in 1 : vector<8x1xf32>, vector<8x255xf32> -> vector<8x256xf32>
    %387 = vector.extract_strided_slice %383 {offsets = [0, 1], sizes = [8, 255], strides = [1, 1]} : vector<8x256xf32> to vector<8x255xf32>
    %388 = vector.extract_strided_slice %383 {offsets = [0, 0], sizes = [8, 1], strides = [1, 1]} : vector<8x256xf32> to vector<8x1xf32>
    %389 = tpu.concatenate %387, %388 in 1 : vector<8x255xf32>, vector<8x1xf32> -> vector<8x256xf32>
    %390 = vector.shape_cast %20 : vector<1x256xi1> to vector<1x256xi1>
    %391 = vector.broadcast %390 : vector<1x256xi1> to vector<8x256xi1>
    %392 = arith.select %391, %389, %386 : vector<8x256xi1>, vector<8x256xf32>
    %c6 = arith.constant 6 : index
    %c0_28 = arith.constant 0 : index
    %c0_29 = arith.constant 0 : index
    %393 = vector.load %arg2[%c6, %c0_28, %c0_29] : memref<9x8x8xf32, #tpu.memory_space<vmem>>, vector<1x8x8xf32>
    %394 = vector.shape_cast %393 : vector<1x8x8xf32> to vector<8x8xf32>
    %395 = vector.extract_strided_slice %394 {offsets = [0, 0], sizes = [8, 1], strides = [1, 1]} : vector<8x8xf32> to vector<8x1xf32>
    %396 = vector.extract_strided_slice %392 {offsets = [0, 0], sizes = [1, 256], strides = [1, 1]} : vector<8x256xf32> to vector<1x256xf32>
    %397 = vector.broadcast %395 : vector<8x1xf32> to vector<8x256xf32>
    %398 = vector.broadcast %396 : vector<1x256xf32> to vector<8x256xf32>
    %399 = arith.mulf %397, %398 : vector<8x256xf32>
    %400 = vector.extract_strided_slice %394 {offsets = [0, 1], sizes = [8, 1], strides = [1, 1]} : vector<8x8xf32> to vector<8x1xf32>
    %401 = vector.extract_strided_slice %392 {offsets = [1, 0], sizes = [1, 256], strides = [1, 1]} : vector<8x256xf32> to vector<1x256xf32>
    %402 = vector.broadcast %400 : vector<8x1xf32> to vector<8x256xf32>
    %403 = vector.broadcast %401 : vector<1x256xf32> to vector<8x256xf32>
    %404 = arith.mulf %402, %403 : vector<8x256xf32>
    %405 = arith.addf %399, %404 : vector<8x256xf32>
    %406 = vector.extract_strided_slice %394 {offsets = [0, 2], sizes = [8, 1], strides = [1, 1]} : vector<8x8xf32> to vector<8x1xf32>
    %407 = vector.extract_strided_slice %392 {offsets = [2, 0], sizes = [1, 256], strides = [1, 1]} : vector<8x256xf32> to vector<1x256xf32>
    %408 = vector.broadcast %406 : vector<8x1xf32> to vector<8x256xf32>
    %409 = vector.broadcast %407 : vector<1x256xf32> to vector<8x256xf32>
    %410 = arith.mulf %408, %409 : vector<8x256xf32>
    %411 = arith.addf %405, %410 : vector<8x256xf32>
    %412 = vector.extract_strided_slice %394 {offsets = [0, 3], sizes = [8, 1], strides = [1, 1]} : vector<8x8xf32> to vector<8x1xf32>
    %413 = vector.extract_strided_slice %392 {offsets = [3, 0], sizes = [1, 256], strides = [1, 1]} : vector<8x256xf32> to vector<1x256xf32>
    %414 = vector.broadcast %412 : vector<8x1xf32> to vector<8x256xf32>
    %415 = vector.broadcast %413 : vector<1x256xf32> to vector<8x256xf32>
    %416 = arith.mulf %414, %415 : vector<8x256xf32>
    %417 = arith.addf %411, %416 : vector<8x256xf32>
    %418 = vector.extract_strided_slice %394 {offsets = [0, 4], sizes = [8, 1], strides = [1, 1]} : vector<8x8xf32> to vector<8x1xf32>
    %419 = vector.extract_strided_slice %392 {offsets = [4, 0], sizes = [1, 256], strides = [1, 1]} : vector<8x256xf32> to vector<1x256xf32>
    %420 = vector.broadcast %418 : vector<8x1xf32> to vector<8x256xf32>
    %421 = vector.broadcast %419 : vector<1x256xf32> to vector<8x256xf32>
    %422 = arith.mulf %420, %421 : vector<8x256xf32>
    %423 = arith.addf %417, %422 : vector<8x256xf32>
    %424 = vector.extract_strided_slice %394 {offsets = [0, 5], sizes = [8, 1], strides = [1, 1]} : vector<8x8xf32> to vector<8x1xf32>
    %425 = vector.extract_strided_slice %392 {offsets = [5, 0], sizes = [1, 256], strides = [1, 1]} : vector<8x256xf32> to vector<1x256xf32>
    %426 = vector.broadcast %424 : vector<8x1xf32> to vector<8x256xf32>
    %427 = vector.broadcast %425 : vector<1x256xf32> to vector<8x256xf32>
    %428 = arith.mulf %426, %427 : vector<8x256xf32>
    %429 = arith.addf %423, %428 : vector<8x256xf32>
    %430 = vector.extract_strided_slice %394 {offsets = [0, 6], sizes = [8, 1], strides = [1, 1]} : vector<8x8xf32> to vector<8x1xf32>
    %431 = vector.extract_strided_slice %392 {offsets = [6, 0], sizes = [1, 256], strides = [1, 1]} : vector<8x256xf32> to vector<1x256xf32>
    %432 = vector.broadcast %430 : vector<8x1xf32> to vector<8x256xf32>
    %433 = vector.broadcast %431 : vector<1x256xf32> to vector<8x256xf32>
    %434 = arith.mulf %432, %433 : vector<8x256xf32>
    %435 = arith.addf %429, %434 : vector<8x256xf32>
    %436 = vector.extract_strided_slice %394 {offsets = [0, 7], sizes = [8, 1], strides = [1, 1]} : vector<8x8xf32> to vector<8x1xf32>
    %437 = vector.extract_strided_slice %392 {offsets = [7, 0], sizes = [1, 256], strides = [1, 1]} : vector<8x256xf32> to vector<1x256xf32>
    %438 = vector.broadcast %436 : vector<8x1xf32> to vector<8x256xf32>
    %439 = vector.broadcast %437 : vector<1x256xf32> to vector<8x256xf32>
    %440 = arith.mulf %438, %439 : vector<8x256xf32>
    %441 = arith.addf %435, %440 : vector<8x256xf32>
    %c7 = arith.constant 7 : index
    %c0_30 = arith.constant 0 : index
    %c0_31 = arith.constant 0 : index
    %442 = vector.load %arg2[%c7, %c0_30, %c0_31] : memref<9x8x8xf32, #tpu.memory_space<vmem>>, vector<1x8x8xf32>
    %443 = vector.shape_cast %442 : vector<1x8x8xf32> to vector<8x8xf32>
    %444 = vector.extract_strided_slice %443 {offsets = [0, 0], sizes = [8, 1], strides = [1, 1]} : vector<8x8xf32> to vector<8x1xf32>
    %445 = vector.extract_strided_slice %383 {offsets = [0, 0], sizes = [1, 256], strides = [1, 1]} : vector<8x256xf32> to vector<1x256xf32>
    %446 = vector.broadcast %444 : vector<8x1xf32> to vector<8x256xf32>
    %447 = vector.broadcast %445 : vector<1x256xf32> to vector<8x256xf32>
    %448 = arith.mulf %446, %447 : vector<8x256xf32>
    %449 = arith.addf %441, %448 : vector<8x256xf32>
    %450 = vector.extract_strided_slice %443 {offsets = [0, 1], sizes = [8, 1], strides = [1, 1]} : vector<8x8xf32> to vector<8x1xf32>
    %451 = vector.extract_strided_slice %383 {offsets = [1, 0], sizes = [1, 256], strides = [1, 1]} : vector<8x256xf32> to vector<1x256xf32>
    %452 = vector.broadcast %450 : vector<8x1xf32> to vector<8x256xf32>
    %453 = vector.broadcast %451 : vector<1x256xf32> to vector<8x256xf32>
    %454 = arith.mulf %452, %453 : vector<8x256xf32>
    %455 = arith.addf %449, %454 : vector<8x256xf32>
    %456 = vector.extract_strided_slice %443 {offsets = [0, 2], sizes = [8, 1], strides = [1, 1]} : vector<8x8xf32> to vector<8x1xf32>
    %457 = vector.extract_strided_slice %383 {offsets = [2, 0], sizes = [1, 256], strides = [1, 1]} : vector<8x256xf32> to vector<1x256xf32>
    %458 = vector.broadcast %456 : vector<8x1xf32> to vector<8x256xf32>
    %459 = vector.broadcast %457 : vector<1x256xf32> to vector<8x256xf32>
    %460 = arith.mulf %458, %459 : vector<8x256xf32>
    %461 = arith.addf %455, %460 : vector<8x256xf32>
    %462 = vector.extract_strided_slice %443 {offsets = [0, 3], sizes = [8, 1], strides = [1, 1]} : vector<8x8xf32> to vector<8x1xf32>
    %463 = vector.extract_strided_slice %383 {offsets = [3, 0], sizes = [1, 256], strides = [1, 1]} : vector<8x256xf32> to vector<1x256xf32>
    %464 = vector.broadcast %462 : vector<8x1xf32> to vector<8x256xf32>
    %465 = vector.broadcast %463 : vector<1x256xf32> to vector<8x256xf32>
    %466 = arith.mulf %464, %465 : vector<8x256xf32>
    %467 = arith.addf %461, %466 : vector<8x256xf32>
    %468 = vector.extract_strided_slice %443 {offsets = [0, 4], sizes = [8, 1], strides = [1, 1]} : vector<8x8xf32> to vector<8x1xf32>
    %469 = vector.extract_strided_slice %383 {offsets = [4, 0], sizes = [1, 256], strides = [1, 1]} : vector<8x256xf32> to vector<1x256xf32>
    %470 = vector.broadcast %468 : vector<8x1xf32> to vector<8x256xf32>
    %471 = vector.broadcast %469 : vector<1x256xf32> to vector<8x256xf32>
    %472 = arith.mulf %470, %471 : vector<8x256xf32>
    %473 = arith.addf %467, %472 : vector<8x256xf32>
    %474 = vector.extract_strided_slice %443 {offsets = [0, 5], sizes = [8, 1], strides = [1, 1]} : vector<8x8xf32> to vector<8x1xf32>
    %475 = vector.extract_strided_slice %383 {offsets = [5, 0], sizes = [1, 256], strides = [1, 1]} : vector<8x256xf32> to vector<1x256xf32>
    %476 = vector.broadcast %474 : vector<8x1xf32> to vector<8x256xf32>
    %477 = vector.broadcast %475 : vector<1x256xf32> to vector<8x256xf32>
    %478 = arith.mulf %476, %477 : vector<8x256xf32>
    %479 = arith.addf %473, %478 : vector<8x256xf32>
    %480 = vector.extract_strided_slice %443 {offsets = [0, 6], sizes = [8, 1], strides = [1, 1]} : vector<8x8xf32> to vector<8x1xf32>
    %481 = vector.extract_strided_slice %383 {offsets = [6, 0], sizes = [1, 256], strides = [1, 1]} : vector<8x256xf32> to vector<1x256xf32>
    %482 = vector.broadcast %480 : vector<8x1xf32> to vector<8x256xf32>
    %483 = vector.broadcast %481 : vector<1x256xf32> to vector<8x256xf32>
    %484 = arith.mulf %482, %483 : vector<8x256xf32>
    %485 = arith.addf %479, %484 : vector<8x256xf32>
    %486 = vector.extract_strided_slice %443 {offsets = [0, 7], sizes = [8, 1], strides = [1, 1]} : vector<8x8xf32> to vector<8x1xf32>
    %487 = vector.extract_strided_slice %383 {offsets = [7, 0], sizes = [1, 256], strides = [1, 1]} : vector<8x256xf32> to vector<1x256xf32>
    %488 = vector.broadcast %486 : vector<8x1xf32> to vector<8x256xf32>
    %489 = vector.broadcast %487 : vector<1x256xf32> to vector<8x256xf32>
    %490 = arith.mulf %488, %489 : vector<8x256xf32>
    %491 = arith.addf %485, %490 : vector<8x256xf32>
    %492 = vector.shape_cast %38 : vector<1x256xi1> to vector<1x256xi1>
    %493 = vector.broadcast %492 : vector<1x256xi1> to vector<8x256xi1>
    %494 = arith.select %493, %386, %389 : vector<8x256xi1>, vector<8x256xf32>
    %c8 = arith.constant 8 : index
    %c0_32 = arith.constant 0 : index
    %c0_33 = arith.constant 0 : index
    %495 = vector.load %arg2[%c8, %c0_32, %c0_33] : memref<9x8x8xf32, #tpu.memory_space<vmem>>, vector<1x8x8xf32>
    %496 = vector.shape_cast %495 : vector<1x8x8xf32> to vector<8x8xf32>
    %497 = vector.extract_strided_slice %496 {offsets = [0, 0], sizes = [8, 1], strides = [1, 1]} : vector<8x8xf32> to vector<8x1xf32>
    %498 = vector.extract_strided_slice %494 {offsets = [0, 0], sizes = [1, 256], strides = [1, 1]} : vector<8x256xf32> to vector<1x256xf32>
    %499 = vector.broadcast %497 : vector<8x1xf32> to vector<8x256xf32>
    %500 = vector.broadcast %498 : vector<1x256xf32> to vector<8x256xf32>
    %501 = arith.mulf %499, %500 : vector<8x256xf32>
    %502 = arith.addf %491, %501 : vector<8x256xf32>
    %503 = vector.extract_strided_slice %496 {offsets = [0, 1], sizes = [8, 1], strides = [1, 1]} : vector<8x8xf32> to vector<8x1xf32>
    %504 = vector.extract_strided_slice %494 {offsets = [1, 0], sizes = [1, 256], strides = [1, 1]} : vector<8x256xf32> to vector<1x256xf32>
    %505 = vector.broadcast %503 : vector<8x1xf32> to vector<8x256xf32>
    %506 = vector.broadcast %504 : vector<1x256xf32> to vector<8x256xf32>
    %507 = arith.mulf %505, %506 : vector<8x256xf32>
    %508 = arith.addf %502, %507 : vector<8x256xf32>
    %509 = vector.extract_strided_slice %496 {offsets = [0, 2], sizes = [8, 1], strides = [1, 1]} : vector<8x8xf32> to vector<8x1xf32>
    %510 = vector.extract_strided_slice %494 {offsets = [2, 0], sizes = [1, 256], strides = [1, 1]} : vector<8x256xf32> to vector<1x256xf32>
    %511 = vector.broadcast %509 : vector<8x1xf32> to vector<8x256xf32>
    %512 = vector.broadcast %510 : vector<1x256xf32> to vector<8x256xf32>
    %513 = arith.mulf %511, %512 : vector<8x256xf32>
    %514 = arith.addf %508, %513 : vector<8x256xf32>
    %515 = vector.extract_strided_slice %496 {offsets = [0, 3], sizes = [8, 1], strides = [1, 1]} : vector<8x8xf32> to vector<8x1xf32>
    %516 = vector.extract_strided_slice %494 {offsets = [3, 0], sizes = [1, 256], strides = [1, 1]} : vector<8x256xf32> to vector<1x256xf32>
    %517 = vector.broadcast %515 : vector<8x1xf32> to vector<8x256xf32>
    %518 = vector.broadcast %516 : vector<1x256xf32> to vector<8x256xf32>
    %519 = arith.mulf %517, %518 : vector<8x256xf32>
    %520 = arith.addf %514, %519 : vector<8x256xf32>
    %521 = vector.extract_strided_slice %496 {offsets = [0, 4], sizes = [8, 1], strides = [1, 1]} : vector<8x8xf32> to vector<8x1xf32>
    %522 = vector.extract_strided_slice %494 {offsets = [4, 0], sizes = [1, 256], strides = [1, 1]} : vector<8x256xf32> to vector<1x256xf32>
    %523 = vector.broadcast %521 : vector<8x1xf32> to vector<8x256xf32>
    %524 = vector.broadcast %522 : vector<1x256xf32> to vector<8x256xf32>
    %525 = arith.mulf %523, %524 : vector<8x256xf32>
    %526 = arith.addf %520, %525 : vector<8x256xf32>
    %527 = vector.extract_strided_slice %496 {offsets = [0, 5], sizes = [8, 1], strides = [1, 1]} : vector<8x8xf32> to vector<8x1xf32>
    %528 = vector.extract_strided_slice %494 {offsets = [5, 0], sizes = [1, 256], strides = [1, 1]} : vector<8x256xf32> to vector<1x256xf32>
    %529 = vector.broadcast %527 : vector<8x1xf32> to vector<8x256xf32>
    %530 = vector.broadcast %528 : vector<1x256xf32> to vector<8x256xf32>
    %531 = arith.mulf %529, %530 : vector<8x256xf32>
    %532 = arith.addf %526, %531 : vector<8x256xf32>
    %533 = vector.extract_strided_slice %496 {offsets = [0, 6], sizes = [8, 1], strides = [1, 1]} : vector<8x8xf32> to vector<8x1xf32>
    %534 = vector.extract_strided_slice %494 {offsets = [6, 0], sizes = [1, 256], strides = [1, 1]} : vector<8x256xf32> to vector<1x256xf32>
    %535 = vector.broadcast %533 : vector<8x1xf32> to vector<8x256xf32>
    %536 = vector.broadcast %534 : vector<1x256xf32> to vector<8x256xf32>
    %537 = arith.mulf %535, %536 : vector<8x256xf32>
    %538 = arith.addf %532, %537 : vector<8x256xf32>
    %539 = vector.extract_strided_slice %496 {offsets = [0, 7], sizes = [8, 1], strides = [1, 1]} : vector<8x8xf32> to vector<8x1xf32>
    %540 = vector.extract_strided_slice %494 {offsets = [7, 0], sizes = [1, 256], strides = [1, 1]} : vector<8x256xf32> to vector<1x256xf32>
    %541 = vector.broadcast %539 : vector<8x1xf32> to vector<8x256xf32>
    %542 = vector.broadcast %540 : vector<1x256xf32> to vector<8x256xf32>
    %543 = arith.mulf %541, %542 : vector<8x256xf32>
    %544 = arith.addf %538, %543 : vector<8x256xf32>
    %545 = vector.broadcast %43 : vector<8x1xf32> to vector<8x256xf32>
    %546 = arith.addf %545, %213 : vector<8x256xf32>
    %547 = arith.addf %546, %374 : vector<8x256xf32>
    %548 = arith.addf %547, %544 : vector<8x256xf32>
    %cst = arith.constant dense<0.000000e+00> : vector<8xf32>
    %549 = vector.multi_reduction <add>, %548, %cst [1] : vector<8x256xf32> to vector<8xf32>
    %550 = vector.shape_cast %549 : vector<8xf32> to vector<8x1xf32>
    %cst_34 = arith.constant 3.906250e-03 : f32
    %551 = vector.broadcast %cst_34 : f32 to vector<8x1xf32>
    %552 = arith.mulf %550, %551 : vector<8x1xf32>
    %553 = vector.broadcast %552 : vector<8x1xf32> to vector<8x256xf32>
    %554 = arith.subf %548, %553 : vector<8x256xf32>
    %555 = arith.mulf %554, %554 : vector<8x256xf32>
    %cst_35 = arith.constant dense<0.000000e+00> : vector<8xf32>
    %556 = vector.multi_reduction <add>, %555, %cst_35 [1] : vector<8x256xf32> to vector<8xf32>
    %557 = vector.shape_cast %556 : vector<8xf32> to vector<8x1xf32>
    %cst_36 = arith.constant 3.906250e-03 : f32
    %558 = vector.broadcast %cst_36 : f32 to vector<8x1xf32>
    %559 = arith.mulf %557, %558 : vector<8x1xf32>
    %cst_37 = arith.constant 9.99999974E-6 : f32
    %560 = vector.broadcast %cst_37 : f32 to vector<8x1xf32>
    %561 = arith.addf %559, %560 : vector<8x1xf32>
    %562 = math.rsqrt %561 : vector<8x1xf32>
    %563 = vector.broadcast %562 : vector<8x1xf32> to vector<8x256xf32>
    %564 = arith.mulf %554, %563 : vector<8x256xf32>
    %cst_38 = arith.constant 0.000000e+00 : f32
    %565 = vector.broadcast %cst_38 : f32 to vector<8x256xf32>
    %566 = arith.maximumf %564, %565 : vector<8x256xf32>
    %c0_39 = arith.constant 0 : index
    %c0_40 = arith.constant 0 : index
    %567 = vector.load %arg5[%c0_39, %c0_40] : memref<8x1xf32, #tpu.memory_space<vmem>>, vector<8x1xf32>
    %568 = vector.extract_strided_slice %566 {offsets = [0, 240], sizes = [8, 16], strides = [1, 1]} : vector<8x256xf32> to vector<8x16xf32>
    %569 = vector.extract_strided_slice %566 {offsets = [0, 0], sizes = [8, 240], strides = [1, 1]} : vector<8x256xf32> to vector<8x240xf32>
    %570 = tpu.concatenate %568, %569 in 1 : vector<8x16xf32>, vector<8x240xf32> -> vector<8x256xf32>
    %571 = vector.extract_strided_slice %566 {offsets = [0, 16], sizes = [8, 240], strides = [1, 1]} : vector<8x256xf32> to vector<8x240xf32>
    %572 = vector.extract_strided_slice %566 {offsets = [0, 0], sizes = [8, 16], strides = [1, 1]} : vector<8x256xf32> to vector<8x16xf32>
    %573 = tpu.concatenate %571, %572 in 1 : vector<8x240xf32>, vector<8x16xf32> -> vector<8x256xf32>
    %574 = vector.shape_cast %40 : vector<1x256xi1> to vector<1x256xi1>
    %575 = vector.broadcast %574 : vector<1x256xi1> to vector<8x256xi1>
    %576 = arith.select %575, %573, %570 : vector<8x256xi1>, vector<8x256xf32>
    %577 = vector.extract_strided_slice %576 {offsets = [0, 255], sizes = [8, 1], strides = [1, 1]} : vector<8x256xf32> to vector<8x1xf32>
    %578 = vector.extract_strided_slice %576 {offsets = [0, 0], sizes = [8, 255], strides = [1, 1]} : vector<8x256xf32> to vector<8x255xf32>
    %579 = tpu.concatenate %577, %578 in 1 : vector<8x1xf32>, vector<8x255xf32> -> vector<8x256xf32>
    %580 = vector.extract_strided_slice %576 {offsets = [0, 1], sizes = [8, 255], strides = [1, 1]} : vector<8x256xf32> to vector<8x255xf32>
    %581 = vector.extract_strided_slice %576 {offsets = [0, 0], sizes = [8, 1], strides = [1, 1]} : vector<8x256xf32> to vector<8x1xf32>
    %582 = tpu.concatenate %580, %581 in 1 : vector<8x255xf32>, vector<8x1xf32> -> vector<8x256xf32>
    %583 = vector.shape_cast %20 : vector<1x256xi1> to vector<1x256xi1>
    %584 = vector.broadcast %583 : vector<1x256xi1> to vector<8x256xi1>
    %585 = arith.select %584, %582, %579 : vector<8x256xi1>, vector<8x256xf32>
    %c0_41 = arith.constant 0 : index
    %c0_42 = arith.constant 0 : index
    %c0_43 = arith.constant 0 : index
    %586 = vector.load %arg4[%c0_41, %c0_42, %c0_43] : memref<9x8x8xf32, #tpu.memory_space<vmem>>, vector<1x8x8xf32>
    %587 = vector.shape_cast %586 : vector<1x8x8xf32> to vector<8x8xf32>
    %588 = vector.extract_strided_slice %587 {offsets = [0, 0], sizes = [8, 1], strides = [1, 1]} : vector<8x8xf32> to vector<8x1xf32>
    %589 = vector.extract_strided_slice %585 {offsets = [0, 0], sizes = [1, 256], strides = [1, 1]} : vector<8x256xf32> to vector<1x256xf32>
    %590 = vector.broadcast %588 : vector<8x1xf32> to vector<8x256xf32>
    %591 = vector.broadcast %589 : vector<1x256xf32> to vector<8x256xf32>
    %592 = arith.mulf %590, %591 : vector<8x256xf32>
    %593 = vector.extract_strided_slice %587 {offsets = [0, 1], sizes = [8, 1], strides = [1, 1]} : vector<8x8xf32> to vector<8x1xf32>
    %594 = vector.extract_strided_slice %585 {offsets = [1, 0], sizes = [1, 256], strides = [1, 1]} : vector<8x256xf32> to vector<1x256xf32>
    %595 = vector.broadcast %593 : vector<8x1xf32> to vector<8x256xf32>
    %596 = vector.broadcast %594 : vector<1x256xf32> to vector<8x256xf32>
    %597 = arith.mulf %595, %596 : vector<8x256xf32>
    %598 = arith.addf %592, %597 : vector<8x256xf32>
    %599 = vector.extract_strided_slice %587 {offsets = [0, 2], sizes = [8, 1], strides = [1, 1]} : vector<8x8xf32> to vector<8x1xf32>
    %600 = vector.extract_strided_slice %585 {offsets = [2, 0], sizes = [1, 256], strides = [1, 1]} : vector<8x256xf32> to vector<1x256xf32>
    %601 = vector.broadcast %599 : vector<8x1xf32> to vector<8x256xf32>
    %602 = vector.broadcast %600 : vector<1x256xf32> to vector<8x256xf32>
    %603 = arith.mulf %601, %602 : vector<8x256xf32>
    %604 = arith.addf %598, %603 : vector<8x256xf32>
    %605 = vector.extract_strided_slice %587 {offsets = [0, 3], sizes = [8, 1], strides = [1, 1]} : vector<8x8xf32> to vector<8x1xf32>
    %606 = vector.extract_strided_slice %585 {offsets = [3, 0], sizes = [1, 256], strides = [1, 1]} : vector<8x256xf32> to vector<1x256xf32>
    %607 = vector.broadcast %605 : vector<8x1xf32> to vector<8x256xf32>
    %608 = vector.broadcast %606 : vector<1x256xf32> to vector<8x256xf32>
    %609 = arith.mulf %607, %608 : vector<8x256xf32>
    %610 = arith.addf %604, %609 : vector<8x256xf32>
    %611 = vector.extract_strided_slice %587 {offsets = [0, 4], sizes = [8, 1], strides = [1, 1]} : vector<8x8xf32> to vector<8x1xf32>
    %612 = vector.extract_strided_slice %585 {offsets = [4, 0], sizes = [1, 256], strides = [1, 1]} : vector<8x256xf32> to vector<1x256xf32>
    %613 = vector.broadcast %611 : vector<8x1xf32> to vector<8x256xf32>
    %614 = vector.broadcast %612 : vector<1x256xf32> to vector<8x256xf32>
    %615 = arith.mulf %613, %614 : vector<8x256xf32>
    %616 = arith.addf %610, %615 : vector<8x256xf32>
    %617 = vector.extract_strided_slice %587 {offsets = [0, 5], sizes = [8, 1], strides = [1, 1]} : vector<8x8xf32> to vector<8x1xf32>
    %618 = vector.extract_strided_slice %585 {offsets = [5, 0], sizes = [1, 256], strides = [1, 1]} : vector<8x256xf32> to vector<1x256xf32>
    %619 = vector.broadcast %617 : vector<8x1xf32> to vector<8x256xf32>
    %620 = vector.broadcast %618 : vector<1x256xf32> to vector<8x256xf32>
    %621 = arith.mulf %619, %620 : vector<8x256xf32>
    %622 = arith.addf %616, %621 : vector<8x256xf32>
    %623 = vector.extract_strided_slice %587 {offsets = [0, 6], sizes = [8, 1], strides = [1, 1]} : vector<8x8xf32> to vector<8x1xf32>
    %624 = vector.extract_strided_slice %585 {offsets = [6, 0], sizes = [1, 256], strides = [1, 1]} : vector<8x256xf32> to vector<1x256xf32>
    %625 = vector.broadcast %623 : vector<8x1xf32> to vector<8x256xf32>
    %626 = vector.broadcast %624 : vector<1x256xf32> to vector<8x256xf32>
    %627 = arith.mulf %625, %626 : vector<8x256xf32>
    %628 = arith.addf %622, %627 : vector<8x256xf32>
    %629 = vector.extract_strided_slice %587 {offsets = [0, 7], sizes = [8, 1], strides = [1, 1]} : vector<8x8xf32> to vector<8x1xf32>
    %630 = vector.extract_strided_slice %585 {offsets = [7, 0], sizes = [1, 256], strides = [1, 1]} : vector<8x256xf32> to vector<1x256xf32>
    %631 = vector.broadcast %629 : vector<8x1xf32> to vector<8x256xf32>
    %632 = vector.broadcast %630 : vector<1x256xf32> to vector<8x256xf32>
    %633 = arith.mulf %631, %632 : vector<8x256xf32>
    %634 = arith.addf %628, %633 : vector<8x256xf32>
    %c1_44 = arith.constant 1 : index
    %c0_45 = arith.constant 0 : index
    %c0_46 = arith.constant 0 : index
    %635 = vector.load %arg4[%c1_44, %c0_45, %c0_46] : memref<9x8x8xf32, #tpu.memory_space<vmem>>, vector<1x8x8xf32>
    %636 = vector.shape_cast %635 : vector<1x8x8xf32> to vector<8x8xf32>
    %637 = vector.extract_strided_slice %636 {offsets = [0, 0], sizes = [8, 1], strides = [1, 1]} : vector<8x8xf32> to vector<8x1xf32>
    %638 = vector.extract_strided_slice %576 {offsets = [0, 0], sizes = [1, 256], strides = [1, 1]} : vector<8x256xf32> to vector<1x256xf32>
    %639 = vector.broadcast %637 : vector<8x1xf32> to vector<8x256xf32>
    %640 = vector.broadcast %638 : vector<1x256xf32> to vector<8x256xf32>
    %641 = arith.mulf %639, %640 : vector<8x256xf32>
    %642 = arith.addf %634, %641 : vector<8x256xf32>
    %643 = vector.extract_strided_slice %636 {offsets = [0, 1], sizes = [8, 1], strides = [1, 1]} : vector<8x8xf32> to vector<8x1xf32>
    %644 = vector.extract_strided_slice %576 {offsets = [1, 0], sizes = [1, 256], strides = [1, 1]} : vector<8x256xf32> to vector<1x256xf32>
    %645 = vector.broadcast %643 : vector<8x1xf32> to vector<8x256xf32>
    %646 = vector.broadcast %644 : vector<1x256xf32> to vector<8x256xf32>
    %647 = arith.mulf %645, %646 : vector<8x256xf32>
    %648 = arith.addf %642, %647 : vector<8x256xf32>
    %649 = vector.extract_strided_slice %636 {offsets = [0, 2], sizes = [8, 1], strides = [1, 1]} : vector<8x8xf32> to vector<8x1xf32>
    %650 = vector.extract_strided_slice %576 {offsets = [2, 0], sizes = [1, 256], strides = [1, 1]} : vector<8x256xf32> to vector<1x256xf32>
    %651 = vector.broadcast %649 : vector<8x1xf32> to vector<8x256xf32>
    %652 = vector.broadcast %650 : vector<1x256xf32> to vector<8x256xf32>
    %653 = arith.mulf %651, %652 : vector<8x256xf32>
    %654 = arith.addf %648, %653 : vector<8x256xf32>
    %655 = vector.extract_strided_slice %636 {offsets = [0, 3], sizes = [8, 1], strides = [1, 1]} : vector<8x8xf32> to vector<8x1xf32>
    %656 = vector.extract_strided_slice %576 {offsets = [3, 0], sizes = [1, 256], strides = [1, 1]} : vector<8x256xf32> to vector<1x256xf32>
    %657 = vector.broadcast %655 : vector<8x1xf32> to vector<8x256xf32>
    %658 = vector.broadcast %656 : vector<1x256xf32> to vector<8x256xf32>
    %659 = arith.mulf %657, %658 : vector<8x256xf32>
    %660 = arith.addf %654, %659 : vector<8x256xf32>
    %661 = vector.extract_strided_slice %636 {offsets = [0, 4], sizes = [8, 1], strides = [1, 1]} : vector<8x8xf32> to vector<8x1xf32>
    %662 = vector.extract_strided_slice %576 {offsets = [4, 0], sizes = [1, 256], strides = [1, 1]} : vector<8x256xf32> to vector<1x256xf32>
    %663 = vector.broadcast %661 : vector<8x1xf32> to vector<8x256xf32>
    %664 = vector.broadcast %662 : vector<1x256xf32> to vector<8x256xf32>
    %665 = arith.mulf %663, %664 : vector<8x256xf32>
    %666 = arith.addf %660, %665 : vector<8x256xf32>
    %667 = vector.extract_strided_slice %636 {offsets = [0, 5], sizes = [8, 1], strides = [1, 1]} : vector<8x8xf32> to vector<8x1xf32>
    %668 = vector.extract_strided_slice %576 {offsets = [5, 0], sizes = [1, 256], strides = [1, 1]} : vector<8x256xf32> to vector<1x256xf32>
    %669 = vector.broadcast %667 : vector<8x1xf32> to vector<8x256xf32>
    %670 = vector.broadcast %668 : vector<1x256xf32> to vector<8x256xf32>
    %671 = arith.mulf %669, %670 : vector<8x256xf32>
    %672 = arith.addf %666, %671 : vector<8x256xf32>
    %673 = vector.extract_strided_slice %636 {offsets = [0, 6], sizes = [8, 1], strides = [1, 1]} : vector<8x8xf32> to vector<8x1xf32>
    %674 = vector.extract_strided_slice %576 {offsets = [6, 0], sizes = [1, 256], strides = [1, 1]} : vector<8x256xf32> to vector<1x256xf32>
    %675 = vector.broadcast %673 : vector<8x1xf32> to vector<8x256xf32>
    %676 = vector.broadcast %674 : vector<1x256xf32> to vector<8x256xf32>
    %677 = arith.mulf %675, %676 : vector<8x256xf32>
    %678 = arith.addf %672, %677 : vector<8x256xf32>
    %679 = vector.extract_strided_slice %636 {offsets = [0, 7], sizes = [8, 1], strides = [1, 1]} : vector<8x8xf32> to vector<8x1xf32>
    %680 = vector.extract_strided_slice %576 {offsets = [7, 0], sizes = [1, 256], strides = [1, 1]} : vector<8x256xf32> to vector<1x256xf32>
    %681 = vector.broadcast %679 : vector<8x1xf32> to vector<8x256xf32>
    %682 = vector.broadcast %680 : vector<1x256xf32> to vector<8x256xf32>
    %683 = arith.mulf %681, %682 : vector<8x256xf32>
    %684 = arith.addf %678, %683 : vector<8x256xf32>
    %685 = vector.shape_cast %38 : vector<1x256xi1> to vector<1x256xi1>
    %686 = vector.broadcast %685 : vector<1x256xi1> to vector<8x256xi1>
    %687 = arith.select %686, %579, %582 : vector<8x256xi1>, vector<8x256xf32>
    %c2_47 = arith.constant 2 : index
    %c0_48 = arith.constant 0 : index
    %c0_49 = arith.constant 0 : index
    %688 = vector.load %arg4[%c2_47, %c0_48, %c0_49] : memref<9x8x8xf32, #tpu.memory_space<vmem>>, vector<1x8x8xf32>
    %689 = vector.shape_cast %688 : vector<1x8x8xf32> to vector<8x8xf32>
    %690 = vector.extract_strided_slice %689 {offsets = [0, 0], sizes = [8, 1], strides = [1, 1]} : vector<8x8xf32> to vector<8x1xf32>
    %691 = vector.extract_strided_slice %687 {offsets = [0, 0], sizes = [1, 256], strides = [1, 1]} : vector<8x256xf32> to vector<1x256xf32>
    %692 = vector.broadcast %690 : vector<8x1xf32> to vector<8x256xf32>
    %693 = vector.broadcast %691 : vector<1x256xf32> to vector<8x256xf32>
    %694 = arith.mulf %692, %693 : vector<8x256xf32>
    %695 = arith.addf %684, %694 : vector<8x256xf32>
    %696 = vector.extract_strided_slice %689 {offsets = [0, 1], sizes = [8, 1], strides = [1, 1]} : vector<8x8xf32> to vector<8x1xf32>
    %697 = vector.extract_strided_slice %687 {offsets = [1, 0], sizes = [1, 256], strides = [1, 1]} : vector<8x256xf32> to vector<1x256xf32>
    %698 = vector.broadcast %696 : vector<8x1xf32> to vector<8x256xf32>
    %699 = vector.broadcast %697 : vector<1x256xf32> to vector<8x256xf32>
    %700 = arith.mulf %698, %699 : vector<8x256xf32>
    %701 = arith.addf %695, %700 : vector<8x256xf32>
    %702 = vector.extract_strided_slice %689 {offsets = [0, 2], sizes = [8, 1], strides = [1, 1]} : vector<8x8xf32> to vector<8x1xf32>
    %703 = vector.extract_strided_slice %687 {offsets = [2, 0], sizes = [1, 256], strides = [1, 1]} : vector<8x256xf32> to vector<1x256xf32>
    %704 = vector.broadcast %702 : vector<8x1xf32> to vector<8x256xf32>
    %705 = vector.broadcast %703 : vector<1x256xf32> to vector<8x256xf32>
    %706 = arith.mulf %704, %705 : vector<8x256xf32>
    %707 = arith.addf %701, %706 : vector<8x256xf32>
    %708 = vector.extract_strided_slice %689 {offsets = [0, 3], sizes = [8, 1], strides = [1, 1]} : vector<8x8xf32> to vector<8x1xf32>
    %709 = vector.extract_strided_slice %687 {offsets = [3, 0], sizes = [1, 256], strides = [1, 1]} : vector<8x256xf32> to vector<1x256xf32>
    %710 = vector.broadcast %708 : vector<8x1xf32> to vector<8x256xf32>
    %711 = vector.broadcast %709 : vector<1x256xf32> to vector<8x256xf32>
    %712 = arith.mulf %710, %711 : vector<8x256xf32>
    %713 = arith.addf %707, %712 : vector<8x256xf32>
    %714 = vector.extract_strided_slice %689 {offsets = [0, 4], sizes = [8, 1], strides = [1, 1]} : vector<8x8xf32> to vector<8x1xf32>
    %715 = vector.extract_strided_slice %687 {offsets = [4, 0], sizes = [1, 256], strides = [1, 1]} : vector<8x256xf32> to vector<1x256xf32>
    %716 = vector.broadcast %714 : vector<8x1xf32> to vector<8x256xf32>
    %717 = vector.broadcast %715 : vector<1x256xf32> to vector<8x256xf32>
    %718 = arith.mulf %716, %717 : vector<8x256xf32>
    %719 = arith.addf %713, %718 : vector<8x256xf32>
    %720 = vector.extract_strided_slice %689 {offsets = [0, 5], sizes = [8, 1], strides = [1, 1]} : vector<8x8xf32> to vector<8x1xf32>
    %721 = vector.extract_strided_slice %687 {offsets = [5, 0], sizes = [1, 256], strides = [1, 1]} : vector<8x256xf32> to vector<1x256xf32>
    %722 = vector.broadcast %720 : vector<8x1xf32> to vector<8x256xf32>
    %723 = vector.broadcast %721 : vector<1x256xf32> to vector<8x256xf32>
    %724 = arith.mulf %722, %723 : vector<8x256xf32>
    %725 = arith.addf %719, %724 : vector<8x256xf32>
    %726 = vector.extract_strided_slice %689 {offsets = [0, 6], sizes = [8, 1], strides = [1, 1]} : vector<8x8xf32> to vector<8x1xf32>
    %727 = vector.extract_strided_slice %687 {offsets = [6, 0], sizes = [1, 256], strides = [1, 1]} : vector<8x256xf32> to vector<1x256xf32>
    %728 = vector.broadcast %726 : vector<8x1xf32> to vector<8x256xf32>
    %729 = vector.broadcast %727 : vector<1x256xf32> to vector<8x256xf32>
    %730 = arith.mulf %728, %729 : vector<8x256xf32>
    %731 = arith.addf %725, %730 : vector<8x256xf32>
    %732 = vector.extract_strided_slice %689 {offsets = [0, 7], sizes = [8, 1], strides = [1, 1]} : vector<8x8xf32> to vector<8x1xf32>
    %733 = vector.extract_strided_slice %687 {offsets = [7, 0], sizes = [1, 256], strides = [1, 1]} : vector<8x256xf32> to vector<1x256xf32>
    %734 = vector.broadcast %732 : vector<8x1xf32> to vector<8x256xf32>
    %735 = vector.broadcast %733 : vector<1x256xf32> to vector<8x256xf32>
    %736 = arith.mulf %734, %735 : vector<8x256xf32>
    %737 = arith.addf %731, %736 : vector<8x256xf32>
    %738 = vector.extract_strided_slice %566 {offsets = [0, 255], sizes = [8, 1], strides = [1, 1]} : vector<8x256xf32> to vector<8x1xf32>
    %739 = vector.extract_strided_slice %566 {offsets = [0, 0], sizes = [8, 255], strides = [1, 1]} : vector<8x256xf32> to vector<8x255xf32>
    %740 = tpu.concatenate %738, %739 in 1 : vector<8x1xf32>, vector<8x255xf32> -> vector<8x256xf32>
    %741 = vector.extract_strided_slice %566 {offsets = [0, 1], sizes = [8, 255], strides = [1, 1]} : vector<8x256xf32> to vector<8x255xf32>
    %742 = vector.extract_strided_slice %566 {offsets = [0, 0], sizes = [8, 1], strides = [1, 1]} : vector<8x256xf32> to vector<8x1xf32>
    %743 = tpu.concatenate %741, %742 in 1 : vector<8x255xf32>, vector<8x1xf32> -> vector<8x256xf32>
    %744 = vector.shape_cast %20 : vector<1x256xi1> to vector<1x256xi1>
    %745 = vector.broadcast %744 : vector<1x256xi1> to vector<8x256xi1>
    %746 = arith.select %745, %743, %740 : vector<8x256xi1>, vector<8x256xf32>
    %c3_50 = arith.constant 3 : index
    %c0_51 = arith.constant 0 : index
    %c0_52 = arith.constant 0 : index
    %747 = vector.load %arg4[%c3_50, %c0_51, %c0_52] : memref<9x8x8xf32, #tpu.memory_space<vmem>>, vector<1x8x8xf32>
    %748 = vector.shape_cast %747 : vector<1x8x8xf32> to vector<8x8xf32>
    %749 = vector.extract_strided_slice %748 {offsets = [0, 0], sizes = [8, 1], strides = [1, 1]} : vector<8x8xf32> to vector<8x1xf32>
    %750 = vector.extract_strided_slice %746 {offsets = [0, 0], sizes = [1, 256], strides = [1, 1]} : vector<8x256xf32> to vector<1x256xf32>
    %751 = vector.broadcast %749 : vector<8x1xf32> to vector<8x256xf32>
    %752 = vector.broadcast %750 : vector<1x256xf32> to vector<8x256xf32>
    %753 = arith.mulf %751, %752 : vector<8x256xf32>
    %754 = vector.extract_strided_slice %748 {offsets = [0, 1], sizes = [8, 1], strides = [1, 1]} : vector<8x8xf32> to vector<8x1xf32>
    %755 = vector.extract_strided_slice %746 {offsets = [1, 0], sizes = [1, 256], strides = [1, 1]} : vector<8x256xf32> to vector<1x256xf32>
    %756 = vector.broadcast %754 : vector<8x1xf32> to vector<8x256xf32>
    %757 = vector.broadcast %755 : vector<1x256xf32> to vector<8x256xf32>
    %758 = arith.mulf %756, %757 : vector<8x256xf32>
    %759 = arith.addf %753, %758 : vector<8x256xf32>
    %760 = vector.extract_strided_slice %748 {offsets = [0, 2], sizes = [8, 1], strides = [1, 1]} : vector<8x8xf32> to vector<8x1xf32>
    %761 = vector.extract_strided_slice %746 {offsets = [2, 0], sizes = [1, 256], strides = [1, 1]} : vector<8x256xf32> to vector<1x256xf32>
    %762 = vector.broadcast %760 : vector<8x1xf32> to vector<8x256xf32>
    %763 = vector.broadcast %761 : vector<1x256xf32> to vector<8x256xf32>
    %764 = arith.mulf %762, %763 : vector<8x256xf32>
    %765 = arith.addf %759, %764 : vector<8x256xf32>
    %766 = vector.extract_strided_slice %748 {offsets = [0, 3], sizes = [8, 1], strides = [1, 1]} : vector<8x8xf32> to vector<8x1xf32>
    %767 = vector.extract_strided_slice %746 {offsets = [3, 0], sizes = [1, 256], strides = [1, 1]} : vector<8x256xf32> to vector<1x256xf32>
    %768 = vector.broadcast %766 : vector<8x1xf32> to vector<8x256xf32>
    %769 = vector.broadcast %767 : vector<1x256xf32> to vector<8x256xf32>
    %770 = arith.mulf %768, %769 : vector<8x256xf32>
    %771 = arith.addf %765, %770 : vector<8x256xf32>
    %772 = vector.extract_strided_slice %748 {offsets = [0, 4], sizes = [8, 1], strides = [1, 1]} : vector<8x8xf32> to vector<8x1xf32>
    %773 = vector.extract_strided_slice %746 {offsets = [4, 0], sizes = [1, 256], strides = [1, 1]} : vector<8x256xf32> to vector<1x256xf32>
    %774 = vector.broadcast %772 : vector<8x1xf32> to vector<8x256xf32>
    %775 = vector.broadcast %773 : vector<1x256xf32> to vector<8x256xf32>
    %776 = arith.mulf %774, %775 : vector<8x256xf32>
    %777 = arith.addf %771, %776 : vector<8x256xf32>
    %778 = vector.extract_strided_slice %748 {offsets = [0, 5], sizes = [8, 1], strides = [1, 1]} : vector<8x8xf32> to vector<8x1xf32>
    %779 = vector.extract_strided_slice %746 {offsets = [5, 0], sizes = [1, 256], strides = [1, 1]} : vector<8x256xf32> to vector<1x256xf32>
    %780 = vector.broadcast %778 : vector<8x1xf32> to vector<8x256xf32>
    %781 = vector.broadcast %779 : vector<1x256xf32> to vector<8x256xf32>
    %782 = arith.mulf %780, %781 : vector<8x256xf32>
    %783 = arith.addf %777, %782 : vector<8x256xf32>
    %784 = vector.extract_strided_slice %748 {offsets = [0, 6], sizes = [8, 1], strides = [1, 1]} : vector<8x8xf32> to vector<8x1xf32>
    %785 = vector.extract_strided_slice %746 {offsets = [6, 0], sizes = [1, 256], strides = [1, 1]} : vector<8x256xf32> to vector<1x256xf32>
    %786 = vector.broadcast %784 : vector<8x1xf32> to vector<8x256xf32>
    %787 = vector.broadcast %785 : vector<1x256xf32> to vector<8x256xf32>
    %788 = arith.mulf %786, %787 : vector<8x256xf32>
    %789 = arith.addf %783, %788 : vector<8x256xf32>
    %790 = vector.extract_strided_slice %748 {offsets = [0, 7], sizes = [8, 1], strides = [1, 1]} : vector<8x8xf32> to vector<8x1xf32>
    %791 = vector.extract_strided_slice %746 {offsets = [7, 0], sizes = [1, 256], strides = [1, 1]} : vector<8x256xf32> to vector<1x256xf32>
    %792 = vector.broadcast %790 : vector<8x1xf32> to vector<8x256xf32>
    %793 = vector.broadcast %791 : vector<1x256xf32> to vector<8x256xf32>
    %794 = arith.mulf %792, %793 : vector<8x256xf32>
    %795 = arith.addf %789, %794 : vector<8x256xf32>
    %c4_53 = arith.constant 4 : index
    %c0_54 = arith.constant 0 : index
    %c0_55 = arith.constant 0 : index
    %796 = vector.load %arg4[%c4_53, %c0_54, %c0_55] : memref<9x8x8xf32, #tpu.memory_space<vmem>>, vector<1x8x8xf32>
    %797 = vector.shape_cast %796 : vector<1x8x8xf32> to vector<8x8xf32>
    %798 = vector.extract_strided_slice %797 {offsets = [0, 0], sizes = [8, 1], strides = [1, 1]} : vector<8x8xf32> to vector<8x1xf32>
    %799 = vector.extract_strided_slice %566 {offsets = [0, 0], sizes = [1, 256], strides = [1, 1]} : vector<8x256xf32> to vector<1x256xf32>
    %800 = vector.broadcast %798 : vector<8x1xf32> to vector<8x256xf32>
    %801 = vector.broadcast %799 : vector<1x256xf32> to vector<8x256xf32>
    %802 = arith.mulf %800, %801 : vector<8x256xf32>
    %803 = arith.addf %795, %802 : vector<8x256xf32>
    %804 = vector.extract_strided_slice %797 {offsets = [0, 1], sizes = [8, 1], strides = [1, 1]} : vector<8x8xf32> to vector<8x1xf32>
    %805 = vector.extract_strided_slice %566 {offsets = [1, 0], sizes = [1, 256], strides = [1, 1]} : vector<8x256xf32> to vector<1x256xf32>
    %806 = vector.broadcast %804 : vector<8x1xf32> to vector<8x256xf32>
    %807 = vector.broadcast %805 : vector<1x256xf32> to vector<8x256xf32>
    %808 = arith.mulf %806, %807 : vector<8x256xf32>
    %809 = arith.addf %803, %808 : vector<8x256xf32>
    %810 = vector.extract_strided_slice %797 {offsets = [0, 2], sizes = [8, 1], strides = [1, 1]} : vector<8x8xf32> to vector<8x1xf32>
    %811 = vector.extract_strided_slice %566 {offsets = [2, 0], sizes = [1, 256], strides = [1, 1]} : vector<8x256xf32> to vector<1x256xf32>
    %812 = vector.broadcast %810 : vector<8x1xf32> to vector<8x256xf32>
    %813 = vector.broadcast %811 : vector<1x256xf32> to vector<8x256xf32>
    %814 = arith.mulf %812, %813 : vector<8x256xf32>
    %815 = arith.addf %809, %814 : vector<8x256xf32>
    %816 = vector.extract_strided_slice %797 {offsets = [0, 3], sizes = [8, 1], strides = [1, 1]} : vector<8x8xf32> to vector<8x1xf32>
    %817 = vector.extract_strided_slice %566 {offsets = [3, 0], sizes = [1, 256], strides = [1, 1]} : vector<8x256xf32> to vector<1x256xf32>
    %818 = vector.broadcast %816 : vector<8x1xf32> to vector<8x256xf32>
    %819 = vector.broadcast %817 : vector<1x256xf32> to vector<8x256xf32>
    %820 = arith.mulf %818, %819 : vector<8x256xf32>
    %821 = arith.addf %815, %820 : vector<8x256xf32>
    %822 = vector.extract_strided_slice %797 {offsets = [0, 4], sizes = [8, 1], strides = [1, 1]} : vector<8x8xf32> to vector<8x1xf32>
    %823 = vector.extract_strided_slice %566 {offsets = [4, 0], sizes = [1, 256], strides = [1, 1]} : vector<8x256xf32> to vector<1x256xf32>
    %824 = vector.broadcast %822 : vector<8x1xf32> to vector<8x256xf32>
    %825 = vector.broadcast %823 : vector<1x256xf32> to vector<8x256xf32>
    %826 = arith.mulf %824, %825 : vector<8x256xf32>
    %827 = arith.addf %821, %826 : vector<8x256xf32>
    %828 = vector.extract_strided_slice %797 {offsets = [0, 5], sizes = [8, 1], strides = [1, 1]} : vector<8x8xf32> to vector<8x1xf32>
    %829 = vector.extract_strided_slice %566 {offsets = [5, 0], sizes = [1, 256], strides = [1, 1]} : vector<8x256xf32> to vector<1x256xf32>
    %830 = vector.broadcast %828 : vector<8x1xf32> to vector<8x256xf32>
    %831 = vector.broadcast %829 : vector<1x256xf32> to vector<8x256xf32>
    %832 = arith.mulf %830, %831 : vector<8x256xf32>
    %833 = arith.addf %827, %832 : vector<8x256xf32>
    %834 = vector.extract_strided_slice %797 {offsets = [0, 6], sizes = [8, 1], strides = [1, 1]} : vector<8x8xf32> to vector<8x1xf32>
    %835 = vector.extract_strided_slice %566 {offsets = [6, 0], sizes = [1, 256], strides = [1, 1]} : vector<8x256xf32> to vector<1x256xf32>
    %836 = vector.broadcast %834 : vector<8x1xf32> to vector<8x256xf32>
    %837 = vector.broadcast %835 : vector<1x256xf32> to vector<8x256xf32>
    %838 = arith.mulf %836, %837 : vector<8x256xf32>
    %839 = arith.addf %833, %838 : vector<8x256xf32>
    %840 = vector.extract_strided_slice %797 {offsets = [0, 7], sizes = [8, 1], strides = [1, 1]} : vector<8x8xf32> to vector<8x1xf32>
    %841 = vector.extract_strided_slice %566 {offsets = [7, 0], sizes = [1, 256], strides = [1, 1]} : vector<8x256xf32> to vector<1x256xf32>
    %842 = vector.broadcast %840 : vector<8x1xf32> to vector<8x256xf32>
    %843 = vector.broadcast %841 : vector<1x256xf32> to vector<8x256xf32>
    %844 = arith.mulf %842, %843 : vector<8x256xf32>
    %845 = arith.addf %839, %844 : vector<8x256xf32>
    %846 = vector.shape_cast %38 : vector<1x256xi1> to vector<1x256xi1>
    %847 = vector.broadcast %846 : vector<1x256xi1> to vector<8x256xi1>
    %848 = arith.select %847, %740, %743 : vector<8x256xi1>, vector<8x256xf32>
    %c5_56 = arith.constant 5 : index
    %c0_57 = arith.constant 0 : index
    %c0_58 = arith.constant 0 : index
    %849 = vector.load %arg4[%c5_56, %c0_57, %c0_58] : memref<9x8x8xf32, #tpu.memory_space<vmem>>, vector<1x8x8xf32>
    %850 = vector.shape_cast %849 : vector<1x8x8xf32> to vector<8x8xf32>
    %851 = vector.extract_strided_slice %850 {offsets = [0, 0], sizes = [8, 1], strides = [1, 1]} : vector<8x8xf32> to vector<8x1xf32>
    %852 = vector.extract_strided_slice %848 {offsets = [0, 0], sizes = [1, 256], strides = [1, 1]} : vector<8x256xf32> to vector<1x256xf32>
    %853 = vector.broadcast %851 : vector<8x1xf32> to vector<8x256xf32>
    %854 = vector.broadcast %852 : vector<1x256xf32> to vector<8x256xf32>
    %855 = arith.mulf %853, %854 : vector<8x256xf32>
    %856 = arith.addf %845, %855 : vector<8x256xf32>
    %857 = vector.extract_strided_slice %850 {offsets = [0, 1], sizes = [8, 1], strides = [1, 1]} : vector<8x8xf32> to vector<8x1xf32>
    %858 = vector.extract_strided_slice %848 {offsets = [1, 0], sizes = [1, 256], strides = [1, 1]} : vector<8x256xf32> to vector<1x256xf32>
    %859 = vector.broadcast %857 : vector<8x1xf32> to vector<8x256xf32>
    %860 = vector.broadcast %858 : vector<1x256xf32> to vector<8x256xf32>
    %861 = arith.mulf %859, %860 : vector<8x256xf32>
    %862 = arith.addf %856, %861 : vector<8x256xf32>
    %863 = vector.extract_strided_slice %850 {offsets = [0, 2], sizes = [8, 1], strides = [1, 1]} : vector<8x8xf32> to vector<8x1xf32>
    %864 = vector.extract_strided_slice %848 {offsets = [2, 0], sizes = [1, 256], strides = [1, 1]} : vector<8x256xf32> to vector<1x256xf32>
    %865 = vector.broadcast %863 : vector<8x1xf32> to vector<8x256xf32>
    %866 = vector.broadcast %864 : vector<1x256xf32> to vector<8x256xf32>
    %867 = arith.mulf %865, %866 : vector<8x256xf32>
    %868 = arith.addf %862, %867 : vector<8x256xf32>
    %869 = vector.extract_strided_slice %850 {offsets = [0, 3], sizes = [8, 1], strides = [1, 1]} : vector<8x8xf32> to vector<8x1xf32>
    %870 = vector.extract_strided_slice %848 {offsets = [3, 0], sizes = [1, 256], strides = [1, 1]} : vector<8x256xf32> to vector<1x256xf32>
    %871 = vector.broadcast %869 : vector<8x1xf32> to vector<8x256xf32>
    %872 = vector.broadcast %870 : vector<1x256xf32> to vector<8x256xf32>
    %873 = arith.mulf %871, %872 : vector<8x256xf32>
    %874 = arith.addf %868, %873 : vector<8x256xf32>
    %875 = vector.extract_strided_slice %850 {offsets = [0, 4], sizes = [8, 1], strides = [1, 1]} : vector<8x8xf32> to vector<8x1xf32>
    %876 = vector.extract_strided_slice %848 {offsets = [4, 0], sizes = [1, 256], strides = [1, 1]} : vector<8x256xf32> to vector<1x256xf32>
    %877 = vector.broadcast %875 : vector<8x1xf32> to vector<8x256xf32>
    %878 = vector.broadcast %876 : vector<1x256xf32> to vector<8x256xf32>
    %879 = arith.mulf %877, %878 : vector<8x256xf32>
    %880 = arith.addf %874, %879 : vector<8x256xf32>
    %881 = vector.extract_strided_slice %850 {offsets = [0, 5], sizes = [8, 1], strides = [1, 1]} : vector<8x8xf32> to vector<8x1xf32>
    %882 = vector.extract_strided_slice %848 {offsets = [5, 0], sizes = [1, 256], strides = [1, 1]} : vector<8x256xf32> to vector<1x256xf32>
    %883 = vector.broadcast %881 : vector<8x1xf32> to vector<8x256xf32>
    %884 = vector.broadcast %882 : vector<1x256xf32> to vector<8x256xf32>
    %885 = arith.mulf %883, %884 : vector<8x256xf32>
    %886 = arith.addf %880, %885 : vector<8x256xf32>
    %887 = vector.extract_strided_slice %850 {offsets = [0, 6], sizes = [8, 1], strides = [1, 1]} : vector<8x8xf32> to vector<8x1xf32>
    %888 = vector.extract_strided_slice %848 {offsets = [6, 0], sizes = [1, 256], strides = [1, 1]} : vector<8x256xf32> to vector<1x256xf32>
    %889 = vector.broadcast %887 : vector<8x1xf32> to vector<8x256xf32>
    %890 = vector.broadcast %888 : vector<1x256xf32> to vector<8x256xf32>
    %891 = arith.mulf %889, %890 : vector<8x256xf32>
    %892 = arith.addf %886, %891 : vector<8x256xf32>
    %893 = vector.extract_strided_slice %850 {offsets = [0, 7], sizes = [8, 1], strides = [1, 1]} : vector<8x8xf32> to vector<8x1xf32>
    %894 = vector.extract_strided_slice %848 {offsets = [7, 0], sizes = [1, 256], strides = [1, 1]} : vector<8x256xf32> to vector<1x256xf32>
    %895 = vector.broadcast %893 : vector<8x1xf32> to vector<8x256xf32>
    %896 = vector.broadcast %894 : vector<1x256xf32> to vector<8x256xf32>
    %897 = arith.mulf %895, %896 : vector<8x256xf32>
    %898 = arith.addf %892, %897 : vector<8x256xf32>
    %899 = vector.extract_strided_slice %566 {offsets = [0, 240], sizes = [8, 16], strides = [1, 1]} : vector<8x256xf32> to vector<8x16xf32>
    %900 = vector.extract_strided_slice %566 {offsets = [0, 0], sizes = [8, 240], strides = [1, 1]} : vector<8x256xf32> to vector<8x240xf32>
    %901 = tpu.concatenate %899, %900 in 1 : vector<8x16xf32>, vector<8x240xf32> -> vector<8x256xf32>
    %902 = vector.extract_strided_slice %566 {offsets = [0, 16], sizes = [8, 240], strides = [1, 1]} : vector<8x256xf32> to vector<8x240xf32>
    %903 = vector.extract_strided_slice %566 {offsets = [0, 0], sizes = [8, 16], strides = [1, 1]} : vector<8x256xf32> to vector<8x16xf32>
    %904 = tpu.concatenate %902, %903 in 1 : vector<8x240xf32>, vector<8x16xf32> -> vector<8x256xf32>
    %905 = vector.shape_cast %42 : vector<1x256xi1> to vector<1x256xi1>
    %906 = vector.broadcast %905 : vector<1x256xi1> to vector<8x256xi1>
    %907 = arith.select %906, %901, %904 : vector<8x256xi1>, vector<8x256xf32>
    %908 = vector.extract_strided_slice %907 {offsets = [0, 255], sizes = [8, 1], strides = [1, 1]} : vector<8x256xf32> to vector<8x1xf32>
    %909 = vector.extract_strided_slice %907 {offsets = [0, 0], sizes = [8, 255], strides = [1, 1]} : vector<8x256xf32> to vector<8x255xf32>
    %910 = tpu.concatenate %908, %909 in 1 : vector<8x1xf32>, vector<8x255xf32> -> vector<8x256xf32>
    %911 = vector.extract_strided_slice %907 {offsets = [0, 1], sizes = [8, 255], strides = [1, 1]} : vector<8x256xf32> to vector<8x255xf32>
    %912 = vector.extract_strided_slice %907 {offsets = [0, 0], sizes = [8, 1], strides = [1, 1]} : vector<8x256xf32> to vector<8x1xf32>
    %913 = tpu.concatenate %911, %912 in 1 : vector<8x255xf32>, vector<8x1xf32> -> vector<8x256xf32>
    %914 = vector.shape_cast %20 : vector<1x256xi1> to vector<1x256xi1>
    %915 = vector.broadcast %914 : vector<1x256xi1> to vector<8x256xi1>
    %916 = arith.select %915, %913, %910 : vector<8x256xi1>, vector<8x256xf32>
    %c6_59 = arith.constant 6 : index
    %c0_60 = arith.constant 0 : index
    %c0_61 = arith.constant 0 : index
    %917 = vector.load %arg4[%c6_59, %c0_60, %c0_61] : memref<9x8x8xf32, #tpu.memory_space<vmem>>, vector<1x8x8xf32>
    %918 = vector.shape_cast %917 : vector<1x8x8xf32> to vector<8x8xf32>
    %919 = vector.extract_strided_slice %918 {offsets = [0, 0], sizes = [8, 1], strides = [1, 1]} : vector<8x8xf32> to vector<8x1xf32>
    %920 = vector.extract_strided_slice %916 {offsets = [0, 0], sizes = [1, 256], strides = [1, 1]} : vector<8x256xf32> to vector<1x256xf32>
    %921 = vector.broadcast %919 : vector<8x1xf32> to vector<8x256xf32>
    %922 = vector.broadcast %920 : vector<1x256xf32> to vector<8x256xf32>
    %923 = arith.mulf %921, %922 : vector<8x256xf32>
    %924 = vector.extract_strided_slice %918 {offsets = [0, 1], sizes = [8, 1], strides = [1, 1]} : vector<8x8xf32> to vector<8x1xf32>
    %925 = vector.extract_strided_slice %916 {offsets = [1, 0], sizes = [1, 256], strides = [1, 1]} : vector<8x256xf32> to vector<1x256xf32>
    %926 = vector.broadcast %924 : vector<8x1xf32> to vector<8x256xf32>
    %927 = vector.broadcast %925 : vector<1x256xf32> to vector<8x256xf32>
    %928 = arith.mulf %926, %927 : vector<8x256xf32>
    %929 = arith.addf %923, %928 : vector<8x256xf32>
    %930 = vector.extract_strided_slice %918 {offsets = [0, 2], sizes = [8, 1], strides = [1, 1]} : vector<8x8xf32> to vector<8x1xf32>
    %931 = vector.extract_strided_slice %916 {offsets = [2, 0], sizes = [1, 256], strides = [1, 1]} : vector<8x256xf32> to vector<1x256xf32>
    %932 = vector.broadcast %930 : vector<8x1xf32> to vector<8x256xf32>
    %933 = vector.broadcast %931 : vector<1x256xf32> to vector<8x256xf32>
    %934 = arith.mulf %932, %933 : vector<8x256xf32>
    %935 = arith.addf %929, %934 : vector<8x256xf32>
    %936 = vector.extract_strided_slice %918 {offsets = [0, 3], sizes = [8, 1], strides = [1, 1]} : vector<8x8xf32> to vector<8x1xf32>
    %937 = vector.extract_strided_slice %916 {offsets = [3, 0], sizes = [1, 256], strides = [1, 1]} : vector<8x256xf32> to vector<1x256xf32>
    %938 = vector.broadcast %936 : vector<8x1xf32> to vector<8x256xf32>
    %939 = vector.broadcast %937 : vector<1x256xf32> to vector<8x256xf32>
    %940 = arith.mulf %938, %939 : vector<8x256xf32>
    %941 = arith.addf %935, %940 : vector<8x256xf32>
    %942 = vector.extract_strided_slice %918 {offsets = [0, 4], sizes = [8, 1], strides = [1, 1]} : vector<8x8xf32> to vector<8x1xf32>
    %943 = vector.extract_strided_slice %916 {offsets = [4, 0], sizes = [1, 256], strides = [1, 1]} : vector<8x256xf32> to vector<1x256xf32>
    %944 = vector.broadcast %942 : vector<8x1xf32> to vector<8x256xf32>
    %945 = vector.broadcast %943 : vector<1x256xf32> to vector<8x256xf32>
    %946 = arith.mulf %944, %945 : vector<8x256xf32>
    %947 = arith.addf %941, %946 : vector<8x256xf32>
    %948 = vector.extract_strided_slice %918 {offsets = [0, 5], sizes = [8, 1], strides = [1, 1]} : vector<8x8xf32> to vector<8x1xf32>
    %949 = vector.extract_strided_slice %916 {offsets = [5, 0], sizes = [1, 256], strides = [1, 1]} : vector<8x256xf32> to vector<1x256xf32>
    %950 = vector.broadcast %948 : vector<8x1xf32> to vector<8x256xf32>
    %951 = vector.broadcast %949 : vector<1x256xf32> to vector<8x256xf32>
    %952 = arith.mulf %950, %951 : vector<8x256xf32>
    %953 = arith.addf %947, %952 : vector<8x256xf32>
    %954 = vector.extract_strided_slice %918 {offsets = [0, 6], sizes = [8, 1], strides = [1, 1]} : vector<8x8xf32> to vector<8x1xf32>
    %955 = vector.extract_strided_slice %916 {offsets = [6, 0], sizes = [1, 256], strides = [1, 1]} : vector<8x256xf32> to vector<1x256xf32>
    %956 = vector.broadcast %954 : vector<8x1xf32> to vector<8x256xf32>
    %957 = vector.broadcast %955 : vector<1x256xf32> to vector<8x256xf32>
    %958 = arith.mulf %956, %957 : vector<8x256xf32>
    %959 = arith.addf %953, %958 : vector<8x256xf32>
    %960 = vector.extract_strided_slice %918 {offsets = [0, 7], sizes = [8, 1], strides = [1, 1]} : vector<8x8xf32> to vector<8x1xf32>
    %961 = vector.extract_strided_slice %916 {offsets = [7, 0], sizes = [1, 256], strides = [1, 1]} : vector<8x256xf32> to vector<1x256xf32>
    %962 = vector.broadcast %960 : vector<8x1xf32> to vector<8x256xf32>
    %963 = vector.broadcast %961 : vector<1x256xf32> to vector<8x256xf32>
    %964 = arith.mulf %962, %963 : vector<8x256xf32>
    %965 = arith.addf %959, %964 : vector<8x256xf32>
    %c7_62 = arith.constant 7 : index
    %c0_63 = arith.constant 0 : index
    %c0_64 = arith.constant 0 : index
    %966 = vector.load %arg4[%c7_62, %c0_63, %c0_64] : memref<9x8x8xf32, #tpu.memory_space<vmem>>, vector<1x8x8xf32>
    %967 = vector.shape_cast %966 : vector<1x8x8xf32> to vector<8x8xf32>
    %968 = vector.extract_strided_slice %967 {offsets = [0, 0], sizes = [8, 1], strides = [1, 1]} : vector<8x8xf32> to vector<8x1xf32>
    %969 = vector.extract_strided_slice %907 {offsets = [0, 0], sizes = [1, 256], strides = [1, 1]} : vector<8x256xf32> to vector<1x256xf32>
    %970 = vector.broadcast %968 : vector<8x1xf32> to vector<8x256xf32>
    %971 = vector.broadcast %969 : vector<1x256xf32> to vector<8x256xf32>
    %972 = arith.mulf %970, %971 : vector<8x256xf32>
    %973 = arith.addf %965, %972 : vector<8x256xf32>
    %974 = vector.extract_strided_slice %967 {offsets = [0, 1], sizes = [8, 1], strides = [1, 1]} : vector<8x8xf32> to vector<8x1xf32>
    %975 = vector.extract_strided_slice %907 {offsets = [1, 0], sizes = [1, 256], strides = [1, 1]} : vector<8x256xf32> to vector<1x256xf32>
    %976 = vector.broadcast %974 : vector<8x1xf32> to vector<8x256xf32>
    %977 = vector.broadcast %975 : vector<1x256xf32> to vector<8x256xf32>
    %978 = arith.mulf %976, %977 : vector<8x256xf32>
    %979 = arith.addf %973, %978 : vector<8x256xf32>
    %980 = vector.extract_strided_slice %967 {offsets = [0, 2], sizes = [8, 1], strides = [1, 1]} : vector<8x8xf32> to vector<8x1xf32>
    %981 = vector.extract_strided_slice %907 {offsets = [2, 0], sizes = [1, 256], strides = [1, 1]} : vector<8x256xf32> to vector<1x256xf32>
    %982 = vector.broadcast %980 : vector<8x1xf32> to vector<8x256xf32>
    %983 = vector.broadcast %981 : vector<1x256xf32> to vector<8x256xf32>
    %984 = arith.mulf %982, %983 : vector<8x256xf32>
    %985 = arith.addf %979, %984 : vector<8x256xf32>
    %986 = vector.extract_strided_slice %967 {offsets = [0, 3], sizes = [8, 1], strides = [1, 1]} : vector<8x8xf32> to vector<8x1xf32>
    %987 = vector.extract_strided_slice %907 {offsets = [3, 0], sizes = [1, 256], strides = [1, 1]} : vector<8x256xf32> to vector<1x256xf32>
    %988 = vector.broadcast %986 : vector<8x1xf32> to vector<8x256xf32>
    %989 = vector.broadcast %987 : vector<1x256xf32> to vector<8x256xf32>
    %990 = arith.mulf %988, %989 : vector<8x256xf32>
    %991 = arith.addf %985, %990 : vector<8x256xf32>
    %992 = vector.extract_strided_slice %967 {offsets = [0, 4], sizes = [8, 1], strides = [1, 1]} : vector<8x8xf32> to vector<8x1xf32>
    %993 = vector.extract_strided_slice %907 {offsets = [4, 0], sizes = [1, 256], strides = [1, 1]} : vector<8x256xf32> to vector<1x256xf32>
    %994 = vector.broadcast %992 : vector<8x1xf32> to vector<8x256xf32>
    %995 = vector.broadcast %993 : vector<1x256xf32> to vector<8x256xf32>
    %996 = arith.mulf %994, %995 : vector<8x256xf32>
    %997 = arith.addf %991, %996 : vector<8x256xf32>
    %998 = vector.extract_strided_slice %967 {offsets = [0, 5], sizes = [8, 1], strides = [1, 1]} : vector<8x8xf32> to vector<8x1xf32>
    %999 = vector.extract_strided_slice %907 {offsets = [5, 0], sizes = [1, 256], strides = [1, 1]} : vector<8x256xf32> to vector<1x256xf32>
    %1000 = vector.broadcast %998 : vector<8x1xf32> to vector<8x256xf32>
    %1001 = vector.broadcast %999 : vector<1x256xf32> to vector<8x256xf32>
    %1002 = arith.mulf %1000, %1001 : vector<8x256xf32>
    %1003 = arith.addf %997, %1002 : vector<8x256xf32>
    %1004 = vector.extract_strided_slice %967 {offsets = [0, 6], sizes = [8, 1], strides = [1, 1]} : vector<8x8xf32> to vector<8x1xf32>
    %1005 = vector.extract_strided_slice %907 {offsets = [6, 0], sizes = [1, 256], strides = [1, 1]} : vector<8x256xf32> to vector<1x256xf32>
    %1006 = vector.broadcast %1004 : vector<8x1xf32> to vector<8x256xf32>
    %1007 = vector.broadcast %1005 : vector<1x256xf32> to vector<8x256xf32>
    %1008 = arith.mulf %1006, %1007 : vector<8x256xf32>
    %1009 = arith.addf %1003, %1008 : vector<8x256xf32>
    %1010 = vector.extract_strided_slice %967 {offsets = [0, 7], sizes = [8, 1], strides = [1, 1]} : vector<8x8xf32> to vector<8x1xf32>
    %1011 = vector.extract_strided_slice %907 {offsets = [7, 0], sizes = [1, 256], strides = [1, 1]} : vector<8x256xf32> to vector<1x256xf32>
    %1012 = vector.broadcast %1010 : vector<8x1xf32> to vector<8x256xf32>
    %1013 = vector.broadcast %1011 : vector<1x256xf32> to vector<8x256xf32>
    %1014 = arith.mulf %1012, %1013 : vector<8x256xf32>
    %1015 = arith.addf %1009, %1014 : vector<8x256xf32>
    %1016 = vector.shape_cast %38 : vector<1x256xi1> to vector<1x256xi1>
    %1017 = vector.broadcast %1016 : vector<1x256xi1> to vector<8x256xi1>
    %1018 = arith.select %1017, %910, %913 : vector<8x256xi1>, vector<8x256xf32>
    %c8_65 = arith.constant 8 : index
    %c0_66 = arith.constant 0 : index
    %c0_67 = arith.constant 0 : index
    %1019 = vector.load %arg4[%c8_65, %c0_66, %c0_67] : memref<9x8x8xf32, #tpu.memory_space<vmem>>, vector<1x8x8xf32>
    %1020 = vector.shape_cast %1019 : vector<1x8x8xf32> to vector<8x8xf32>
    %1021 = vector.extract_strided_slice %1020 {offsets = [0, 0], sizes = [8, 1], strides = [1, 1]} : vector<8x8xf32> to vector<8x1xf32>
    %1022 = vector.extract_strided_slice %1018 {offsets = [0, 0], sizes = [1, 256], strides = [1, 1]} : vector<8x256xf32> to vector<1x256xf32>
    %1023 = vector.broadcast %1021 : vector<8x1xf32> to vector<8x256xf32>
    %1024 = vector.broadcast %1022 : vector<1x256xf32> to vector<8x256xf32>
    %1025 = arith.mulf %1023, %1024 : vector<8x256xf32>
    %1026 = arith.addf %1015, %1025 : vector<8x256xf32>
    %1027 = vector.extract_strided_slice %1020 {offsets = [0, 1], sizes = [8, 1], strides = [1, 1]} : vector<8x8xf32> to vector<8x1xf32>
    %1028 = vector.extract_strided_slice %1018 {offsets = [1, 0], sizes = [1, 256], strides = [1, 1]} : vector<8x256xf32> to vector<1x256xf32>
    %1029 = vector.broadcast %1027 : vector<8x1xf32> to vector<8x256xf32>
    %1030 = vector.broadcast %1028 : vector<1x256xf32> to vector<8x256xf32>
    %1031 = arith.mulf %1029, %1030 : vector<8x256xf32>
    %1032 = arith.addf %1026, %1031 : vector<8x256xf32>
    %1033 = vector.extract_strided_slice %1020 {offsets = [0, 2], sizes = [8, 1], strides = [1, 1]} : vector<8x8xf32> to vector<8x1xf32>
    %1034 = vector.extract_strided_slice %1018 {offsets = [2, 0], sizes = [1, 256], strides = [1, 1]} : vector<8x256xf32> to vector<1x256xf32>
    %1035 = vector.broadcast %1033 : vector<8x1xf32> to vector<8x256xf32>
    %1036 = vector.broadcast %1034 : vector<1x256xf32> to vector<8x256xf32>
    %1037 = arith.mulf %1035, %1036 : vector<8x256xf32>
    %1038 = arith.addf %1032, %1037 : vector<8x256xf32>
    %1039 = vector.extract_strided_slice %1020 {offsets = [0, 3], sizes = [8, 1], strides = [1, 1]} : vector<8x8xf32> to vector<8x1xf32>
    %1040 = vector.extract_strided_slice %1018 {offsets = [3, 0], sizes = [1, 256], strides = [1, 1]} : vector<8x256xf32> to vector<1x256xf32>
    %1041 = vector.broadcast %1039 : vector<8x1xf32> to vector<8x256xf32>
    %1042 = vector.broadcast %1040 : vector<1x256xf32> to vector<8x256xf32>
    %1043 = arith.mulf %1041, %1042 : vector<8x256xf32>
    %1044 = arith.addf %1038, %1043 : vector<8x256xf32>
    %1045 = vector.extract_strided_slice %1020 {offsets = [0, 4], sizes = [8, 1], strides = [1, 1]} : vector<8x8xf32> to vector<8x1xf32>
    %1046 = vector.extract_strided_slice %1018 {offsets = [4, 0], sizes = [1, 256], strides = [1, 1]} : vector<8x256xf32> to vector<1x256xf32>
    %1047 = vector.broadcast %1045 : vector<8x1xf32> to vector<8x256xf32>
    %1048 = vector.broadcast %1046 : vector<1x256xf32> to vector<8x256xf32>
    %1049 = arith.mulf %1047, %1048 : vector<8x256xf32>
    %1050 = arith.addf %1044, %1049 : vector<8x256xf32>
    %1051 = vector.extract_strided_slice %1020 {offsets = [0, 5], sizes = [8, 1], strides = [1, 1]} : vector<8x8xf32> to vector<8x1xf32>
    %1052 = vector.extract_strided_slice %1018 {offsets = [5, 0], sizes = [1, 256], strides = [1, 1]} : vector<8x256xf32> to vector<1x256xf32>
    %1053 = vector.broadcast %1051 : vector<8x1xf32> to vector<8x256xf32>
    %1054 = vector.broadcast %1052 : vector<1x256xf32> to vector<8x256xf32>
    %1055 = arith.mulf %1053, %1054 : vector<8x256xf32>
    %1056 = arith.addf %1050, %1055 : vector<8x256xf32>
    %1057 = vector.extract_strided_slice %1020 {offsets = [0, 6], sizes = [8, 1], strides = [1, 1]} : vector<8x8xf32> to vector<8x1xf32>
    %1058 = vector.extract_strided_slice %1018 {offsets = [6, 0], sizes = [1, 256], strides = [1, 1]} : vector<8x256xf32> to vector<1x256xf32>
    %1059 = vector.broadcast %1057 : vector<8x1xf32> to vector<8x256xf32>
    %1060 = vector.broadcast %1058 : vector<1x256xf32> to vector<8x256xf32>
    %1061 = arith.mulf %1059, %1060 : vector<8x256xf32>
    %1062 = arith.addf %1056, %1061 : vector<8x256xf32>
    %1063 = vector.extract_strided_slice %1020 {offsets = [0, 7], sizes = [8, 1], strides = [1, 1]} : vector<8x8xf32> to vector<8x1xf32>
    %1064 = vector.extract_strided_slice %1018 {offsets = [7, 0], sizes = [1, 256], strides = [1, 1]} : vector<8x256xf32> to vector<1x256xf32>
    %1065 = vector.broadcast %1063 : vector<8x1xf32> to vector<8x256xf32>
    %1066 = vector.broadcast %1064 : vector<1x256xf32> to vector<8x256xf32>
    %1067 = arith.mulf %1065, %1066 : vector<8x256xf32>
    %1068 = arith.addf %1062, %1067 : vector<8x256xf32>
    %1069 = vector.broadcast %567 : vector<8x1xf32> to vector<8x256xf32>
    %1070 = arith.addf %1069, %737 : vector<8x256xf32>
    %1071 = arith.addf %1070, %898 : vector<8x256xf32>
    %1072 = arith.addf %1071, %1068 : vector<8x256xf32>
    %cst_68 = arith.constant dense<0.000000e+00> : vector<8xf32>
    %1073 = vector.multi_reduction <add>, %1072, %cst_68 [1] : vector<8x256xf32> to vector<8xf32>
    %1074 = vector.shape_cast %1073 : vector<8xf32> to vector<8x1xf32>
    %cst_69 = arith.constant 3.906250e-03 : f32
    %1075 = vector.broadcast %cst_69 : f32 to vector<8x1xf32>
    %1076 = arith.mulf %1074, %1075 : vector<8x1xf32>
    %1077 = vector.broadcast %1076 : vector<8x1xf32> to vector<8x256xf32>
    %1078 = arith.subf %1072, %1077 : vector<8x256xf32>
    %1079 = arith.mulf %1078, %1078 : vector<8x256xf32>
    %cst_70 = arith.constant dense<0.000000e+00> : vector<8xf32>
    %1080 = vector.multi_reduction <add>, %1079, %cst_70 [1] : vector<8x256xf32> to vector<8xf32>
    %1081 = vector.shape_cast %1080 : vector<8xf32> to vector<8x1xf32>
    %cst_71 = arith.constant 3.906250e-03 : f32
    %1082 = vector.broadcast %cst_71 : f32 to vector<8x1xf32>
    %1083 = arith.mulf %1081, %1082 : vector<8x1xf32>
    %cst_72 = arith.constant 9.99999974E-6 : f32
    %1084 = vector.broadcast %cst_72 : f32 to vector<8x1xf32>
    %1085 = arith.addf %1083, %1084 : vector<8x1xf32>
    %1086 = math.rsqrt %1085 : vector<8x1xf32>
    %1087 = vector.broadcast %1086 : vector<8x1xf32> to vector<8x256xf32>
    %1088 = arith.mulf %1078, %1087 : vector<8x256xf32>
    %1089 = arith.addf %1, %1088 : vector<8x256xf32>
    %c0_73 = arith.constant 0 : index
    %c0_74 = arith.constant 0 : index
    %c0_75 = arith.constant 0 : index
    %1090 = vector.load %arg6[%c0_73, %c0_74, %c0_75] : memref<1x8x256xf32, #tpu.memory_space<vmem>>, vector<1x8x256xf32>
    %1091 = vector.shape_cast %1090 : vector<1x8x256xf32> to vector<8x256xf32>
    %1092 = vector.shape_cast %1089 : vector<8x256xf32> to vector<1x8x256xf32>
    tpu.vector_store %arg6[%c0_73, %c0_74, %c0_75], %1092 {strides = array<i32>} : memref<1x8x256xf32, #tpu.memory_space<vmem>>, vector<1x8x256xf32>,
    return
  }
  func.func @transform_0(%arg0: i32) -> (i32, i32, i32) {
    %c0_i32 = arith.constant 0 : i32
    %c0_i32_0 = arith.constant 0 : i32
    %c0_i32_1 = arith.constant 0 : i32
    return %arg0, %c0_i32, %c0_i32_0 : i32, i32, i32
  }
  func.func @transform_1(%arg0: i32) -> (i32, i32, i32) {
    %c0_i32 = arith.constant 0 : i32
    %c0_i32_0 = arith.constant 0 : i32
    %c0_i32_1 = arith.constant 0 : i32
    %c0_i32_2 = arith.constant 0 : i32
    return %c0_i32, %c0_i32_0, %c0_i32_1 : i32, i32, i32
  }
  func.func @transform_2(%arg0: i32) -> (i32, i32) {
    %c0_i32 = arith.constant 0 : i32
    %c0_i32_0 = arith.constant 0 : i32
    %c0_i32_1 = arith.constant 0 : i32
    return %c0_i32, %c0_i32_0 : i32, i32
  }
  func.func @transform_3(%arg0: i32) -> (i32, i32, i32) {
    %c0_i32 = arith.constant 0 : i32
    %c0_i32_0 = arith.constant 0 : i32
    %c0_i32_1 = arith.constant 0 : i32
    %c0_i32_2 = arith.constant 0 : i32
    return %c0_i32, %c0_i32_0, %c0_i32_1 : i32, i32, i32
  }
  func.func @transform_4(%arg0: i32) -> (i32, i32) {
    %c0_i32 = arith.constant 0 : i32
    %c0_i32_0 = arith.constant 0 : i32
    %c0_i32_1 = arith.constant 0 : i32
    return %c0_i32, %c0_i32_0 : i32, i32
  }
  func.func @transform_5(%arg0: i32) -> (i32, i32, i32) {
    %c0_i32 = arith.constant 0 : i32
    %c0_i32_0 = arith.constant 0 : i32
    %c0_i32_1 = arith.constant 0 : i32
    return %arg0, %c0_i32, %c0_i32_0 : i32, i32, i32
  }
}

</mosaic_0001>

<llo_original>
// kernel: tpu_custom_call.1
$region0: #{tpu_custom_call.1}
  #allocation0 [shape = 'u32[]', space=smem, size = 0x4, offset = 0x4, fixed_abs, tag = 'smem constant byte address 0x4 - core index']
  #allocation1 [shape = 'u32[144,128]{1,0:T(1,128)}', space=vmem, size = 0x12000, scoped, tag = 'internal scratch']
  %s0 = inlined_call_operand.hbm [shape: f32[8,128], index: 0, kind: input, shape index: {}]
  %s1 = inlined_call_operand.hbm [shape: f32[8,128], index: 1, kind: output, shape index: {}]
  %s2 = sld [smem:[#allocation0]]
  $region18: #{tpu_custom_call.1} parent=0
    _
  %s4 = ssub.s32 1, %s2
  %s5 = scalar_select 0, %s4, %s2
  $region1: #{tpu_custom_call.1} parent=0
    #allocation2 [shape = 'u8[4096]{0}', space=vmem, size = 0x1000, scoped, tag = 'input window, operand 0, single buffered']
    #allocation3 [shape = 's32[1]{0}', space=sflag, size = 0x4, scoped, tag = 'scoped memory for tpu_custom_call.1']
    #allocation4 [shape = 's32[1]{0}', space=sflag, size = 0x4, scoped, tag = 'scoped memory for tpu_custom_call.1']
    #allocation5 [shape = 'u8[4096]{0}', space=vmem, size = 0x1000, scoped, tag = 'output window, operand 0, single buffered']
    %6 = vsyncpa [#allocation3], 0
    %7 = vsyncpa [#allocation4], 0
    // Predicated region
    $region2: #{tpu_custom_call.1} parent=1 // pred_check
      _
    $region3: #{tpu_custom_call.1} parent=1 // pred_check_branch
      %9 = sbr.rel (0) target = $region5
    $region4: #{tpu_custom_call.1} parent=1 // pred_region
      %s11 = ssub.s32 128, 128
      %12 = vsyncadd [#allocation3], %s11
      %s14 = sshll.u32 [#allocation2], 4
      %s15 = int_to_ptr.vmem [resolvable:$true] %s14
      %17 = dma.hbm_to_vmem [thread:$0]  %s0, 128, %s15, [#allocation3]
    $region5: #{tpu_custom_call.1} parent=1 // pred_fallthru
      _
    // Predicated region
    $region6: #{tpu_custom_call.1} parent=1 // pred_check
      _
    $region7: #{tpu_custom_call.1} parent=1 // pred_check_branch
      %19 = sbr.rel (0) target = $region9
    $region8: #{tpu_custom_call.1} parent=1 // pred_region
      %20 = dma.done [#allocation3], 128
    $region9: #{tpu_custom_call.1} parent=1 // pred_fallthru
      _
    %v21 = vld [vmem:[#allocation2] sm:$0xff]
    %22 = vrot.lane.b32.xlu0 %v21, 1
    %v23 = vpop.permute.xlu0 %22
    %24 = vst [vmem:[#allocation5] sm:$0xff] %v23
    // Predicated region
    $region10: #{tpu_custom_call.1} parent=1 // pred_check
      _
    $region11: #{tpu_custom_call.1} parent=1 // pred_check_branch
      %26 = sbr.rel (0) target = $region13
    $region12: #{tpu_custom_call.1} parent=1 // pred_region
      %s28 = ssub.s32 128, 128
      %29 = vsyncadd [#allocation4], %s28
      %s31 = sshll.u32 [#allocation5], 4
      %s32 = int_to_ptr.vmem [resolvable:$true] %s31
      %34 = dma.vmem_to_hbm [thread:$0]  %s32, 128, %s1, [#allocation4]
    $region13: #{tpu_custom_call.1} parent=1 // pred_fallthru
      _
    // Predicated region
    $region14: #{tpu_custom_call.1} parent=1 // pred_check
      _
    $region15: #{tpu_custom_call.1} parent=1 // pred_check_branch
      %36 = sbr.rel (0) target = $region17
    $region16: #{tpu_custom_call.1} parent=1 // pred_region
      %37 = dma.done [#allocation4], 128
    $region17: #{tpu_custom_call.1} parent=1 // pred_fallthru
      _
    %38 = vsyncpa [#allocation3], 1
    %39 = vsyncpa [#allocation4], 1

// kernel: tpu_custom_call.1
$region0: #{tpu_custom_call.1}
  #allocation0 [shape = 'u32[]', space=smem, size = 0x4, offset = 0x4, fixed_abs, tag = 'smem constant byte address 0x4 - core index']
  #allocation1 [shape = 'u32[144,128]{1,0:T(1,128)}', space=vmem, size = 0x12000, scoped, tag = 'internal scratch']
  %s0 = inlined_call_operand.vmem [shape: f32[2,8,256], index: 0, kind: input, shape index: {}]
  %s1 = inlined_call_operand.vmem [shape: f32[9,8,8], index: 1, kind: input, shape index: {}]
  %s2 = inlined_call_operand.vmem [shape: f32[8,1], index: 2, kind: input, shape index: {}]
  %s3 = inlined_call_operand.vmem [shape: f32[9,8,8], index: 3, kind: input, shape index: {}]
  %s4 = inlined_call_operand.vmem [shape: f32[8,1], index: 4, kind: input, shape index: {}]
  %s5 = inlined_call_operand.hbm [shape: f32[2,8,256], index: 5, kind: output, shape index: {}]
  %s6 = sld [smem:[#allocation0]]
  $region53: #{tpu_custom_call.1} parent=0
    _
  %s8 = ssub.s32 1, %s6
  %s9 = scalar_select 0, %s8, %s6
  $region1: #{tpu_custom_call.1} parent=0
    #allocation2 [shape = 'u8[16384]{0}', space=vmem, size = 0x4000, scoped, tag = 'output window, operand 0']
    #allocation3 [shape = 's32[2]{0}', space=sflag, size = 0x8, scoped, tag = 'scoped memory for tpu_custom_call.1']
    %10 = vsyncpa [#allocation3], 0
    %s11 = scalar_lea.sflag [#allocation3], 1
    %12 = vsyncpa %s11, 0
    loop: start=0, step=1, limit=4
    $region2: #{tpu_custom_call.1} parent=1 // loop_pre_header
      _
    $region3: #{tpu_custom_call.1} parent=1 // loop_header
      %s14 = sphi 0, %s18
      %p15 = scmp.ge.s32.totalorder %s14, 4
      %s24 = sphi 0, %s26
      %s27 = sphi 0, %s24
      %s28 = sphi 0, %s27
      %s44 = sphi 0, %s28
      %s48 = sphi 0, %s48
      %s50 = sphi 0, %s48
      %s51 = sphi 0, %s50
      %s65 = sphi 0, %s51
      %s69 = sphi 0, %s69
      %s71 = sphi 0, %s69
      %s72 = sphi 0, %s71
      %s86 = sphi 0, %s72
      %s90 = sphi 0, %s90
      %s92 = sphi 0, %s90
      %s93 = sphi 0, %s92
      %s107 = sphi 0, %s93
      %s111 = sphi 0, %s111
      %s113 = sphi 0, %s111
      %s114 = sphi 0, %s113
      %s128 = sphi 0, %s114
      %s134 = sphi 0, %s136
      %s137 = sphi 0, %s134
      %s138 = sphi 0, %s137
      %s154 = sphi 0, %s138
    $region4: #{tpu_custom_call.1} parent=1 // loop_header_branch
      %17 = sbr.rel (%p15) target = $region8
    $region5: #{tpu_custom_call.1} parent=1 // loop_body
      %s19 = ssub.s32 %s14, 1
      %s20 = ssub.s32 %s14, 2
      %s21 = sadd.s32 %s14, 1
      %s22 = ssub.s32 %s14, %s21
      %p23 = scmp.eq.s32.totalorder %s22, 0
      %s25 = sadd.s32 %s24, 1
      %s26 = scalar_select %p23, %s24, %s25
      %p29 = pneg %p23
      %p30 = scmp.eq.s32.totalorder %s14, 1
      %p31 = por %p29, %p30
      %p32 = scmp.ne.s32.totalorder %s24, %s27
      %p33 = scmp.eq.s32.totalorder %s14, 0
      %p34 = por %p32, %p33
      %p35 = scmp.ne.s32.totalorder %s24, %s27
      %p36 = scmp.eq.s32.totalorder %s19, 1
      %p37 = por %p35, %p36
      %p38 = scmp.ne.s32.totalorder %s27, %s28
      %p39 = scmp.eq.s32.totalorder %s19, 0
      %p40 = por %p38, %p39
      %p41 = scmp.ne.s32.totalorder %s27, %s28
      %p42 = scmp.eq.s32.totalorder %s20, 1
      %p43 = por %p41, %p42
      %p45 = scmp.ne.s32.totalorder %s28, %s44
      %p46 = scmp.eq.s32.totalorder %s20, 0
      %p47 = por %p45, %p46
      %s49 = sadd.s32 %s48, 1
      %p52 = scmp.eq.s32.totalorder %s14, 1
      %p53 = scmp.ne.s32.totalorder %s48, %s50
      %p54 = scmp.eq.s32.totalorder %s14, 0
      %p55 = por %p53, %p54
      %p56 = scmp.ne.s32.totalorder %s48, %s50
      %p57 = scmp.eq.s32.totalorder %s19, 1
      %p58 = por %p56, %p57
      %p59 = scmp.ne.s32.totalorder %s50, %s51
      %p60 = scmp.eq.s32.totalorder %s19, 0
      %p61 = por %p59, %p60
      %p62 = scmp.ne.s32.totalorder %s50, %s51
      %p63 = scmp.eq.s32.totalorder %s20, 1
      %p64 = por %p62, %p63
      %p66 = scmp.ne.s32.totalorder %s51, %s65
      %p67 = scmp.eq.s32.totalorder %s20, 0
      %p68 = por %p66, %p67
      %s70 = sadd.s32 %s69, 1
      %p73 = scmp.eq.s32.totalorder %s14, 1
      %p74 = scmp.ne.s32.totalorder %s69, %s71
      %p75 = scmp.eq.s32.totalorder %s14, 0
      %p76 = por %p74, %p75
      %p77 = scmp.ne.s32.totalorder %s69, %s71
      %p78 = scmp.eq.s32.totalorder %s19, 1
      %p79 = por %p77, %p78
      %p80 = scmp.ne.s32.totalorder %s71, %s72
      %p81 = scmp.eq.s32.totalorder %s19, 0
      %p82 = por %p80, %p81
      %p83 = scmp.ne.s32.totalorder %s71, %s72
      %p84 = scmp.eq.s32.totalorder %s20, 1
      %p85 = por %p83, %p84
      %p87 = scmp.ne.s32.totalorder %s72, %s86
      %p88 = scmp.eq.s32.totalorder %s20, 0
      %p89 = por %p87, %p88
      %s91 = sadd.s32 %s90, 1
      %p94 = scmp.eq.s32.totalorder %s14, 1
      %p95 = scmp.ne.s32.totalorder %s90, %s92
      %p96 = scmp.eq.s32.totalorder %s14, 0
      %p97 = por %p95, %p96
      %p98 = scmp.ne.s32.totalorder %s90, %s92
      %p99 = scmp.eq.s32.totalorder %s19, 1
      %p100 = por %p98, %p99
      %p101 = scmp.ne.s32.totalorder %s92, %s93
      %p102 = scmp.eq.s32.totalorder %s19, 0
      %p103 = por %p101, %p102
      %p104 = scmp.ne.s32.totalorder %s92, %s93
      %p105 = scmp.eq.s32.totalorder %s20, 1
      %p106 = por %p104, %p105
      %p108 = scmp.ne.s32.totalorder %s93, %s107
      %p109 = scmp.eq.s32.totalorder %s20, 0
      %p110 = por %p108, %p109
      %s112 = sadd.s32 %s111, 1
      %p115 = scmp.eq.s32.totalorder %s14, 1
      %p116 = scmp.ne.s32.totalorder %s111, %s113
      %p117 = scmp.eq.s32.totalorder %s14, 0
      %p118 = por %p116, %p117
      %p119 = scmp.ne.s32.totalorder %s111, %s113
      %p120 = scmp.eq.s32.totalorder %s19, 1
      %p121 = por %p119, %p120
      %p122 = scmp.ne.s32.totalorder %s113, %s114
      %p123 = scmp.eq.s32.totalorder %s19, 0
      %p124 = por %p122, %p123
      %p125 = scmp.ne.s32.totalorder %s113, %s114
      %p126 = scmp.eq.s32.totalorder %s20, 1
      %p127 = por %p125, %p126
      %p129 = scmp.ne.s32.totalorder %s114, %s128
      %p130 = scmp.eq.s32.totalorder %s20, 0
      %p131 = por %p129, %p130
      %s132 = ssub.s32 %s14, %s21
      %p133 = scmp.eq.s32.totalorder %s132, 0
      %s135 = sadd.s32 %s134, 1
      %s136 = scalar_select %p133, %s134, %s135
      %p139 = pneg %p133
      %p140 = scmp.eq.s32.totalorder %s14, 1
      %p141 = por %p139, %p140
      %p142 = scmp.ne.s32.totalorder %s134, %s137
      %p143 = scmp.eq.s32.totalorder %s14, 0
      %p144 = por %p142, %p143
      %p145 = scmp.ne.s32.totalorder %s134, %s137
      %p146 = scmp.eq.s32.totalorder %s19, 1
      %p147 = por %p145, %p146
      %p148 = scmp.ne.s32.totalorder %s137, %s138
      %p149 = scmp.eq.s32.totalorder %s19, 0
      %p150 = por %p148, %p149
      %p151 = scmp.ne.s32.totalorder %s137, %s138
      %p152 = scmp.eq.s32.totalorder %s20, 1
      %p153 = por %p151, %p152
      %p155 = scmp.ne.s32.totalorder %s138, %s154
      %p156 = scmp.eq.s32.totalorder %s20, 0
      %p157 = por %p155, %p156
      %p158 = scmp.le.s32.totalorder 1, %s14
      %p159 = scmp.lt.s32.totalorder %s14, 3
      %p160 = pnand %p158, %p159
      %p161 = pneg %p160
      // Predicated region
      $region9: #{tpu_custom_call.1} parent=5 // pred_check
        _
      $region10: #{tpu_custom_call.1} parent=5 // pred_check_branch
        %163 = sbr.rel (%p160) target = $region12
      $region11: #{tpu_custom_call.1} parent=5 // pred_region
        %s164 = ssub.s32 %s14, 1
        // Predicated region
        $region13: #{tpu_custom_call.1} parent=11 // pred_check
          %p165 = pneg %p61
        $region14: #{tpu_custom_call.1} parent=11 // pred_check_branch
          %167 = sbr.rel (%p165) target = $region16
        $region15: #{tpu_custom_call.1} parent=11 // pred_region
          _
        $region16: #{tpu_custom_call.1} parent=11 // pred_fallthru
          _
        // Predicated region
        $region17: #{tpu_custom_call.1} parent=11 // pred_check
          %p168 = pneg %p82
        $region18: #{tpu_custom_call.1} parent=11 // pred_check_branch
          %170 = sbr.rel (%p168) target = $region20
        $region19: #{tpu_custom_call.1} parent=11 // pred_region
          _
        $region20: #{tpu_custom_call.1} parent=11 // pred_fallthru
          _
        // Predicated region
        $region21: #{tpu_custom_call.1} parent=11 // pred_check
          %p171 = pneg %p103
        $region22: #{tpu_custom_call.1} parent=11 // pred_check_branch
          %173 = sbr.rel (%p171) target = $region24
        $region23: #{tpu_custom_call.1} parent=11 // pred_region
          _
        $region24: #{tpu_custom_call.1} parent=11 // pred_fallthru
          _
        // Predicated region
        $region25: #{tpu_custom_call.1} parent=11 // pred_check
          %p174 = pneg %p124
        $region26: #{tpu_custom_call.1} parent=11 // pred_check_branch
          %176 = sbr.rel (%p174) target = $region28
        $region27: #{tpu_custom_call.1} parent=11 // pred_region
          _
        $region28: #{tpu_custom_call.1} parent=11 // pred_fallthru
          _
      $region12: #{tpu_custom_call.1} parent=5 // pred_fallthru
        _
      %p177 = scmp.lt.s32.totalorder %s14, 2
      // Predicated region
      $region29: #{tpu_custom_call.1} parent=5 // pred_check
        %p178 = pneg %p177
      $region30: #{tpu_custom_call.1} parent=5 // pred_check_branch
        %180 = sbr.rel (%p178) target = $region32
      $region31: #{tpu_custom_call.1} parent=5 // pred_region
        // Predicated region
        $region33: #{tpu_custom_call.1} parent=31 // pred_check
          %p181 = pneg %p34
        $region34: #{tpu_custom_call.1} parent=31 // pred_check_branch
          %183 = sbr.rel (%p181) target = $region36
        $region35: #{tpu_custom_call.1} parent=31 // pred_region
          %p184 = scmp.lt.s32.totalorder %s14, 1
          %s185 = scalar_select %p184, %s14, 1
          %s186 = smul.addr %s185, 2
          %s187 = smul.addr %s186, 8
          %s188 = scalar_lea.vmem %s0, %s187
        $region36: #{tpu_custom_call.1} parent=31 // pred_fallthru
          _
      $region32: #{tpu_custom_call.1} parent=5 // pred_fallthru
        _
      %p189 = scmp.le.s32.totalorder 1, %s14
      %p190 = scmp.lt.s32.totalorder %s14, 3
      %p191 = pnand %p189, %p190
      %p192 = pneg %p191
      // Predicated region
      $region37: #{tpu_custom_call.1} parent=5 // pred_check
        _
      $region38: #{tpu_custom_call.1} parent=5 // pred_check_branch
        %194 = sbr.rel (%p191) target = $region40
      $region39: #{tpu_custom_call.1} parent=5 // pred_region
        %s195 = ssub.s32 %s14, 1
        %p196 = scmp.lt.s32.totalorder %s19, 1
        %s197 = scalar_select %p196, %s19, 1
        %s198 = smul.addr %s197, 2
        %s199 = smul.addr %s198, 8
        %s200 = scalar_lea.vmem %s0, %s199
        %p201 = pneg %p40
        %p202 = pneg %p37
        %p203 = pneg %p61
        %p204 = pneg %p58
        %p205 = pneg %p82
        %p206 = pneg %p79
        %p207 = pneg %p103
        %p208 = pneg %p100
        %p209 = pneg %p124
        %p210 = pneg %p121
        %p211 = pneg %p150
        %p212 = pneg %p147
        %s213 = sand.u32 %s137, 1
        %s214 = scalar_lea.sflag [#allocation3], %s213
        %s215 = sand.u32 %s137, 1
        %s216 = smul.addr %s215, 16
        %s217 = scalar_lea.vmem [#allocation2], %s216
        %p218 = scmp.lt.s32.totalorder %s19, 1
        %s219 = scalar_select %p218, %s19, 1
        %s220 = smul.addr %s219, 2
        %s221 = smul.addr %s220, 8
        %s222 = scalar_lea.vmem %s0, %s221
        %v223 = vld [vmem:[%s222] sm:$0xff]
        %v224 = vld [vmem:[%s222 + $0x8] sm:$0xff]
        %v225 = vlaneseq
        %v226 = vand.u32 %v225, 127
        %v227 = vadd.s32 %v226, 128
        %vm228 = vcmp.lt.s32.totalorder %v226, 0
        %v229 = vsub.s32 0, %v226
        %v230 = vsel %vm228, %v229, %v226
        %v231 = vshrl.u32 %v230, 4
        %v232 = vand.u32 %v230, 15
        %v233 = vsub.s32 0, %v232
        %v234 = vsel %vm228, %v233, %v232
        %vm235 = vcmp.lt.s32.totalorder %v227, 0
        %v236 = vsub.s32 0, %v227
        %v237 = vsel %vm235, %v236, %v227
        %v238 = vshrl.u32 %v237, 4
        %v239 = vand.u32 %v237, 15
        %v240 = vsub.s32 0, %v239
        %v241 = vsel %vm235, %v240, %v239
        %vm242 = vcmp.ne.s32.totalorder %v234, 0
        %vm243 = vcmp.ne.s32.totalorder %v241, 0
        %vm244 = vcmp.lt.s32.totalorder %v234, 0
        %vm245 = vcmp.lt.s32.totalorder %v241, 0
        %vm246 = vmand %vm244, %vm242
        %vm247 = vmand %vm245, %vm243
        %v248 = vadd.s32 %v234, 16
        %v249 = vadd.s32 %v241, 16
        %v250 = vsel %vm246, %v248, %v234
        %v251 = vsel %vm247, %v249, %v241
        %vm252 = vcmp.eq.s32.totalorder %v250, 0
        %vm253 = vcmp.eq.s32.totalorder %v251, 0
        %vm254 = vcmp.eq.s32.totalorder %v250, 15
        %vm255 = vcmp.eq.s32.totalorder %v251, 15
        %vm256 = vcmp.lt.s32.totalorder %v226, 16
        %vm257 = vcmp.lt.s32.totalorder %v227, 16
        %vm258 = vcmp.ge.s32.totalorder %v226, 240
        %vm259 = vcmp.ge.s32.totalorder %v227, 240
        %v260 = vld [vmem:[%s2] sm:$0xff]
        %262 = vrot.lane.b32.xlu0 %v224, 16
        %v263 = vpop.permute.xlu0 %262
        %266 = vrot.lane.b32.xlu0 %v223, 16
        %v267 = vpop.permute.xlu0 %266
        %vm268 = vcmask 130048
        %v269 = vsel %vm268, %v267, %v263
        %v272 = vsel %vm268, %v263, %v267
        %273 = vrot.lane.b32.xlu0 %v223, 112
        %v274 = vpop.permute.xlu0 %273
        %275 = vrot.lane.b32.xlu0 %v224, 112
        %v276 = vpop.permute.xlu0 %275
        %vm277 = vcmask 916480
        %v278 = vsel %vm277, %v274, %v276
        %v282 = vsel %vm277, %v276, %v274
        %v283 = vsel %vm256, 1, 0
        %v284 = vsel %vm257, 1, 0
        %vm285 = vcmp.eq.s32.totalorder %v283, 1
        %vm286 = vcmp.eq.s32.totalorder %v284, 1
        %v287 = vsel %vm285, %v278, %v272
        %v288 = vsel %vm286, %v282, %v269
        %290 = vrot.lane.b32.xlu0 %v288, 1
        %v291 = vpop.permute.xlu0 %290
        %294 = vrot.lane.b32.xlu0 %v287, 1
        %v295 = vpop.permute.xlu0 %294
        %vm296 = vcmask 7168
        %v297 = vsel %vm296, %v295, %v291
        %v300 = vsel %vm296, %v291, %v295
        %301 = vrot.lane.b32.xlu0 %v287, 127
        %v302 = vpop.permute.xlu0 %301
        %303 = vrot.lane.b32.xlu0 %v288, 127
        %v304 = vpop.permute.xlu0 %303
        %vm305 = vcmask 1039360
        %v306 = vsel %vm305, %v302, %v304
        %v310 = vsel %vm305, %v304, %v302
        %v311 = vsel %vm252, 1, 0
        %v312 = vsel %vm253, 1, 0
        %vm313 = vcmp.eq.s32.totalorder %v311, 1
        %vm314 = vcmp.eq.s32.totalorder %v312, 1
        %v315 = vsel %vm313, %v306, %v300
        %v316 = vsel %vm314, %v310, %v297
        %v317 = vld [vmem:[%s1] sm:$0xff]
        %319 = vset.pattern.permute.xlu0 0
        %320 = vperm.xlu0 %319, %v317
        %v321 = vpop.permute.xlu0 %320
        %v323 = vlaneseq
        %v324 = vshrl.u32 %v323, 7
        %v325 = vsub.s32 0, %v324
        %v326 = vrot.slane %v315, %v325
        %v327 = vlaneseq
        %v328 = vshrl.u32 %v327, 7
        %v329 = vsub.s32 0, %v328
        %v330 = vrot.slane %v316, %v329
        %v331 = vmul.f32 %v321, %v326
        %v332 = vmul.f32 %v321, %v330
        %333 = vset.pattern.permute.xlu0 1
        %334 = vperm.xlu0 %333, %v317
        %v335 = vpop.permute.xlu0 %334
        %v337 = vlaneseq
        %v338 = vshrl.u32 %v337, 7
        %v339 = vsub.s32 1, %v338
        %v340 = vrot.slane %v315, %v339
        %v341 = vlaneseq
        %v342 = vshrl.u32 %v341, 7
        %v343 = vsub.s32 1, %v342
        %v344 = vrot.slane %v316, %v343
        %v345 = vmul.f32 %v335, %v340
        %v346 = vmul.f32 %v335, %v344
        %v347 = vadd.f32 %v331, %v345
        %v348 = vadd.f32 %v332, %v346
        %349 = vset.pattern.permute.xlu0 2
        %350 = vperm.xlu0 %349, %v317
        %v351 = vpop.permute.xlu0 %350
        %v353 = vlaneseq
        %v354 = vshrl.u32 %v353, 7
        %v355 = vsub.s32 2, %v354
        %v356 = vrot.slane %v315, %v355
        %v357 = vlaneseq
        %v358 = vshrl.u32 %v357, 7
        %v359 = vsub.s32 2, %v358
        %v360 = vrot.slane %v316, %v359
        %v361 = vmul.f32 %v351, %v356
        %v362 = vmul.f32 %v351, %v360
        %v363 = vadd.f32 %v347, %v361
        %v364 = vadd.f32 %v348, %v362
        %365 = vset.pattern.permute.xlu0 3
        %366 = vperm.xlu0 %365, %v317
        %v367 = vpop.permute.xlu0 %366
        %v369 = vlaneseq
        %v370 = vshrl.u32 %v369, 7
        %v371 = vsub.s32 3, %v370
        %v372 = vrot.slane %v315, %v371
        %v373 = vlaneseq
        %v374 = vshrl.u32 %v373, 7
        %v375 = vsub.s32 3, %v374
        %v376 = vrot.slane %v316, %v375
        %v377 = vmul.f32 %v367, %v372
        %v378 = vmul.f32 %v367, %v376
        %v379 = vadd.f32 %v363, %v377
        %v380 = vadd.f32 %v364, %v378
        %381 = vset.pattern.permute.xlu0 4
        %382 = vperm.xlu0 %381, %v317
        %v383 = vpop.permute.xlu0 %382
        %v385 = vlaneseq
        %v386 = vshrl.u32 %v385, 7
        %v387 = vsub.s32 4, %v386
        %v388 = vrot.slane %v315, %v387
        %v389 = vlaneseq
        %v390 = vshrl.u32 %v389, 7
        %v391 = vsub.s32 4, %v390
        %v392 = vrot.slane %v316, %v391
        %v393 = vmul.f32 %v383, %v388
        %v394 = vmul.f32 %v383, %v392
        %v395 = vadd.f32 %v379, %v393
        %v396 = vadd.f32 %v380, %v394
        %397 = vset.pattern.permute.xlu0 5
        %398 = vperm.xlu0 %397, %v317
        %v399 = vpop.permute.xlu0 %398
        %v401 = vlaneseq
        %v402 = vshrl.u32 %v401, 7
        %v403 = vsub.s32 5, %v402
        %v404 = vrot.slane %v315, %v403
        %v405 = vlaneseq
        %v406 = vshrl.u32 %v405, 7
        %v407 = vsub.s32 5, %v406
        %v408 = vrot.slane %v316, %v407
        %v409 = vmul.f32 %v399, %v404
        %v410 = vmul.f32 %v399, %v408
        %v411 = vadd.f32 %v395, %v409
        %v412 = vadd.f32 %v396, %v410
        %413 = vset.pattern.permute.xlu0 6
        %414 = vperm.xlu0 %413, %v317
        %v415 = vpop.permute.xlu0 %414
        %v417 = vlaneseq
        %v418 = vshrl.u32 %v417, 7
        %v419 = vsub.s32 6, %v418
        %v420 = vrot.slane %v315, %v419
        %v421 = vlaneseq
        %v422 = vshrl.u32 %v421, 7
        %v423 = vsub.s32 6, %v422
        %v424 = vrot.slane %v316, %v423
        %v425 = vmul.f32 %v415, %v420
        %v426 = vmul.f32 %v415, %v424
        %v427 = vadd.f32 %v411, %v425
        %v428 = vadd.f32 %v412, %v426
        %429 = vset.pattern.permute.xlu0 7
        %430 = vperm.xlu0 %429, %v317
        %v431 = vpop.permute.xlu0 %430
        %v433 = vlaneseq
        %v434 = vshrl.u32 %v433, 7
        %v435 = vsub.s32 7, %v434
        %v436 = vrot.slane %v315, %v435
        %v437 = vlaneseq
        %v438 = vshrl.u32 %v437, 7
        %v439 = vsub.s32 7, %v438
        %v440 = vrot.slane %v316, %v439
        %v441 = vmul.f32 %v431, %v436
        %v442 = vmul.f32 %v431, %v440
        %v443 = vadd.f32 %v427, %v441
        %v444 = vadd.f32 %v428, %v442
        %s445 = scalar_lea.vmem %s1, 8
        %v446 = vld [vmem:[%s445] sm:$0xff]
        %448 = vset.pattern.permute.xlu0 0
        %449 = vperm.xlu0 %448, %v446
        %v450 = vpop.permute.xlu0 %449
        %v452 = vlaneseq
        %v453 = vshrl.u32 %v452, 7
        %v454 = vsub.s32 0, %v453
        %v455 = vrot.slane %v287, %v454
        %v456 = vlaneseq
        %v457 = vshrl.u32 %v456, 7
        %v458 = vsub.s32 0, %v457
        %v459 = vrot.slane %v288, %v458
        %v460 = vmul.f32 %v450, %v455
        %v461 = vmul.f32 %v450, %v459
        %v462 = vadd.f32 %v443, %v460
        %v463 = vadd.f32 %v444, %v461
        %464 = vset.pattern.permute.xlu0 1
        %465 = vperm.xlu0 %464, %v446
        %v466 = vpop.permute.xlu0 %465
        %v468 = vlaneseq
        %v469 = vshrl.u32 %v468, 7
        %v470 = vsub.s32 1, %v469
        %v471 = vrot.slane %v287, %v470
        %v472 = vlaneseq
        %v473 = vshrl.u32 %v472, 7
        %v474 = vsub.s32 1, %v473
        %v475 = vrot.slane %v288, %v474
        %v476 = vmul.f32 %v466, %v471
        %v477 = vmul.f32 %v466, %v475
        %v478 = vadd.f32 %v462, %v476
        %v479 = vadd.f32 %v463, %v477
        %480 = vset.pattern.permute.xlu0 2
        %481 = vperm.xlu0 %480, %v446
        %v482 = vpop.permute.xlu0 %481
        %v484 = vlaneseq
        %v485 = vshrl.u32 %v484, 7
        %v486 = vsub.s32 2, %v485
        %v487 = vrot.slane %v287, %v486
        %v488 = vlaneseq
        %v489 = vshrl.u32 %v488, 7
        %v490 = vsub.s32 2, %v489
        %v491 = vrot.slane %v288, %v490
        %v492 = vmul.f32 %v482, %v487
        %v493 = vmul.f32 %v482, %v491
        %v494 = vadd.f32 %v478, %v492
        %v495 = vadd.f32 %v479, %v493
        %496 = vset.pattern.permute.xlu0 3
        %497 = vperm.xlu0 %496, %v446
        %v498 = vpop.permute.xlu0 %497
        %v500 = vlaneseq
        %v501 = vshrl.u32 %v500, 7
        %v502 = vsub.s32 3, %v501
        %v503 = vrot.slane %v287, %v502
        %v504 = vlaneseq
        %v505 = vshrl.u32 %v504, 7
        %v506 = vsub.s32 3, %v505
        %v507 = vrot.slane %v288, %v506
        %v508 = vmul.f32 %v498, %v503
        %v509 = vmul.f32 %v498, %v507
        %v510 = vadd.f32 %v494, %v508
        %v511 = vadd.f32 %v495, %v509
        %512 = vset.pattern.permute.xlu0 4
        %513 = vperm.xlu0 %512, %v446
        %v514 = vpop.permute.xlu0 %513
        %v516 = vlaneseq
        %v517 = vshrl.u32 %v516, 7
        %v518 = vsub.s32 4, %v517
        %v519 = vrot.slane %v287, %v518
        %v520 = vlaneseq
        %v521 = vshrl.u32 %v520, 7
        %v522 = vsub.s32 4, %v521
        %v523 = vrot.slane %v288, %v522
        %v524 = vmul.f32 %v514, %v519
        %v525 = vmul.f32 %v514, %v523
        %v526 = vadd.f32 %v510, %v524
        %v527 = vadd.f32 %v511, %v525
        %528 = vset.pattern.permute.xlu0 5
        %529 = vperm.xlu0 %528, %v446
        %v530 = vpop.permute.xlu0 %529
        %v532 = vlaneseq
        %v533 = vshrl.u32 %v532, 7
        %v534 = vsub.s32 5, %v533
        %v535 = vrot.slane %v287, %v534
        %v536 = vlaneseq
        %v537 = vshrl.u32 %v536, 7
        %v538 = vsub.s32 5, %v537
        %v539 = vrot.slane %v288, %v538
        %v540 = vmul.f32 %v530, %v535
        %v541 = vmul.f32 %v530, %v539
        %v542 = vadd.f32 %v526, %v540
        %v543 = vadd.f32 %v527, %v541
        %544 = vset.pattern.permute.xlu0 6
        %545 = vperm.xlu0 %544, %v446
        %v546 = vpop.permute.xlu0 %545
        %v548 = vlaneseq
        %v549 = vshrl.u32 %v548, 7
        %v550 = vsub.s32 6, %v549
        %v551 = vrot.slane %v287, %v550
        %v552 = vlaneseq
        %v553 = vshrl.u32 %v552, 7
        %v554 = vsub.s32 6, %v553
        %v555 = vrot.slane %v288, %v554
        %v556 = vmul.f32 %v546, %v551
        %v557 = vmul.f32 %v546, %v555
        %v558 = vadd.f32 %v542, %v556
        %v559 = vadd.f32 %v543, %v557
        %560 = vset.pattern.permute.xlu0 7
        %561 = vperm.xlu0 %560, %v446
        %v562 = vpop.permute.xlu0 %561
        %v564 = vlaneseq
        %v565 = vshrl.u32 %v564, 7
        %v566 = vsub.s32 7, %v565
        %v567 = vrot.slane %v287, %v566
        %v568 = vlaneseq
        %v569 = vshrl.u32 %v568, 7
        %v570 = vsub.s32 7, %v569
        %v571 = vrot.slane %v288, %v570
        %v572 = vmul.f32 %v562, %v567
        %v573 = vmul.f32 %v562, %v571
        %v574 = vadd.f32 %v558, %v572
        %v575 = vadd.f32 %v559, %v573
        %v576 = vsel %vm254, 1, 0
        %v577 = vsel %vm255, 1, 0
        %vm578 = vcmp.eq.s32.totalorder %v576, 1
        %vm579 = vcmp.eq.s32.totalorder %v577, 1
        %v580 = vsel %vm578, %v300, %v306
        %v581 = vsel %vm579, %v297, %v310
        %s582 = scalar_lea.vmem %s1, 16
        %v583 = vld [vmem:[%s582] sm:$0xff]
        %585 = vset.pattern.permute.xlu0 0
        %586 = vperm.xlu0 %585, %v583
        %v587 = vpop.permute.xlu0 %586
        %v589 = vlaneseq
        %v590 = vshrl.u32 %v589, 7
        %v591 = vsub.s32 0, %v590
        %v592 = vrot.slane %v580, %v591
        %v593 = vlaneseq
        %v594 = vshrl.u32 %v593, 7
        %v595 = vsub.s32 0, %v594
        %v596 = vrot.slane %v581, %v595
        %v597 = vmul.f32 %v587, %v592
        %v598 = vmul.f32 %v587, %v596
        %v599 = vadd.f32 %v574, %v597
        %v600 = vadd.f32 %v575, %v598
        %601 = vset.pattern.permute.xlu0 1
        %602 = vperm.xlu0 %601, %v583
        %v603 = vpop.permute.xlu0 %602
        %v605 = vlaneseq
        %v606 = vshrl.u32 %v605, 7
        %v607 = vsub.s32 1, %v606
        %v608 = vrot.slane %v580, %v607
        %v609 = vlaneseq
        %v610 = vshrl.u32 %v609, 7
        %v611 = vsub.s32 1, %v610
        %v612 = vrot.slane %v581, %v611
        %v613 = vmul.f32 %v603, %v608
        %v614 = vmul.f32 %v603, %v612
        %v615 = vadd.f32 %v599, %v613
        %v616 = vadd.f32 %v600, %v614
        %617 = vset.pattern.permute.xlu0 2
        %618 = vperm.xlu0 %617, %v583
        %v619 = vpop.permute.xlu0 %618
        %v621 = vlaneseq
        %v622 = vshrl.u32 %v621, 7
        %v623 = vsub.s32 2, %v622
        %v624 = vrot.slane %v580, %v623
        %v625 = vlaneseq
        %v626 = vshrl.u32 %v625, 7
        %v627 = vsub.s32 2, %v626
        %v628 = vrot.slane %v581, %v627
        %v629 = vmul.f32 %v619, %v624
        %v630 = vmul.f32 %v619, %v628
        %v631 = vadd.f32 %v615, %v629
        %v632 = vadd.f32 %v616, %v630
        %633 = vset.pattern.permute.xlu0 3
        %634 = vperm.xlu0 %633, %v583
        %v635 = vpop.permute.xlu0 %634
        %v637 = vlaneseq
        %v638 = vshrl.u32 %v637, 7
        %v639 = vsub.s32 3, %v638
        %v640 = vrot.slane %v580, %v639
        %v641 = vlaneseq
        %v642 = vshrl.u32 %v641, 7
        %v643 = vsub.s32 3, %v642
        %v644 = vrot.slane %v581, %v643
        %v645 = vmul.f32 %v635, %v640
        %v646 = vmul.f32 %v635, %v644
        %v647 = vadd.f32 %v631, %v645
        %v648 = vadd.f32 %v632, %v646
        %649 = vset.pattern.permute.xlu0 4
        %650 = vperm.xlu0 %649, %v583
        %v651 = vpop.permute.xlu0 %650
        %v653 = vlaneseq
        %v654 = vshrl.u32 %v653, 7
        %v655 = vsub.s32 4, %v654
        %v656 = vrot.slane %v580, %v655
        %v657 = vlaneseq
        %v658 = vshrl.u32 %v657, 7
        %v659 = vsub.s32 4, %v658
        %v660 = vrot.slane %v581, %v659
        %v661 = vmul.f32 %v651, %v656
        %v662 = vmul.f32 %v651, %v660
        %v663 = vadd.f32 %v647, %v661
        %v664 = vadd.f32 %v648, %v662
        %665 = vset.pattern.permute.xlu0 5
        %666 = vperm.xlu0 %665, %v583
        %v667 = vpop.permute.xlu0 %666
        %v669 = vlaneseq
        %v670 = vshrl.u32 %v669, 7
        %v671 = vsub.s32 5, %v670
        %v672 = vrot.slane %v580, %v671
        %v673 = vlaneseq
        %v674 = vshrl.u32 %v673, 7
        %v675 = vsub.s32 5, %v674
        %v676 = vrot.slane %v581, %v675
        %v677 = vmul.f32 %v667, %v672
        %v678 = vmul.f32 %v667, %v676
        %v679 = vadd.f32 %v663, %v677
        %v680 = vadd.f32 %v664, %v678
        %681 = vset.pattern.permute.xlu0 6
        %682 = vperm.xlu0 %681, %v583
        %v683 = vpop.permute.xlu0 %682
        %v685 = vlaneseq
        %v686 = vshrl.u32 %v685, 7
        %v687 = vsub.s32 6, %v686
        %v688 = vrot.slane %v580, %v687
        %v689 = vlaneseq
        %v690 = vshrl.u32 %v689, 7
        %v691 = vsub.s32 6, %v690
        %v692 = vrot.slane %v581, %v691
        %v693 = vmul.f32 %v683, %v688
        %v694 = vmul.f32 %v683, %v692
        %v695 = vadd.f32 %v679, %v693
        %v696 = vadd.f32 %v680, %v694
        %697 = vset.pattern.permute.xlu0 7
        %698 = vperm.xlu0 %697, %v583
        %v699 = vpop.permute.xlu0 %698
        %v701 = vlaneseq
        %v702 = vshrl.u32 %v701, 7
        %v703 = vsub.s32 7, %v702
        %v704 = vrot.slane %v580, %v703
        %v705 = vlaneseq
        %v706 = vshrl.u32 %v705, 7
        %v707 = vsub.s32 7, %v706
        %v708 = vrot.slane %v581, %v707
        %v709 = vmul.f32 %v699, %v704
        %v710 = vmul.f32 %v699, %v708
        %v711 = vadd.f32 %v695, %v709
        %v712 = vadd.f32 %v696, %v710
        %713 = vrot.lane.b32.xlu0 %v224, 1
        %v714 = vpop.permute.xlu0 %713
        %716 = vrot.lane.b32.xlu0 %v223, 1
        %v717 = vpop.permute.xlu0 %716
        %v718 = vsel %vm296, %v717, %v714
        %v721 = vsel %vm296, %v714, %v717
        %722 = vrot.lane.b32.xlu0 %v223, 127
        %v723 = vpop.permute.xlu0 %722
        %724 = vrot.lane.b32.xlu0 %v224, 127
        %v725 = vpop.permute.xlu0 %724
        %v726 = vsel %vm305, %v723, %v725
        %v730 = vsel %vm305, %v725, %v723
        %v731 = vsel %vm313, %v726, %v721
        %v732 = vsel %vm314, %v730, %v718
        %s733 = scalar_lea.vmem %s1, 24
        %v734 = vld [vmem:[%s733] sm:$0xff]
        %736 = vset.pattern.permute.xlu0 0
        %737 = vperm.xlu0 %736, %v734
        %v738 = vpop.permute.xlu0 %737
        %v740 = vlaneseq
        %v741 = vshrl.u32 %v740, 7
        %v742 = vsub.s32 0, %v741
        %v743 = vrot.slane %v731, %v742
        %v744 = vlaneseq
        %v745 = vshrl.u32 %v744, 7
        %v746 = vsub.s32 0, %v745
        %v747 = vrot.slane %v732, %v746
        %v748 = vmul.f32 %v738, %v743
        %v749 = vmul.f32 %v738, %v747
        %750 = vset.pattern.permute.xlu0 1
        %751 = vperm.xlu0 %750, %v734
        %v752 = vpop.permute.xlu0 %751
        %v754 = vlaneseq
        %v755 = vshrl.u32 %v754, 7
        %v756 = vsub.s32 1, %v755
        %v757 = vrot.slane %v731, %v756
        %v758 = vlaneseq
        %v759 = vshrl.u32 %v758, 7
        %v760 = vsub.s32 1, %v759
        %v761 = vrot.slane %v732, %v760
        %v762 = vmul.f32 %v752, %v757
        %v763 = vmul.f32 %v752, %v761
        %v764 = vadd.f32 %v748, %v762
        %v765 = vadd.f32 %v749, %v763
        %766 = vset.pattern.permute.xlu0 2
        %767 = vperm.xlu0 %766, %v734
        %v768 = vpop.permute.xlu0 %767
        %v770 = vlaneseq
        %v771 = vshrl.u32 %v770, 7
        %v772 = vsub.s32 2, %v771
        %v773 = vrot.slane %v731, %v772
        %v774 = vlaneseq
        %v775 = vshrl.u32 %v774, 7
        %v776 = vsub.s32 2, %v775
        %v777 = vrot.slane %v732, %v776
        %v778 = vmul.f32 %v768, %v773
        %v779 = vmul.f32 %v768, %v777
        %v780 = vadd.f32 %v764, %v778
        %v781 = vadd.f32 %v765, %v779
        %782 = vset.pattern.permute.xlu0 3
        %783 = vperm.xlu0 %782, %v734
        %v784 = vpop.permute.xlu0 %783
        %v786 = vlaneseq
        %v787 = vshrl.u32 %v786, 7
        %v788 = vsub.s32 3, %v787
        %v789 = vrot.slane %v731, %v788
        %v790 = vlaneseq
        %v791 = vshrl.u32 %v790, 7
        %v792 = vsub.s32 3, %v791
        %v793 = vrot.slane %v732, %v792
        %v794 = vmul.f32 %v784, %v789
        %v795 = vmul.f32 %v784, %v793
        %v796 = vadd.f32 %v780, %v794
        %v797 = vadd.f32 %v781, %v795
        %798 = vset.pattern.permute.xlu0 4
        %799 = vperm.xlu0 %798, %v734
        %v800 = vpop.permute.xlu0 %799
        %v802 = vlaneseq
        %v803 = vshrl.u32 %v802, 7
        %v804 = vsub.s32 4, %v803
        %v805 = vrot.slane %v731, %v804
        %v806 = vlaneseq
        %v807 = vshrl.u32 %v806, 7
        %v808 = vsub.s32 4, %v807
        %v809 = vrot.slane %v732, %v808
        %v810 = vmul.f32 %v800, %v805
        %v811 = vmul.f32 %v800, %v809
        %v812 = vadd.f32 %v796, %v810
        %v813 = vadd.f32 %v797, %v811
        %814 = vset.pattern.permute.xlu0 5
        %815 = vperm.xlu0 %814, %v734
        %v816 = vpop.permute.xlu0 %815
        %v818 = vlaneseq
        %v819 = vshrl.u32 %v818, 7
        %v820 = vsub.s32 5, %v819
        %v821 = vrot.slane %v731, %v820
        %v822 = vlaneseq
        %v823 = vshrl.u32 %v822, 7
        %v824 = vsub.s32 5, %v823
        %v825 = vrot.slane %v732, %v824
        %v826 = vmul.f32 %v816, %v821
        %v827 = vmul.f32 %v816, %v825
        %v828 = vadd.f32 %v812, %v826
        %v829 = vadd.f32 %v813, %v827
        %830 = vset.pattern.permute.xlu0 6
        %831 = vperm.xlu0 %830, %v734
        %v832 = vpop.permute.xlu0 %831
        %v834 = vlaneseq
        %v835 = vshrl.u32 %v834, 7
        %v836 = vsub.s32 6, %v835
        %v837 = vrot.slane %v731, %v836
        %v838 = vlaneseq
        %v839 = vshrl.u32 %v838, 7
        %v840 = vsub.s32 6, %v839
        %v841 = vrot.slane %v732, %v840
        %v842 = vmul.f32 %v832, %v837
        %v843 = vmul.f32 %v832, %v841
        %v844 = vadd.f32 %v828, %v842
        %v845 = vadd.f32 %v829, %v843
        %846 = vset.pattern.permute.xlu0 7
        %847 = vperm.xlu0 %846, %v734
        %v848 = vpop.permute.xlu0 %847
        %v850 = vlaneseq
        %v851 = vshrl.u32 %v850, 7
        %v852 = vsub.s32 7, %v851
        %v853 = vrot.slane %v731, %v852
        %v854 = vlaneseq
        %v855 = vshrl.u32 %v854, 7
        %v856 = vsub.s32 7, %v855
        %v857 = vrot.slane %v732, %v856
        %v858 = vmul.f32 %v848, %v853
        %v859 = vmul.f32 %v848, %v857
        %v860 = vadd.f32 %v844, %v858
        %v861 = vadd.f32 %v845, %v859
        %s862 = scalar_lea.vmem %s1, 32
        %v863 = vld [vmem:[%s862] sm:$0xff]
        %865 = vset.pattern.permute.xlu0 0
        %866 = vperm.xlu0 %865, %v863
        %v867 = vpop.permute.xlu0 %866
        %v869 = vlaneseq
        %v870 = vshrl.u32 %v869, 7
        %v871 = vsub.s32 0, %v870
        %v872 = vrot.slane %v223, %v871
        %v873 = vlaneseq
        %v874 = vshrl.u32 %v873, 7
        %v875 = vsub.s32 0, %v874
        %v876 = vrot.slane %v224, %v875
        %v877 = vmul.f32 %v867, %v872
        %v878 = vmul.f32 %v867, %v876
        %v879 = vadd.f32 %v860, %v877
        %v880 = vadd.f32 %v861, %v878
        %881 = vset.pattern.permute.xlu0 1
        %882 = vperm.xlu0 %881, %v863
        %v883 = vpop.permute.xlu0 %882
        %v885 = vlaneseq
        %v886 = vshrl.u32 %v885, 7
        %v887 = vsub.s32 1, %v886
        %v888 = vrot.slane %v223, %v887
        %v889 = vlaneseq
        %v890 = vshrl.u32 %v889, 7
        %v891 = vsub.s32 1, %v890
        %v892 = vrot.slane %v224, %v891
        %v893 = vmul.f32 %v883, %v888
        %v894 = vmul.f32 %v883, %v892
        %v895 = vadd.f32 %v879, %v893
        %v896 = vadd.f32 %v880, %v894
        %897 = vset.pattern.permute.xlu0 2
        %898 = vperm.xlu0 %897, %v863
        %v899 = vpop.permute.xlu0 %898
        %v901 = vlaneseq
        %v902 = vshrl.u32 %v901, 7
        %v903 = vsub.s32 2, %v902
        %v904 = vrot.slane %v223, %v903
        %v905 = vlaneseq
        %v906 = vshrl.u32 %v905, 7
        %v907 = vsub.s32 2, %v906
        %v908 = vrot.slane %v224, %v907
        %v909 = vmul.f32 %v899, %v904
        %v910 = vmul.f32 %v899, %v908
        %v911 = vadd.f32 %v895, %v909
        %v912 = vadd.f32 %v896, %v910
        %913 = vset.pattern.permute.xlu0 3
        %914 = vperm.xlu0 %913, %v863
        %v915 = vpop.permute.xlu0 %914
        %v917 = vlaneseq
        %v918 = vshrl.u32 %v917, 7
        %v919 = vsub.s32 3, %v918
        %v920 = vrot.slane %v223, %v919
        %v921 = vlaneseq
        %v922 = vshrl.u32 %v921, 7
        %v923 = vsub.s32 3, %v922
        %v924 = vrot.slane %v224, %v923
        %v925 = vmul.f32 %v915, %v920
        %v926 = vmul.f32 %v915, %v924
        %v927 = vadd.f32 %v911, %v925
        %v928 = vadd.f32 %v912, %v926
        %929 = vset.pattern.permute.xlu0 4
        %930 = vperm.xlu0 %929, %v863
        %v931 = vpop.permute.xlu0 %930
        %v933 = vlaneseq
        %v934 = vshrl.u32 %v933, 7
        %v935 = vsub.s32 4, %v934
        %v936 = vrot.slane %v223, %v935
        %v937 = vlaneseq
        %v938 = vshrl.u32 %v937, 7
        %v939 = vsub.s32 4, %v938
        %v940 = vrot.slane %v224, %v939
        %v941 = vmul.f32 %v931, %v936
        %v942 = vmul.f32 %v931, %v940
        %v943 = vadd.f32 %v927, %v941
        %v944 = vadd.f32 %v928, %v942
        %945 = vset.pattern.permute.xlu0 5
        %946 = vperm.xlu0 %945, %v863
        %v947 = vpop.permute.xlu0 %946
        %v949 = vlaneseq
        %v950 = vshrl.u32 %v949, 7
        %v951 = vsub.s32 5, %v950
        %v952 = vrot.slane %v223, %v951
        %v953 = vlaneseq
        %v954 = vshrl.u32 %v953, 7
        %v955 = vsub.s32 5, %v954
        %v956 = vrot.slane %v224, %v955
        %v957 = vmul.f32 %v947, %v952
        %v958 = vmul.f32 %v947, %v956
        %v959 = vadd.f32 %v943, %v957
        %v960 = vadd.f32 %v944, %v958
        %961 = vset.pattern.permute.xlu0 6
        %962 = vperm.xlu0 %961, %v863
        %v963 = vpop.permute.xlu0 %962
        %v965 = vlaneseq
        %v966 = vshrl.u32 %v965, 7
        %v967 = vsub.s32 6, %v966
        %v968 = vrot.slane %v223, %v967
        %v969 = vlaneseq
        %v970 = vshrl.u32 %v969, 7
        %v971 = vsub.s32 6, %v970
        %v972 = vrot.slane %v224, %v971
        %v973 = vmul.f32 %v963, %v968
        %v974 = vmul.f32 %v963, %v972
        %v975 = vadd.f32 %v959, %v973
        %v976 = vadd.f32 %v960, %v974
        %977 = vset.pattern.permute.xlu0 7
        %978 = vperm.xlu0 %977, %v863
        %v979 = vpop.permute.xlu0 %978
        %v981 = vlaneseq
        %v982 = vshrl.u32 %v981, 7
        %v983 = vsub.s32 7, %v982
        %v984 = vrot.slane %v223, %v983
        %v985 = vlaneseq
        %v986 = vshrl.u32 %v985, 7
        %v987 = vsub.s32 7, %v986
        %v988 = vrot.slane %v224, %v987
        %v989 = vmul.f32 %v979, %v984
        %v990 = vmul.f32 %v979, %v988
        %v991 = vadd.f32 %v975, %v989
        %v992 = vadd.f32 %v976, %v990
        %v993 = vsel %vm578, %v721, %v726
        %v994 = vsel %vm579, %v718, %v730
        %s995 = scalar_lea.vmem %s1, 40
        %v996 = vld [vmem:[%s995] sm:$0xff]
        %998 = vset.pattern.permute.xlu0 0
        %999 = vperm.xlu0 %998, %v996
        %v1000 = vpop.permute.xlu0 %999
        %v1002 = vlaneseq
        %v1003 = vshrl.u32 %v1002, 7
        %v1004 = vsub.s32 0, %v1003
        %v1005 = vrot.slane %v993, %v1004
        %v1006 = vlaneseq
        %v1007 = vshrl.u32 %v1006, 7
        %v1008 = vsub.s32 0, %v1007
        %v1009 = vrot.slane %v994, %v1008
        %v1010 = vmul.f32 %v1000, %v1005
        %v1011 = vmul.f32 %v1000, %v1009
        %v1012 = vadd.f32 %v991, %v1010
        %v1013 = vadd.f32 %v992, %v1011
        %1014 = vset.pattern.permute.xlu0 1
        %1015 = vperm.xlu0 %1014, %v996
        %v1016 = vpop.permute.xlu0 %1015
        %v1018 = vlaneseq
        %v1019 = vshrl.u32 %v1018, 7
        %v1020 = vsub.s32 1, %v1019
        %v1021 = vrot.slane %v993, %v1020
        %v1022 = vlaneseq
        %v1023 = vshrl.u32 %v1022, 7
        %v1024 = vsub.s32 1, %v1023
        %v1025 = vrot.slane %v994, %v1024
        %v1026 = vmul.f32 %v1016, %v1021
        %v1027 = vmul.f32 %v1016, %v1025
        %v1028 = vadd.f32 %v1012, %v1026
        %v1029 = vadd.f32 %v1013, %v1027
        %1030 = vset.pattern.permute.xlu0 2
        %1031 = vperm.xlu0 %1030, %v996
        %v1032 = vpop.permute.xlu0 %1031
        %v1034 = vlaneseq
        %v1035 = vshrl.u32 %v1034, 7
        %v1036 = vsub.s32 2, %v1035
        %v1037 = vrot.slane %v993, %v1036
        %v1038 = vlaneseq
        %v1039 = vshrl.u32 %v1038, 7
        %v1040 = vsub.s32 2, %v1039
        %v1041 = vrot.slane %v994, %v1040
        %v1042 = vmul.f32 %v1032, %v1037
        %v1043 = vmul.f32 %v1032, %v1041
        %v1044 = vadd.f32 %v1028, %v1042
        %v1045 = vadd.f32 %v1029, %v1043
        %1046 = vset.pattern.permute.xlu0 3
        %1047 = vperm.xlu0 %1046, %v996
        %v1048 = vpop.permute.xlu0 %1047
        %v1050 = vlaneseq
        %v1051 = vshrl.u32 %v1050, 7
        %v1052 = vsub.s32 3, %v1051
        %v1053 = vrot.slane %v993, %v1052
        %v1054 = vlaneseq
        %v1055 = vshrl.u32 %v1054, 7
        %v1056 = vsub.s32 3, %v1055
        %v1057 = vrot.slane %v994, %v1056
        %v1058 = vmul.f32 %v1048, %v1053
        %v1059 = vmul.f32 %v1048, %v1057
        %v1060 = vadd.f32 %v1044, %v1058
        %v1061 = vadd.f32 %v1045, %v1059
        %1062 = vset.pattern.permute.xlu0 4
        %1063 = vperm.xlu0 %1062, %v996
        %v1064 = vpop.permute.xlu0 %1063
        %v1066 = vlaneseq
        %v1067 = vshrl.u32 %v1066, 7
        %v1068 = vsub.s32 4, %v1067
        %v1069 = vrot.slane %v993, %v1068
        %v1070 = vlaneseq
        %v1071 = vshrl.u32 %v1070, 7
        %v1072 = vsub.s32 4, %v1071
        %v1073 = vrot.slane %v994, %v1072
        %v1074 = vmul.f32 %v1064, %v1069
        %v1075 = vmul.f32 %v1064, %v1073
        %v1076 = vadd.f32 %v1060, %v1074
        %v1077 = vadd.f32 %v1061, %v1075
        %1078 = vset.pattern.permute.xlu0 5
        %1079 = vperm.xlu0 %1078, %v996
        %v1080 = vpop.permute.xlu0 %1079
        %v1082 = vlaneseq
        %v1083 = vshrl.u32 %v1082, 7
        %v1084 = vsub.s32 5, %v1083
        %v1085 = vrot.slane %v993, %v1084
        %v1086 = vlaneseq
        %v1087 = vshrl.u32 %v1086, 7
        %v1088 = vsub.s32 5, %v1087
        %v1089 = vrot.slane %v994, %v1088
        %v1090 = vmul.f32 %v1080, %v1085
        %v1091 = vmul.f32 %v1080, %v1089
        %v1092 = vadd.f32 %v1076, %v1090
        %v1093 = vadd.f32 %v1077, %v1091
        %1094 = vset.pattern.permute.xlu0 6
        %1095 = vperm.xlu0 %1094, %v996
        %v1096 = vpop.permute.xlu0 %1095
        %v1098 = vlaneseq
        %v1099 = vshrl.u32 %v1098, 7
        %v1100 = vsub.s32 6, %v1099
        %v1101 = vrot.slane %v993, %v1100
        %v1102 = vlaneseq
        %v1103 = vshrl.u32 %v1102, 7
        %v1104 = vsub.s32 6, %v1103
        %v1105 = vrot.slane %v994, %v1104
        %v1106 = vmul.f32 %v1096, %v1101
        %v1107 = vmul.f32 %v1096, %v1105
        %v1108 = vadd.f32 %v1092, %v1106
        %v1109 = vadd.f32 %v1093, %v1107
        %1110 = vset.pattern.permute.xlu0 7
        %1111 = vperm.xlu0 %1110, %v996
        %v1112 = vpop.permute.xlu0 %1111
        %v1114 = vlaneseq
        %v1115 = vshrl.u32 %v1114, 7
        %v1116 = vsub.s32 7, %v1115
        %v1117 = vrot.slane %v993, %v1116
        %v1118 = vlaneseq
        %v1119 = vshrl.u32 %v1118, 7
        %v1120 = vsub.s32 7, %v1119
        %v1121 = vrot.slane %v994, %v1120
        %v1122 = vmul.f32 %v1112, %v1117
        %v1123 = vmul.f32 %v1112, %v1121
        %v1124 = vadd.f32 %v1108, %v1122
        %v1125 = vadd.f32 %v1109, %v1123
        %v1126 = vsel %vm258, 1, 0
        %v1127 = vsel %vm259, 1, 0
        %vm1128 = vcmp.eq.s32.totalorder %v1126, 1
        %vm1129 = vcmp.eq.s32.totalorder %v1127, 1
        %v1130 = vsel %vm1128, %v272, %v278
        %v1131 = vsel %vm1129, %v269, %v282
        %1133 = vrot.lane.b32.xlu0 %v1131, 1
        %v1134 = vpop.permute.xlu0 %1133
        %1137 = vrot.lane.b32.xlu0 %v1130, 1
        %v1138 = vpop.permute.xlu0 %1137
        %v1139 = vsel %vm296, %v1138, %v1134
        %v1142 = vsel %vm296, %v1134, %v1138
        %1143 = vrot.lane.b32.xlu0 %v1130, 127
        %v1144 = vpop.permute.xlu0 %1143
        %1145 = vrot.lane.b32.xlu0 %v1131, 127
        %v1146 = vpop.permute.xlu0 %1145
        %v1147 = vsel %vm305, %v1144, %v1146
        %v1151 = vsel %vm305, %v1146, %v1144
        %v1152 = vsel %vm313, %v1147, %v1142
        %v1153 = vsel %vm314, %v1151, %v1139
        %s1154 = scalar_lea.vmem %s1, 48
        %v1155 = vld [vmem:[%s1154] sm:$0xff]
        %1157 = vset.pattern.permute.xlu0 0
        %1158 = vperm.xlu0 %1157, %v1155
        %v1159 = vpop.permute.xlu0 %1158
        %v1161 = vlaneseq
        %v1162 = vshrl.u32 %v1161, 7
        %v1163 = vsub.s32 0, %v1162
        %v1164 = vrot.slane %v1152, %v1163
        %v1165 = vlaneseq
        %v1166 = vshrl.u32 %v1165, 7
        %v1167 = vsub.s32 0, %v1166
        %v1168 = vrot.slane %v1153, %v1167
        %v1169 = vmul.f32 %v1159, %v1164
        %v1170 = vmul.f32 %v1159, %v1168
        %1171 = vset.pattern.permute.xlu0 1
        %1172 = vperm.xlu0 %1171, %v1155
        %v1173 = vpop.permute.xlu0 %1172
        %v1175 = vlaneseq
        %v1176 = vshrl.u32 %v1175, 7
        %v1177 = vsub.s32 1, %v1176
        %v1178 = vrot.slane %v1152, %v1177
        %v1179 = vlaneseq
        %v1180 = vshrl.u32 %v1179, 7
        %v1181 = vsub.s32 1, %v1180
        %v1182 = vrot.slane %v1153, %v1181
        %v1183 = vmul.f32 %v1173, %v1178
        %v1184 = vmul.f32 %v1173, %v1182
        %v1185 = vadd.f32 %v1169, %v1183
        %v1186 = vadd.f32 %v1170, %v1184
        %1187 = vset.pattern.permute.xlu0 2
        %1188 = vperm.xlu0 %1187, %v1155
        %v1189 = vpop.permute.xlu0 %1188
        %v1191 = vlaneseq
        %v1192 = vshrl.u32 %v1191, 7
        %v1193 = vsub.s32 2, %v1192
        %v1194 = vrot.slane %v1152, %v1193
        %v1195 = vlaneseq
        %v1196 = vshrl.u32 %v1195, 7
        %v1197 = vsub.s32 2, %v1196
        %v1198 = vrot.slane %v1153, %v1197
        %v1199 = vmul.f32 %v1189, %v1194
        %v1200 = vmul.f32 %v1189, %v1198
        %v1201 = vadd.f32 %v1185, %v1199
        %v1202 = vadd.f32 %v1186, %v1200
        %1203 = vset.pattern.permute.xlu0 3
        %1204 = vperm.xlu0 %1203, %v1155
        %v1205 = vpop.permute.xlu0 %1204
        %v1207 = vlaneseq
        %v1208 = vshrl.u32 %v1207, 7
        %v1209 = vsub.s32 3, %v1208
        %v1210 = vrot.slane %v1152, %v1209
        %v1211 = vlaneseq
        %v1212 = vshrl.u32 %v1211, 7
        %v1213 = vsub.s32 3, %v1212
        %v1214 = vrot.slane %v1153, %v1213
        %v1215 = vmul.f32 %v1205, %v1210
        %v1216 = vmul.f32 %v1205, %v1214
        %v1217 = vadd.f32 %v1201, %v1215
        %v1218 = vadd.f32 %v1202, %v1216
        %1219 = vset.pattern.permute.xlu0 4
        %1220 = vperm.xlu0 %1219, %v1155
        %v1221 = vpop.permute.xlu0 %1220
        %v1223 = vlaneseq
        %v1224 = vshrl.u32 %v1223, 7
        %v1225 = vsub.s32 4, %v1224
        %v1226 = vrot.slane %v1152, %v1225
        %v1227 = vlaneseq
        %v1228 = vshrl.u32 %v1227, 7
        %v1229 = vsub.s32 4, %v1228
        %v1230 = vrot.slane %v1153, %v1229
        %v1231 = vmul.f32 %v1221, %v1226
        %v1232 = vmul.f32 %v1221, %v1230
        %v1233 = vadd.f32 %v1217, %v1231
        %v1234 = vadd.f32 %v1218, %v1232
        %1235 = vset.pattern.permute.xlu0 5
        %1236 = vperm.xlu0 %1235, %v1155
        %v1237 = vpop.permute.xlu0 %1236
        %v1239 = vlaneseq
        %v1240 = vshrl.u32 %v1239, 7
        %v1241 = vsub.s32 5, %v1240
        %v1242 = vrot.slane %v1152, %v1241
        %v1243 = vlaneseq
        %v1244 = vshrl.u32 %v1243, 7
        %v1245 = vsub.s32 5, %v1244
        %v1246 = vrot.slane %v1153, %v1245
        %v1247 = vmul.f32 %v1237, %v1242
        %v1248 = vmul.f32 %v1237, %v1246
        %v1249 = vadd.f32 %v1233, %v1247
        %v1250 = vadd.f32 %v1234, %v1248
        %1251 = vset.pattern.permute.xlu0 6
        %1252 = vperm.xlu0 %1251, %v1155
        %v1253 = vpop.permute.xlu0 %1252
        %v1255 = vlaneseq
        %v1256 = vshrl.u32 %v1255, 7
        %v1257 = vsub.s32 6, %v1256
        %v1258 = vrot.slane %v1152, %v1257
        %v1259 = vlaneseq
        %v1260 = vshrl.u32 %v1259, 7
        %v1261 = vsub.s32 6, %v1260
        %v1262 = vrot.slane %v1153, %v1261
        %v1263 = vmul.f32 %v1253, %v1258
        %v1264 = vmul.f32 %v1253, %v1262
        %v1265 = vadd.f32 %v1249, %v1263
        %v1266 = vadd.f32 %v1250, %v1264
        %1267 = vset.pattern.permute.xlu0 7
        %1268 = vperm.xlu0 %1267, %v1155
        %v1269 = vpop.permute.xlu0 %1268
        %v1271 = vlaneseq
        %v1272 = vshrl.u32 %v1271, 7
        %v1273 = vsub.s32 7, %v1272
        %v1274 = vrot.slane %v1152, %v1273
        %v1275 = vlaneseq
        %v1276 = vshrl.u32 %v1275, 7
        %v1277 = vsub.s32 7, %v1276
        %v1278 = vrot.slane %v1153, %v1277
        %v1279 = vmul.f32 %v1269, %v1274
        %v1280 = vmul.f32 %v1269, %v1278
        %v1281 = vadd.f32 %v1265, %v1279
        %v1282 = vadd.f32 %v1266, %v1280
        %s1283 = scalar_lea.vmem %s1, 56
        %v1284 = vld [vmem:[%s1283] sm:$0xff]
        %1286 = vset.pattern.permute.xlu0 0
        %1287 = vperm.xlu0 %1286, %v1284
        %v1288 = vpop.permute.xlu0 %1287
        %v1290 = vlaneseq
        %v1291 = vshrl.u32 %v1290, 7
        %v1292 = vsub.s32 0, %v1291
        %v1293 = vrot.slane %v1130, %v1292
        %v1294 = vlaneseq
        %v1295 = vshrl.u32 %v1294, 7
        %v1296 = vsub.s32 0, %v1295
        %v1297 = vrot.slane %v1131, %v1296
        %v1298 = vmul.f32 %v1288, %v1293
        %v1299 = vmul.f32 %v1288, %v1297
        %v1300 = vadd.f32 %v1281, %v1298
        %v1301 = vadd.f32 %v1282, %v1299
        %1302 = vset.pattern.permute.xlu0 1
        %1303 = vperm.xlu0 %1302, %v1284
        %v1304 = vpop.permute.xlu0 %1303
        %v1306 = vlaneseq
        %v1307 = vshrl.u32 %v1306, 7
        %v1308 = vsub.s32 1, %v1307
        %v1309 = vrot.slane %v1130, %v1308
        %v1310 = vlaneseq
        %v1311 = vshrl.u32 %v1310, 7
        %v1312 = vsub.s32 1, %v1311
        %v1313 = vrot.slane %v1131, %v1312
        %v1314 = vmul.f32 %v1304, %v1309
        %v1315 = vmul.f32 %v1304, %v1313
        %v1316 = vadd.f32 %v1300, %v1314
        %v1317 = vadd.f32 %v1301, %v1315
        %1318 = vset.pattern.permute.xlu0 2
        %1319 = vperm.xlu0 %1318, %v1284
        %v1320 = vpop.permute.xlu0 %1319
        %v1322 = vlaneseq
        %v1323 = vshrl.u32 %v1322, 7
        %v1324 = vsub.s32 2, %v1323
        %v1325 = vrot.slane %v1130, %v1324
        %v1326 = vlaneseq
        %v1327 = vshrl.u32 %v1326, 7
        %v1328 = vsub.s32 2, %v1327
        %v1329 = vrot.slane %v1131, %v1328
        %v1330 = vmul.f32 %v1320, %v1325
        %v1331 = vmul.f32 %v1320, %v1329
        %v1332 = vadd.f32 %v1316, %v1330
        %v1333 = vadd.f32 %v1317, %v1331
        %1334 = vset.pattern.permute.xlu0 3
        %1335 = vperm.xlu0 %1334, %v1284
        %v1336 = vpop.permute.xlu0 %1335
        %v1338 = vlaneseq
        %v1339 = vshrl.u32 %v1338, 7
        %v1340 = vsub.s32 3, %v1339
        %v1341 = vrot.slane %v1130, %v1340
        %v1342 = vlaneseq
        %v1343 = vshrl.u32 %v1342, 7
        %v1344 = vsub.s32 3, %v1343
        %v1345 = vrot.slane %v1131, %v1344
        %v1346 = vmul.f32 %v1336, %v1341
        %v1347 = vmul.f32 %v1336, %v1345
        %v1348 = vadd.f32 %v1332, %v1346
        %v1349 = vadd.f32 %v1333, %v1347
        %1350 = vset.pattern.permute.xlu0 4
        %1351 = vperm.xlu0 %1350, %v1284
        %v1352 = vpop.permute.xlu0 %1351
        %v1354 = vlaneseq
        %v1355 = vshrl.u32 %v1354, 7
        %v1356 = vsub.s32 4, %v1355
        %v1357 = vrot.slane %v1130, %v1356
        %v1358 = vlaneseq
        %v1359 = vshrl.u32 %v1358, 7
        %v1360 = vsub.s32 4, %v1359
        %v1361 = vrot.slane %v1131, %v1360
        %v1362 = vmul.f32 %v1352, %v1357
        %v1363 = vmul.f32 %v1352, %v1361
        %v1364 = vadd.f32 %v1348, %v1362
        %v1365 = vadd.f32 %v1349, %v1363
        %1366 = vset.pattern.permute.xlu0 5
        %1367 = vperm.xlu0 %1366, %v1284
        %v1368 = vpop.permute.xlu0 %1367
        %v1370 = vlaneseq
        %v1371 = vshrl.u32 %v1370, 7
        %v1372 = vsub.s32 5, %v1371
        %v1373 = vrot.slane %v1130, %v1372
        %v1374 = vlaneseq
        %v1375 = vshrl.u32 %v1374, 7
        %v1376 = vsub.s32 5, %v1375
        %v1377 = vrot.slane %v1131, %v1376
        %v1378 = vmul.f32 %v1368, %v1373
        %v1379 = vmul.f32 %v1368, %v1377
        %v1380 = vadd.f32 %v1364, %v1378
        %v1381 = vadd.f32 %v1365, %v1379
        %1382 = vset.pattern.permute.xlu0 6
        %1383 = vperm.xlu0 %1382, %v1284
        %v1384 = vpop.permute.xlu0 %1383
        %v1386 = vlaneseq
        %v1387 = vshrl.u32 %v1386, 7
        %v1388 = vsub.s32 6, %v1387
        %v1389 = vrot.slane %v1130, %v1388
        %v1390 = vlaneseq
        %v1391 = vshrl.u32 %v1390, 7
        %v1392 = vsub.s32 6, %v1391
        %v1393 = vrot.slane %v1131, %v1392
        %v1394 = vmul.f32 %v1384, %v1389
        %v1395 = vmul.f32 %v1384, %v1393
        %v1396 = vadd.f32 %v1380, %v1394
        %v1397 = vadd.f32 %v1381, %v1395
        %1398 = vset.pattern.permute.xlu0 7
        %1399 = vperm.xlu0 %1398, %v1284
        %v1400 = vpop.permute.xlu0 %1399
        %v1402 = vlaneseq
        %v1403 = vshrl.u32 %v1402, 7
        %v1404 = vsub.s32 7, %v1403
        %v1405 = vrot.slane %v1130, %v1404
        %v1406 = vlaneseq
        %v1407 = vshrl.u32 %v1406, 7
        %v1408 = vsub.s32 7, %v1407
        %v1409 = vrot.slane %v1131, %v1408
        %v1410 = vmul.f32 %v1400, %v1405
        %v1411 = vmul.f32 %v1400, %v1409
        %v1412 = vadd.f32 %v1396, %v1410
        %v1413 = vadd.f32 %v1397, %v1411
        %v1414 = vsel %vm578, %v1142, %v1147
        %v1415 = vsel %vm579, %v1139, %v1151
        %s1416 = scalar_lea.vmem %s1, 64
        %v1417 = vld [vmem:[%s1416] sm:$0xff]
        %1419 = vset.pattern.permute.xlu0 0
        %1420 = vperm.xlu0 %1419, %v1417
        %v1421 = vpop.permute.xlu0 %1420
        %v1423 = vlaneseq
        %v1424 = vshrl.u32 %v1423, 7
        %v1425 = vsub.s32 0, %v1424
        %v1426 = vrot.slane %v1414, %v1425
        %v1427 = vlaneseq
        %v1428 = vshrl.u32 %v1427, 7
        %v1429 = vsub.s32 0, %v1428
        %v1430 = vrot.slane %v1415, %v1429
        %v1431 = vmul.f32 %v1421, %v1426
        %v1432 = vmul.f32 %v1421, %v1430
        %v1433 = vadd.f32 %v1412, %v1431
        %v1434 = vadd.f32 %v1413, %v1432
        %1435 = vset.pattern.permute.xlu0 1
        %1436 = vperm.xlu0 %1435, %v1417
        %v1437 = vpop.permute.xlu0 %1436
        %v1439 = vlaneseq
        %v1440 = vshrl.u32 %v1439, 7
        %v1441 = vsub.s32 1, %v1440
        %v1442 = vrot.slane %v1414, %v1441
        %v1443 = vlaneseq
        %v1444 = vshrl.u32 %v1443, 7
        %v1445 = vsub.s32 1, %v1444
        %v1446 = vrot.slane %v1415, %v1445
        %v1447 = vmul.f32 %v1437, %v1442
        %v1448 = vmul.f32 %v1437, %v1446
        %v1449 = vadd.f32 %v1433, %v1447
        %v1450 = vadd.f32 %v1434, %v1448
        %1451 = vset.pattern.permute.xlu0 2
        %1452 = vperm.xlu0 %1451, %v1417
        %v1453 = vpop.permute.xlu0 %1452
        %v1455 = vlaneseq
        %v1456 = vshrl.u32 %v1455, 7
        %v1457 = vsub.s32 2, %v1456
        %v1458 = vrot.slane %v1414, %v1457
        %v1459 = vlaneseq
        %v1460 = vshrl.u32 %v1459, 7
        %v1461 = vsub.s32 2, %v1460
        %v1462 = vrot.slane %v1415, %v1461
        %v1463 = vmul.f32 %v1453, %v1458
        %v1464 = vmul.f32 %v1453, %v1462
        %v1465 = vadd.f32 %v1449, %v1463
        %v1466 = vadd.f32 %v1450, %v1464
        %1467 = vset.pattern.permute.xlu0 3
        %1468 = vperm.xlu0 %1467, %v1417
        %v1469 = vpop.permute.xlu0 %1468
        %v1471 = vlaneseq
        %v1472 = vshrl.u32 %v1471, 7
        %v1473 = vsub.s32 3, %v1472
        %v1474 = vrot.slane %v1414, %v1473
        %v1475 = vlaneseq
        %v1476 = vshrl.u32 %v1475, 7
        %v1477 = vsub.s32 3, %v1476
        %v1478 = vrot.slane %v1415, %v1477
        %v1479 = vmul.f32 %v1469, %v1474
        %v1480 = vmul.f32 %v1469, %v1478
        %v1481 = vadd.f32 %v1465, %v1479
        %v1482 = vadd.f32 %v1466, %v1480
        %1483 = vset.pattern.permute.xlu0 4
        %1484 = vperm.xlu0 %1483, %v1417
        %v1485 = vpop.permute.xlu0 %1484
        %v1487 = vlaneseq
        %v1488 = vshrl.u32 %v1487, 7
        %v1489 = vsub.s32 4, %v1488
        %v1490 = vrot.slane %v1414, %v1489
        %v1491 = vlaneseq
        %v1492 = vshrl.u32 %v1491, 7
        %v1493 = vsub.s32 4, %v1492
        %v1494 = vrot.slane %v1415, %v1493
        %v1495 = vmul.f32 %v1485, %v1490
        %v1496 = vmul.f32 %v1485, %v1494
        %v1497 = vadd.f32 %v1481, %v1495
        %v1498 = vadd.f32 %v1482, %v1496
        %1499 = vset.pattern.permute.xlu0 5
        %1500 = vperm.xlu0 %1499, %v1417
        %v1501 = vpop.permute.xlu0 %1500
        %v1503 = vlaneseq
        %v1504 = vshrl.u32 %v1503, 7
        %v1505 = vsub.s32 5, %v1504
        %v1506 = vrot.slane %v1414, %v1505
        %v1507 = vlaneseq
        %v1508 = vshrl.u32 %v1507, 7
        %v1509 = vsub.s32 5, %v1508
        %v1510 = vrot.slane %v1415, %v1509
        %v1511 = vmul.f32 %v1501, %v1506
        %v1512 = vmul.f32 %v1501, %v1510
        %v1513 = vadd.f32 %v1497, %v1511
        %v1514 = vadd.f32 %v1498, %v1512
        %1515 = vset.pattern.permute.xlu0 6
        %1516 = vperm.xlu0 %1515, %v1417
        %v1517 = vpop.permute.xlu0 %1516
        %v1519 = vlaneseq
        %v1520 = vshrl.u32 %v1519, 7
        %v1521 = vsub.s32 6, %v1520
        %v1522 = vrot.slane %v1414, %v1521
        %v1523 = vlaneseq
        %v1524 = vshrl.u32 %v1523, 7
        %v1525 = vsub.s32 6, %v1524
        %v1526 = vrot.slane %v1415, %v1525
        %v1527 = vmul.f32 %v1517, %v1522
        %v1528 = vmul.f32 %v1517, %v1526
        %v1529 = vadd.f32 %v1513, %v1527
        %v1530 = vadd.f32 %v1514, %v1528
        %1531 = vset.pattern.permute.xlu0 7
        %1532 = vperm.xlu0 %1531, %v1417
        %v1533 = vpop.permute.xlu0 %1532
        %v1535 = vlaneseq
        %v1536 = vshrl.u32 %v1535, 7
        %v1537 = vsub.s32 7, %v1536
        %v1538 = vrot.slane %v1414, %v1537
        %v1539 = vlaneseq
        %v1540 = vshrl.u32 %v1539, 7
        %v1541 = vsub.s32 7, %v1540
        %v1542 = vrot.slane %v1415, %v1541
        %v1543 = vmul.f32 %v1533, %v1538
        %v1544 = vmul.f32 %v1533, %v1542
        %v1545 = vadd.f32 %v1529, %v1543
        %v1546 = vadd.f32 %v1530, %v1544
        %1548 = vset.pattern.permute.xlu0 0
        %1549 = vperm.xlu0 %1548, %v260
        %v1550 = vpop.permute.xlu0 %1549
        %v1552 = vadd.f32 %v1550, %v711
        %v1553 = vadd.f32 %v1550, %v712
        %v1554 = vadd.f32 %v1552, %v1124
        %v1555 = vadd.f32 %v1553, %v1125
        %v1556 = vadd.f32 %v1554, %v1545
        %v1557 = vadd.f32 %v1555, %v1546
        %v1558 = vadd.f32 %v1556, %v1557
        %1559 = vadd.xlane.f32.xlu0 %v1558
        %v1560 = vpop.xlane.xlu0 %1559
        %v1561 = vmul.f32 %v1560, 0.00390625
        %v1562 = vsub.f32 %v1556, %v1561
        %v1563 = vsub.f32 %v1557, %v1561
        %v1564 = vmul.f32 %v1562, %v1562
        %v1565 = vmul.f32 %v1563, %v1563
        %v1566 = vadd.f32 %v1564, %v1565
        %1567 = vadd.xlane.f32.xlu0 %v1566
        %v1568 = vpop.xlane.xlu0 %1567
        %v1569 = vmul.f32 %v1568, 0.00390625
        %v1570 = vadd.f32 %v1569, 1e-05
        %v1571 = vrsqrt.pop %v1570
        %v1572 = vmul.f32 %v1562, %v1571
        %v1573 = vmul.f32 %v1563, %v1571
        %v1574 = vmax.f32 %v1572, 0.0
        %v1575 = vmax.f32 %v1573, 0.0
        %v1576 = vld [vmem:[%s4] sm:$0xff]
        %1578 = vrot.lane.b32.xlu0 %v1575, 16
        %v1579 = vpop.permute.xlu0 %1578
        %1582 = vrot.lane.b32.xlu0 %v1574, 16
        %v1583 = vpop.permute.xlu0 %1582
        %v1584 = vsel %vm268, %v1583, %v1579
        %v1587 = vsel %vm268, %v1579, %v1583
        %1588 = vrot.lane.b32.xlu0 %v1574, 112
        %v1589 = vpop.permute.xlu0 %1588
        %1590 = vrot.lane.b32.xlu0 %v1575, 112
        %v1591 = vpop.permute.xlu0 %1590
        %v1592 = vsel %vm277, %v1589, %v1591
        %v1596 = vsel %vm277, %v1591, %v1589
        %v1597 = vsel %vm285, %v1592, %v1587
        %v1598 = vsel %vm286, %v1596, %v1584
        %1600 = vrot.lane.b32.xlu0 %v1598, 1
        %v1601 = vpop.permute.xlu0 %1600
        %1604 = vrot.lane.b32.xlu0 %v1597, 1
        %v1605 = vpop.permute.xlu0 %1604
        %v1606 = vsel %vm296, %v1605, %v1601
        %v1609 = vsel %vm296, %v1601, %v1605
        %1610 = vrot.lane.b32.xlu0 %v1597, 127
        %v1611 = vpop.permute.xlu0 %1610
        %1612 = vrot.lane.b32.xlu0 %v1598, 127
        %v1613 = vpop.permute.xlu0 %1612
        %v1614 = vsel %vm305, %v1611, %v1613
        %v1618 = vsel %vm305, %v1613, %v1611
        %v1619 = vsel %vm313, %v1614, %v1609
        %v1620 = vsel %vm314, %v1618, %v1606
        %v1621 = vld [vmem:[%s3] sm:$0xff]
        %1623 = vset.pattern.permute.xlu0 0
        %1624 = vperm.xlu0 %1623, %v1621
        %v1625 = vpop.permute.xlu0 %1624
        %v1627 = vlaneseq
        %v1628 = vshrl.u32 %v1627, 7
        %v1629 = vsub.s32 0, %v1628
        %v1630 = vrot.slane %v1619, %v1629
        %v1631 = vlaneseq
        %v1632 = vshrl.u32 %v1631, 7
        %v1633 = vsub.s32 0, %v1632
        %v1634 = vrot.slane %v1620, %v1633
        %v1635 = vmul.f32 %v1625, %v1630
        %v1636 = vmul.f32 %v1625, %v1634
        %1637 = vset.pattern.permute.xlu0 1
        %1638 = vperm.xlu0 %1637, %v1621
        %v1639 = vpop.permute.xlu0 %1638
        %v1641 = vlaneseq
        %v1642 = vshrl.u32 %v1641, 7
        %v1643 = vsub.s32 1, %v1642
        %v1644 = vrot.slane %v1619, %v1643
        %v1645 = vlaneseq
        %v1646 = vshrl.u32 %v1645, 7
        %v1647 = vsub.s32 1, %v1646
        %v1648 = vrot.slane %v1620, %v1647
        %v1649 = vmul.f32 %v1639, %v1644
        %v1650 = vmul.f32 %v1639, %v1648
        %v1651 = vadd.f32 %v1635, %v1649
        %v1652 = vadd.f32 %v1636, %v1650
        %1653 = vset.pattern.permute.xlu0 2
        %1654 = vperm.xlu0 %1653, %v1621
        %v1655 = vpop.permute.xlu0 %1654
        %v1657 = vlaneseq
        %v1658 = vshrl.u32 %v1657, 7
        %v1659 = vsub.s32 2, %v1658
        %v1660 = vrot.slane %v1619, %v1659
        %v1661 = vlaneseq
        %v1662 = vshrl.u32 %v1661, 7
        %v1663 = vsub.s32 2, %v1662
        %v1664 = vrot.slane %v1620, %v1663
        %v1665 = vmul.f32 %v1655, %v1660
        %v1666 = vmul.f32 %v1655, %v1664
        %v1667 = vadd.f32 %v1651, %v1665
        %v1668 = vadd.f32 %v1652, %v1666
        %1669 = vset.pattern.permute.xlu0 3
        %1670 = vperm.xlu0 %1669, %v1621
        %v1671 = vpop.permute.xlu0 %1670
        %v1673 = vlaneseq
        %v1674 = vshrl.u32 %v1673, 7
        %v1675 = vsub.s32 3, %v1674
        %v1676 = vrot.slane %v1619, %v1675
        %v1677 = vlaneseq
        %v1678 = vshrl.u32 %v1677, 7
        %v1679 = vsub.s32 3, %v1678
        %v1680 = vrot.slane %v1620, %v1679
        %v1681 = vmul.f32 %v1671, %v1676
        %v1682 = vmul.f32 %v1671, %v1680
        %v1683 = vadd.f32 %v1667, %v1681
        %v1684 = vadd.f32 %v1668, %v1682
        %1685 = vset.pattern.permute.xlu0 4
        %1686 = vperm.xlu0 %1685, %v1621
        %v1687 = vpop.permute.xlu0 %1686
        %v1689 = vlaneseq
        %v1690 = vshrl.u32 %v1689, 7
        %v1691 = vsub.s32 4, %v1690
        %v1692 = vrot.slane %v1619, %v1691
        %v1693 = vlaneseq
        %v1694 = vshrl.u32 %v1693, 7
        %v1695 = vsub.s32 4, %v1694
        %v1696 = vrot.slane %v1620, %v1695
        %v1697 = vmul.f32 %v1687, %v1692
        %v1698 = vmul.f32 %v1687, %v1696
        %v1699 = vadd.f32 %v1683, %v1697
        %v1700 = vadd.f32 %v1684, %v1698
        %1701 = vset.pattern.permute.xlu0 5
        %1702 = vperm.xlu0 %1701, %v1621
        %v1703 = vpop.permute.xlu0 %1702
        %v1705 = vlaneseq
        %v1706 = vshrl.u32 %v1705, 7
        %v1707 = vsub.s32 5, %v1706
        %v1708 = vrot.slane %v1619, %v1707
        %v1709 = vlaneseq
        %v1710 = vshrl.u32 %v1709, 7
        %v1711 = vsub.s32 5, %v1710
        %v1712 = vrot.slane %v1620, %v1711
        %v1713 = vmul.f32 %v1703, %v1708
        %v1714 = vmul.f32 %v1703, %v1712
        %v1715 = vadd.f32 %v1699, %v1713
        %v1716 = vadd.f32 %v1700, %v1714
        %1717 = vset.pattern.permute.xlu0 6
        %1718 = vperm.xlu0 %1717, %v1621
        %v1719 = vpop.permute.xlu0 %1718
        %v1721 = vlaneseq
        %v1722 = vshrl.u32 %v1721, 7
        %v1723 = vsub.s32 6, %v1722
        %v1724 = vrot.slane %v1619, %v1723
        %v1725 = vlaneseq
        %v1726 = vshrl.u32 %v1725, 7
        %v1727 = vsub.s32 6, %v1726
        %v1728 = vrot.slane %v1620, %v1727
        %v1729 = vmul.f32 %v1719, %v1724
        %v1730 = vmul.f32 %v1719, %v1728
        %v1731 = vadd.f32 %v1715, %v1729
        %v1732 = vadd.f32 %v1716, %v1730
        %1733 = vset.pattern.permute.xlu0 7
        %1734 = vperm.xlu0 %1733, %v1621
        %v1735 = vpop.permute.xlu0 %1734
        %v1737 = vlaneseq
        %v1738 = vshrl.u32 %v1737, 7
        %v1739 = vsub.s32 7, %v1738
        %v1740 = vrot.slane %v1619, %v1739
        %v1741 = vlaneseq
        %v1742 = vshrl.u32 %v1741, 7
        %v1743 = vsub.s32 7, %v1742
        %v1744 = vrot.slane %v1620, %v1743
        %v1745 = vmul.f32 %v1735, %v1740
        %v1746 = vmul.f32 %v1735, %v1744
        %v1747 = vadd.f32 %v1731, %v1745
        %v1748 = vadd.f32 %v1732, %v1746
        %s1749 = scalar_lea.vmem %s3, 8
        %v1750 = vld [vmem:[%s1749] sm:$0xff]
        %1752 = vset.pattern.permute.xlu0 0
        %1753 = vperm.xlu0 %1752, %v1750
        %v1754 = vpop.permute.xlu0 %1753
        %v1756 = vlaneseq
        %v1757 = vshrl.u32 %v1756, 7
        %v1758 = vsub.s32 0, %v1757
        %v1759 = vrot.slane %v1597, %v1758
        %v1760 = vlaneseq
        %v1761 = vshrl.u32 %v1760, 7
        %v1762 = vsub.s32 0, %v1761
        %v1763 = vrot.slane %v1598, %v1762
        %v1764 = vmul.f32 %v1754, %v1759
        %v1765 = vmul.f32 %v1754, %v1763
        %v1766 = vadd.f32 %v1747, %v1764
        %v1767 = vadd.f32 %v1748, %v1765
        %1768 = vset.pattern.permute.xlu0 1
        %1769 = vperm.xlu0 %1768, %v1750
        %v1770 = vpop.permute.xlu0 %1769
        %v1772 = vlaneseq
        %v1773 = vshrl.u32 %v1772, 7
        %v1774 = vsub.s32 1, %v1773
        %v1775 = vrot.slane %v1597, %v1774
        %v1776 = vlaneseq
        %v1777 = vshrl.u32 %v1776, 7
        %v1778 = vsub.s32 1, %v1777
        %v1779 = vrot.slane %v1598, %v1778
        %v1780 = vmul.f32 %v1770, %v1775
        %v1781 = vmul.f32 %v1770, %v1779
        %v1782 = vadd.f32 %v1766, %v1780
        %v1783 = vadd.f32 %v1767, %v1781
        %1784 = vset.pattern.permute.xlu0 2
        %1785 = vperm.xlu0 %1784, %v1750
        %v1786 = vpop.permute.xlu0 %1785
        %v1788 = vlaneseq
        %v1789 = vshrl.u32 %v1788, 7
        %v1790 = vsub.s32 2, %v1789
        %v1791 = vrot.slane %v1597, %v1790
        %v1792 = vlaneseq
        %v1793 = vshrl.u32 %v1792, 7
        %v1794 = vsub.s32 2, %v1793
        %v1795 = vrot.slane %v1598, %v1794
        %v1796 = vmul.f32 %v1786, %v1791
        %v1797 = vmul.f32 %v1786, %v1795
        %v1798 = vadd.f32 %v1782, %v1796
        %v1799 = vadd.f32 %v1783, %v1797
        %1800 = vset.pattern.permute.xlu0 3
        %1801 = vperm.xlu0 %1800, %v1750
        %v1802 = vpop.permute.xlu0 %1801
        %v1804 = vlaneseq
        %v1805 = vshrl.u32 %v1804, 7
        %v1806 = vsub.s32 3, %v1805
        %v1807 = vrot.slane %v1597, %v1806
        %v1808 = vlaneseq
        %v1809 = vshrl.u32 %v1808, 7
        %v1810 = vsub.s32 3, %v1809
        %v1811 = vrot.slane %v1598, %v1810
        %v1812 = vmul.f32 %v1802, %v1807
        %v1813 = vmul.f32 %v1802, %v1811
        %v1814 = vadd.f32 %v1798, %v1812
        %v1815 = vadd.f32 %v1799, %v1813
        %1816 = vset.pattern.permute.xlu0 4
        %1817 = vperm.xlu0 %1816, %v1750
        %v1818 = vpop.permute.xlu0 %1817
        %v1820 = vlaneseq
        %v1821 = vshrl.u32 %v1820, 7
        %v1822 = vsub.s32 4, %v1821
        %v1823 = vrot.slane %v1597, %v1822
        %v1824 = vlaneseq
        %v1825 = vshrl.u32 %v1824, 7
        %v1826 = vsub.s32 4, %v1825
        %v1827 = vrot.slane %v1598, %v1826
        %v1828 = vmul.f32 %v1818, %v1823
        %v1829 = vmul.f32 %v1818, %v1827
        %v1830 = vadd.f32 %v1814, %v1828
        %v1831 = vadd.f32 %v1815, %v1829
        %1832 = vset.pattern.permute.xlu0 5
        %1833 = vperm.xlu0 %1832, %v1750
        %v1834 = vpop.permute.xlu0 %1833
        %v1836 = vlaneseq
        %v1837 = vshrl.u32 %v1836, 7
        %v1838 = vsub.s32 5, %v1837
        %v1839 = vrot.slane %v1597, %v1838
        %v1840 = vlaneseq
        %v1841 = vshrl.u32 %v1840, 7
        %v1842 = vsub.s32 5, %v1841
        %v1843 = vrot.slane %v1598, %v1842
        %v1844 = vmul.f32 %v1834, %v1839
        %v1845 = vmul.f32 %v1834, %v1843
        %v1846 = vadd.f32 %v1830, %v1844
        %v1847 = vadd.f32 %v1831, %v1845
        %1848 = vset.pattern.permute.xlu0 6
        %1849 = vperm.xlu0 %1848, %v1750
        %v1850 = vpop.permute.xlu0 %1849
        %v1852 = vlaneseq
        %v1853 = vshrl.u32 %v1852, 7
        %v1854 = vsub.s32 6, %v1853
        %v1855 = vrot.slane %v1597, %v1854
        %v1856 = vlaneseq
        %v1857 = vshrl.u32 %v1856, 7
        %v1858 = vsub.s32 6, %v1857
        %v1859 = vrot.slane %v1598, %v1858
        %v1860 = vmul.f32 %v1850, %v1855
        %v1861 = vmul.f32 %v1850, %v1859
        %v1862 = vadd.f32 %v1846, %v1860
        %v1863 = vadd.f32 %v1847, %v1861
        %1864 = vset.pattern.permute.xlu0 7
        %1865 = vperm.xlu0 %1864, %v1750
        %v1866 = vpop.permute.xlu0 %1865
        %v1868 = vlaneseq
        %v1869 = vshrl.u32 %v1868, 7
        %v1870 = vsub.s32 7, %v1869
        %v1871 = vrot.slane %v1597, %v1870
        %v1872 = vlaneseq
        %v1873 = vshrl.u32 %v1872, 7
        %v1874 = vsub.s32 7, %v1873
        %v1875 = vrot.slane %v1598, %v1874
        %v1876 = vmul.f32 %v1866, %v1871
        %v1877 = vmul.f32 %v1866, %v1875
        %v1878 = vadd.f32 %v1862, %v1876
        %v1879 = vadd.f32 %v1863, %v1877
        %v1880 = vsel %vm578, %v1609, %v1614
        %v1881 = vsel %vm579, %v1606, %v1618
        %s1882 = scalar_lea.vmem %s3, 16
        %v1883 = vld [vmem:[%s1882] sm:$0xff]
        %1885 = vset.pattern.permute.xlu0 0
        %1886 = vperm.xlu0 %1885, %v1883
        %v1887 = vpop.permute.xlu0 %1886
        %v1889 = vlaneseq
        %v1890 = vshrl.u32 %v1889, 7
        %v1891 = vsub.s32 0, %v1890
        %v1892 = vrot.slane %v1880, %v1891
        %v1893 = vlaneseq
        %v1894 = vshrl.u32 %v1893, 7
        %v1895 = vsub.s32 0, %v1894
        %v1896 = vrot.slane %v1881, %v1895
        %v1897 = vmul.f32 %v1887, %v1892
        %v1898 = vmul.f32 %v1887, %v1896
        %v1899 = vadd.f32 %v1878, %v1897
        %v1900 = vadd.f32 %v1879, %v1898
        %1901 = vset.pattern.permute.xlu0 1
        %1902 = vperm.xlu0 %1901, %v1883
        %v1903 = vpop.permute.xlu0 %1902
        %v1905 = vlaneseq
        %v1906 = vshrl.u32 %v1905, 7
        %v1907 = vsub.s32 1, %v1906
        %v1908 = vrot.slane %v1880, %v1907
        %v1909 = vlaneseq
        %v1910 = vshrl.u32 %v1909, 7
        %v1911 = vsub.s32 1, %v1910
        %v1912 = vrot.slane %v1881, %v1911
        %v1913 = vmul.f32 %v1903, %v1908
        %v1914 = vmul.f32 %v1903, %v1912
        %v1915 = vadd.f32 %v1899, %v1913
        %v1916 = vadd.f32 %v1900, %v1914
        %1917 = vset.pattern.permute.xlu0 2
        %1918 = vperm.xlu0 %1917, %v1883
        %v1919 = vpop.permute.xlu0 %1918
        %v1921 = vlaneseq
        %v1922 = vshrl.u32 %v1921, 7
        %v1923 = vsub.s32 2, %v1922
        %v1924 = vrot.slane %v1880, %v1923
        %v1925 = vlaneseq
        %v1926 = vshrl.u32 %v1925, 7
        %v1927 = vsub.s32 2, %v1926
        %v1928 = vrot.slane %v1881, %v1927
        %v1929 = vmul.f32 %v1919, %v1924
        %v1930 = vmul.f32 %v1919, %v1928
        %v1931 = vadd.f32 %v1915, %v1929
        %v1932 = vadd.f32 %v1916, %v1930
        %1933 = vset.pattern.permute.xlu0 3
        %1934 = vperm.xlu0 %1933, %v1883
        %v1935 = vpop.permute.xlu0 %1934
        %v1937 = vlaneseq
        %v1938 = vshrl.u32 %v1937, 7
        %v1939 = vsub.s32 3, %v1938
        %v1940 = vrot.slane %v1880, %v1939
        %v1941 = vlaneseq
        %v1942 = vshrl.u32 %v1941, 7
        %v1943 = vsub.s32 3, %v1942
        %v1944 = vrot.slane %v1881, %v1943
        %v1945 = vmul.f32 %v1935, %v1940
        %v1946 = vmul.f32 %v1935, %v1944
        %v1947 = vadd.f32 %v1931, %v1945
        %v1948 = vadd.f32 %v1932, %v1946
        %1949 = vset.pattern.permute.xlu0 4
        %1950 = vperm.xlu0 %1949, %v1883
        %v1951 = vpop.permute.xlu0 %1950
        %v1953 = vlaneseq
        %v1954 = vshrl.u32 %v1953, 7
        %v1955 = vsub.s32 4, %v1954
        %v1956 = vrot.slane %v1880, %v1955
        %v1957 = vlaneseq
        %v1958 = vshrl.u32 %v1957, 7
        %v1959 = vsub.s32 4, %v1958
        %v1960 = vrot.slane %v1881, %v1959
        %v1961 = vmul.f32 %v1951, %v1956
        %v1962 = vmul.f32 %v1951, %v1960
        %v1963 = vadd.f32 %v1947, %v1961
        %v1964 = vadd.f32 %v1948, %v1962
        %1965 = vset.pattern.permute.xlu0 5
        %1966 = vperm.xlu0 %1965, %v1883
        %v1967 = vpop.permute.xlu0 %1966
        %v1969 = vlaneseq
        %v1970 = vshrl.u32 %v1969, 7
        %v1971 = vsub.s32 5, %v1970
        %v1972 = vrot.slane %v1880, %v1971
        %v1973 = vlaneseq
        %v1974 = vshrl.u32 %v1973, 7
        %v1975 = vsub.s32 5, %v1974
        %v1976 = vrot.slane %v1881, %v1975
        %v1977 = vmul.f32 %v1967, %v1972
        %v1978 = vmul.f32 %v1967, %v1976
        %v1979 = vadd.f32 %v1963, %v1977
        %v1980 = vadd.f32 %v1964, %v1978
        %1981 = vset.pattern.permute.xlu0 6
        %1982 = vperm.xlu0 %1981, %v1883
        %v1983 = vpop.permute.xlu0 %1982
        %v1985 = vlaneseq
        %v1986 = vshrl.u32 %v1985, 7
        %v1987 = vsub.s32 6, %v1986
        %v1988 = vrot.slane %v1880, %v1987
        %v1989 = vlaneseq
        %v1990 = vshrl.u32 %v1989, 7
        %v1991 = vsub.s32 6, %v1990
        %v1992 = vrot.slane %v1881, %v1991
        %v1993 = vmul.f32 %v1983, %v1988
        %v1994 = vmul.f32 %v1983, %v1992
        %v1995 = vadd.f32 %v1979, %v1993
        %v1996 = vadd.f32 %v1980, %v1994
        %1997 = vset.pattern.permute.xlu0 7
        %1998 = vperm.xlu0 %1997, %v1883
        %v1999 = vpop.permute.xlu0 %1998
        %v2001 = vlaneseq
        %v2002 = vshrl.u32 %v2001, 7
        %v2003 = vsub.s32 7, %v2002
        %v2004 = vrot.slane %v1880, %v2003
        %v2005 = vlaneseq
        %v2006 = vshrl.u32 %v2005, 7
        %v2007 = vsub.s32 7, %v2006
        %v2008 = vrot.slane %v1881, %v2007
        %v2009 = vmul.f32 %v1999, %v2004
        %v2010 = vmul.f32 %v1999, %v2008
        %v2011 = vadd.f32 %v1995, %v2009
        %v2012 = vadd.f32 %v1996, %v2010
        %2013 = vrot.lane.b32.xlu0 %v1575, 1
        %v2014 = vpop.permute.xlu0 %2013
        %2016 = vrot.lane.b32.xlu0 %v1574, 1
        %v2017 = vpop.permute.xlu0 %2016
        %v2018 = vsel %vm296, %v2017, %v2014
        %v2021 = vsel %vm296, %v2014, %v2017
        %2022 = vrot.lane.b32.xlu0 %v1574, 127
        %v2023 = vpop.permute.xlu0 %2022
        %2024 = vrot.lane.b32.xlu0 %v1575, 127
        %v2025 = vpop.permute.xlu0 %2024
        %v2026 = vsel %vm305, %v2023, %v2025
        %v2030 = vsel %vm305, %v2025, %v2023
        %v2031 = vsel %vm313, %v2026, %v2021
        %v2032 = vsel %vm314, %v2030, %v2018
        %s2033 = scalar_lea.vmem %s3, 24
        %v2034 = vld [vmem:[%s2033] sm:$0xff]
        %2036 = vset.pattern.permute.xlu0 0
        %2037 = vperm.xlu0 %2036, %v2034
        %v2038 = vpop.permute.xlu0 %2037
        %v2040 = vlaneseq
        %v2041 = vshrl.u32 %v2040, 7
        %v2042 = vsub.s32 0, %v2041
        %v2043 = vrot.slane %v2031, %v2042
        %v2044 = vlaneseq
        %v2045 = vshrl.u32 %v2044, 7
        %v2046 = vsub.s32 0, %v2045
        %v2047 = vrot.slane %v2032, %v2046
        %v2048 = vmul.f32 %v2038, %v2043
        %v2049 = vmul.f32 %v2038, %v2047
        %2050 = vset.pattern.permute.xlu0 1
        %2051 = vperm.xlu0 %2050, %v2034
        %v2052 = vpop.permute.xlu0 %2051
        %v2054 = vlaneseq
        %v2055 = vshrl.u32 %v2054, 7
        %v2056 = vsub.s32 1, %v2055
        %v2057 = vrot.slane %v2031, %v2056
        %v2058 = vlaneseq
        %v2059 = vshrl.u32 %v2058, 7
        %v2060 = vsub.s32 1, %v2059
        %v2061 = vrot.slane %v2032, %v2060
        %v2062 = vmul.f32 %v2052, %v2057
        %v2063 = vmul.f32 %v2052, %v2061
        %v2064 = vadd.f32 %v2048, %v2062
        %v2065 = vadd.f32 %v2049, %v2063
        %2066 = vset.pattern.permute.xlu0 2
        %2067 = vperm.xlu0 %2066, %v2034
        %v2068 = vpop.permute.xlu0 %2067
        %v2070 = vlaneseq
        %v2071 = vshrl.u32 %v2070, 7
        %v2072 = vsub.s32 2, %v2071
        %v2073 = vrot.slane %v2031, %v2072
        %v2074 = vlaneseq
        %v2075 = vshrl.u32 %v2074, 7
        %v2076 = vsub.s32 2, %v2075
        %v2077 = vrot.slane %v2032, %v2076
        %v2078 = vmul.f32 %v2068, %v2073
        %v2079 = vmul.f32 %v2068, %v2077
        %v2080 = vadd.f32 %v2064, %v2078
        %v2081 = vadd.f32 %v2065, %v2079
        %2082 = vset.pattern.permute.xlu0 3
        %2083 = vperm.xlu0 %2082, %v2034
        %v2084 = vpop.permute.xlu0 %2083
        %v2086 = vlaneseq
        %v2087 = vshrl.u32 %v2086, 7
        %v2088 = vsub.s32 3, %v2087
        %v2089 = vrot.slane %v2031, %v2088
        %v2090 = vlaneseq
        %v2091 = vshrl.u32 %v2090, 7
        %v2092 = vsub.s32 3, %v2091
        %v2093 = vrot.slane %v2032, %v2092
        %v2094 = vmul.f32 %v2084, %v2089
        %v2095 = vmul.f32 %v2084, %v2093
        %v2096 = vadd.f32 %v2080, %v2094
        %v2097 = vadd.f32 %v2081, %v2095
        %2098 = vset.pattern.permute.xlu0 4
        %2099 = vperm.xlu0 %2098, %v2034
        %v2100 = vpop.permute.xlu0 %2099
        %v2102 = vlaneseq
        %v2103 = vshrl.u32 %v2102, 7
        %v2104 = vsub.s32 4, %v2103
        %v2105 = vrot.slane %v2031, %v2104
        %v2106 = vlaneseq
        %v2107 = vshrl.u32 %v2106, 7
        %v2108 = vsub.s32 4, %v2107
        %v2109 = vrot.slane %v2032, %v2108
        %v2110 = vmul.f32 %v2100, %v2105
        %v2111 = vmul.f32 %v2100, %v2109
        %v2112 = vadd.f32 %v2096, %v2110
        %v2113 = vadd.f32 %v2097, %v2111
        %2114 = vset.pattern.permute.xlu0 5
        %2115 = vperm.xlu0 %2114, %v2034
        %v2116 = vpop.permute.xlu0 %2115
        %v2118 = vlaneseq
        %v2119 = vshrl.u32 %v2118, 7
        %v2120 = vsub.s32 5, %v2119
        %v2121 = vrot.slane %v2031, %v2120
        %v2122 = vlaneseq
        %v2123 = vshrl.u32 %v2122, 7
        %v2124 = vsub.s32 5, %v2123
        %v2125 = vrot.slane %v2032, %v2124
        %v2126 = vmul.f32 %v2116, %v2121
        %v2127 = vmul.f32 %v2116, %v2125
        %v2128 = vadd.f32 %v2112, %v2126
        %v2129 = vadd.f32 %v2113, %v2127
        %2130 = vset.pattern.permute.xlu0 6
        %2131 = vperm.xlu0 %2130, %v2034
        %v2132 = vpop.permute.xlu0 %2131
        %v2134 = vlaneseq
        %v2135 = vshrl.u32 %v2134, 7
        %v2136 = vsub.s32 6, %v2135
        %v2137 = vrot.slane %v2031, %v2136
        %v2138 = vlaneseq
        %v2139 = vshrl.u32 %v2138, 7
        %v2140 = vsub.s32 6, %v2139
        %v2141 = vrot.slane %v2032, %v2140
        %v2142 = vmul.f32 %v2132, %v2137
        %v2143 = vmul.f32 %v2132, %v2141
        %v2144 = vadd.f32 %v2128, %v2142
        %v2145 = vadd.f32 %v2129, %v2143
        %2146 = vset.pattern.permute.xlu0 7
        %2147 = vperm.xlu0 %2146, %v2034
        %v2148 = vpop.permute.xlu0 %2147
        %v2150 = vlaneseq
        %v2151 = vshrl.u32 %v2150, 7
        %v2152 = vsub.s32 7, %v2151
        %v2153 = vrot.slane %v2031, %v2152
        %v2154 = vlaneseq
        %v2155 = vshrl.u32 %v2154, 7
        %v2156 = vsub.s32 7, %v2155
        %v2157 = vrot.slane %v2032, %v2156
        %v2158 = vmul.f32 %v2148, %v2153
        %v2159 = vmul.f32 %v2148, %v2157
        %v2160 = vadd.f32 %v2144, %v2158
        %v2161 = vadd.f32 %v2145, %v2159
        %s2162 = scalar_lea.vmem %s3, 32
        %v2163 = vld [vmem:[%s2162] sm:$0xff]
        %2165 = vset.pattern.permute.xlu0 0
        %2166 = vperm.xlu0 %2165, %v2163
        %v2167 = vpop.permute.xlu0 %2166
        %v2169 = vlaneseq
        %v2170 = vshrl.u32 %v2169, 7
        %v2171 = vsub.s32 0, %v2170
        %v2172 = vrot.slane %v1574, %v2171
        %v2173 = vlaneseq
        %v2174 = vshrl.u32 %v2173, 7
        %v2175 = vsub.s32 0, %v2174
        %v2176 = vrot.slane %v1575, %v2175
        %v2177 = vmul.f32 %v2167, %v2172
        %v2178 = vmul.f32 %v2167, %v2176
        %v2179 = vadd.f32 %v2160, %v2177
        %v2180 = vadd.f32 %v2161, %v2178
        %2181 = vset.pattern.permute.xlu0 1
        %2182 = vperm.xlu0 %2181, %v2163
        %v2183 = vpop.permute.xlu0 %2182
        %v2185 = vlaneseq
        %v2186 = vshrl.u32 %v2185, 7
        %v2187 = vsub.s32 1, %v2186
        %v2188 = vrot.slane %v1574, %v2187
        %v2189 = vlaneseq
        %v2190 = vshrl.u32 %v2189, 7
        %v2191 = vsub.s32 1, %v2190
        %v2192 = vrot.slane %v1575, %v2191
        %v2193 = vmul.f32 %v2183, %v2188
        %v2194 = vmul.f32 %v2183, %v2192
        %v2195 = vadd.f32 %v2179, %v2193
        %v2196 = vadd.f32 %v2180, %v2194
        %2197 = vset.pattern.permute.xlu0 2
        %2198 = vperm.xlu0 %2197, %v2163
        %v2199 = vpop.permute.xlu0 %2198
        %v2201 = vlaneseq
        %v2202 = vshrl.u32 %v2201, 7
        %v2203 = vsub.s32 2, %v2202
        %v2204 = vrot.slane %v1574, %v2203
        %v2205 = vlaneseq
        %v2206 = vshrl.u32 %v2205, 7
        %v2207 = vsub.s32 2, %v2206
        %v2208 = vrot.slane %v1575, %v2207
        %v2209 = vmul.f32 %v2199, %v2204
        %v2210 = vmul.f32 %v2199, %v2208
        %v2211 = vadd.f32 %v2195, %v2209
        %v2212 = vadd.f32 %v2196, %v2210
        %2213 = vset.pattern.permute.xlu0 3
        %2214 = vperm.xlu0 %2213, %v2163
        %v2215 = vpop.permute.xlu0 %2214
        %v2217 = vlaneseq
        %v2218 = vshrl.u32 %v2217, 7
        %v2219 = vsub.s32 3, %v2218
        %v2220 = vrot.slane %v1574, %v2219
        %v2221 = vlaneseq
        %v2222 = vshrl.u32 %v2221, 7
        %v2223 = vsub.s32 3, %v2222
        %v2224 = vrot.slane %v1575, %v2223
        %v2225 = vmul.f32 %v2215, %v2220
        %v2226 = vmul.f32 %v2215, %v2224
        %v2227 = vadd.f32 %v2211, %v2225
        %v2228 = vadd.f32 %v2212, %v2226
        %2229 = vset.pattern.permute.xlu0 4
        %2230 = vperm.xlu0 %2229, %v2163
        %v2231 = vpop.permute.xlu0 %2230
        %v2233 = vlaneseq
        %v2234 = vshrl.u32 %v2233, 7
        %v2235 = vsub.s32 4, %v2234
        %v2236 = vrot.slane %v1574, %v2235
        %v2237 = vlaneseq
        %v2238 = vshrl.u32 %v2237, 7
        %v2239 = vsub.s32 4, %v2238
        %v2240 = vrot.slane %v1575, %v2239
        %v2241 = vmul.f32 %v2231, %v2236
        %v2242 = vmul.f32 %v2231, %v2240
        %v2243 = vadd.f32 %v2227, %v2241
        %v2244 = vadd.f32 %v2228, %v2242
        %2245 = vset.pattern.permute.xlu0 5
        %2246 = vperm.xlu0 %2245, %v2163
        %v2247 = vpop.permute.xlu0 %2246
        %v2249 = vlaneseq
        %v2250 = vshrl.u32 %v2249, 7
        %v2251 = vsub.s32 5, %v2250
        %v2252 = vrot.slane %v1574, %v2251
        %v2253 = vlaneseq
        %v2254 = vshrl.u32 %v2253, 7
        %v2255 = vsub.s32 5, %v2254
        %v2256 = vrot.slane %v1575, %v2255
        %v2257 = vmul.f32 %v2247, %v2252
        %v2258 = vmul.f32 %v2247, %v2256
        %v2259 = vadd.f32 %v2243, %v2257
        %v2260 = vadd.f32 %v2244, %v2258
        %2261 = vset.pattern.permute.xlu0 6
        %2262 = vperm.xlu0 %2261, %v2163
        %v2263 = vpop.permute.xlu0 %2262
        %v2265 = vlaneseq
        %v2266 = vshrl.u32 %v2265, 7
        %v2267 = vsub.s32 6, %v2266
        %v2268 = vrot.slane %v1574, %v2267
        %v2269 = vlaneseq
        %v2270 = vshrl.u32 %v2269, 7
        %v2271 = vsub.s32 6, %v2270
        %v2272 = vrot.slane %v1575, %v2271
        %v2273 = vmul.f32 %v2263, %v2268
        %v2274 = vmul.f32 %v2263, %v2272
        %v2275 = vadd.f32 %v2259, %v2273
        %v2276 = vadd.f32 %v2260, %v2274
        %2277 = vset.pattern.permute.xlu0 7
        %2278 = vperm.xlu0 %2277, %v2163
        %v2279 = vpop.permute.xlu0 %2278
        %v2281 = vlaneseq
        %v2282 = vshrl.u32 %v2281, 7
        %v2283 = vsub.s32 7, %v2282
        %v2284 = vrot.slane %v1574, %v2283
        %v2285 = vlaneseq
        %v2286 = vshrl.u32 %v2285, 7
        %v2287 = vsub.s32 7, %v2286
        %v2288 = vrot.slane %v1575, %v2287
        %v2289 = vmul.f32 %v2279, %v2284
        %v2290 = vmul.f32 %v2279, %v2288
        %v2291 = vadd.f32 %v2275, %v2289
        %v2292 = vadd.f32 %v2276, %v2290
        %v2293 = vsel %vm578, %v2021, %v2026
        %v2294 = vsel %vm579, %v2018, %v2030
        %s2295 = scalar_lea.vmem %s3, 40
        %v2296 = vld [vmem:[%s2295] sm:$0xff]
        %2298 = vset.pattern.permute.xlu0 0
        %2299 = vperm.xlu0 %2298, %v2296
        %v2300 = vpop.permute.xlu0 %2299
        %v2302 = vlaneseq
        %v2303 = vshrl.u32 %v2302, 7
        %v2304 = vsub.s32 0, %v2303
        %v2305 = vrot.slane %v2293, %v2304
        %v2306 = vlaneseq
        %v2307 = vshrl.u32 %v2306, 7
        %v2308 = vsub.s32 0, %v2307
        %v2309 = vrot.slane %v2294, %v2308
        %v2310 = vmul.f32 %v2300, %v2305
        %v2311 = vmul.f32 %v2300, %v2309
        %v2312 = vadd.f32 %v2291, %v2310
        %v2313 = vadd.f32 %v2292, %v2311
        %2314 = vset.pattern.permute.xlu0 1
        %2315 = vperm.xlu0 %2314, %v2296
        %v2316 = vpop.permute.xlu0 %2315
        %v2318 = vlaneseq
        %v2319 = vshrl.u32 %v2318, 7
        %v2320 = vsub.s32 1, %v2319
        %v2321 = vrot.slane %v2293, %v2320
        %v2322 = vlaneseq
        %v2323 = vshrl.u32 %v2322, 7
        %v2324 = vsub.s32 1, %v2323
        %v2325 = vrot.slane %v2294, %v2324
        %v2326 = vmul.f32 %v2316, %v2321
        %v2327 = vmul.f32 %v2316, %v2325
        %v2328 = vadd.f32 %v2312, %v2326
        %v2329 = vadd.f32 %v2313, %v2327
        %2330 = vset.pattern.permute.xlu0 2
        %2331 = vperm.xlu0 %2330, %v2296
        %v2332 = vpop.permute.xlu0 %2331
        %v2334 = vlaneseq
        %v2335 = vshrl.u32 %v2334, 7
        %v2336 = vsub.s32 2, %v2335
        %v2337 = vrot.slane %v2293, %v2336
        %v2338 = vlaneseq
        %v2339 = vshrl.u32 %v2338, 7
        %v2340 = vsub.s32 2, %v2339
        %v2341 = vrot.slane %v2294, %v2340
        %v2342 = vmul.f32 %v2332, %v2337
        %v2343 = vmul.f32 %v2332, %v2341
        %v2344 = vadd.f32 %v2328, %v2342
        %v2345 = vadd.f32 %v2329, %v2343
        %2346 = vset.pattern.permute.xlu0 3
        %2347 = vperm.xlu0 %2346, %v2296
        %v2348 = vpop.permute.xlu0 %2347
        %v2350 = vlaneseq
        %v2351 = vshrl.u32 %v2350, 7
        %v2352 = vsub.s32 3, %v2351
        %v2353 = vrot.slane %v2293, %v2352
        %v2354 = vlaneseq
        %v2355 = vshrl.u32 %v2354, 7
        %v2356 = vsub.s32 3, %v2355
        %v2357 = vrot.slane %v2294, %v2356
        %v2358 = vmul.f32 %v2348, %v2353
        %v2359 = vmul.f32 %v2348, %v2357
        %v2360 = vadd.f32 %v2344, %v2358
        %v2361 = vadd.f32 %v2345, %v2359
        %2362 = vset.pattern.permute.xlu0 4
        %2363 = vperm.xlu0 %2362, %v2296
        %v2364 = vpop.permute.xlu0 %2363
        %v2366 = vlaneseq
        %v2367 = vshrl.u32 %v2366, 7
        %v2368 = vsub.s32 4, %v2367
        %v2369 = vrot.slane %v2293, %v2368
        %v2370 = vlaneseq
        %v2371 = vshrl.u32 %v2370, 7
        %v2372 = vsub.s32 4, %v2371
        %v2373 = vrot.slane %v2294, %v2372
        %v2374 = vmul.f32 %v2364, %v2369
        %v2375 = vmul.f32 %v2364, %v2373
        %v2376 = vadd.f32 %v2360, %v2374
        %v2377 = vadd.f32 %v2361, %v2375
        %2378 = vset.pattern.permute.xlu0 5
        %2379 = vperm.xlu0 %2378, %v2296
        %v2380 = vpop.permute.xlu0 %2379
        %v2382 = vlaneseq
        %v2383 = vshrl.u32 %v2382, 7
        %v2384 = vsub.s32 5, %v2383
        %v2385 = vrot.slane %v2293, %v2384
        %v2386 = vlaneseq
        %v2387 = vshrl.u32 %v2386, 7
        %v2388 = vsub.s32 5, %v2387
        %v2389 = vrot.slane %v2294, %v2388
        %v2390 = vmul.f32 %v2380, %v2385
        %v2391 = vmul.f32 %v2380, %v2389
        %v2392 = vadd.f32 %v2376, %v2390
        %v2393 = vadd.f32 %v2377, %v2391
        %2394 = vset.pattern.permute.xlu0 6
        %2395 = vperm.xlu0 %2394, %v2296
        %v2396 = vpop.permute.xlu0 %2395
        %v2398 = vlaneseq
        %v2399 = vshrl.u32 %v2398, 7
        %v2400 = vsub.s32 6, %v2399
        %v2401 = vrot.slane %v2293, %v2400
        %v2402 = vlaneseq
        %v2403 = vshrl.u32 %v2402, 7
        %v2404 = vsub.s32 6, %v2403
        %v2405 = vrot.slane %v2294, %v2404
        %v2406 = vmul.f32 %v2396, %v2401
        %v2407 = vmul.f32 %v2396, %v2405
        %v2408 = vadd.f32 %v2392, %v2406
        %v2409 = vadd.f32 %v2393, %v2407
        %2410 = vset.pattern.permute.xlu0 7
        %2411 = vperm.xlu0 %2410, %v2296
        %v2412 = vpop.permute.xlu0 %2411
        %v2414 = vlaneseq
        %v2415 = vshrl.u32 %v2414, 7
        %v2416 = vsub.s32 7, %v2415
        %v2417 = vrot.slane %v2293, %v2416
        %v2418 = vlaneseq
        %v2419 = vshrl.u32 %v2418, 7
        %v2420 = vsub.s32 7, %v2419
        %v2421 = vrot.slane %v2294, %v2420
        %v2422 = vmul.f32 %v2412, %v2417
        %v2423 = vmul.f32 %v2412, %v2421
        %v2424 = vadd.f32 %v2408, %v2422
        %v2425 = vadd.f32 %v2409, %v2423
        %v2426 = vsel %vm1128, %v1587, %v1592
        %v2427 = vsel %vm1129, %v1584, %v1596
        %2429 = vrot.lane.b32.xlu0 %v2427, 1
        %v2430 = vpop.permute.xlu0 %2429
        %2433 = vrot.lane.b32.xlu0 %v2426, 1
        %v2434 = vpop.permute.xlu0 %2433
        %v2435 = vsel %vm296, %v2434, %v2430
        %v2438 = vsel %vm296, %v2430, %v2434
        %2439 = vrot.lane.b32.xlu0 %v2426, 127
        %v2440 = vpop.permute.xlu0 %2439
        %2441 = vrot.lane.b32.xlu0 %v2427, 127
        %v2442 = vpop.permute.xlu0 %2441
        %v2443 = vsel %vm305, %v2440, %v2442
        %v2447 = vsel %vm305, %v2442, %v2440
        %v2448 = vsel %vm313, %v2443, %v2438
        %v2449 = vsel %vm314, %v2447, %v2435
        %s2450 = scalar_lea.vmem %s3, 48
        %v2451 = vld [vmem:[%s2450] sm:$0xff]
        %2453 = vset.pattern.permute.xlu0 0
        %2454 = vperm.xlu0 %2453, %v2451
        %v2455 = vpop.permute.xlu0 %2454
        %v2457 = vlaneseq
        %v2458 = vshrl.u32 %v2457, 7
        %v2459 = vsub.s32 0, %v2458
        %v2460 = vrot.slane %v2448, %v2459
        %v2461 = vlaneseq
        %v2462 = vshrl.u32 %v2461, 7
        %v2463 = vsub.s32 0, %v2462
        %v2464 = vrot.slane %v2449, %v2463
        %v2465 = vmul.f32 %v2455, %v2460
        %v2466 = vmul.f32 %v2455, %v2464
        %2467 = vset.pattern.permute.xlu0 1
        %2468 = vperm.xlu0 %2467, %v2451
        %v2469 = vpop.permute.xlu0 %2468
        %v2471 = vlaneseq
        %v2472 = vshrl.u32 %v2471, 7
        %v2473 = vsub.s32 1, %v2472
        %v2474 = vrot.slane %v2448, %v2473
        %v2475 = vlaneseq
        %v2476 = vshrl.u32 %v2475, 7
        %v2477 = vsub.s32 1, %v2476
        %v2478 = vrot.slane %v2449, %v2477
        %v2479 = vmul.f32 %v2469, %v2474
        %v2480 = vmul.f32 %v2469, %v2478
        %v2481 = vadd.f32 %v2465, %v2479
        %v2482 = vadd.f32 %v2466, %v2480
        %2483 = vset.pattern.permute.xlu0 2
        %2484 = vperm.xlu0 %2483, %v2451
        %v2485 = vpop.permute.xlu0 %2484
        %v2487 = vlaneseq
        %v2488 = vshrl.u32 %v2487, 7
        %v2489 = vsub.s32 2, %v2488
        %v2490 = vrot.slane %v2448, %v2489
        %v2491 = vlaneseq
        %v2492 = vshrl.u32 %v2491, 7
        %v2493 = vsub.s32 2, %v2492
        %v2494 = vrot.slane %v2449, %v2493
        %v2495 = vmul.f32 %v2485, %v2490
        %v2496 = vmul.f32 %v2485, %v2494
        %v2497 = vadd.f32 %v2481, %v2495
        %v2498 = vadd.f32 %v2482, %v2496
        %2499 = vset.pattern.permute.xlu0 3
        %2500 = vperm.xlu0 %2499, %v2451
        %v2501 = vpop.permute.xlu0 %2500
        %v2503 = vlaneseq
        %v2504 = vshrl.u32 %v2503, 7
        %v2505 = vsub.s32 3, %v2504
        %v2506 = vrot.slane %v2448, %v2505
        %v2507 = vlaneseq
        %v2508 = vshrl.u32 %v2507, 7
        %v2509 = vsub.s32 3, %v2508
        %v2510 = vrot.slane %v2449, %v2509
        %v2511 = vmul.f32 %v2501, %v2506
        %v2512 = vmul.f32 %v2501, %v2510
        %v2513 = vadd.f32 %v2497, %v2511
        %v2514 = vadd.f32 %v2498, %v2512
        %2515 = vset.pattern.permute.xlu0 4
        %2516 = vperm.xlu0 %2515, %v2451
        %v2517 = vpop.permute.xlu0 %2516
        %v2519 = vlaneseq
        %v2520 = vshrl.u32 %v2519, 7
        %v2521 = vsub.s32 4, %v2520
        %v2522 = vrot.slane %v2448, %v2521
        %v2523 = vlaneseq
        %v2524 = vshrl.u32 %v2523, 7
        %v2525 = vsub.s32 4, %v2524
        %v2526 = vrot.slane %v2449, %v2525
        %v2527 = vmul.f32 %v2517, %v2522
        %v2528 = vmul.f32 %v2517, %v2526
        %v2529 = vadd.f32 %v2513, %v2527
        %v2530 = vadd.f32 %v2514, %v2528
        %2531 = vset.pattern.permute.xlu0 5
        %2532 = vperm.xlu0 %2531, %v2451
        %v2533 = vpop.permute.xlu0 %2532
        %v2535 = vlaneseq
        %v2536 = vshrl.u32 %v2535, 7
        %v2537 = vsub.s32 5, %v2536
        %v2538 = vrot.slane %v2448, %v2537
        %v2539 = vlaneseq
        %v2540 = vshrl.u32 %v2539, 7
        %v2541 = vsub.s32 5, %v2540
        %v2542 = vrot.slane %v2449, %v2541
        %v2543 = vmul.f32 %v2533, %v2538
        %v2544 = vmul.f32 %v2533, %v2542
        %v2545 = vadd.f32 %v2529, %v2543
        %v2546 = vadd.f32 %v2530, %v2544
        %2547 = vset.pattern.permute.xlu0 6
        %2548 = vperm.xlu0 %2547, %v2451
        %v2549 = vpop.permute.xlu0 %2548
        %v2551 = vlaneseq
        %v2552 = vshrl.u32 %v2551, 7
        %v2553 = vsub.s32 6, %v2552
        %v2554 = vrot.slane %v2448, %v2553
        %v2555 = vlaneseq
        %v2556 = vshrl.u32 %v2555, 7
        %v2557 = vsub.s32 6, %v2556
        %v2558 = vrot.slane %v2449, %v2557
        %v2559 = vmul.f32 %v2549, %v2554
        %v2560 = vmul.f32 %v2549, %v2558
        %v2561 = vadd.f32 %v2545, %v2559
        %v2562 = vadd.f32 %v2546, %v2560
        %2563 = vset.pattern.permute.xlu0 7
        %2564 = vperm.xlu0 %2563, %v2451
        %v2565 = vpop.permute.xlu0 %2564
        %v2567 = vlaneseq
        %v2568 = vshrl.u32 %v2567, 7
        %v2569 = vsub.s32 7, %v2568
        %v2570 = vrot.slane %v2448, %v2569
        %v2571 = vlaneseq
        %v2572 = vshrl.u32 %v2571, 7
        %v2573 = vsub.s32 7, %v2572
        %v2574 = vrot.slane %v2449, %v2573
        %v2575 = vmul.f32 %v2565, %v2570
        %v2576 = vmul.f32 %v2565, %v2574
        %v2577 = vadd.f32 %v2561, %v2575
        %v2578 = vadd.f32 %v2562, %v2576
        %s2579 = scalar_lea.vmem %s3, 56
        %v2580 = vld [vmem:[%s2579] sm:$0xff]
        %2582 = vset.pattern.permute.xlu0 0
        %2583 = vperm.xlu0 %2582, %v2580
        %v2584 = vpop.permute.xlu0 %2583
        %v2586 = vlaneseq
        %v2587 = vshrl.u32 %v2586, 7
        %v2588 = vsub.s32 0, %v2587
        %v2589 = vrot.slane %v2426, %v2588
        %v2590 = vlaneseq
        %v2591 = vshrl.u32 %v2590, 7
        %v2592 = vsub.s32 0, %v2591
        %v2593 = vrot.slane %v2427, %v2592
        %v2594 = vmul.f32 %v2584, %v2589
        %v2595 = vmul.f32 %v2584, %v2593
        %v2596 = vadd.f32 %v2577, %v2594
        %v2597 = vadd.f32 %v2578, %v2595
        %2598 = vset.pattern.permute.xlu0 1
        %2599 = vperm.xlu0 %2598, %v2580
        %v2600 = vpop.permute.xlu0 %2599
        %v2602 = vlaneseq
        %v2603 = vshrl.u32 %v2602, 7
        %v2604 = vsub.s32 1, %v2603
        %v2605 = vrot.slane %v2426, %v2604
        %v2606 = vlaneseq
        %v2607 = vshrl.u32 %v2606, 7
        %v2608 = vsub.s32 1, %v2607
        %v2609 = vrot.slane %v2427, %v2608
        %v2610 = vmul.f32 %v2600, %v2605
        %v2611 = vmul.f32 %v2600, %v2609
        %v2612 = vadd.f32 %v2596, %v2610
        %v2613 = vadd.f32 %v2597, %v2611
        %2614 = vset.pattern.permute.xlu0 2
        %2615 = vperm.xlu0 %2614, %v2580
        %v2616 = vpop.permute.xlu0 %2615
        %v2618 = vlaneseq
        %v2619 = vshrl.u32 %v2618, 7
        %v2620 = vsub.s32 2, %v2619
        %v2621 = vrot.slane %v2426, %v2620
        %v2622 = vlaneseq
        %v2623 = vshrl.u32 %v2622, 7
        %v2624 = vsub.s32 2, %v2623
        %v2625 = vrot.slane %v2427, %v2624
        %v2626 = vmul.f32 %v2616, %v2621
        %v2627 = vmul.f32 %v2616, %v2625
        %v2628 = vadd.f32 %v2612, %v2626
        %v2629 = vadd.f32 %v2613, %v2627
        %2630 = vset.pattern.permute.xlu0 3
        %2631 = vperm.xlu0 %2630, %v2580
        %v2632 = vpop.permute.xlu0 %2631
        %v2634 = vlaneseq
        %v2635 = vshrl.u32 %v2634, 7
        %v2636 = vsub.s32 3, %v2635
        %v2637 = vrot.slane %v2426, %v2636
        %v2638 = vlaneseq
        %v2639 = vshrl.u32 %v2638, 7
        %v2640 = vsub.s32 3, %v2639
        %v2641 = vrot.slane %v2427, %v2640
        %v2642 = vmul.f32 %v2632, %v2637
        %v2643 = vmul.f32 %v2632, %v2641
        %v2644 = vadd.f32 %v2628, %v2642
        %v2645 = vadd.f32 %v2629, %v2643
        %2646 = vset.pattern.permute.xlu0 4
        %2647 = vperm.xlu0 %2646, %v2580
        %v2648 = vpop.permute.xlu0 %2647
        %v2650 = vlaneseq
        %v2651 = vshrl.u32 %v2650, 7
        %v2652 = vsub.s32 4, %v2651
        %v2653 = vrot.slane %v2426, %v2652
        %v2654 = vlaneseq
        %v2655 = vshrl.u32 %v2654, 7
        %v2656 = vsub.s32 4, %v2655
        %v2657 = vrot.slane %v2427, %v2656
        %v2658 = vmul.f32 %v2648, %v2653
        %v2659 = vmul.f32 %v2648, %v2657
        %v2660 = vadd.f32 %v2644, %v2658
        %v2661 = vadd.f32 %v2645, %v2659
        %2662 = vset.pattern.permute.xlu0 5
        %2663 = vperm.xlu0 %2662, %v2580
        %v2664 = vpop.permute.xlu0 %2663
        %v2666 = vlaneseq
        %v2667 = vshrl.u32 %v2666, 7
        %v2668 = vsub.s32 5, %v2667
        %v2669 = vrot.slane %v2426, %v2668
        %v2670 = vlaneseq
        %v2671 = vshrl.u32 %v2670, 7
        %v2672 = vsub.s32 5, %v2671
        %v2673 = vrot.slane %v2427, %v2672
        %v2674 = vmul.f32 %v2664, %v2669
        %v2675 = vmul.f32 %v2664, %v2673
        %v2676 = vadd.f32 %v2660, %v2674
        %v2677 = vadd.f32 %v2661, %v2675
        %2678 = vset.pattern.permute.xlu0 6
        %2679 = vperm.xlu0 %2678, %v2580
        %v2680 = vpop.permute.xlu0 %2679
        %v2682 = vlaneseq
        %v2683 = vshrl.u32 %v2682, 7
        %v2684 = vsub.s32 6, %v2683
        %v2685 = vrot.slane %v2426, %v2684
        %v2686 = vlaneseq
        %v2687 = vshrl.u32 %v2686, 7
        %v2688 = vsub.s32 6, %v2687
        %v2689 = vrot.slane %v2427, %v2688
        %v2690 = vmul.f32 %v2680, %v2685
        %v2691 = vmul.f32 %v2680, %v2689
        %v2692 = vadd.f32 %v2676, %v2690
        %v2693 = vadd.f32 %v2677, %v2691
        %2694 = vset.pattern.permute.xlu0 7
        %2695 = vperm.xlu0 %2694, %v2580
        %v2696 = vpop.permute.xlu0 %2695
        %v2698 = vlaneseq
        %v2699 = vshrl.u32 %v2698, 7
        %v2700 = vsub.s32 7, %v2699
        %v2701 = vrot.slane %v2426, %v2700
        %v2702 = vlaneseq
        %v2703 = vshrl.u32 %v2702, 7
        %v2704 = vsub.s32 7, %v2703
        %v2705 = vrot.slane %v2427, %v2704
        %v2706 = vmul.f32 %v2696, %v2701
        %v2707 = vmul.f32 %v2696, %v2705
        %v2708 = vadd.f32 %v2692, %v2706
        %v2709 = vadd.f32 %v2693, %v2707
        %v2710 = vsel %vm578, %v2438, %v2443
        %v2711 = vsel %vm579, %v2435, %v2447
        %s2712 = scalar_lea.vmem %s3, 64
        %v2713 = vld [vmem:[%s2712] sm:$0xff]
        %2715 = vset.pattern.permute.xlu0 0
        %2716 = vperm.xlu0 %2715, %v2713
        %v2717 = vpop.permute.xlu0 %2716
        %v2719 = vlaneseq
        %v2720 = vshrl.u32 %v2719, 7
        %v2721 = vsub.s32 0, %v2720
        %v2722 = vrot.slane %v2710, %v2721
        %v2723 = vlaneseq
        %v2724 = vshrl.u32 %v2723, 7
        %v2725 = vsub.s32 0, %v2724
        %v2726 = vrot.slane %v2711, %v2725
        %v2727 = vmul.f32 %v2717, %v2722
        %v2728 = vmul.f32 %v2717, %v2726
        %v2729 = vadd.f32 %v2708, %v2727
        %v2730 = vadd.f32 %v2709, %v2728
        %2731 = vset.pattern.permute.xlu0 1
        %2732 = vperm.xlu0 %2731, %v2713
        %v2733 = vpop.permute.xlu0 %2732
        %v2735 = vlaneseq
        %v2736 = vshrl.u32 %v2735, 7
        %v2737 = vsub.s32 1, %v2736
        %v2738 = vrot.slane %v2710, %v2737
        %v2739 = vlaneseq
        %v2740 = vshrl.u32 %v2739, 7
        %v2741 = vsub.s32 1, %v2740
        %v2742 = vrot.slane %v2711, %v2741
        %v2743 = vmul.f32 %v2733, %v2738
        %v2744 = vmul.f32 %v2733, %v2742
        %v2745 = vadd.f32 %v2729, %v2743
        %v2746 = vadd.f32 %v2730, %v2744
        %2747 = vset.pattern.permute.xlu0 2
        %2748 = vperm.xlu0 %2747, %v2713
        %v2749 = vpop.permute.xlu0 %2748
        %v2751 = vlaneseq
        %v2752 = vshrl.u32 %v2751, 7
        %v2753 = vsub.s32 2, %v2752
        %v2754 = vrot.slane %v2710, %v2753
        %v2755 = vlaneseq
        %v2756 = vshrl.u32 %v2755, 7
        %v2757 = vsub.s32 2, %v2756
        %v2758 = vrot.slane %v2711, %v2757
        %v2759 = vmul.f32 %v2749, %v2754
        %v2760 = vmul.f32 %v2749, %v2758
        %v2761 = vadd.f32 %v2745, %v2759
        %v2762 = vadd.f32 %v2746, %v2760
        %2763 = vset.pattern.permute.xlu0 3
        %2764 = vperm.xlu0 %2763, %v2713
        %v2765 = vpop.permute.xlu0 %2764
        %v2767 = vlaneseq
        %v2768 = vshrl.u32 %v2767, 7
        %v2769 = vsub.s32 3, %v2768
        %v2770 = vrot.slane %v2710, %v2769
        %v2771 = vlaneseq
        %v2772 = vshrl.u32 %v2771, 7
        %v2773 = vsub.s32 3, %v2772
        %v2774 = vrot.slane %v2711, %v2773
        %v2775 = vmul.f32 %v2765, %v2770
        %v2776 = vmul.f32 %v2765, %v2774
        %v2777 = vadd.f32 %v2761, %v2775
        %v2778 = vadd.f32 %v2762, %v2776
        %2779 = vset.pattern.permute.xlu0 4
        %2780 = vperm.xlu0 %2779, %v2713
        %v2781 = vpop.permute.xlu0 %2780
        %v2783 = vlaneseq
        %v2784 = vshrl.u32 %v2783, 7
        %v2785 = vsub.s32 4, %v2784
        %v2786 = vrot.slane %v2710, %v2785
        %v2787 = vlaneseq
        %v2788 = vshrl.u32 %v2787, 7
        %v2789 = vsub.s32 4, %v2788
        %v2790 = vrot.slane %v2711, %v2789
        %v2791 = vmul.f32 %v2781, %v2786
        %v2792 = vmul.f32 %v2781, %v2790
        %v2793 = vadd.f32 %v2777, %v2791
        %v2794 = vadd.f32 %v2778, %v2792
        %2795 = vset.pattern.permute.xlu0 5
        %2796 = vperm.xlu0 %2795, %v2713
        %v2797 = vpop.permute.xlu0 %2796
        %v2799 = vlaneseq
        %v2800 = vshrl.u32 %v2799, 7
        %v2801 = vsub.s32 5, %v2800
        %v2802 = vrot.slane %v2710, %v2801
        %v2803 = vlaneseq
        %v2804 = vshrl.u32 %v2803, 7
        %v2805 = vsub.s32 5, %v2804
        %v2806 = vrot.slane %v2711, %v2805
        %v2807 = vmul.f32 %v2797, %v2802
        %v2808 = vmul.f32 %v2797, %v2806
        %v2809 = vadd.f32 %v2793, %v2807
        %v2810 = vadd.f32 %v2794, %v2808
        %2811 = vset.pattern.permute.xlu0 6
        %2812 = vperm.xlu0 %2811, %v2713
        %v2813 = vpop.permute.xlu0 %2812
        %v2815 = vlaneseq
        %v2816 = vshrl.u32 %v2815, 7
        %v2817 = vsub.s32 6, %v2816
        %v2818 = vrot.slane %v2710, %v2817
        %v2819 = vlaneseq
        %v2820 = vshrl.u32 %v2819, 7
        %v2821 = vsub.s32 6, %v2820
        %v2822 = vrot.slane %v2711, %v2821
        %v2823 = vmul.f32 %v2813, %v2818
        %v2824 = vmul.f32 %v2813, %v2822
        %v2825 = vadd.f32 %v2809, %v2823
        %v2826 = vadd.f32 %v2810, %v2824
        %2827 = vset.pattern.permute.xlu0 7
        %2828 = vperm.xlu0 %2827, %v2713
        %v2829 = vpop.permute.xlu0 %2828
        %v2831 = vlaneseq
        %v2832 = vshrl.u32 %v2831, 7
        %v2833 = vsub.s32 7, %v2832
        %v2834 = vrot.slane %v2710, %v2833
        %v2835 = vlaneseq
        %v2836 = vshrl.u32 %v2835, 7
        %v2837 = vsub.s32 7, %v2836
        %v2838 = vrot.slane %v2711, %v2837
        %v2839 = vmul.f32 %v2829, %v2834
        %v2840 = vmul.f32 %v2829, %v2838
        %v2841 = vadd.f32 %v2825, %v2839
        %v2842 = vadd.f32 %v2826, %v2840
        %2844 = vset.pattern.permute.xlu0 0
        %2845 = vperm.xlu0 %2844, %v1576
        %v2846 = vpop.permute.xlu0 %2845
        %v2848 = vadd.f32 %v2846, %v2011
        %v2849 = vadd.f32 %v2846, %v2012
        %v2850 = vadd.f32 %v2848, %v2424
        %v2851 = vadd.f32 %v2849, %v2425
        %v2852 = vadd.f32 %v2850, %v2841
        %v2853 = vadd.f32 %v2851, %v2842
        %v2854 = vadd.f32 %v2852, %v2853
        %2855 = vadd.xlane.f32.xlu0 %v2854
        %v2856 = vpop.xlane.xlu0 %2855
        %v2857 = vmul.f32 %v2856, 0.00390625
        %v2858 = vsub.f32 %v2852, %v2857
        %v2859 = vsub.f32 %v2853, %v2857
        %v2860 = vmul.f32 %v2858, %v2858
        %v2861 = vmul.f32 %v2859, %v2859
        %v2862 = vadd.f32 %v2860, %v2861
        %2863 = vadd.xlane.f32.xlu0 %v2862
        %v2864 = vpop.xlane.xlu0 %2863
        %v2865 = vmul.f32 %v2864, 0.00390625
        %v2866 = vadd.f32 %v2865, 1e-05
        %v2867 = vrsqrt.pop %v2866
        %v2868 = vmul.f32 %v2858, %v2867
        %v2869 = vmul.f32 %v2859, %v2867
        %v2870 = vadd.f32 %v223, %v2868
        %v2871 = vadd.f32 %v224, %v2869
        %2872 = vst [vmem:[%s217] sm:$0xff] %v2870
        %2873 = vst [vmem:[%s217 + $0x8] sm:$0xff] %v2871
        %s2874 = sand.u32 %s137, 1
        %s2875 = scalar_lea.sflag [#allocation3], %s2874
        %s2876 = sand.u32 %s137, 1
        %s2877 = smul.addr %s2876, 16
        %s2878 = scalar_lea.vmem [#allocation2], %s2877
        // Predicated region
        $region41: #{tpu_custom_call.1} parent=39 // pred_check
          %p2879 = pneg %p147
        $region42: #{tpu_custom_call.1} parent=39 // pred_check_branch
          %2881 = sbr.rel (%p2879) target = $region44
        $region43: #{tpu_custom_call.1} parent=39 // pred_region
          %s2883 = ssub.s32 256, 256
          %2884 = vsyncadd %s2875, %s2883
          %s2885 = smul.addr %s19, 2
          %s2886 = smul.addr %s2885, 128
          %s2887 = scalar_lea.hbm %s5, %s2886
          %s2889 = sshll.u32 %s2878, 4
          %s2890 = int_to_ptr.vmem [resolvable:$true] %s2889
          %2892 = dma.vmem_to_hbm [thread:$0]  %s2890, 256, %s2887, %s2875
        $region44: #{tpu_custom_call.1} parent=39 // pred_fallthru
          _
      $region40: #{tpu_custom_call.1} parent=5 // pred_fallthru
        _
      %p2893 = scmp.le.s32.totalorder 2, %s14
      // Predicated region
      $region45: #{tpu_custom_call.1} parent=5 // pred_check
        %p2894 = pneg %p2893
      $region46: #{tpu_custom_call.1} parent=5 // pred_check_branch
        %2896 = sbr.rel (%p2894) target = $region48
      $region47: #{tpu_custom_call.1} parent=5 // pred_region
        %s2897 = ssub.s32 %s14, 2
        // Predicated region
        $region49: #{tpu_custom_call.1} parent=47 // pred_check
          %p2898 = pneg %p153
        $region50: #{tpu_custom_call.1} parent=47 // pred_check_branch
          %2900 = sbr.rel (%p2898) target = $region52
        $region51: #{tpu_custom_call.1} parent=47 // pred_region
          %s2901 = sand.u32 %s138, 1
          %s2902 = scalar_lea.sflag [#allocation3], %s2901
          %s2903 = sand.u32 %s138, 1
          %s2904 = smul.addr %s2903, 16
          %s2905 = scalar_lea.vmem [#allocation2], %s2904
          %2906 = dma.done %s2902, 256
        $region52: #{tpu_custom_call.1} parent=47 // pred_fallthru
          _
      $region48: #{tpu_custom_call.1} parent=5 // pred_fallthru
        _
    $region6: #{tpu_custom_call.1} parent=1 // loop_footer
      %s18 = sadd.s32 1, %s14
    $region7: #{tpu_custom_call.1} parent=1 // loop_footer_branch
      %13 = sbr.rel target = $region3
    $region8: #{tpu_custom_call.1} parent=1 // loop_exit
      _
    %2907 = vsyncpa [#allocation3], 1
    %s2908 = scalar_lea.sflag [#allocation3], 1
    %2909 = vsyncpa %s2908, 1

// kernel: tpu_custom_call.1
$region0: #{tpu_custom_call.1}
  #allocation0 [shape = 'u32[]', space=smem, size = 0x4, offset = 0x4, fixed_abs, tag = 'smem constant byte address 0x4 - core index']
  #allocation1 [shape = 'u32[144,128]{1,0:T(1,128)}', space=vmem, size = 0x12000, scoped, tag = 'internal scratch']
  %s0 = inlined_call_operand.vmem [shape: f32[2,8,256], index: 0, kind: input, shape index: {}]
  %s1 = inlined_call_operand.vmem [shape: f32[9,8,8], index: 1, kind: input, shape index: {}]
  %s2 = inlined_call_operand.vmem [shape: f32[8,1], index: 2, kind: input, shape index: {}]
  %s3 = inlined_call_operand.vmem [shape: f32[9,8,8], index: 3, kind: input, shape index: {}]
  %s4 = inlined_call_operand.vmem [shape: f32[8,1], index: 4, kind: input, shape index: {}]
  %s5 = inlined_call_operand.hbm [shape: f32[2,8,256], index: 5, kind: output, shape index: {}]
  %s6 = sld [smem:[#allocation0]]
  $region53: #{tpu_custom_call.1} parent=0
    _
  %s8 = ssub.s32 1, %s6
  %s9 = scalar_select 0, %s8, %s6
  $region1: #{tpu_custom_call.1} parent=0
    #allocation2 [shape = 'u8[16384]{0}', space=vmem, size = 0x4000, scoped, tag = 'output window, operand 0']
    #allocation3 [shape = 's32[2]{0}', space=sflag, size = 0x8, scoped, tag = 'scoped memory for tpu_custom_call.1']
    %10 = vsyncpa [#allocation3], 0
    %s11 = scalar_lea.sflag [#allocation3], 1
    %12 = vsyncpa %s11, 0
    loop: start=0, step=1, limit=4
    $region2: #{tpu_custom_call.1} parent=1 // loop_pre_header
      _
    $region3: #{tpu_custom_call.1} parent=1 // loop_header
      %s14 = sphi 0, %s18
      %p15 = scmp.ge.s32.totalorder %s14, 4
      %s24 = sphi 0, %s26
      %s27 = sphi 0, %s24
      %s28 = sphi 0, %s27
      %s44 = sphi 0, %s28
      %s48 = sphi 0, %s48
      %s50 = sphi 0, %s48
      %s51 = sphi 0, %s50
      %s65 = sphi 0, %s51
      %s69 = sphi 0, %s69
      %s71 = sphi 0, %s69
      %s72 = sphi 0, %s71
      %s86 = sphi 0, %s72
      %s90 = sphi 0, %s90
      %s92 = sphi 0, %s90
      %s93 = sphi 0, %s92
      %s107 = sphi 0, %s93
      %s111 = sphi 0, %s111
      %s113 = sphi 0, %s111
      %s114 = sphi 0, %s113
      %s128 = sphi 0, %s114
      %s134 = sphi 0, %s136
      %s137 = sphi 0, %s134
      %s138 = sphi 0, %s137
      %s154 = sphi 0, %s138
    $region4: #{tpu_custom_call.1} parent=1 // loop_header_branch
      %17 = sbr.rel (%p15) target = $region8
    $region5: #{tpu_custom_call.1} parent=1 // loop_body
      %s19 = ssub.s32 %s14, 1
      %s20 = ssub.s32 %s14, 2
      %s21 = sadd.s32 %s14, 1
      %s22 = ssub.s32 %s14, %s21
      %p23 = scmp.eq.s32.totalorder %s22, 0
      %s25 = sadd.s32 %s24, 1
      %s26 = scalar_select %p23, %s24, %s25
      %p29 = pneg %p23
      %p30 = scmp.eq.s32.totalorder %s14, 1
      %p31 = por %p29, %p30
      %p32 = scmp.ne.s32.totalorder %s24, %s27
      %p33 = scmp.eq.s32.totalorder %s14, 0
      %p34 = por %p32, %p33
      %p35 = scmp.ne.s32.totalorder %s24, %s27
      %p36 = scmp.eq.s32.totalorder %s19, 1
      %p37 = por %p35, %p36
      %p38 = scmp.ne.s32.totalorder %s27, %s28
      %p39 = scmp.eq.s32.totalorder %s19, 0
      %p40 = por %p38, %p39
      %p41 = scmp.ne.s32.totalorder %s27, %s28
      %p42 = scmp.eq.s32.totalorder %s20, 1
      %p43 = por %p41, %p42
      %p45 = scmp.ne.s32.totalorder %s28, %s44
      %p46 = scmp.eq.s32.totalorder %s20, 0
      %p47 = por %p45, %p46
      %s49 = sadd.s32 %s48, 1
      %p52 = scmp.eq.s32.totalorder %s14, 1
      %p53 = scmp.ne.s32.totalorder %s48, %s50
      %p54 = scmp.eq.s32.totalorder %s14, 0
      %p55 = por %p53, %p54
      %p56 = scmp.ne.s32.totalorder %s48, %s50
      %p57 = scmp.eq.s32.totalorder %s19, 1
      %p58 = por %p56, %p57
      %p59 = scmp.ne.s32.totalorder %s50, %s51
      %p60 = scmp.eq.s32.totalorder %s19, 0
      %p61 = por %p59, %p60
      %p62 = scmp.ne.s32.totalorder %s50, %s51
      %p63 = scmp.eq.s32.totalorder %s20, 1
      %p64 = por %p62, %p63
      %p66 = scmp.ne.s32.totalorder %s51, %s65
      %p67 = scmp.eq.s32.totalorder %s20, 0
      %p68 = por %p66, %p67
      %s70 = sadd.s32 %s69, 1
      %p73 = scmp.eq.s32.totalorder %s14, 1
      %p74 = scmp.ne.s32.totalorder %s69, %s71
      %p75 = scmp.eq.s32.totalorder %s14, 0
      %p76 = por %p74, %p75
      %p77 = scmp.ne.s32.totalorder %s69, %s71
      %p78 = scmp.eq.s32.totalorder %s19, 1
      %p79 = por %p77, %p78
      %p80 = scmp.ne.s32.totalorder %s71, %s72
      %p81 = scmp.eq.s32.totalorder %s19, 0
      %p82 = por %p80, %p81
      %p83 = scmp.ne.s32.totalorder %s71, %s72
      %p84 = scmp.eq.s32.totalorder %s20, 1
      %p85 = por %p83, %p84
      %p87 = scmp.ne.s32.totalorder %s72, %s86
      %p88 = scmp.eq.s32.totalorder %s20, 0
      %p89 = por %p87, %p88
      %s91 = sadd.s32 %s90, 1
      %p94 = scmp.eq.s32.totalorder %s14, 1
      %p95 = scmp.ne.s32.totalorder %s90, %s92
      %p96 = scmp.eq.s32.totalorder %s14, 0
      %p97 = por %p95, %p96
      %p98 = scmp.ne.s32.totalorder %s90, %s92
      %p99 = scmp.eq.s32.totalorder %s19, 1
      %p100 = por %p98, %p99
      %p101 = scmp.ne.s32.totalorder %s92, %s93
      %p102 = scmp.eq.s32.totalorder %s19, 0
      %p103 = por %p101, %p102
      %p104 = scmp.ne.s32.totalorder %s92, %s93
      %p105 = scmp.eq.s32.totalorder %s20, 1
      %p106 = por %p104, %p105
      %p108 = scmp.ne.s32.totalorder %s93, %s107
      %p109 = scmp.eq.s32.totalorder %s20, 0
      %p110 = por %p108, %p109
      %s112 = sadd.s32 %s111, 1
      %p115 = scmp.eq.s32.totalorder %s14, 1
      %p116 = scmp.ne.s32.totalorder %s111, %s113
      %p117 = scmp.eq.s32.totalorder %s14, 0
      %p118 = por %p116, %p117
      %p119 = scmp.ne.s32.totalorder %s111, %s113
      %p120 = scmp.eq.s32.totalorder %s19, 1
      %p121 = por %p119, %p120
      %p122 = scmp.ne.s32.totalorder %s113, %s114
      %p123 = scmp.eq.s32.totalorder %s19, 0
      %p124 = por %p122, %p123
      %p125 = scmp.ne.s32.totalorder %s113, %s114
      %p126 = scmp.eq.s32.totalorder %s20, 1
      %p127 = por %p125, %p126
      %p129 = scmp.ne.s32.totalorder %s114, %s128
      %p130 = scmp.eq.s32.totalorder %s20, 0
      %p131 = por %p129, %p130
      %s132 = ssub.s32 %s14, %s21
      %p133 = scmp.eq.s32.totalorder %s132, 0
      %s135 = sadd.s32 %s134, 1
      %s136 = scalar_select %p133, %s134, %s135
      %p139 = pneg %p133
      %p140 = scmp.eq.s32.totalorder %s14, 1
      %p141 = por %p139, %p140
      %p142 = scmp.ne.s32.totalorder %s134, %s137
      %p143 = scmp.eq.s32.totalorder %s14, 0
      %p144 = por %p142, %p143
      %p145 = scmp.ne.s32.totalorder %s134, %s137
      %p146 = scmp.eq.s32.totalorder %s19, 1
      %p147 = por %p145, %p146
      %p148 = scmp.ne.s32.totalorder %s137, %s138
      %p149 = scmp.eq.s32.totalorder %s19, 0
      %p150 = por %p148, %p149
      %p151 = scmp.ne.s32.totalorder %s137, %s138
      %p152 = scmp.eq.s32.totalorder %s20, 1
      %p153 = por %p151, %p152
      %p155 = scmp.ne.s32.totalorder %s138, %s154
      %p156 = scmp.eq.s32.totalorder %s20, 0
      %p157 = por %p155, %p156
      %p158 = scmp.le.s32.totalorder 1, %s14
      %p159 = scmp.lt.s32.totalorder %s14, 3
      %p160 = pnand %p158, %p159
      %p161 = pneg %p160
      // Predicated region
      $region9: #{tpu_custom_call.1} parent=5 // pred_check
        _
      $region10: #{tpu_custom_call.1} parent=5 // pred_check_branch
        %163 = sbr.rel (%p160) target = $region12
      $region11: #{tpu_custom_call.1} parent=5 // pred_region
        %s164 = ssub.s32 %s14, 1
        // Predicated region
        $region13: #{tpu_custom_call.1} parent=11 // pred_check
          %p165 = pneg %p61
        $region14: #{tpu_custom_call.1} parent=11 // pred_check_branch
          %167 = sbr.rel (%p165) target = $region16
        $region15: #{tpu_custom_call.1} parent=11 // pred_region
          _
        $region16: #{tpu_custom_call.1} parent=11 // pred_fallthru
          _
        // Predicated region
        $region17: #{tpu_custom_call.1} parent=11 // pred_check
          %p168 = pneg %p82
        $region18: #{tpu_custom_call.1} parent=11 // pred_check_branch
          %170 = sbr.rel (%p168) target = $region20
        $region19: #{tpu_custom_call.1} parent=11 // pred_region
          _
        $region20: #{tpu_custom_call.1} parent=11 // pred_fallthru
          _
        // Predicated region
        $region21: #{tpu_custom_call.1} parent=11 // pred_check
          %p171 = pneg %p103
        $region22: #{tpu_custom_call.1} parent=11 // pred_check_branch
          %173 = sbr.rel (%p171) target = $region24
        $region23: #{tpu_custom_call.1} parent=11 // pred_region
          _
        $region24: #{tpu_custom_call.1} parent=11 // pred_fallthru
          _
        // Predicated region
        $region25: #{tpu_custom_call.1} parent=11 // pred_check
          %p174 = pneg %p124
        $region26: #{tpu_custom_call.1} parent=11 // pred_check_branch
          %176 = sbr.rel (%p174) target = $region28
        $region27: #{tpu_custom_call.1} parent=11 // pred_region
          _
        $region28: #{tpu_custom_call.1} parent=11 // pred_fallthru
          _
      $region12: #{tpu_custom_call.1} parent=5 // pred_fallthru
        _
      %p177 = scmp.lt.s32.totalorder %s14, 2
      // Predicated region
      $region29: #{tpu_custom_call.1} parent=5 // pred_check
        %p178 = pneg %p177
      $region30: #{tpu_custom_call.1} parent=5 // pred_check_branch
        %180 = sbr.rel (%p178) target = $region32
      $region31: #{tpu_custom_call.1} parent=5 // pred_region
        // Predicated region
        $region33: #{tpu_custom_call.1} parent=31 // pred_check
          %p181 = pneg %p34
        $region34: #{tpu_custom_call.1} parent=31 // pred_check_branch
          %183 = sbr.rel (%p181) target = $region36
        $region35: #{tpu_custom_call.1} parent=31 // pred_region
          %p184 = scmp.lt.s32.totalorder %s14, 1
          %s185 = scalar_select %p184, %s14, 1
          %s186 = smul.addr %s185, 2
          %s187 = smul.addr %s186, 8
          %s188 = scalar_lea.vmem %s0, %s187
        $region36: #{tpu_custom_call.1} parent=31 // pred_fallthru
          _
      $region32: #{tpu_custom_call.1} parent=5 // pred_fallthru
        _
      %p189 = scmp.le.s32.totalorder 1, %s14
      %p190 = scmp.lt.s32.totalorder %s14, 3
      %p191 = pnand %p189, %p190
      %p192 = pneg %p191
      // Predicated region
      $region37: #{tpu_custom_call.1} parent=5 // pred_check
        _
      $region38: #{tpu_custom_call.1} parent=5 // pred_check_branch
        %194 = sbr.rel (%p191) target = $region40
      $region39: #{tpu_custom_call.1} parent=5 // pred_region
        %s195 = ssub.s32 %s14, 1
        %p196 = scmp.lt.s32.totalorder %s19, 1
        %s197 = scalar_select %p196, %s19, 1
        %s198 = smul.addr %s197, 2
        %s199 = smul.addr %s198, 8
        %s200 = scalar_lea.vmem %s0, %s199
        %p201 = pneg %p40
        %p202 = pneg %p37
        %p203 = pneg %p61
        %p204 = pneg %p58
        %p205 = pneg %p82
        %p206 = pneg %p79
        %p207 = pneg %p103
        %p208 = pneg %p100
        %p209 = pneg %p124
        %p210 = pneg %p121
        %p211 = pneg %p150
        %p212 = pneg %p147
        %s213 = sand.u32 %s137, 1
        %s214 = scalar_lea.sflag [#allocation3], %s213
        %s215 = sand.u32 %s137, 1
        %s216 = smul.addr %s215, 16
        %s217 = scalar_lea.vmem [#allocation2], %s216
        %p218 = scmp.lt.s32.totalorder %s19, 1
        %s219 = scalar_select %p218, %s19, 1
        %s220 = smul.addr %s219, 2
        %s221 = smul.addr %s220, 8
        %s222 = scalar_lea.vmem %s0, %s221
        %v223 = vld [vmem:[%s222] sm:$0xff]
        %v224 = vld [vmem:[%s222 + $0x8] sm:$0xff]
        %v225 = vlaneseq
        %v226 = vand.u32 %v225, 127
        %v227 = vadd.s32 %v226, 128
        %vm228 = vcmp.lt.s32.totalorder %v226, 0
        %v229 = vsub.s32 0, %v226
        %v230 = vsel %vm228, %v229, %v226
        %v231 = vshrl.u32 %v230, 4
        %v232 = vand.u32 %v230, 15
        %v233 = vsub.s32 0, %v232
        %v234 = vsel %vm228, %v233, %v232
        %vm235 = vcmp.lt.s32.totalorder %v227, 0
        %v236 = vsub.s32 0, %v227
        %v237 = vsel %vm235, %v236, %v227
        %v238 = vshrl.u32 %v237, 4
        %v239 = vand.u32 %v237, 15
        %v240 = vsub.s32 0, %v239
        %v241 = vsel %vm235, %v240, %v239
        %vm242 = vcmp.ne.s32.totalorder %v234, 0
        %vm243 = vcmp.ne.s32.totalorder %v241, 0
        %vm244 = vcmp.lt.s32.totalorder %v234, 0
        %vm245 = vcmp.lt.s32.totalorder %v241, 0
        %vm246 = vmand %vm244, %vm242
        %vm247 = vmand %vm245, %vm243
        %v248 = vadd.s32 %v234, 16
        %v249 = vadd.s32 %v241, 16
        %v250 = vsel %vm246, %v248, %v234
        %v251 = vsel %vm247, %v249, %v241
        %vm252 = vcmp.eq.s32.totalorder %v250, 0
        %vm253 = vcmp.eq.s32.totalorder %v251, 0
        %vm254 = vcmp.eq.s32.totalorder %v250, 15
        %vm255 = vcmp.eq.s32.totalorder %v251, 15
        %vm256 = vcmp.lt.s32.totalorder %v226, 16
        %vm257 = vcmp.lt.s32.totalorder %v227, 16
        %vm258 = vcmp.ge.s32.totalorder %v226, 240
        %vm259 = vcmp.ge.s32.totalorder %v227, 240
        %v260 = vld [vmem:[%s2] sm:$0xff]
        %262 = vrot.lane.b32.xlu0 %v224, 16
        %v263 = vpop.permute.xlu0 %262
        %266 = vrot.lane.b32.xlu0 %v223, 16
        %v267 = vpop.permute.xlu0 %266
        %vm268 = vcmask 130048
        %v269 = vsel %vm268, %v267, %v263
        %v272 = vsel %vm268, %v263, %v267
        %273 = vrot.lane.b32.xlu0 %v223, 112
        %v274 = vpop.permute.xlu0 %273
        %275 = vrot.lane.b32.xlu0 %v224, 112
        %v276 = vpop.permute.xlu0 %275
        %vm277 = vcmask 916480
        %v278 = vsel %vm277, %v274, %v276
        %v282 = vsel %vm277, %v276, %v274
        %v283 = vsel %vm256, 1, 0
        %v284 = vsel %vm257, 1, 0
        %vm285 = vcmp.eq.s32.totalorder %v283, 1
        %vm286 = vcmp.eq.s32.totalorder %v284, 1
        %v287 = vsel %vm285, %v278, %v272
        %v288 = vsel %vm286, %v282, %v269
        %290 = vrot.lane.b32.xlu0 %v288, 1
        %v291 = vpop.permute.xlu0 %290
        %294 = vrot.lane.b32.xlu0 %v287, 1
        %v295 = vpop.permute.xlu0 %294
        %vm296 = vcmask 7168
        %v297 = vsel %vm296, %v295, %v291
        %v300 = vsel %vm296, %v291, %v295
        %301 = vrot.lane.b32.xlu0 %v287, 127
        %v302 = vpop.permute.xlu0 %301
        %303 = vrot.lane.b32.xlu0 %v288, 127
        %v304 = vpop.permute.xlu0 %303
        %vm305 = vcmask 1039360
        %v306 = vsel %vm305, %v302, %v304
        %v310 = vsel %vm305, %v304, %v302
        %v311 = vsel %vm252, 1, 0
        %v312 = vsel %vm253, 1, 0
        %vm313 = vcmp.eq.s32.totalorder %v311, 1
        %vm314 = vcmp.eq.s32.totalorder %v312, 1
        %v315 = vsel %vm313, %v306, %v300
        %v316 = vsel %vm314, %v310, %v297
        %v317 = vld [vmem:[%s1] sm:$0xff]
        %319 = vset.pattern.permute.xlu0 0
        %320 = vperm.xlu0 %319, %v317
        %v321 = vpop.permute.xlu0 %320
        %v323 = vlaneseq
        %v324 = vshrl.u32 %v323, 7
        %v325 = vsub.s32 0, %v324
        %v326 = vrot.slane %v315, %v325
        %v327 = vlaneseq
        %v328 = vshrl.u32 %v327, 7
        %v329 = vsub.s32 0, %v328
        %v330 = vrot.slane %v316, %v329
        %v331 = vmul.f32 %v321, %v326
        %v332 = vmul.f32 %v321, %v330
        %333 = vset.pattern.permute.xlu0 1
        %334 = vperm.xlu0 %333, %v317
        %v335 = vpop.permute.xlu0 %334
        %v337 = vlaneseq
        %v338 = vshrl.u32 %v337, 7
        %v339 = vsub.s32 1, %v338
        %v340 = vrot.slane %v315, %v339
        %v341 = vlaneseq
        %v342 = vshrl.u32 %v341, 7
        %v343 = vsub.s32 1, %v342
        %v344 = vrot.slane %v316, %v343
        %v345 = vmul.f32 %v335, %v340
        %v346 = vmul.f32 %v335, %v344
        %v347 = vadd.f32 %v331, %v345
        %v348 = vadd.f32 %v332, %v346
        %349 = vset.pattern.permute.xlu0 2
        %350 = vperm.xlu0 %349, %v317
        %v351 = vpop.permute.xlu0 %350
        %v353 = vlaneseq
        %v354 = vshrl.u32 %v353, 7
        %v355 = vsub.s32 2, %v354
        %v356 = vrot.slane %v315, %v355
        %v357 = vlaneseq
        %v358 = vshrl.u32 %v357, 7
        %v359 = vsub.s32 2, %v358
        %v360 = vrot.slane %v316, %v359
        %v361 = vmul.f32 %v351, %v356
        %v362 = vmul.f32 %v351, %v360
        %v363 = vadd.f32 %v347, %v361
        %v364 = vadd.f32 %v348, %v362
        %365 = vset.pattern.permute.xlu0 3
        %366 = vperm.xlu0 %365, %v317
        %v367 = vpop.permute.xlu0 %366
        %v369 = vlaneseq
        %v370 = vshrl.u32 %v369, 7
        %v371 = vsub.s32 3, %v370
        %v372 = vrot.slane %v315, %v371
        %v373 = vlaneseq
        %v374 = vshrl.u32 %v373, 7
        %v375 = vsub.s32 3, %v374
        %v376 = vrot.slane %v316, %v375
        %v377 = vmul.f32 %v367, %v372
        %v378 = vmul.f32 %v367, %v376
        %v379 = vadd.f32 %v363, %v377
        %v380 = vadd.f32 %v364, %v378
        %381 = vset.pattern.permute.xlu0 4
        %382 = vperm.xlu0 %381, %v317
        %v383 = vpop.permute.xlu0 %382
        %v385 = vlaneseq
        %v386 = vshrl.u32 %v385, 7
        %v387 = vsub.s32 4, %v386
        %v388 = vrot.slane %v315, %v387
        %v389 = vlaneseq
        %v390 = vshrl.u32 %v389, 7
        %v391 = vsub.s32 4, %v390
        %v392 = vrot.slane %v316, %v391
        %v393 = vmul.f32 %v383, %v388
        %v394 = vmul.f32 %v383, %v392
        %v395 = vadd.f32 %v379, %v393
        %v396 = vadd.f32 %v380, %v394
        %397 = vset.pattern.permute.xlu0 5
        %398 = vperm.xlu0 %397, %v317
        %v399 = vpop.permute.xlu0 %398
        %v401 = vlaneseq
        %v402 = vshrl.u32 %v401, 7
        %v403 = vsub.s32 5, %v402
        %v404 = vrot.slane %v315, %v403
        %v405 = vlaneseq
        %v406 = vshrl.u32 %v405, 7
        %v407 = vsub.s32 5, %v406
        %v408 = vrot.slane %v316, %v407
        %v409 = vmul.f32 %v399, %v404
        %v410 = vmul.f32 %v399, %v408
        %v411 = vadd.f32 %v395, %v409
        %v412 = vadd.f32 %v396, %v410
        %413 = vset.pattern.permute.xlu0 6
        %414 = vperm.xlu0 %413, %v317
        %v415 = vpop.permute.xlu0 %414
        %v417 = vlaneseq
        %v418 = vshrl.u32 %v417, 7
        %v419 = vsub.s32 6, %v418
        %v420 = vrot.slane %v315, %v419
        %v421 = vlaneseq
        %v422 = vshrl.u32 %v421, 7
        %v423 = vsub.s32 6, %v422
        %v424 = vrot.slane %v316, %v423
        %v425 = vmul.f32 %v415, %v420
        %v426 = vmul.f32 %v415, %v424
        %v427 = vadd.f32 %v411, %v425
        %v428 = vadd.f32 %v412, %v426
        %429 = vset.pattern.permute.xlu0 7
        %430 = vperm.xlu0 %429, %v317
        %v431 = vpop.permute.xlu0 %430
        %v433 = vlaneseq
        %v434 = vshrl.u32 %v433, 7
        %v435 = vsub.s32 7, %v434
        %v436 = vrot.slane %v315, %v435
        %v437 = vlaneseq
        %v438 = vshrl.u32 %v437, 7
        %v439 = vsub.s32 7, %v438
        %v440 = vrot.slane %v316, %v439
        %v441 = vmul.f32 %v431, %v436
        %v442 = vmul.f32 %v431, %v440
        %v443 = vadd.f32 %v427, %v441
        %v444 = vadd.f32 %v428, %v442
        %s445 = scalar_lea.vmem %s1, 8
        %v446 = vld [vmem:[%s445] sm:$0xff]
        %448 = vset.pattern.permute.xlu0 0
        %449 = vperm.xlu0 %448, %v446
        %v450 = vpop.permute.xlu0 %449
        %v452 = vlaneseq
        %v453 = vshrl.u32 %v452, 7
        %v454 = vsub.s32 0, %v453
        %v455 = vrot.slane %v287, %v454
        %v456 = vlaneseq
        %v457 = vshrl.u32 %v456, 7
        %v458 = vsub.s32 0, %v457
        %v459 = vrot.slane %v288, %v458
        %v460 = vmul.f32 %v450, %v455
        %v461 = vmul.f32 %v450, %v459
        %v462 = vadd.f32 %v443, %v460
        %v463 = vadd.f32 %v444, %v461
        %464 = vset.pattern.permute.xlu0 1
        %465 = vperm.xlu0 %464, %v446
        %v466 = vpop.permute.xlu0 %465
        %v468 = vlaneseq
        %v469 = vshrl.u32 %v468, 7
        %v470 = vsub.s32 1, %v469
        %v471 = vrot.slane %v287, %v470
        %v472 = vlaneseq
        %v473 = vshrl.u32 %v472, 7
        %v474 = vsub.s32 1, %v473
        %v475 = vrot.slane %v288, %v474
        %v476 = vmul.f32 %v466, %v471
        %v477 = vmul.f32 %v466, %v475
        %v478 = vadd.f32 %v462, %v476
        %v479 = vadd.f32 %v463, %v477
        %480 = vset.pattern.permute.xlu0 2
        %481 = vperm.xlu0 %480, %v446
        %v482 = vpop.permute.xlu0 %481
        %v484 = vlaneseq
        %v485 = vshrl.u32 %v484, 7
        %v486 = vsub.s32 2, %v485
        %v487 = vrot.slane %v287, %v486
        %v488 = vlaneseq
        %v489 = vshrl.u32 %v488, 7
        %v490 = vsub.s32 2, %v489
        %v491 = vrot.slane %v288, %v490
        %v492 = vmul.f32 %v482, %v487
        %v493 = vmul.f32 %v482, %v491
        %v494 = vadd.f32 %v478, %v492
        %v495 = vadd.f32 %v479, %v493
        %496 = vset.pattern.permute.xlu0 3
        %497 = vperm.xlu0 %496, %v446
        %v498 = vpop.permute.xlu0 %497
        %v500 = vlaneseq
        %v501 = vshrl.u32 %v500, 7
        %v502 = vsub.s32 3, %v501
        %v503 = vrot.slane %v287, %v502
        %v504 = vlaneseq
        %v505 = vshrl.u32 %v504, 7
        %v506 = vsub.s32 3, %v505
        %v507 = vrot.slane %v288, %v506
        %v508 = vmul.f32 %v498, %v503
        %v509 = vmul.f32 %v498, %v507
        %v510 = vadd.f32 %v494, %v508
        %v511 = vadd.f32 %v495, %v509
        %512 = vset.pattern.permute.xlu0 4
        %513 = vperm.xlu0 %512, %v446
        %v514 = vpop.permute.xlu0 %513
        %v516 = vlaneseq
        %v517 = vshrl.u32 %v516, 7
        %v518 = vsub.s32 4, %v517
        %v519 = vrot.slane %v287, %v518
        %v520 = vlaneseq
        %v521 = vshrl.u32 %v520, 7
        %v522 = vsub.s32 4, %v521
        %v523 = vrot.slane %v288, %v522
        %v524 = vmul.f32 %v514, %v519
        %v525 = vmul.f32 %v514, %v523
        %v526 = vadd.f32 %v510, %v524
        %v527 = vadd.f32 %v511, %v525
        %528 = vset.pattern.permute.xlu0 5
        %529 = vperm.xlu0 %528, %v446
        %v530 = vpop.permute.xlu0 %529
        %v532 = vlaneseq
        %v533 = vshrl.u32 %v532, 7
        %v534 = vsub.s32 5, %v533
        %v535 = vrot.slane %v287, %v534
        %v536 = vlaneseq
        %v537 = vshrl.u32 %v536, 7
        %v538 = vsub.s32 5, %v537
        %v539 = vrot.slane %v288, %v538
        %v540 = vmul.f32 %v530, %v535
        %v541 = vmul.f32 %v530, %v539
        %v542 = vadd.f32 %v526, %v540
        %v543 = vadd.f32 %v527, %v541
        %544 = vset.pattern.permute.xlu0 6
        %545 = vperm.xlu0 %544, %v446
        %v546 = vpop.permute.xlu0 %545
        %v548 = vlaneseq
        %v549 = vshrl.u32 %v548, 7
        %v550 = vsub.s32 6, %v549
        %v551 = vrot.slane %v287, %v550
        %v552 = vlaneseq
        %v553 = vshrl.u32 %v552, 7
        %v554 = vsub.s32 6, %v553
        %v555 = vrot.slane %v288, %v554
        %v556 = vmul.f32 %v546, %v551
        %v557 = vmul.f32 %v546, %v555
        %v558 = vadd.f32 %v542, %v556
        %v559 = vadd.f32 %v543, %v557
        %560 = vset.pattern.permute.xlu0 7
        %561 = vperm.xlu0 %560, %v446
        %v562 = vpop.permute.xlu0 %561
        %v564 = vlaneseq
        %v565 = vshrl.u32 %v564, 7
        %v566 = vsub.s32 7, %v565
        %v567 = vrot.slane %v287, %v566
        %v568 = vlaneseq
        %v569 = vshrl.u32 %v568, 7
        %v570 = vsub.s32 7, %v569
        %v571 = vrot.slane %v288, %v570
        %v572 = vmul.f32 %v562, %v567
        %v573 = vmul.f32 %v562, %v571
        %v574 = vadd.f32 %v558, %v572
        %v575 = vadd.f32 %v559, %v573
        %v576 = vsel %vm254, 1, 0
        %v577 = vsel %vm255, 1, 0
        %vm578 = vcmp.eq.s32.totalorder %v576, 1
        %vm579 = vcmp.eq.s32.totalorder %v577, 1
        %v580 = vsel %vm578, %v300, %v306
        %v581 = vsel %vm579, %v297, %v310
        %s582 = scalar_lea.vmem %s1, 16
        %v583 = vld [vmem:[%s582] sm:$0xff]
        %585 = vset.pattern.permute.xlu0 0
        %586 = vperm.xlu0 %585, %v583
        %v587 = vpop.permute.xlu0 %586
        %v589 = vlaneseq
        %v590 = vshrl.u32 %v589, 7
        %v591 = vsub.s32 0, %v590
        %v592 = vrot.slane %v580, %v591
        %v593 = vlaneseq
        %v594 = vshrl.u32 %v593, 7
        %v595 = vsub.s32 0, %v594
        %v596 = vrot.slane %v581, %v595
        %v597 = vmul.f32 %v587, %v592
        %v598 = vmul.f32 %v587, %v596
        %v599 = vadd.f32 %v574, %v597
        %v600 = vadd.f32 %v575, %v598
        %601 = vset.pattern.permute.xlu0 1
        %602 = vperm.xlu0 %601, %v583
        %v603 = vpop.permute.xlu0 %602
        %v605 = vlaneseq
        %v606 = vshrl.u32 %v605, 7
        %v607 = vsub.s32 1, %v606
        %v608 = vrot.slane %v580, %v607
        %v609 = vlaneseq
        %v610 = vshrl.u32 %v609, 7
        %v611 = vsub.s32 1, %v610
        %v612 = vrot.slane %v581, %v611
        %v613 = vmul.f32 %v603, %v608
        %v614 = vmul.f32 %v603, %v612
        %v615 = vadd.f32 %v599, %v613
        %v616 = vadd.f32 %v600, %v614
        %617 = vset.pattern.permute.xlu0 2
        %618 = vperm.xlu0 %617, %v583
        %v619 = vpop.permute.xlu0 %618
        %v621 = vlaneseq
        %v622 = vshrl.u32 %v621, 7
        %v623 = vsub.s32 2, %v622
        %v624 = vrot.slane %v580, %v623
        %v625 = vlaneseq
        %v626 = vshrl.u32 %v625, 7
        %v627 = vsub.s32 2, %v626
        %v628 = vrot.slane %v581, %v627
        %v629 = vmul.f32 %v619, %v624
        %v630 = vmul.f32 %v619, %v628
        %v631 = vadd.f32 %v615, %v629
        %v632 = vadd.f32 %v616, %v630
        %633 = vset.pattern.permute.xlu0 3
        %634 = vperm.xlu0 %633, %v583
        %v635 = vpop.permute.xlu0 %634
        %v637 = vlaneseq
        %v638 = vshrl.u32 %v637, 7
        %v639 = vsub.s32 3, %v638
        %v640 = vrot.slane %v580, %v639
        %v641 = vlaneseq
        %v642 = vshrl.u32 %v641, 7
        %v643 = vsub.s32 3, %v642
        %v644 = vrot.slane %v581, %v643
        %v645 = vmul.f32 %v635, %v640
        %v646 = vmul.f32 %v635, %v644
        %v647 = vadd.f32 %v631, %v645
        %v648 = vadd.f32 %v632, %v646
        %649 = vset.pattern.permute.xlu0 4
        %650 = vperm.xlu0 %649, %v583
        %v651 = vpop.permute.xlu0 %650
        %v653 = vlaneseq
        %v654 = vshrl.u32 %v653, 7
        %v655 = vsub.s32 4, %v654
        %v656 = vrot.slane %v580, %v655
        %v657 = vlaneseq
        %v658 = vshrl.u32 %v657, 7
        %v659 = vsub.s32 4, %v658
        %v660 = vrot.slane %v581, %v659
        %v661 = vmul.f32 %v651, %v656
        %v662 = vmul.f32 %v651, %v660
        %v663 = vadd.f32 %v647, %v661
        %v664 = vadd.f32 %v648, %v662
        %665 = vset.pattern.permute.xlu0 5
        %666 = vperm.xlu0 %665, %v583
        %v667 = vpop.permute.xlu0 %666
        %v669 = vlaneseq
        %v670 = vshrl.u32 %v669, 7
        %v671 = vsub.s32 5, %v670
        %v672 = vrot.slane %v580, %v671
        %v673 = vlaneseq
        %v674 = vshrl.u32 %v673, 7
        %v675 = vsub.s32 5, %v674
        %v676 = vrot.slane %v581, %v675
        %v677 = vmul.f32 %v667, %v672
        %v678 = vmul.f32 %v667, %v676
        %v679 = vadd.f32 %v663, %v677
        %v680 = vadd.f32 %v664, %v678
        %681 = vset.pattern.permute.xlu0 6
        %682 = vperm.xlu0 %681, %v583
        %v683 = vpop.permute.xlu0 %682
        %v685 = vlaneseq
        %v686 = vshrl.u32 %v685, 7
        %v687 = vsub.s32 6, %v686
        %v688 = vrot.slane %v580, %v687
        %v689 = vlaneseq
        %v690 = vshrl.u32 %v689, 7
        %v691 = vsub.s32 6, %v690
        %v692 = vrot.slane %v581, %v691
        %v693 = vmul.f32 %v683, %v688
        %v694 = vmul.f32 %v683, %v692
        %v695 = vadd.f32 %v679, %v693
        %v696 = vadd.f32 %v680, %v694
        %697 = vset.pattern.permute.xlu0 7
        %698 = vperm.xlu0 %697, %v583
        %v699 = vpop.permute.xlu0 %698
        %v701 = vlaneseq
        %v702 = vshrl.u32 %v701, 7
        %v703 = vsub.s32 7, %v702
        %v704 = vrot.slane %v580, %v703
        %v705 = vlaneseq
        %v706 = vshrl.u32 %v705, 7
        %v707 = vsub.s32 7, %v706
        %v708 = vrot.slane %v581, %v707
        %v709 = vmul.f32 %v699, %v704
        %v710 = vmul.f32 %v699, %v708
        %v711 = vadd.f32 %v695, %v709
        %v712 = vadd.f32 %v696, %v710
        %713 = vrot.lane.b32.xlu0 %v224, 1
        %v714 = vpop.permute.xlu0 %713
        %716 = vrot.lane.b32.xlu0 %v223, 1
        %v717 = vpop.permute.xlu0 %716
        %v718 = vsel %vm296, %v717, %v714
        %v721 = vsel %vm296, %v714, %v717
        %722 = vrot.lane.b32.xlu0 %v223, 127
        %v723 = vpop.permute.xlu0 %722
        %724 = vrot.lane.b32.xlu0 %v224, 127
        %v725 = vpop.permute.xlu0 %724
        %v726 = vsel %vm305, %v723, %v725
        %v730 = vsel %vm305, %v725, %v723
        %v731 = vsel %vm313, %v726, %v721
        %v732 = vsel %vm314, %v730, %v718
        %s733 = scalar_lea.vmem %s1, 24
        %v734 = vld [vmem:[%s733] sm:$0xff]
        %736 = vset.pattern.permute.xlu0 0
        %737 = vperm.xlu0 %736, %v734
        %v738 = vpop.permute.xlu0 %737
        %v740 = vlaneseq
        %v741 = vshrl.u32 %v740, 7
        %v742 = vsub.s32 0, %v741
        %v743 = vrot.slane %v731, %v742
        %v744 = vlaneseq
        %v745 = vshrl.u32 %v744, 7
        %v746 = vsub.s32 0, %v745
        %v747 = vrot.slane %v732, %v746
        %v748 = vmul.f32 %v738, %v743
        %v749 = vmul.f32 %v738, %v747
        %750 = vset.pattern.permute.xlu0 1
        %751 = vperm.xlu0 %750, %v734
        %v752 = vpop.permute.xlu0 %751
        %v754 = vlaneseq
        %v755 = vshrl.u32 %v754, 7
        %v756 = vsub.s32 1, %v755
        %v757 = vrot.slane %v731, %v756
        %v758 = vlaneseq
        %v759 = vshrl.u32 %v758, 7
        %v760 = vsub.s32 1, %v759
        %v761 = vrot.slane %v732, %v760
        %v762 = vmul.f32 %v752, %v757
        %v763 = vmul.f32 %v752, %v761
        %v764 = vadd.f32 %v748, %v762
        %v765 = vadd.f32 %v749, %v763
        %766 = vset.pattern.permute.xlu0 2
        %767 = vperm.xlu0 %766, %v734
        %v768 = vpop.permute.xlu0 %767
        %v770 = vlaneseq
        %v771 = vshrl.u32 %v770, 7
        %v772 = vsub.s32 2, %v771
        %v773 = vrot.slane %v731, %v772
        %v774 = vlaneseq
        %v775 = vshrl.u32 %v774, 7
        %v776 = vsub.s32 2, %v775
        %v777 = vrot.slane %v732, %v776
        %v778 = vmul.f32 %v768, %v773
        %v779 = vmul.f32 %v768, %v777
        %v780 = vadd.f32 %v764, %v778
        %v781 = vadd.f32 %v765, %v779
        %782 = vset.pattern.permute.xlu0 3
        %783 = vperm.xlu0 %782, %v734
        %v784 = vpop.permute.xlu0 %783
        %v786 = vlaneseq
        %v787 = vshrl.u32 %v786, 7
        %v788 = vsub.s32 3, %v787
        %v789 = vrot.slane %v731, %v788
        %v790 = vlaneseq
        %v791 = vshrl.u32 %v790, 7
        %v792 = vsub.s32 3, %v791
        %v793 = vrot.slane %v732, %v792
        %v794 = vmul.f32 %v784, %v789
        %v795 = vmul.f32 %v784, %v793
        %v796 = vadd.f32 %v780, %v794
        %v797 = vadd.f32 %v781, %v795
        %798 = vset.pattern.permute.xlu0 4
        %799 = vperm.xlu0 %798, %v734
        %v800 = vpop.permute.xlu0 %799
        %v802 = vlaneseq
        %v803 = vshrl.u32 %v802, 7
        %v804 = vsub.s32 4, %v803
        %v805 = vrot.slane %v731, %v804
        %v806 = vlaneseq
        %v807 = vshrl.u32 %v806, 7
        %v808 = vsub.s32 4, %v807
        %v809 = vrot.slane %v732, %v808
        %v810 = vmul.f32 %v800, %v805
        %v811 = vmul.f32 %v800, %v809
        %v812 = vadd.f32 %v796, %v810
        %v813 = vadd.f32 %v797, %v811
        %814 = vset.pattern.permute.xlu0 5
        %815 = vperm.xlu0 %814, %v734
        %v816 = vpop.permute.xlu0 %815
        %v818 = vlaneseq
        %v819 = vshrl.u32 %v818, 7
        %v820 = vsub.s32 5, %v819
        %v821 = vrot.slane %v731, %v820
        %v822 = vlaneseq
        %v823 = vshrl.u32 %v822, 7
        %v824 = vsub.s32 5, %v823
        %v825 = vrot.slane %v732, %v824
        %v826 = vmul.f32 %v816, %v821
        %v827 = vmul.f32 %v816, %v825
        %v828 = vadd.f32 %v812, %v826
        %v829 = vadd.f32 %v813, %v827
        %830 = vset.pattern.permute.xlu0 6
        %831 = vperm.xlu0 %830, %v734
        %v832 = vpop.permute.xlu0 %831
        %v834 = vlaneseq
        %v835 = vshrl.u32 %v834, 7
        %v836 = vsub.s32 6, %v835
        %v837 = vrot.slane %v731, %v836
        %v838 = vlaneseq
        %v839 = vshrl.u32 %v838, 7
        %v840 = vsub.s32 6, %v839
        %v841 = vrot.slane %v732, %v840
        %v842 = vmul.f32 %v832, %v837
        %v843 = vmul.f32 %v832, %v841
        %v844 = vadd.f32 %v828, %v842
        %v845 = vadd.f32 %v829, %v843
        %846 = vset.pattern.permute.xlu0 7
        %847 = vperm.xlu0 %846, %v734
        %v848 = vpop.permute.xlu0 %847
        %v850 = vlaneseq
        %v851 = vshrl.u32 %v850, 7
        %v852 = vsub.s32 7, %v851
        %v853 = vrot.slane %v731, %v852
        %v854 = vlaneseq
        %v855 = vshrl.u32 %v854, 7
        %v856 = vsub.s32 7, %v855
        %v857 = vrot.slane %v732, %v856
        %v858 = vmul.f32 %v848, %v853
        %v859 = vmul.f32 %v848, %v857
        %v860 = vadd.f32 %v844, %v858
        %v861 = vadd.f32 %v845, %v859
        %s862 = scalar_lea.vmem %s1, 32
        %v863 = vld [vmem:[%s862] sm:$0xff]
        %865 = vset.pattern.permute.xlu0 0
        %866 = vperm.xlu0 %865, %v863
        %v867 = vpop.permute.xlu0 %866
        %v869 = vlaneseq
        %v870 = vshrl.u32 %v869, 7
        %v871 = vsub.s32 0, %v870
        %v872 = vrot.slane %v223, %v871
        %v873 = vlaneseq
        %v874 = vshrl.u32 %v873, 7
        %v875 = vsub.s32 0, %v874
        %v876 = vrot.slane %v224, %v875
        %v877 = vmul.f32 %v867, %v872
        %v878 = vmul.f32 %v867, %v876
        %v879 = vadd.f32 %v860, %v877
        %v880 = vadd.f32 %v861, %v878
        %881 = vset.pattern.permute.xlu0 1
        %882 = vperm.xlu0 %881, %v863
        %v883 = vpop.permute.xlu0 %882
        %v885 = vlaneseq
        %v886 = vshrl.u32 %v885, 7
        %v887 = vsub.s32 1, %v886
        %v888 = vrot.slane %v223, %v887
        %v889 = vlaneseq
        %v890 = vshrl.u32 %v889, 7
        %v891 = vsub.s32 1, %v890
        %v892 = vrot.slane %v224, %v891
        %v893 = vmul.f32 %v883, %v888
        %v894 = vmul.f32 %v883, %v892
        %v895 = vadd.f32 %v879, %v893
        %v896 = vadd.f32 %v880, %v894
        %897 = vset.pattern.permute.xlu0 2
        %898 = vperm.xlu0 %897, %v863
        %v899 = vpop.permute.xlu0 %898
        %v901 = vlaneseq
        %v902 = vshrl.u32 %v901, 7
        %v903 = vsub.s32 2, %v902
        %v904 = vrot.slane %v223, %v903
        %v905 = vlaneseq
        %v906 = vshrl.u32 %v905, 7
        %v907 = vsub.s32 2, %v906
        %v908 = vrot.slane %v224, %v907
        %v909 = vmul.f32 %v899, %v904
        %v910 = vmul.f32 %v899, %v908
        %v911 = vadd.f32 %v895, %v909
        %v912 = vadd.f32 %v896, %v910
        %913 = vset.pattern.permute.xlu0 3
        %914 = vperm.xlu0 %913, %v863
        %v915 = vpop.permute.xlu0 %914
        %v917 = vlaneseq
        %v918 = vshrl.u32 %v917, 7
        %v919 = vsub.s32 3, %v918
        %v920 = vrot.slane %v223, %v919
        %v921 = vlaneseq
        %v922 = vshrl.u32 %v921, 7
        %v923 = vsub.s32 3, %v922
        %v924 = vrot.slane %v224, %v923
        %v925 = vmul.f32 %v915, %v920
        %v926 = vmul.f32 %v915, %v924
        %v927 = vadd.f32 %v911, %v925
        %v928 = vadd.f32 %v912, %v926
        %929 = vset.pattern.permute.xlu0 4
        %930 = vperm.xlu0 %929, %v863
        %v931 = vpop.permute.xlu0 %930
        %v933 = vlaneseq
        %v934 = vshrl.u32 %v933, 7
        %v935 = vsub.s32 4, %v934
        %v936 = vrot.slane %v223, %v935
        %v937 = vlaneseq
        %v938 = vshrl.u32 %v937, 7
        %v939 = vsub.s32 4, %v938
        %v940 = vrot.slane %v224, %v939
        %v941 = vmul.f32 %v931, %v936
        %v942 = vmul.f32 %v931, %v940
        %v943 = vadd.f32 %v927, %v941
        %v944 = vadd.f32 %v928, %v942
        %945 = vset.pattern.permute.xlu0 5
        %946 = vperm.xlu0 %945, %v863
        %v947 = vpop.permute.xlu0 %946
        %v949 = vlaneseq
        %v950 = vshrl.u32 %v949, 7
        %v951 = vsub.s32 5, %v950
        %v952 = vrot.slane %v223, %v951
        %v953 = vlaneseq
        %v954 = vshrl.u32 %v953, 7
        %v955 = vsub.s32 5, %v954
        %v956 = vrot.slane %v224, %v955
        %v957 = vmul.f32 %v947, %v952
        %v958 = vmul.f32 %v947, %v956
        %v959 = vadd.f32 %v943, %v957
        %v960 = vadd.f32 %v944, %v958
        %961 = vset.pattern.permute.xlu0 6
        %962 = vperm.xlu0 %961, %v863
        %v963 = vpop.permute.xlu0 %962
        %v965 = vlaneseq
        %v966 = vshrl.u32 %v965, 7
        %v967 = vsub.s32 6, %v966
        %v968 = vrot.slane %v223, %v967
        %v969 = vlaneseq
        %v970 = vshrl.u32 %v969, 7
        %v971 = vsub.s32 6, %v970
        %v972 = vrot.slane %v224, %v971
        %v973 = vmul.f32 %v963, %v968
        %v974 = vmul.f32 %v963, %v972
        %v975 = vadd.f32 %v959, %v973
        %v976 = vadd.f32 %v960, %v974
        %977 = vset.pattern.permute.xlu0 7
        %978 = vperm.xlu0 %977, %v863
        %v979 = vpop.permute.xlu0 %978
        %v981 = vlaneseq
        %v982 = vshrl.u32 %v981, 7
        %v983 = vsub.s32 7, %v982
        %v984 = vrot.slane %v223, %v983
        %v985 = vlaneseq
        %v986 = vshrl.u32 %v985, 7
        %v987 = vsub.s32 7, %v986
        %v988 = vrot.slane %v224, %v987
        %v989 = vmul.f32 %v979, %v984
        %v990 = vmul.f32 %v979, %v988
        %v991 = vadd.f32 %v975, %v989
        %v992 = vadd.f32 %v976, %v990
        %v993 = vsel %vm578, %v721, %v726
        %v994 = vsel %vm579, %v718, %v730
        %s995 = scalar_lea.vmem %s1, 40
        %v996 = vld [vmem:[%s995] sm:$0xff]
        %998 = vset.pattern.permute.xlu0 0
        %999 = vperm.xlu0 %998, %v996
        %v1000 = vpop.permute.xlu0 %999
        %v1002 = vlaneseq
        %v1003 = vshrl.u32 %v1002, 7
        %v1004 = vsub.s32 0, %v1003
        %v1005 = vrot.slane %v993, %v1004
        %v1006 = vlaneseq
        %v1007 = vshrl.u32 %v1006, 7
        %v1008 = vsub.s32 0, %v1007
        %v1009 = vrot.slane %v994, %v1008
        %v1010 = vmul.f32 %v1000, %v1005
        %v1011 = vmul.f32 %v1000, %v1009
        %v1012 = vadd.f32 %v991, %v1010
        %v1013 = vadd.f32 %v992, %v1011
        %1014 = vset.pattern.permute.xlu0 1
        %1015 = vperm.xlu0 %1014, %v996
        %v1016 = vpop.permute.xlu0 %1015
        %v1018 = vlaneseq
        %v1019 = vshrl.u32 %v1018, 7
        %v1020 = vsub.s32 1, %v1019
        %v1021 = vrot.slane %v993, %v1020
        %v1022 = vlaneseq
        %v1023 = vshrl.u32 %v1022, 7
        %v1024 = vsub.s32 1, %v1023
        %v1025 = vrot.slane %v994, %v1024
        %v1026 = vmul.f32 %v1016, %v1021
        %v1027 = vmul.f32 %v1016, %v1025
        %v1028 = vadd.f32 %v1012, %v1026
        %v1029 = vadd.f32 %v1013, %v1027
        %1030 = vset.pattern.permute.xlu0 2
        %1031 = vperm.xlu0 %1030, %v996
        %v1032 = vpop.permute.xlu0 %1031
        %v1034 = vlaneseq
        %v1035 = vshrl.u32 %v1034, 7
        %v1036 = vsub.s32 2, %v1035
        %v1037 = vrot.slane %v993, %v1036
        %v1038 = vlaneseq
        %v1039 = vshrl.u32 %v1038, 7
        %v1040 = vsub.s32 2, %v1039
        %v1041 = vrot.slane %v994, %v1040
        %v1042 = vmul.f32 %v1032, %v1037
        %v1043 = vmul.f32 %v1032, %v1041
        %v1044 = vadd.f32 %v1028, %v1042
        %v1045 = vadd.f32 %v1029, %v1043
        %1046 = vset.pattern.permute.xlu0 3
        %1047 = vperm.xlu0 %1046, %v996
        %v1048 = vpop.permute.xlu0 %1047
        %v1050 = vlaneseq
        %v1051 = vshrl.u32 %v1050, 7
        %v1052 = vsub.s32 3, %v1051
        %v1053 = vrot.slane %v993, %v1052
        %v1054 = vlaneseq
        %v1055 = vshrl.u32 %v1054, 7
        %v1056 = vsub.s32 3, %v1055
        %v1057 = vrot.slane %v994, %v1056
        %v1058 = vmul.f32 %v1048, %v1053
        %v1059 = vmul.f32 %v1048, %v1057
        %v1060 = vadd.f32 %v1044, %v1058
        %v1061 = vadd.f32 %v1045, %v1059
        %1062 = vset.pattern.permute.xlu0 4
        %1063 = vperm.xlu0 %1062, %v996
        %v1064 = vpop.permute.xlu0 %1063
        %v1066 = vlaneseq
        %v1067 = vshrl.u32 %v1066, 7
        %v1068 = vsub.s32 4, %v1067
        %v1069 = vrot.slane %v993, %v1068
        %v1070 = vlaneseq
        %v1071 = vshrl.u32 %v1070, 7
        %v1072 = vsub.s32 4, %v1071
        %v1073 = vrot.slane %v994, %v1072
        %v1074 = vmul.f32 %v1064, %v1069
        %v1075 = vmul.f32 %v1064, %v1073
        %v1076 = vadd.f32 %v1060, %v1074
        %v1077 = vadd.f32 %v1061, %v1075
        %1078 = vset.pattern.permute.xlu0 5
        %1079 = vperm.xlu0 %1078, %v996
        %v1080 = vpop.permute.xlu0 %1079
        %v1082 = vlaneseq
        %v1083 = vshrl.u32 %v1082, 7
        %v1084 = vsub.s32 5, %v1083
        %v1085 = vrot.slane %v993, %v1084
        %v1086 = vlaneseq
        %v1087 = vshrl.u32 %v1086, 7
        %v1088 = vsub.s32 5, %v1087
        %v1089 = vrot.slane %v994, %v1088
        %v1090 = vmul.f32 %v1080, %v1085
        %v1091 = vmul.f32 %v1080, %v1089
        %v1092 = vadd.f32 %v1076, %v1090
        %v1093 = vadd.f32 %v1077, %v1091
        %1094 = vset.pattern.permute.xlu0 6
        %1095 = vperm.xlu0 %1094, %v996
        %v1096 = vpop.permute.xlu0 %1095
        %v1098 = vlaneseq
        %v1099 = vshrl.u32 %v1098, 7
        %v1100 = vsub.s32 6, %v1099
        %v1101 = vrot.slane %v993, %v1100
        %v1102 = vlaneseq
        %v1103 = vshrl.u32 %v1102, 7
        %v1104 = vsub.s32 6, %v1103
        %v1105 = vrot.slane %v994, %v1104
        %v1106 = vmul.f32 %v1096, %v1101
        %v1107 = vmul.f32 %v1096, %v1105
        %v1108 = vadd.f32 %v1092, %v1106
        %v1109 = vadd.f32 %v1093, %v1107
        %1110 = vset.pattern.permute.xlu0 7
        %1111 = vperm.xlu0 %1110, %v996
        %v1112 = vpop.permute.xlu0 %1111
        %v1114 = vlaneseq
        %v1115 = vshrl.u32 %v1114, 7
        %v1116 = vsub.s32 7, %v1115
        %v1117 = vrot.slane %v993, %v1116
        %v1118 = vlaneseq
        %v1119 = vshrl.u32 %v1118, 7
        %v1120 = vsub.s32 7, %v1119
        %v1121 = vrot.slane %v994, %v1120
        %v1122 = vmul.f32 %v1112, %v1117
        %v1123 = vmul.f32 %v1112, %v1121
        %v1124 = vadd.f32 %v1108, %v1122
        %v1125 = vadd.f32 %v1109, %v1123
        %v1126 = vsel %vm258, 1, 0
        %v1127 = vsel %vm259, 1, 0
        %vm1128 = vcmp.eq.s32.totalorder %v1126, 1
        %vm1129 = vcmp.eq.s32.totalorder %v1127, 1
        %v1130 = vsel %vm1128, %v272, %v278
        %v1131 = vsel %vm1129, %v269, %v282
        %1133 = vrot.lane.b32.xlu0 %v1131, 1
        %v1134 = vpop.permute.xlu0 %1133
        %1137 = vrot.lane.b32.xlu0 %v1130, 1
        %v1138 = vpop.permute.xlu0 %1137
        %v1139 = vsel %vm296, %v1138, %v1134
        %v1142 = vsel %vm296, %v1134, %v1138
        %1143 = vrot.lane.b32.xlu0 %v1130, 127
        %v1144 = vpop.permute.xlu0 %1143
        %1145 = vrot.lane.b32.xlu0 %v1131, 127
        %v1146 = vpop.permute.xlu0 %1145
        %v1147 = vsel %vm305, %v1144, %v1146
        %v1151 = vsel %vm305, %v1146, %v1144
        %v1152 = vsel %vm313, %v1147, %v1142
        %v1153 = vsel %vm314, %v1151, %v1139
        %s1154 = scalar_lea.vmem %s1, 48
        %v1155 = vld [vmem:[%s1154] sm:$0xff]
        %1157 = vset.pattern.permute.xlu0 0
        %1158 = vperm.xlu0 %1157, %v1155
        %v1159 = vpop.permute.xlu0 %1158
        %v1161 = vlaneseq
        %v1162 = vshrl.u32 %v1161, 7
        %v1163 = vsub.s32 0, %v1162
        %v1164 = vrot.slane %v1152, %v1163
        %v1165 = vlaneseq
        %v1166 = vshrl.u32 %v1165, 7
        %v1167 = vsub.s32 0, %v1166
        %v1168 = vrot.slane %v1153, %v1167
        %v1169 = vmul.f32 %v1159, %v1164
        %v1170 = vmul.f32 %v1159, %v1168
        %1171 = vset.pattern.permute.xlu0 1
        %1172 = vperm.xlu0 %1171, %v1155
        %v1173 = vpop.permute.xlu0 %1172
        %v1175 = vlaneseq
        %v1176 = vshrl.u32 %v1175, 7
        %v1177 = vsub.s32 1, %v1176
        %v1178 = vrot.slane %v1152, %v1177
        %v1179 = vlaneseq
        %v1180 = vshrl.u32 %v1179, 7
        %v1181 = vsub.s32 1, %v1180
        %v1182 = vrot.slane %v1153, %v1181
        %v1183 = vmul.f32 %v1173, %v1178
        %v1184 = vmul.f32 %v1173, %v1182
        %v1185 = vadd.f32 %v1169, %v1183
        %v1186 = vadd.f32 %v1170, %v1184
        %1187 = vset.pattern.permute.xlu0 2
        %1188 = vperm.xlu0 %1187, %v1155
        %v1189 = vpop.permute.xlu0 %1188
        %v1191 = vlaneseq
        %v1192 = vshrl.u32 %v1191, 7
        %v1193 = vsub.s32 2, %v1192
        %v1194 = vrot.slane %v1152, %v1193
        %v1195 = vlaneseq
        %v1196 = vshrl.u32 %v1195, 7
        %v1197 = vsub.s32 2, %v1196
        %v1198 = vrot.slane %v1153, %v1197
        %v1199 = vmul.f32 %v1189, %v1194
        %v1200 = vmul.f32 %v1189, %v1198
        %v1201 = vadd.f32 %v1185, %v1199
        %v1202 = vadd.f32 %v1186, %v1200
        %1203 = vset.pattern.permute.xlu0 3
        %1204 = vperm.xlu0 %1203, %v1155
        %v1205 = vpop.permute.xlu0 %1204
        %v1207 = vlaneseq
        %v1208 = vshrl.u32 %v1207, 7
        %v1209 = vsub.s32 3, %v1208
        %v1210 = vrot.slane %v1152, %v1209
        %v1211 = vlaneseq
        %v1212 = vshrl.u32 %v1211, 7
        %v1213 = vsub.s32 3, %v1212
        %v1214 = vrot.slane %v1153, %v1213
        %v1215 = vmul.f32 %v1205, %v1210
        %v1216 = vmul.f32 %v1205, %v1214
        %v1217 = vadd.f32 %v1201, %v1215
        %v1218 = vadd.f32 %v1202, %v1216
        %1219 = vset.pattern.permute.xlu0 4
        %1220 = vperm.xlu0 %1219, %v1155
        %v1221 = vpop.permute.xlu0 %1220
        %v1223 = vlaneseq
        %v1224 = vshrl.u32 %v1223, 7
        %v1225 = vsub.s32 4, %v1224
        %v1226 = vrot.slane %v1152, %v1225
        %v1227 = vlaneseq
        %v1228 = vshrl.u32 %v1227, 7
        %v1229 = vsub.s32 4, %v1228
        %v1230 = vrot.slane %v1153, %v1229
        %v1231 = vmul.f32 %v1221, %v1226
        %v1232 = vmul.f32 %v1221, %v1230
        %v1233 = vadd.f32 %v1217, %v1231
        %v1234 = vadd.f32 %v1218, %v1232
        %1235 = vset.pattern.permute.xlu0 5
        %1236 = vperm.xlu0 %1235, %v1155
        %v1237 = vpop.permute.xlu0 %1236
        %v1239 = vlaneseq
        %v1240 = vshrl.u32 %v1239, 7
        %v1241 = vsub.s32 5, %v1240
        %v1242 = vrot.slane %v1152, %v1241
        %v1243 = vlaneseq
        %v1244 = vshrl.u32 %v1243, 7
        %v1245 = vsub.s32 5, %v1244
        %v1246 = vrot.slane %v1153, %v1245
        %v1247 = vmul.f32 %v1237, %v1242
        %v1248 = vmul.f32 %v1237, %v1246
        %v1249 = vadd.f32 %v1233, %v1247
        %v1250 = vadd.f32 %v1234, %v1248
        %1251 = vset.pattern.permute.xlu0 6
        %1252 = vperm.xlu0 %1251, %v1155
        %v1253 = vpop.permute.xlu0 %1252
        %v1255 = vlaneseq
        %v1256 = vshrl.u32 %v1255, 7
        %v1257 = vsub.s32 6, %v1256
        %v1258 = vrot.slane %v1152, %v1257
        %v1259 = vlaneseq
        %v1260 = vshrl.u32 %v1259, 7
        %v1261 = vsub.s32 6, %v1260
        %v1262 = vrot.slane %v1153, %v1261
        %v1263 = vmul.f32 %v1253, %v1258
        %v1264 = vmul.f32 %v1253, %v1262
        %v1265 = vadd.f32 %v1249, %v1263
        %v1266 = vadd.f32 %v1250, %v1264
        %1267 = vset.pattern.permute.xlu0 7
        %1268 = vperm.xlu0 %1267, %v1155
        %v1269 = vpop.permute.xlu0 %1268
        %v1271 = vlaneseq
        %v1272 = vshrl.u32 %v1271, 7
        %v1273 = vsub.s32 7, %v1272
        %v1274 = vrot.slane %v1152, %v1273
        %v1275 = vlaneseq
        %v1276 = vshrl.u32 %v1275, 7
        %v1277 = vsub.s32 7, %v1276
        %v1278 = vrot.slane %v1153, %v1277
        %v1279 = vmul.f32 %v1269, %v1274
        %v1280 = vmul.f32 %v1269, %v1278
        %v1281 = vadd.f32 %v1265, %v1279
        %v1282 = vadd.f32 %v1266, %v1280
        %s1283 = scalar_lea.vmem %s1, 56
        %v1284 = vld [vmem:[%s1283] sm:$0xff]
        %1286 = vset.pattern.permute.xlu0 0
        %1287 = vperm.xlu0 %1286, %v1284
        %v1288 = vpop.permute.xlu0 %1287
        %v1290 = vlaneseq
        %v1291 = vshrl.u32 %v1290, 7
        %v1292 = vsub.s32 0, %v1291
        %v1293 = vrot.slane %v1130, %v1292
        %v1294 = vlaneseq
        %v1295 = vshrl.u32 %v1294, 7
        %v1296 = vsub.s32 0, %v1295
        %v1297 = vrot.slane %v1131, %v1296
        %v1298 = vmul.f32 %v1288, %v1293
        %v1299 = vmul.f32 %v1288, %v1297
        %v1300 = vadd.f32 %v1281, %v1298
        %v1301 = vadd.f32 %v1282, %v1299
        %1302 = vset.pattern.permute.xlu0 1
        %1303 = vperm.xlu0 %1302, %v1284
        %v1304 = vpop.permute.xlu0 %1303
        %v1306 = vlaneseq
        %v1307 = vshrl.u32 %v1306, 7
        %v1308 = vsub.s32 1, %v1307
        %v1309 = vrot.slane %v1130, %v1308
        %v1310 = vlaneseq
        %v1311 = vshrl.u32 %v1310, 7
        %v1312 = vsub.s32 1, %v1311
        %v1313 = vrot.slane %v1131, %v1312
        %v1314 = vmul.f32 %v1304, %v1309
        %v1315 = vmul.f32 %v1304, %v1313
        %v1316 = vadd.f32 %v1300, %v1314
        %v1317 = vadd.f32 %v1301, %v1315
        %1318 = vset.pattern.permute.xlu0 2
        %1319 = vperm.xlu0 %1318, %v1284
        %v1320 = vpop.permute.xlu0 %1319
        %v1322 = vlaneseq
        %v1323 = vshrl.u32 %v1322, 7
        %v1324 = vsub.s32 2, %v1323
        %v1325 = vrot.slane %v1130, %v1324
        %v1326 = vlaneseq
        %v1327 = vshrl.u32 %v1326, 7
        %v1328 = vsub.s32 2, %v1327
        %v1329 = vrot.slane %v1131, %v1328
        %v1330 = vmul.f32 %v1320, %v1325
        %v1331 = vmul.f32 %v1320, %v1329
        %v1332 = vadd.f32 %v1316, %v1330
        %v1333 = vadd.f32 %v1317, %v1331
        %1334 = vset.pattern.permute.xlu0 3
        %1335 = vperm.xlu0 %1334, %v1284
        %v1336 = vpop.permute.xlu0 %1335
        %v1338 = vlaneseq
        %v1339 = vshrl.u32 %v1338, 7
        %v1340 = vsub.s32 3, %v1339
        %v1341 = vrot.slane %v1130, %v1340
        %v1342 = vlaneseq
        %v1343 = vshrl.u32 %v1342, 7
        %v1344 = vsub.s32 3, %v1343
        %v1345 = vrot.slane %v1131, %v1344
        %v1346 = vmul.f32 %v1336, %v1341
        %v1347 = vmul.f32 %v1336, %v1345
        %v1348 = vadd.f32 %v1332, %v1346
        %v1349 = vadd.f32 %v1333, %v1347
        %1350 = vset.pattern.permute.xlu0 4
        %1351 = vperm.xlu0 %1350, %v1284
        %v1352 = vpop.permute.xlu0 %1351
        %v1354 = vlaneseq
        %v1355 = vshrl.u32 %v1354, 7
        %v1356 = vsub.s32 4, %v1355
        %v1357 = vrot.slane %v1130, %v1356
        %v1358 = vlaneseq
        %v1359 = vshrl.u32 %v1358, 7
        %v1360 = vsub.s32 4, %v1359
        %v1361 = vrot.slane %v1131, %v1360
        %v1362 = vmul.f32 %v1352, %v1357
        %v1363 = vmul.f32 %v1352, %v1361
        %v1364 = vadd.f32 %v1348, %v1362
        %v1365 = vadd.f32 %v1349, %v1363
        %1366 = vset.pattern.permute.xlu0 5
        %1367 = vperm.xlu0 %1366, %v1284
        %v1368 = vpop.permute.xlu0 %1367
        %v1370 = vlaneseq
        %v1371 = vshrl.u32 %v1370, 7
        %v1372 = vsub.s32 5, %v1371
        %v1373 = vrot.slane %v1130, %v1372
        %v1374 = vlaneseq
        %v1375 = vshrl.u32 %v1374, 7
        %v1376 = vsub.s32 5, %v1375
        %v1377 = vrot.slane %v1131, %v1376
        %v1378 = vmul.f32 %v1368, %v1373
        %v1379 = vmul.f32 %v1368, %v1377
        %v1380 = vadd.f32 %v1364, %v1378
        %v1381 = vadd.f32 %v1365, %v1379
        %1382 = vset.pattern.permute.xlu0 6
        %1383 = vperm.xlu0 %1382, %v1284
        %v1384 = vpop.permute.xlu0 %1383
        %v1386 = vlaneseq
        %v1387 = vshrl.u32 %v1386, 7
        %v1388 = vsub.s32 6, %v1387
        %v1389 = vrot.slane %v1130, %v1388
        %v1390 = vlaneseq
        %v1391 = vshrl.u32 %v1390, 7
        %v1392 = vsub.s32 6, %v1391
        %v1393 = vrot.slane %v1131, %v1392
        %v1394 = vmul.f32 %v1384, %v1389
        %v1395 = vmul.f32 %v1384, %v1393
        %v1396 = vadd.f32 %v1380, %v1394
        %v1397 = vadd.f32 %v1381, %v1395
        %1398 = vset.pattern.permute.xlu0 7
        %1399 = vperm.xlu0 %1398, %v1284
        %v1400 = vpop.permute.xlu0 %1399
        %v1402 = vlaneseq
        %v1403 = vshrl.u32 %v1402, 7
        %v1404 = vsub.s32 7, %v1403
        %v1405 = vrot.slane %v1130, %v1404
        %v1406 = vlaneseq
        %v1407 = vshrl.u32 %v1406, 7
        %v1408 = vsub.s32 7, %v1407
        %v1409 = vrot.slane %v1131, %v1408
        %v1410 = vmul.f32 %v1400, %v1405
        %v1411 = vmul.f32 %v1400, %v1409
        %v1412 = vadd.f32 %v1396, %v1410
        %v1413 = vadd.f32 %v1397, %v1411
        %v1414 = vsel %vm578, %v1142, %v1147
        %v1415 = vsel %vm579, %v1139, %v1151
        %s1416 = scalar_lea.vmem %s1, 64
        %v1417 = vld [vmem:[%s1416] sm:$0xff]
        %1419 = vset.pattern.permute.xlu0 0
        %1420 = vperm.xlu0 %1419, %v1417
        %v1421 = vpop.permute.xlu0 %1420
        %v1423 = vlaneseq
        %v1424 = vshrl.u32 %v1423, 7
        %v1425 = vsub.s32 0, %v1424
        %v1426 = vrot.slane %v1414, %v1425
        %v1427 = vlaneseq
        %v1428 = vshrl.u32 %v1427, 7
        %v1429 = vsub.s32 0, %v1428
        %v1430 = vrot.slane %v1415, %v1429
        %v1431 = vmul.f32 %v1421, %v1426
        %v1432 = vmul.f32 %v1421, %v1430
        %v1433 = vadd.f32 %v1412, %v1431
        %v1434 = vadd.f32 %v1413, %v1432
        %1435 = vset.pattern.permute.xlu0 1
        %1436 = vperm.xlu0 %1435, %v1417
        %v1437 = vpop.permute.xlu0 %1436
        %v1439 = vlaneseq
        %v1440 = vshrl.u32 %v1439, 7
        %v1441 = vsub.s32 1, %v1440
        %v1442 = vrot.slane %v1414, %v1441
        %v1443 = vlaneseq
        %v1444 = vshrl.u32 %v1443, 7
        %v1445 = vsub.s32 1, %v1444
        %v1446 = vrot.slane %v1415, %v1445
        %v1447 = vmul.f32 %v1437, %v1442
        %v1448 = vmul.f32 %v1437, %v1446
        %v1449 = vadd.f32 %v1433, %v1447
        %v1450 = vadd.f32 %v1434, %v1448
        %1451 = vset.pattern.permute.xlu0 2
        %1452 = vperm.xlu0 %1451, %v1417
        %v1453 = vpop.permute.xlu0 %1452
        %v1455 = vlaneseq
        %v1456 = vshrl.u32 %v1455, 7
        %v1457 = vsub.s32 2, %v1456
        %v1458 = vrot.slane %v1414, %v1457
        %v1459 = vlaneseq
        %v1460 = vshrl.u32 %v1459, 7
        %v1461 = vsub.s32 2, %v1460
        %v1462 = vrot.slane %v1415, %v1461
        %v1463 = vmul.f32 %v1453, %v1458
        %v1464 = vmul.f32 %v1453, %v1462
        %v1465 = vadd.f32 %v1449, %v1463
        %v1466 = vadd.f32 %v1450, %v1464
        %1467 = vset.pattern.permute.xlu0 3
        %1468 = vperm.xlu0 %1467, %v1417
        %v1469 = vpop.permute.xlu0 %1468
        %v1471 = vlaneseq
        %v1472 = vshrl.u32 %v1471, 7
        %v1473 = vsub.s32 3, %v1472
        %v1474 = vrot.slane %v1414, %v1473
        %v1475 = vlaneseq
        %v1476 = vshrl.u32 %v1475, 7
        %v1477 = vsub.s32 3, %v1476
        %v1478 = vrot.slane %v1415, %v1477
        %v1479 = vmul.f32 %v1469, %v1474
        %v1480 = vmul.f32 %v1469, %v1478
        %v1481 = vadd.f32 %v1465, %v1479
        %v1482 = vadd.f32 %v1466, %v1480
        %1483 = vset.pattern.permute.xlu0 4
        %1484 = vperm.xlu0 %1483, %v1417
        %v1485 = vpop.permute.xlu0 %1484
        %v1487 = vlaneseq
        %v1488 = vshrl.u32 %v1487, 7
        %v1489 = vsub.s32 4, %v1488
        %v1490 = vrot.slane %v1414, %v1489
        %v1491 = vlaneseq
        %v1492 = vshrl.u32 %v1491, 7
        %v1493 = vsub.s32 4, %v1492
        %v1494 = vrot.slane %v1415, %v1493
        %v1495 = vmul.f32 %v1485, %v1490
        %v1496 = vmul.f32 %v1485, %v1494
        %v1497 = vadd.f32 %v1481, %v1495
        %v1498 = vadd.f32 %v1482, %v1496
        %1499 = vset.pattern.permute.xlu0 5
        %1500 = vperm.xlu0 %1499, %v1417
        %v1501 = vpop.permute.xlu0 %1500
        %v1503 = vlaneseq
        %v1504 = vshrl.u32 %v1503, 7
        %v1505 = vsub.s32 5, %v1504
        %v1506 = vrot.slane %v1414, %v1505
        %v1507 = vlaneseq
        %v1508 = vshrl.u32 %v1507, 7
        %v1509 = vsub.s32 5, %v1508
        %v1510 = vrot.slane %v1415, %v1509
        %v1511 = vmul.f32 %v1501, %v1506
        %v1512 = vmul.f32 %v1501, %v1510
        %v1513 = vadd.f32 %v1497, %v1511
        %v1514 = vadd.f32 %v1498, %v1512
        %1515 = vset.pattern.permute.xlu0 6
        %1516 = vperm.xlu0 %1515, %v1417
        %v1517 = vpop.permute.xlu0 %1516
        %v1519 = vlaneseq
        %v1520 = vshrl.u32 %v1519, 7
        %v1521 = vsub.s32 6, %v1520
        %v1522 = vrot.slane %v1414, %v1521
        %v1523 = vlaneseq
        %v1524 = vshrl.u32 %v1523, 7
        %v1525 = vsub.s32 6, %v1524
        %v1526 = vrot.slane %v1415, %v1525
        %v1527 = vmul.f32 %v1517, %v1522
        %v1528 = vmul.f32 %v1517, %v1526
        %v1529 = vadd.f32 %v1513, %v1527
        %v1530 = vadd.f32 %v1514, %v1528
        %1531 = vset.pattern.permute.xlu0 7
        %1532 = vperm.xlu0 %1531, %v1417
        %v1533 = vpop.permute.xlu0 %1532
        %v1535 = vlaneseq
        %v1536 = vshrl.u32 %v1535, 7
        %v1537 = vsub.s32 7, %v1536
        %v1538 = vrot.slane %v1414, %v1537
        %v1539 = vlaneseq
        %v1540 = vshrl.u32 %v1539, 7
        %v1541 = vsub.s32 7, %v1540
        %v1542 = vrot.slane %v1415, %v1541
        %v1543 = vmul.f32 %v1533, %v1538
        %v1544 = vmul.f32 %v1533, %v1542
        %v1545 = vadd.f32 %v1529, %v1543
        %v1546 = vadd.f32 %v1530, %v1544
        %1548 = vset.pattern.permute.xlu0 0
        %1549 = vperm.xlu0 %1548, %v260
        %v1550 = vpop.permute.xlu0 %1549
        %v1552 = vadd.f32 %v1550, %v711
        %v1553 = vadd.f32 %v1550, %v712
        %v1554 = vadd.f32 %v1552, %v1124
        %v1555 = vadd.f32 %v1553, %v1125
        %v1556 = vadd.f32 %v1554, %v1545
        %v1557 = vadd.f32 %v1555, %v1546
        %v1558 = vadd.f32 %v1556, %v1557
        %1559 = vadd.xlane.f32.xlu0 %v1558
        %v1560 = vpop.xlane.xlu0 %1559
        %v1561 = vmul.f32 %v1560, 0.00390625
        %v1562 = vsub.f32 %v1556, %v1561
        %v1563 = vsub.f32 %v1557, %v1561
        %v1564 = vmul.f32 %v1562, %v1562
        %v1565 = vmul.f32 %v1563, %v1563
        %v1566 = vadd.f32 %v1564, %v1565
        %1567 = vadd.xlane.f32.xlu0 %v1566
        %v1568 = vpop.xlane.xlu0 %1567
        %v1569 = vmul.f32 %v1568, 0.00390625
        %v1570 = vadd.f32 %v1569, 1e-05
        %v1571 = vrsqrt.pop %v1570
        %v1572 = vmul.f32 %v1562, %v1571
        %v1573 = vmul.f32 %v1563, %v1571
        %v1574 = vmax.f32 %v1572, 0.0
        %v1575 = vmax.f32 %v1573, 0.0
        %v1576 = vld [vmem:[%s4] sm:$0xff]
        %1578 = vrot.lane.b32.xlu0 %v1575, 16
        %v1579 = vpop.permute.xlu0 %1578
        %1582 = vrot.lane.b32.xlu0 %v1574, 16
        %v1583 = vpop.permute.xlu0 %1582
        %v1584 = vsel %vm268, %v1583, %v1579
        %v1587 = vsel %vm268, %v1579, %v1583
        %1588 = vrot.lane.b32.xlu0 %v1574, 112
        %v1589 = vpop.permute.xlu0 %1588
        %1590 = vrot.lane.b32.xlu0 %v1575, 112
        %v1591 = vpop.permute.xlu0 %1590
        %v1592 = vsel %vm277, %v1589, %v1591
        %v1596 = vsel %vm277, %v1591, %v1589
        %v1597 = vsel %vm285, %v1592, %v1587
        %v1598 = vsel %vm286, %v1596, %v1584
        %1600 = vrot.lane.b32.xlu0 %v1598, 1
        %v1601 = vpop.permute.xlu0 %1600
        %1604 = vrot.lane.b32.xlu0 %v1597, 1
        %v1605 = vpop.permute.xlu0 %1604
        %v1606 = vsel %vm296, %v1605, %v1601
        %v1609 = vsel %vm296, %v1601, %v1605
        %1610 = vrot.lane.b32.xlu0 %v1597, 127
        %v1611 = vpop.permute.xlu0 %1610
        %1612 = vrot.lane.b32.xlu0 %v1598, 127
        %v1613 = vpop.permute.xlu0 %1612
        %v1614 = vsel %vm305, %v1611, %v1613
        %v1618 = vsel %vm305, %v1613, %v1611
        %v1619 = vsel %vm313, %v1614, %v1609
        %v1620 = vsel %vm314, %v1618, %v1606
        %v1621 = vld [vmem:[%s3] sm:$0xff]
        %1623 = vset.pattern.permute.xlu0 0
        %1624 = vperm.xlu0 %1623, %v1621
        %v1625 = vpop.permute.xlu0 %1624
        %v1627 = vlaneseq
        %v1628 = vshrl.u32 %v1627, 7
        %v1629 = vsub.s32 0, %v1628
        %v1630 = vrot.slane %v1619, %v1629
        %v1631 = vlaneseq
        %v1632 = vshrl.u32 %v1631, 7
        %v1633 = vsub.s32 0, %v1632
        %v1634 = vrot.slane %v1620, %v1633
        %v1635 = vmul.f32 %v1625, %v1630
        %v1636 = vmul.f32 %v1625, %v1634
        %1637 = vset.pattern.permute.xlu0 1
        %1638 = vperm.xlu0 %1637, %v1621
        %v1639 = vpop.permute.xlu0 %1638
        %v1641 = vlaneseq
        %v1642 = vshrl.u32 %v1641, 7
        %v1643 = vsub.s32 1, %v1642
        %v1644 = vrot.slane %v1619, %v1643
        %v1645 = vlaneseq
        %v1646 = vshrl.u32 %v1645, 7
        %v1647 = vsub.s32 1, %v1646
        %v1648 = vrot.slane %v1620, %v1647
        %v1649 = vmul.f32 %v1639, %v1644
        %v1650 = vmul.f32 %v1639, %v1648
        %v1651 = vadd.f32 %v1635, %v1649
        %v1652 = vadd.f32 %v1636, %v1650
        %1653 = vset.pattern.permute.xlu0 2
        %1654 = vperm.xlu0 %1653, %v1621
        %v1655 = vpop.permute.xlu0 %1654
        %v1657 = vlaneseq
        %v1658 = vshrl.u32 %v1657, 7
        %v1659 = vsub.s32 2, %v1658
        %v1660 = vrot.slane %v1619, %v1659
        %v1661 = vlaneseq
        %v1662 = vshrl.u32 %v1661, 7
        %v1663 = vsub.s32 2, %v1662
        %v1664 = vrot.slane %v1620, %v1663
        %v1665 = vmul.f32 %v1655, %v1660
        %v1666 = vmul.f32 %v1655, %v1664
        %v1667 = vadd.f32 %v1651, %v1665
        %v1668 = vadd.f32 %v1652, %v1666
        %1669 = vset.pattern.permute.xlu0 3
        %1670 = vperm.xlu0 %1669, %v1621
        %v1671 = vpop.permute.xlu0 %1670
        %v1673 = vlaneseq
        %v1674 = vshrl.u32 %v1673, 7
        %v1675 = vsub.s32 3, %v1674
        %v1676 = vrot.slane %v1619, %v1675
        %v1677 = vlaneseq
        %v1678 = vshrl.u32 %v1677, 7
        %v1679 = vsub.s32 3, %v1678
        %v1680 = vrot.slane %v1620, %v1679
        %v1681 = vmul.f32 %v1671, %v1676
        %v1682 = vmul.f32 %v1671, %v1680
        %v1683 = vadd.f32 %v1667, %v1681
        %v1684 = vadd.f32 %v1668, %v1682
        %1685 = vset.pattern.permute.xlu0 4
        %1686 = vperm.xlu0 %1685, %v1621
        %v1687 = vpop.permute.xlu0 %1686
        %v1689 = vlaneseq
        %v1690 = vshrl.u32 %v1689, 7
        %v1691 = vsub.s32 4, %v1690
        %v1692 = vrot.slane %v1619, %v1691
        %v1693 = vlaneseq
        %v1694 = vshrl.u32 %v1693, 7
        %v1695 = vsub.s32 4, %v1694
        %v1696 = vrot.slane %v1620, %v1695
        %v1697 = vmul.f32 %v1687, %v1692
        %v1698 = vmul.f32 %v1687, %v1696
        %v1699 = vadd.f32 %v1683, %v1697
        %v1700 = vadd.f32 %v1684, %v1698
        %1701 = vset.pattern.permute.xlu0 5
        %1702 = vperm.xlu0 %1701, %v1621
        %v1703 = vpop.permute.xlu0 %1702
        %v1705 = vlaneseq
        %v1706 = vshrl.u32 %v1705, 7
        %v1707 = vsub.s32 5, %v1706
        %v1708 = vrot.slane %v1619, %v1707
        %v1709 = vlaneseq
        %v1710 = vshrl.u32 %v1709, 7
        %v1711 = vsub.s32 5, %v1710
        %v1712 = vrot.slane %v1620, %v1711
        %v1713 = vmul.f32 %v1703, %v1708
        %v1714 = vmul.f32 %v1703, %v1712
        %v1715 = vadd.f32 %v1699, %v1713
        %v1716 = vadd.f32 %v1700, %v1714
        %1717 = vset.pattern.permute.xlu0 6
        %1718 = vperm.xlu0 %1717, %v1621
        %v1719 = vpop.permute.xlu0 %1718
        %v1721 = vlaneseq
        %v1722 = vshrl.u32 %v1721, 7
        %v1723 = vsub.s32 6, %v1722
        %v1724 = vrot.slane %v1619, %v1723
        %v1725 = vlaneseq
        %v1726 = vshrl.u32 %v1725, 7
        %v1727 = vsub.s32 6, %v1726
        %v1728 = vrot.slane %v1620, %v1727
        %v1729 = vmul.f32 %v1719, %v1724
        %v1730 = vmul.f32 %v1719, %v1728
        %v1731 = vadd.f32 %v1715, %v1729
        %v1732 = vadd.f32 %v1716, %v1730
        %1733 = vset.pattern.permute.xlu0 7
        %1734 = vperm.xlu0 %1733, %v1621
        %v1735 = vpop.permute.xlu0 %1734
        %v1737 = vlaneseq
        %v1738 = vshrl.u32 %v1737, 7
        %v1739 = vsub.s32 7, %v1738
        %v1740 = vrot.slane %v1619, %v1739
        %v1741 = vlaneseq
        %v1742 = vshrl.u32 %v1741, 7
        %v1743 = vsub.s32 7, %v1742
        %v1744 = vrot.slane %v1620, %v1743
        %v1745 = vmul.f32 %v1735, %v1740
        %v1746 = vmul.f32 %v1735, %v1744
        %v1747 = vadd.f32 %v1731, %v1745
        %v1748 = vadd.f32 %v1732, %v1746
        %s1749 = scalar_lea.vmem %s3, 8
        %v1750 = vld [vmem:[%s1749] sm:$0xff]
        %1752 = vset.pattern.permute.xlu0 0
        %1753 = vperm.xlu0 %1752, %v1750
        %v1754 = vpop.permute.xlu0 %1753
        %v1756 = vlaneseq
        %v1757 = vshrl.u32 %v1756, 7
        %v1758 = vsub.s32 0, %v1757
        %v1759 = vrot.slane %v1597, %v1758
        %v1760 = vlaneseq
        %v1761 = vshrl.u32 %v1760, 7
        %v1762 = vsub.s32 0, %v1761
        %v1763 = vrot.slane %v1598, %v1762
        %v1764 = vmul.f32 %v1754, %v1759
        %v1765 = vmul.f32 %v1754, %v1763
        %v1766 = vadd.f32 %v1747, %v1764
        %v1767 = vadd.f32 %v1748, %v1765
        %1768 = vset.pattern.permute.xlu0 1
        %1769 = vperm.xlu0 %1768, %v1750
        %v1770 = vpop.permute.xlu0 %1769
        %v1772 = vlaneseq
        %v1773 = vshrl.u32 %v1772, 7
        %v1774 = vsub.s32 1, %v1773
        %v1775 = vrot.slane %v1597, %v1774
        %v1776 = vlaneseq
        %v1777 = vshrl.u32 %v1776, 7
        %v1778 = vsub.s32 1, %v1777
        %v1779 = vrot.slane %v1598, %v1778
        %v1780 = vmul.f32 %v1770, %v1775
        %v1781 = vmul.f32 %v1770, %v1779
        %v1782 = vadd.f32 %v1766, %v1780
        %v1783 = vadd.f32 %v1767, %v1781
        %1784 = vset.pattern.permute.xlu0 2
        %1785 = vperm.xlu0 %1784, %v1750
        %v1786 = vpop.permute.xlu0 %1785
        %v1788 = vlaneseq
        %v1789 = vshrl.u32 %v1788, 7
        %v1790 = vsub.s32 2, %v1789
        %v1791 = vrot.slane %v1597, %v1790
        %v1792 = vlaneseq
        %v1793 = vshrl.u32 %v1792, 7
        %v1794 = vsub.s32 2, %v1793
        %v1795 = vrot.slane %v1598, %v1794
        %v1796 = vmul.f32 %v1786, %v1791
        %v1797 = vmul.f32 %v1786, %v1795
        %v1798 = vadd.f32 %v1782, %v1796
        %v1799 = vadd.f32 %v1783, %v1797
        %1800 = vset.pattern.permute.xlu0 3
        %1801 = vperm.xlu0 %1800, %v1750
        %v1802 = vpop.permute.xlu0 %1801
        %v1804 = vlaneseq
        %v1805 = vshrl.u32 %v1804, 7
        %v1806 = vsub.s32 3, %v1805
        %v1807 = vrot.slane %v1597, %v1806
        %v1808 = vlaneseq
        %v1809 = vshrl.u32 %v1808, 7
        %v1810 = vsub.s32 3, %v1809
        %v1811 = vrot.slane %v1598, %v1810
        %v1812 = vmul.f32 %v1802, %v1807
        %v1813 = vmul.f32 %v1802, %v1811
        %v1814 = vadd.f32 %v1798, %v1812
        %v1815 = vadd.f32 %v1799, %v1813
        %1816 = vset.pattern.permute.xlu0 4
        %1817 = vperm.xlu0 %1816, %v1750
        %v1818 = vpop.permute.xlu0 %1817
        %v1820 = vlaneseq
        %v1821 = vshrl.u32 %v1820, 7
        %v1822 = vsub.s32 4, %v1821
        %v1823 = vrot.slane %v1597, %v1822
        %v1824 = vlaneseq
        %v1825 = vshrl.u32 %v1824, 7
        %v1826 = vsub.s32 4, %v1825
        %v1827 = vrot.slane %v1598, %v1826
        %v1828 = vmul.f32 %v1818, %v1823
        %v1829 = vmul.f32 %v1818, %v1827
        %v1830 = vadd.f32 %v1814, %v1828
        %v1831 = vadd.f32 %v1815, %v1829
        %1832 = vset.pattern.permute.xlu0 5
        %1833 = vperm.xlu0 %1832, %v1750
        %v1834 = vpop.permute.xlu0 %1833
        %v1836 = vlaneseq
        %v1837 = vshrl.u32 %v1836, 7
        %v1838 = vsub.s32 5, %v1837
        %v1839 = vrot.slane %v1597, %v1838
        %v1840 = vlaneseq
        %v1841 = vshrl.u32 %v1840, 7
        %v1842 = vsub.s32 5, %v1841
        %v1843 = vrot.slane %v1598, %v1842
        %v1844 = vmul.f32 %v1834, %v1839
        %v1845 = vmul.f32 %v1834, %v1843
        %v1846 = vadd.f32 %v1830, %v1844
        %v1847 = vadd.f32 %v1831, %v1845
        %1848 = vset.pattern.permute.xlu0 6
        %1849 = vperm.xlu0 %1848, %v1750
        %v1850 = vpop.permute.xlu0 %1849
        %v1852 = vlaneseq
        %v1853 = vshrl.u32 %v1852, 7
        %v1854 = vsub.s32 6, %v1853
        %v1855 = vrot.slane %v1597, %v1854
        %v1856 = vlaneseq
        %v1857 = vshrl.u32 %v1856, 7
        %v1858 = vsub.s32 6, %v1857
        %v1859 = vrot.slane %v1598, %v1858
        %v1860 = vmul.f32 %v1850, %v1855
        %v1861 = vmul.f32 %v1850, %v1859
        %v1862 = vadd.f32 %v1846, %v1860
        %v1863 = vadd.f32 %v1847, %v1861
        %1864 = vset.pattern.permute.xlu0 7
        %1865 = vperm.xlu0 %1864, %v1750
        %v1866 = vpop.permute.xlu0 %1865
        %v1868 = vlaneseq
        %v1869 = vshrl.u32 %v1868, 7
        %v1870 = vsub.s32 7, %v1869
        %v1871 = vrot.slane %v1597, %v1870
        %v1872 = vlaneseq
        %v1873 = vshrl.u32 %v1872, 7
        %v1874 = vsub.s32 7, %v1873
        %v1875 = vrot.slane %v1598, %v1874
        %v1876 = vmul.f32 %v1866, %v1871
        %v1877 = vmul.f32 %v1866, %v1875
        %v1878 = vadd.f32 %v1862, %v1876
        %v1879 = vadd.f32 %v1863, %v1877
        %v1880 = vsel %vm578, %v1609, %v1614
        %v1881 = vsel %vm579, %v1606, %v1618
        %s1882 = scalar_lea.vmem %s3, 16
        %v1883 = vld [vmem:[%s1882] sm:$0xff]
        %1885 = vset.pattern.permute.xlu0 0
        %1886 = vperm.xlu0 %1885, %v1883
        %v1887 = vpop.permute.xlu0 %1886
        %v1889 = vlaneseq
        %v1890 = vshrl.u32 %v1889, 7
        %v1891 = vsub.s32 0, %v1890
        %v1892 = vrot.slane %v1880, %v1891
        %v1893 = vlaneseq
        %v1894 = vshrl.u32 %v1893, 7
        %v1895 = vsub.s32 0, %v1894
        %v1896 = vrot.slane %v1881, %v1895
        %v1897 = vmul.f32 %v1887, %v1892
        %v1898 = vmul.f32 %v1887, %v1896
        %v1899 = vadd.f32 %v1878, %v1897
        %v1900 = vadd.f32 %v1879, %v1898
        %1901 = vset.pattern.permute.xlu0 1
        %1902 = vperm.xlu0 %1901, %v1883
        %v1903 = vpop.permute.xlu0 %1902
        %v1905 = vlaneseq
        %v1906 = vshrl.u32 %v1905, 7
        %v1907 = vsub.s32 1, %v1906
        %v1908 = vrot.slane %v1880, %v1907
        %v1909 = vlaneseq
        %v1910 = vshrl.u32 %v1909, 7
        %v1911 = vsub.s32 1, %v1910
        %v1912 = vrot.slane %v1881, %v1911
        %v1913 = vmul.f32 %v1903, %v1908
        %v1914 = vmul.f32 %v1903, %v1912
        %v1915 = vadd.f32 %v1899, %v1913
        %v1916 = vadd.f32 %v1900, %v1914
        %1917 = vset.pattern.permute.xlu0 2
        %1918 = vperm.xlu0 %1917, %v1883
        %v1919 = vpop.permute.xlu0 %1918
        %v1921 = vlaneseq
        %v1922 = vshrl.u32 %v1921, 7
        %v1923 = vsub.s32 2, %v1922
        %v1924 = vrot.slane %v1880, %v1923
        %v1925 = vlaneseq
        %v1926 = vshrl.u32 %v1925, 7
        %v1927 = vsub.s32 2, %v1926
        %v1928 = vrot.slane %v1881, %v1927
        %v1929 = vmul.f32 %v1919, %v1924
        %v1930 = vmul.f32 %v1919, %v1928
        %v1931 = vadd.f32 %v1915, %v1929
        %v1932 = vadd.f32 %v1916, %v1930
        %1933 = vset.pattern.permute.xlu0 3
        %1934 = vperm.xlu0 %1933, %v1883
        %v1935 = vpop.permute.xlu0 %1934
        %v1937 = vlaneseq
        %v1938 = vshrl.u32 %v1937, 7
        %v1939 = vsub.s32 3, %v1938
        %v1940 = vrot.slane %v1880, %v1939
        %v1941 = vlaneseq
        %v1942 = vshrl.u32 %v1941, 7
        %v1943 = vsub.s32 3, %v1942
        %v1944 = vrot.slane %v1881, %v1943
        %v1945 = vmul.f32 %v1935, %v1940
        %v1946 = vmul.f32 %v1935, %v1944
        %v1947 = vadd.f32 %v1931, %v1945
        %v1948 = vadd.f32 %v1932, %v1946
        %1949 = vset.pattern.permute.xlu0 4
        %1950 = vperm.xlu0 %1949, %v1883
        %v1951 = vpop.permute.xlu0 %1950
        %v1953 = vlaneseq
        %v1954 = vshrl.u32 %v1953, 7
        %v1955 = vsub.s32 4, %v1954
        %v1956 = vrot.slane %v1880, %v1955
        %v1957 = vlaneseq
        %v1958 = vshrl.u32 %v1957, 7
        %v1959 = vsub.s32 4, %v1958
        %v1960 = vrot.slane %v1881, %v1959
        %v1961 = vmul.f32 %v1951, %v1956
        %v1962 = vmul.f32 %v1951, %v1960
        %v1963 = vadd.f32 %v1947, %v1961
        %v1964 = vadd.f32 %v1948, %v1962
        %1965 = vset.pattern.permute.xlu0 5
        %1966 = vperm.xlu0 %1965, %v1883
        %v1967 = vpop.permute.xlu0 %1966
        %v1969 = vlaneseq
        %v1970 = vshrl.u32 %v1969, 7
        %v1971 = vsub.s32 5, %v1970
        %v1972 = vrot.slane %v1880, %v1971
        %v1973 = vlaneseq
        %v1974 = vshrl.u32 %v1973, 7
        %v1975 = vsub.s32 5, %v1974
        %v1976 = vrot.slane %v1881, %v1975
        %v1977 = vmul.f32 %v1967, %v1972
        %v1978 = vmul.f32 %v1967, %v1976
        %v1979 = vadd.f32 %v1963, %v1977
        %v1980 = vadd.f32 %v1964, %v1978
        %1981 = vset.pattern.permute.xlu0 6
        %1982 = vperm.xlu0 %1981, %v1883
        %v1983 = vpop.permute.xlu0 %1982
        %v1985 = vlaneseq
        %v1986 = vshrl.u32 %v1985, 7
        %v1987 = vsub.s32 6, %v1986
        %v1988 = vrot.slane %v1880, %v1987
        %v1989 = vlaneseq
        %v1990 = vshrl.u32 %v1989, 7
        %v1991 = vsub.s32 6, %v1990
        %v1992 = vrot.slane %v1881, %v1991
        %v1993 = vmul.f32 %v1983, %v1988
        %v1994 = vmul.f32 %v1983, %v1992
        %v1995 = vadd.f32 %v1979, %v1993
        %v1996 = vadd.f32 %v1980, %v1994
        %1997 = vset.pattern.permute.xlu0 7
        %1998 = vperm.xlu0 %1997, %v1883
        %v1999 = vpop.permute.xlu0 %1998
        %v2001 = vlaneseq
        %v2002 = vshrl.u32 %v2001, 7
        %v2003 = vsub.s32 7, %v2002
        %v2004 = vrot.slane %v1880, %v2003
        %v2005 = vlaneseq
        %v2006 = vshrl.u32 %v2005, 7
        %v2007 = vsub.s32 7, %v2006
        %v2008 = vrot.slane %v1881, %v2007
        %v2009 = vmul.f32 %v1999, %v2004
        %v2010 = vmul.f32 %v1999, %v2008
        %v2011 = vadd.f32 %v1995, %v2009
        %v2012 = vadd.f32 %v1996, %v2010
        %2013 = vrot.lane.b32.xlu0 %v1575, 1
        %v2014 = vpop.permute.xlu0 %2013
        %2016 = vrot.lane.b32.xlu0 %v1574, 1
        %v2017 = vpop.permute.xlu0 %2016
        %v2018 = vsel %vm296, %v2017, %v2014
        %v2021 = vsel %vm296, %v2014, %v2017
        %2022 = vrot.lane.b32.xlu0 %v1574, 127
        %v2023 = vpop.permute.xlu0 %2022
        %2024 = vrot.lane.b32.xlu0 %v1575, 127
        %v2025 = vpop.permute.xlu0 %2024
        %v2026 = vsel %vm305, %v2023, %v2025
        %v2030 = vsel %vm305, %v2025, %v2023
        %v2031 = vsel %vm313, %v2026, %v2021
        %v2032 = vsel %vm314, %v2030, %v2018
        %s2033 = scalar_lea.vmem %s3, 24
        %v2034 = vld [vmem:[%s2033] sm:$0xff]
        %2036 = vset.pattern.permute.xlu0 0
        %2037 = vperm.xlu0 %2036, %v2034
        %v2038 = vpop.permute.xlu0 %2037
        %v2040 = vlaneseq
        %v2041 = vshrl.u32 %v2040, 7
        %v2042 = vsub.s32 0, %v2041
        %v2043 = vrot.slane %v2031, %v2042
        %v2044 = vlaneseq
        %v2045 = vshrl.u32 %v2044, 7
        %v2046 = vsub.s32 0, %v2045
        %v2047 = vrot.slane %v2032, %v2046
        %v2048 = vmul.f32 %v2038, %v2043
        %v2049 = vmul.f32 %v2038, %v2047
        %2050 = vset.pattern.permute.xlu0 1
        %2051 = vperm.xlu0 %2050, %v2034
        %v2052 = vpop.permute.xlu0 %2051
        %v2054 = vlaneseq
        %v2055 = vshrl.u32 %v2054, 7
        %v2056 = vsub.s32 1, %v2055
        %v2057 = vrot.slane %v2031, %v2056
        %v2058 = vlaneseq
        %v2059 = vshrl.u32 %v2058, 7
        %v2060 = vsub.s32 1, %v2059
        %v2061 = vrot.slane %v2032, %v2060
        %v2062 = vmul.f32 %v2052, %v2057
        %v2063 = vmul.f32 %v2052, %v2061
        %v2064 = vadd.f32 %v2048, %v2062
        %v2065 = vadd.f32 %v2049, %v2063
        %2066 = vset.pattern.permute.xlu0 2
        %2067 = vperm.xlu0 %2066, %v2034
        %v2068 = vpop.permute.xlu0 %2067
        %v2070 = vlaneseq
        %v2071 = vshrl.u32 %v2070, 7
        %v2072 = vsub.s32 2, %v2071
        %v2073 = vrot.slane %v2031, %v2072
        %v2074 = vlaneseq
        %v2075 = vshrl.u32 %v2074, 7
        %v2076 = vsub.s32 2, %v2075
        %v2077 = vrot.slane %v2032, %v2076
        %v2078 = vmul.f32 %v2068, %v2073
        %v2079 = vmul.f32 %v2068, %v2077
        %v2080 = vadd.f32 %v2064, %v2078
        %v2081 = vadd.f32 %v2065, %v2079
        %2082 = vset.pattern.permute.xlu0 3
        %2083 = vperm.xlu0 %2082, %v2034
        %v2084 = vpop.permute.xlu0 %2083
        %v2086 = vlaneseq
        %v2087 = vshrl.u32 %v2086, 7
        %v2088 = vsub.s32 3, %v2087
        %v2089 = vrot.slane %v2031, %v2088
        %v2090 = vlaneseq
        %v2091 = vshrl.u32 %v2090, 7
        %v2092 = vsub.s32 3, %v2091
        %v2093 = vrot.slane %v2032, %v2092
        %v2094 = vmul.f32 %v2084, %v2089
        %v2095 = vmul.f32 %v2084, %v2093
        %v2096 = vadd.f32 %v2080, %v2094
        %v2097 = vadd.f32 %v2081, %v2095
        %2098 = vset.pattern.permute.xlu0 4
        %2099 = vperm.xlu0 %2098, %v2034
        %v2100 = vpop.permute.xlu0 %2099
        %v2102 = vlaneseq
        %v2103 = vshrl.u32 %v2102, 7
        %v2104 = vsub.s32 4, %v2103
        %v2105 = vrot.slane %v2031, %v2104
        %v2106 = vlaneseq
        %v2107 = vshrl.u32 %v2106, 7
        %v2108 = vsub.s32 4, %v2107
        %v2109 = vrot.slane %v2032, %v2108
        %v2110 = vmul.f32 %v2100, %v2105
        %v2111 = vmul.f32 %v2100, %v2109
        %v2112 = vadd.f32 %v2096, %v2110
        %v2113 = vadd.f32 %v2097, %v2111
        %2114 = vset.pattern.permute.xlu0 5
        %2115 = vperm.xlu0 %2114, %v2034
        %v2116 = vpop.permute.xlu0 %2115
        %v2118 = vlaneseq
        %v2119 = vshrl.u32 %v2118, 7
        %v2120 = vsub.s32 5, %v2119
        %v2121 = vrot.slane %v2031, %v2120
        %v2122 = vlaneseq
        %v2123 = vshrl.u32 %v2122, 7
        %v2124 = vsub.s32 5, %v2123
        %v2125 = vrot.slane %v2032, %v2124
        %v2126 = vmul.f32 %v2116, %v2121
        %v2127 = vmul.f32 %v2116, %v2125
        %v2128 = vadd.f32 %v2112, %v2126
        %v2129 = vadd.f32 %v2113, %v2127
        %2130 = vset.pattern.permute.xlu0 6
        %2131 = vperm.xlu0 %2130, %v2034
        %v2132 = vpop.permute.xlu0 %2131
        %v2134 = vlaneseq
        %v2135 = vshrl.u32 %v2134, 7
        %v2136 = vsub.s32 6, %v2135
        %v2137 = vrot.slane %v2031, %v2136
        %v2138 = vlaneseq
        %v2139 = vshrl.u32 %v2138, 7
        %v2140 = vsub.s32 6, %v2139
        %v2141 = vrot.slane %v2032, %v2140
        %v2142 = vmul.f32 %v2132, %v2137
        %v2143 = vmul.f32 %v2132, %v2141
        %v2144 = vadd.f32 %v2128, %v2142
        %v2145 = vadd.f32 %v2129, %v2143
        %2146 = vset.pattern.permute.xlu0 7
        %2147 = vperm.xlu0 %2146, %v2034
        %v2148 = vpop.permute.xlu0 %2147
        %v2150 = vlaneseq
        %v2151 = vshrl.u32 %v2150, 7
        %v2152 = vsub.s32 7, %v2151
        %v2153 = vrot.slane %v2031, %v2152
        %v2154 = vlaneseq
        %v2155 = vshrl.u32 %v2154, 7
        %v2156 = vsub.s32 7, %v2155
        %v2157 = vrot.slane %v2032, %v2156
        %v2158 = vmul.f32 %v2148, %v2153
        %v2159 = vmul.f32 %v2148, %v2157
        %v2160 = vadd.f32 %v2144, %v2158
        %v2161 = vadd.f32 %v2145, %v2159
        %s2162 = scalar_lea.vmem %s3, 32
        %v2163 = vld [vmem:[%s2162] sm:$0xff]
        %2165 = vset.pattern.permute.xlu0 0
        %2166 = vperm.xlu0 %2165, %v2163
        %v2167 = vpop.permute.xlu0 %2166
        %v2169 = vlaneseq
        %v2170 = vshrl.u32 %v2169, 7
        %v2171 = vsub.s32 0, %v2170
        %v2172 = vrot.slane %v1574, %v2171
        %v2173 = vlaneseq
        %v2174 = vshrl.u32 %v2173, 7
        %v2175 = vsub.s32 0, %v2174
        %v2176 = vrot.slane %v1575, %v2175
        %v2177 = vmul.f32 %v2167, %v2172
        %v2178 = vmul.f32 %v2167, %v2176
        %v2179 = vadd.f32 %v2160, %v2177
        %v2180 = vadd.f32 %v2161, %v2178
        %2181 = vset.pattern.permute.xlu0 1
        %2182 = vperm.xlu0 %2181, %v2163
        %v2183 = vpop.permute.xlu0 %2182
        %v2185 = vlaneseq
        %v2186 = vshrl.u32 %v2185, 7
        %v2187 = vsub.s32 1, %v2186
        %v2188 = vrot.slane %v1574, %v2187
        %v2189 = vlaneseq
        %v2190 = vshrl.u32 %v2189, 7
        %v2191 = vsub.s32 1, %v2190
        %v2192 = vrot.slane %v1575, %v2191
        %v2193 = vmul.f32 %v2183, %v2188
        %v2194 = vmul.f32 %v2183, %v2192
        %v2195 = vadd.f32 %v2179, %v2193
        %v2196 = vadd.f32 %v2180, %v2194
        %2197 = vset.pattern.permute.xlu0 2
        %2198 = vperm.xlu0 %2197, %v2163
        %v2199 = vpop.permute.xlu0 %2198
        %v2201 = vlaneseq
        %v2202 = vshrl.u32 %v2201, 7
        %v2203 = vsub.s32 2, %v2202
        %v2204 = vrot.slane %v1574, %v2203
        %v2205 = vlaneseq
        %v2206 = vshrl.u32 %v2205, 7
        %v2207 = vsub.s32 2, %v2206
        %v2208 = vrot.slane %v1575, %v2207
        %v2209 = vmul.f32 %v2199, %v2204
        %v2210 = vmul.f32 %v2199, %v2208
        %v2211 = vadd.f32 %v2195, %v2209
        %v2212 = vadd.f32 %v2196, %v2210
        %2213 = vset.pattern.permute.xlu0 3
        %2214 = vperm.xlu0 %2213, %v2163
        %v2215 = vpop.permute.xlu0 %2214
        %v2217 = vlaneseq
        %v2218 = vshrl.u32 %v2217, 7
        %v2219 = vsub.s32 3, %v2218
        %v2220 = vrot.slane %v1574, %v2219
        %v2221 = vlaneseq
        %v2222 = vshrl.u32 %v2221, 7
        %v2223 = vsub.s32 3, %v2222
        %v2224 = vrot.slane %v1575, %v2223
        %v2225 = vmul.f32 %v2215, %v2220
        %v2226 = vmul.f32 %v2215, %v2224
        %v2227 = vadd.f32 %v2211, %v2225
        %v2228 = vadd.f32 %v2212, %v2226
        %2229 = vset.pattern.permute.xlu0 4
        %2230 = vperm.xlu0 %2229, %v2163
        %v2231 = vpop.permute.xlu0 %2230
        %v2233 = vlaneseq
        %v2234 = vshrl.u32 %v2233, 7
        %v2235 = vsub.s32 4, %v2234
        %v2236 = vrot.slane %v1574, %v2235
        %v2237 = vlaneseq
        %v2238 = vshrl.u32 %v2237, 7
        %v2239 = vsub.s32 4, %v2238
        %v2240 = vrot.slane %v1575, %v2239
        %v2241 = vmul.f32 %v2231, %v2236
        %v2242 = vmul.f32 %v2231, %v2240
        %v2243 = vadd.f32 %v2227, %v2241
        %v2244 = vadd.f32 %v2228, %v2242
        %2245 = vset.pattern.permute.xlu0 5
        %2246 = vperm.xlu0 %2245, %v2163
        %v2247 = vpop.permute.xlu0 %2246
        %v2249 = vlaneseq
        %v2250 = vshrl.u32 %v2249, 7
        %v2251 = vsub.s32 5, %v2250
        %v2252 = vrot.slane %v1574, %v2251
        %v2253 = vlaneseq
        %v2254 = vshrl.u32 %v2253, 7
        %v2255 = vsub.s32 5, %v2254
        %v2256 = vrot.slane %v1575, %v2255
        %v2257 = vmul.f32 %v2247, %v2252
        %v2258 = vmul.f32 %v2247, %v2256
        %v2259 = vadd.f32 %v2243, %v2257
        %v2260 = vadd.f32 %v2244, %v2258
        %2261 = vset.pattern.permute.xlu0 6
        %2262 = vperm.xlu0 %2261, %v2163
        %v2263 = vpop.permute.xlu0 %2262
        %v2265 = vlaneseq
        %v2266 = vshrl.u32 %v2265, 7
        %v2267 = vsub.s32 6, %v2266
        %v2268 = vrot.slane %v1574, %v2267
        %v2269 = vlaneseq
        %v2270 = vshrl.u32 %v2269, 7
        %v2271 = vsub.s32 6, %v2270
        %v2272 = vrot.slane %v1575, %v2271
        %v2273 = vmul.f32 %v2263, %v2268
        %v2274 = vmul.f32 %v2263, %v2272
        %v2275 = vadd.f32 %v2259, %v2273
        %v2276 = vadd.f32 %v2260, %v2274
        %2277 = vset.pattern.permute.xlu0 7
        %2278 = vperm.xlu0 %2277, %v2163
        %v2279 = vpop.permute.xlu0 %2278
        %v2281 = vlaneseq
        %v2282 = vshrl.u32 %v2281, 7
        %v2283 = vsub.s32 7, %v2282
        %v2284 = vrot.slane %v1574, %v2283
        %v2285 = vlaneseq
        %v2286 = vshrl.u32 %v2285, 7
        %v2287 = vsub.s32 7, %v2286
        %v2288 = vrot.slane %v1575, %v2287
        %v2289 = vmul.f32 %v2279, %v2284
        %v2290 = vmul.f32 %v2279, %v2288
        %v2291 = vadd.f32 %v2275, %v2289
        %v2292 = vadd.f32 %v2276, %v2290
        %v2293 = vsel %vm578, %v2021, %v2026
        %v2294 = vsel %vm579, %v2018, %v2030
        %s2295 = scalar_lea.vmem %s3, 40
        %v2296 = vld [vmem:[%s2295] sm:$0xff]
        %2298 = vset.pattern.permute.xlu0 0
        %2299 = vperm.xlu0 %2298, %v2296
        %v2300 = vpop.permute.xlu0 %2299
        %v2302 = vlaneseq
        %v2303 = vshrl.u32 %v2302, 7
        %v2304 = vsub.s32 0, %v2303
        %v2305 = vrot.slane %v2293, %v2304
        %v2306 = vlaneseq
        %v2307 = vshrl.u32 %v2306, 7
        %v2308 = vsub.s32 0, %v2307
        %v2309 = vrot.slane %v2294, %v2308
        %v2310 = vmul.f32 %v2300, %v2305
        %v2311 = vmul.f32 %v2300, %v2309
        %v2312 = vadd.f32 %v2291, %v2310
        %v2313 = vadd.f32 %v2292, %v2311
        %2314 = vset.pattern.permute.xlu0 1
        %2315 = vperm.xlu0 %2314, %v2296
        %v2316 = vpop.permute.xlu0 %2315
        %v2318 = vlaneseq
        %v2319 = vshrl.u32 %v2318, 7
        %v2320 = vsub.s32 1, %v2319
        %v2321 = vrot.slane %v2293, %v2320
        %v2322 = vlaneseq
        %v2323 = vshrl.u32 %v2322, 7
        %v2324 = vsub.s32 1, %v2323
        %v2325 = vrot.slane %v2294, %v2324
        %v2326 = vmul.f32 %v2316, %v2321
        %v2327 = vmul.f32 %v2316, %v2325
        %v2328 = vadd.f32 %v2312, %v2326
        %v2329 = vadd.f32 %v2313, %v2327
        %2330 = vset.pattern.permute.xlu0 2
        %2331 = vperm.xlu0 %2330, %v2296
        %v2332 = vpop.permute.xlu0 %2331
        %v2334 = vlaneseq
        %v2335 = vshrl.u32 %v2334, 7
        %v2336 = vsub.s32 2, %v2335
        %v2337 = vrot.slane %v2293, %v2336
        %v2338 = vlaneseq
        %v2339 = vshrl.u32 %v2338, 7
        %v2340 = vsub.s32 2, %v2339
        %v2341 = vrot.slane %v2294, %v2340
        %v2342 = vmul.f32 %v2332, %v2337
        %v2343 = vmul.f32 %v2332, %v2341
        %v2344 = vadd.f32 %v2328, %v2342
        %v2345 = vadd.f32 %v2329, %v2343
        %2346 = vset.pattern.permute.xlu0 3
        %2347 = vperm.xlu0 %2346, %v2296
        %v2348 = vpop.permute.xlu0 %2347
        %v2350 = vlaneseq
        %v2351 = vshrl.u32 %v2350, 7
        %v2352 = vsub.s32 3, %v2351
        %v2353 = vrot.slane %v2293, %v2352
        %v2354 = vlaneseq
        %v2355 = vshrl.u32 %v2354, 7
        %v2356 = vsub.s32 3, %v2355
        %v2357 = vrot.slane %v2294, %v2356
        %v2358 = vmul.f32 %v2348, %v2353
        %v2359 = vmul.f32 %v2348, %v2357
        %v2360 = vadd.f32 %v2344, %v2358
        %v2361 = vadd.f32 %v2345, %v2359
        %2362 = vset.pattern.permute.xlu0 4
        %2363 = vperm.xlu0 %2362, %v2296
        %v2364 = vpop.permute.xlu0 %2363
        %v2366 = vlaneseq
        %v2367 = vshrl.u32 %v2366, 7
        %v2368 = vsub.s32 4, %v2367
        %v2369 = vrot.slane %v2293, %v2368
        %v2370 = vlaneseq
        %v2371 = vshrl.u32 %v2370, 7
        %v2372 = vsub.s32 4, %v2371
        %v2373 = vrot.slane %v2294, %v2372
        %v2374 = vmul.f32 %v2364, %v2369
        %v2375 = vmul.f32 %v2364, %v2373
        %v2376 = vadd.f32 %v2360, %v2374
        %v2377 = vadd.f32 %v2361, %v2375
        %2378 = vset.pattern.permute.xlu0 5
        %2379 = vperm.xlu0 %2378, %v2296
        %v2380 = vpop.permute.xlu0 %2379
        %v2382 = vlaneseq
        %v2383 = vshrl.u32 %v2382, 7
        %v2384 = vsub.s32 5, %v2383
        %v2385 = vrot.slane %v2293, %v2384
        %v2386 = vlaneseq
        %v2387 = vshrl.u32 %v2386, 7
        %v2388 = vsub.s32 5, %v2387
        %v2389 = vrot.slane %v2294, %v2388
        %v2390 = vmul.f32 %v2380, %v2385
        %v2391 = vmul.f32 %v2380, %v2389
        %v2392 = vadd.f32 %v2376, %v2390
        %v2393 = vadd.f32 %v2377, %v2391
        %2394 = vset.pattern.permute.xlu0 6
        %2395 = vperm.xlu0 %2394, %v2296
        %v2396 = vpop.permute.xlu0 %2395
        %v2398 = vlaneseq
        %v2399 = vshrl.u32 %v2398, 7
        %v2400 = vsub.s32 6, %v2399
        %v2401 = vrot.slane %v2293, %v2400
        %v2402 = vlaneseq
        %v2403 = vshrl.u32 %v2402, 7
        %v2404 = vsub.s32 6, %v2403
        %v2405 = vrot.slane %v2294, %v2404
        %v2406 = vmul.f32 %v2396, %v2401
        %v2407 = vmul.f32 %v2396, %v2405
        %v2408 = vadd.f32 %v2392, %v2406
        %v2409 = vadd.f32 %v2393, %v2407
        %2410 = vset.pattern.permute.xlu0 7
        %2411 = vperm.xlu0 %2410, %v2296
        %v2412 = vpop.permute.xlu0 %2411
        %v2414 = vlaneseq
        %v2415 = vshrl.u32 %v2414, 7
        %v2416 = vsub.s32 7, %v2415
        %v2417 = vrot.slane %v2293, %v2416
        %v2418 = vlaneseq
        %v2419 = vshrl.u32 %v2418, 7
        %v2420 = vsub.s32 7, %v2419
        %v2421 = vrot.slane %v2294, %v2420
        %v2422 = vmul.f32 %v2412, %v2417
        %v2423 = vmul.f32 %v2412, %v2421
        %v2424 = vadd.f32 %v2408, %v2422
        %v2425 = vadd.f32 %v2409, %v2423
        %v2426 = vsel %vm1128, %v1587, %v1592
        %v2427 = vsel %vm1129, %v1584, %v1596
        %2429 = vrot.lane.b32.xlu0 %v2427, 1
        %v2430 = vpop.permute.xlu0 %2429
        %2433 = vrot.lane.b32.xlu0 %v2426, 1
        %v2434 = vpop.permute.xlu0 %2433
        %v2435 = vsel %vm296, %v2434, %v2430
        %v2438 = vsel %vm296, %v2430, %v2434
        %2439 = vrot.lane.b32.xlu0 %v2426, 127
        %v2440 = vpop.permute.xlu0 %2439
        %2441 = vrot.lane.b32.xlu0 %v2427, 127
        %v2442 = vpop.permute.xlu0 %2441
        %v2443 = vsel %vm305, %v2440, %v2442
        %v2447 = vsel %vm305, %v2442, %v2440
        %v2448 = vsel %vm313, %v2443, %v2438
        %v2449 = vsel %vm314, %v2447, %v2435
        %s2450 = scalar_lea.vmem %s3, 48
        %v2451 = vld [vmem:[%s2450] sm:$0xff]
        %2453 = vset.pattern.permute.xlu0 0
        %2454 = vperm.xlu0 %2453, %v2451
        %v2455 = vpop.permute.xlu0 %2454
        %v2457 = vlaneseq
        %v2458 = vshrl.u32 %v2457, 7
        %v2459 = vsub.s32 0, %v2458
        %v2460 = vrot.slane %v2448, %v2459
        %v2461 = vlaneseq
        %v2462 = vshrl.u32 %v2461, 7
        %v2463 = vsub.s32 0, %v2462
        %v2464 = vrot.slane %v2449, %v2463
        %v2465 = vmul.f32 %v2455, %v2460
        %v2466 = vmul.f32 %v2455, %v2464
        %2467 = vset.pattern.permute.xlu0 1
        %2468 = vperm.xlu0 %2467, %v2451
        %v2469 = vpop.permute.xlu0 %2468
        %v2471 = vlaneseq
        %v2472 = vshrl.u32 %v2471, 7
        %v2473 = vsub.s32 1, %v2472
        %v2474 = vrot.slane %v2448, %v2473
        %v2475 = vlaneseq
        %v2476 = vshrl.u32 %v2475, 7
        %v2477 = vsub.s32 1, %v2476
        %v2478 = vrot.slane %v2449, %v2477
        %v2479 = vmul.f32 %v2469, %v2474
        %v2480 = vmul.f32 %v2469, %v2478
        %v2481 = vadd.f32 %v2465, %v2479
        %v2482 = vadd.f32 %v2466, %v2480
        %2483 = vset.pattern.permute.xlu0 2
        %2484 = vperm.xlu0 %2483, %v2451
        %v2485 = vpop.permute.xlu0 %2484
        %v2487 = vlaneseq
        %v2488 = vshrl.u32 %v2487, 7
        %v2489 = vsub.s32 2, %v2488
        %v2490 = vrot.slane %v2448, %v2489
        %v2491 = vlaneseq
        %v2492 = vshrl.u32 %v2491, 7
        %v2493 = vsub.s32 2, %v2492
        %v2494 = vrot.slane %v2449, %v2493
        %v2495 = vmul.f32 %v2485, %v2490
        %v2496 = vmul.f32 %v2485, %v2494
        %v2497 = vadd.f32 %v2481, %v2495
        %v2498 = vadd.f32 %v2482, %v2496
        %2499 = vset.pattern.permute.xlu0 3
        %2500 = vperm.xlu0 %2499, %v2451
        %v2501 = vpop.permute.xlu0 %2500
        %v2503 = vlaneseq
        %v2504 = vshrl.u32 %v2503, 7
        %v2505 = vsub.s32 3, %v2504
        %v2506 = vrot.slane %v2448, %v2505
        %v2507 = vlaneseq
        %v2508 = vshrl.u32 %v2507, 7
        %v2509 = vsub.s32 3, %v2508
        %v2510 = vrot.slane %v2449, %v2509
        %v2511 = vmul.f32 %v2501, %v2506
        %v2512 = vmul.f32 %v2501, %v2510
        %v2513 = vadd.f32 %v2497, %v2511
        %v2514 = vadd.f32 %v2498, %v2512
        %2515 = vset.pattern.permute.xlu0 4
        %2516 = vperm.xlu0 %2515, %v2451
        %v2517 = vpop.permute.xlu0 %2516
        %v2519 = vlaneseq
        %v2520 = vshrl.u32 %v2519, 7
        %v2521 = vsub.s32 4, %v2520
        %v2522 = vrot.slane %v2448, %v2521
        %v2523 = vlaneseq
        %v2524 = vshrl.u32 %v2523, 7
        %v2525 = vsub.s32 4, %v2524
        %v2526 = vrot.slane %v2449, %v2525
        %v2527 = vmul.f32 %v2517, %v2522
        %v2528 = vmul.f32 %v2517, %v2526
        %v2529 = vadd.f32 %v2513, %v2527
        %v2530 = vadd.f32 %v2514, %v2528
        %2531 = vset.pattern.permute.xlu0 5
        %2532 = vperm.xlu0 %2531, %v2451
        %v2533 = vpop.permute.xlu0 %2532
        %v2535 = vlaneseq
        %v2536 = vshrl.u32 %v2535, 7
        %v2537 = vsub.s32 5, %v2536
        %v2538 = vrot.slane %v2448, %v2537
        %v2539 = vlaneseq
        %v2540 = vshrl.u32 %v2539, 7
        %v2541 = vsub.s32 5, %v2540
        %v2542 = vrot.slane %v2449, %v2541
        %v2543 = vmul.f32 %v2533, %v2538
        %v2544 = vmul.f32 %v2533, %v2542
        %v2545 = vadd.f32 %v2529, %v2543
        %v2546 = vadd.f32 %v2530, %v2544
        %2547 = vset.pattern.permute.xlu0 6
        %2548 = vperm.xlu0 %2547, %v2451
        %v2549 = vpop.permute.xlu0 %2548
        %v2551 = vlaneseq
        %v2552 = vshrl.u32 %v2551, 7
        %v2553 = vsub.s32 6, %v2552
        %v2554 = vrot.slane %v2448, %v2553
        %v2555 = vlaneseq
        %v2556 = vshrl.u32 %v2555, 7
        %v2557 = vsub.s32 6, %v2556
        %v2558 = vrot.slane %v2449, %v2557
        %v2559 = vmul.f32 %v2549, %v2554
        %v2560 = vmul.f32 %v2549, %v2558
        %v2561 = vadd.f32 %v2545, %v2559
        %v2562 = vadd.f32 %v2546, %v2560
        %2563 = vset.pattern.permute.xlu0 7
        %2564 = vperm.xlu0 %2563, %v2451
        %v2565 = vpop.permute.xlu0 %2564
        %v2567 = vlaneseq
        %v2568 = vshrl.u32 %v2567, 7
        %v2569 = vsub.s32 7, %v2568
        %v2570 = vrot.slane %v2448, %v2569
        %v2571 = vlaneseq
        %v2572 = vshrl.u32 %v2571, 7
        %v2573 = vsub.s32 7, %v2572
        %v2574 = vrot.slane %v2449, %v2573
        %v2575 = vmul.f32 %v2565, %v2570
        %v2576 = vmul.f32 %v2565, %v2574
        %v2577 = vadd.f32 %v2561, %v2575
        %v2578 = vadd.f32 %v2562, %v2576
        %s2579 = scalar_lea.vmem %s3, 56
        %v2580 = vld [vmem:[%s2579] sm:$0xff]
        %2582 = vset.pattern.permute.xlu0 0
        %2583 = vperm.xlu0 %2582, %v2580
        %v2584 = vpop.permute.xlu0 %2583
        %v2586 = vlaneseq
        %v2587 = vshrl.u32 %v2586, 7
        %v2588 = vsub.s32 0, %v2587
        %v2589 = vrot.slane %v2426, %v2588
        %v2590 = vlaneseq
        %v2591 = vshrl.u32 %v2590, 7
        %v2592 = vsub.s32 0, %v2591
        %v2593 = vrot.slane %v2427, %v2592
        %v2594 = vmul.f32 %v2584, %v2589
        %v2595 = vmul.f32 %v2584, %v2593
        %v2596 = vadd.f32 %v2577, %v2594
        %v2597 = vadd.f32 %v2578, %v2595
        %2598 = vset.pattern.permute.xlu0 1
        %2599 = vperm.xlu0 %2598, %v2580
        %v2600 = vpop.permute.xlu0 %2599
        %v2602 = vlaneseq
        %v2603 = vshrl.u32 %v2602, 7
        %v2604 = vsub.s32 1, %v2603
        %v2605 = vrot.slane %v2426, %v2604
        %v2606 = vlaneseq
        %v2607 = vshrl.u32 %v2606, 7
        %v2608 = vsub.s32 1, %v2607
        %v2609 = vrot.slane %v2427, %v2608
        %v2610 = vmul.f32 %v2600, %v2605
        %v2611 = vmul.f32 %v2600, %v2609
        %v2612 = vadd.f32 %v2596, %v2610
        %v2613 = vadd.f32 %v2597, %v2611
        %2614 = vset.pattern.permute.xlu0 2
        %2615 = vperm.xlu0 %2614, %v2580
        %v2616 = vpop.permute.xlu0 %2615
        %v2618 = vlaneseq
        %v2619 = vshrl.u32 %v2618, 7
        %v2620 = vsub.s32 2, %v2619
        %v2621 = vrot.slane %v2426, %v2620
        %v2622 = vlaneseq
        %v2623 = vshrl.u32 %v2622, 7
        %v2624 = vsub.s32 2, %v2623
        %v2625 = vrot.slane %v2427, %v2624
        %v2626 = vmul.f32 %v2616, %v2621
        %v2627 = vmul.f32 %v2616, %v2625
        %v2628 = vadd.f32 %v2612, %v2626
        %v2629 = vadd.f32 %v2613, %v2627
        %2630 = vset.pattern.permute.xlu0 3
        %2631 = vperm.xlu0 %2630, %v2580
        %v2632 = vpop.permute.xlu0 %2631
        %v2634 = vlaneseq
        %v2635 = vshrl.u32 %v2634, 7
        %v2636 = vsub.s32 3, %v2635
        %v2637 = vrot.slane %v2426, %v2636
        %v2638 = vlaneseq
        %v2639 = vshrl.u32 %v2638, 7
        %v2640 = vsub.s32 3, %v2639
        %v2641 = vrot.slane %v2427, %v2640
        %v2642 = vmul.f32 %v2632, %v2637
        %v2643 = vmul.f32 %v2632, %v2641
        %v2644 = vadd.f32 %v2628, %v2642
        %v2645 = vadd.f32 %v2629, %v2643
        %2646 = vset.pattern.permute.xlu0 4
        %2647 = vperm.xlu0 %2646, %v2580
        %v2648 = vpop.permute.xlu0 %2647
        %v2650 = vlaneseq
        %v2651 = vshrl.u32 %v2650, 7
        %v2652 = vsub.s32 4, %v2651
        %v2653 = vrot.slane %v2426, %v2652
        %v2654 = vlaneseq
        %v2655 = vshrl.u32 %v2654, 7
        %v2656 = vsub.s32 4, %v2655
        %v2657 = vrot.slane %v2427, %v2656
        %v2658 = vmul.f32 %v2648, %v2653
        %v2659 = vmul.f32 %v2648, %v2657
        %v2660 = vadd.f32 %v2644, %v2658
        %v2661 = vadd.f32 %v2645, %v2659
        %2662 = vset.pattern.permute.xlu0 5
        %2663 = vperm.xlu0 %2662, %v2580
        %v2664 = vpop.permute.xlu0 %2663
        %v2666 = vlaneseq
        %v2667 = vshrl.u32 %v2666, 7
        %v2668 = vsub.s32 5, %v2667
        %v2669 = vrot.slane %v2426, %v2668
        %v2670 = vlaneseq
        %v2671 = vshrl.u32 %v2670, 7
        %v2672 = vsub.s32 5, %v2671
        %v2673 = vrot.slane %v2427, %v2672
        %v2674 = vmul.f32 %v2664, %v2669
        %v2675 = vmul.f32 %v2664, %v2673
        %v2676 = vadd.f32 %v2660, %v2674
        %v2677 = vadd.f32 %v2661, %v2675
        %2678 = vset.pattern.permute.xlu0 6
        %2679 = vperm.xlu0 %2678, %v2580
        %v2680 = vpop.permute.xlu0 %2679
        %v2682 = vlaneseq
        %v2683 = vshrl.u32 %v2682, 7
        %v2684 = vsub.s32 6, %v2683
        %v2685 = vrot.slane %v2426, %v2684
        %v2686 = vlaneseq
        %v2687 = vshrl.u32 %v2686, 7
        %v2688 = vsub.s32 6, %v2687
        %v2689 = vrot.slane %v2427, %v2688
        %v2690 = vmul.f32 %v2680, %v2685
        %v2691 = vmul.f32 %v2680, %v2689
        %v2692 = vadd.f32 %v2676, %v2690
        %v2693 = vadd.f32 %v2677, %v2691
        %2694 = vset.pattern.permute.xlu0 7
        %2695 = vperm.xlu0 %2694, %v2580
        %v2696 = vpop.permute.xlu0 %2695
        %v2698 = vlaneseq
        %v2699 = vshrl.u32 %v2698, 7
        %v2700 = vsub.s32 7, %v2699
        %v2701 = vrot.slane %v2426, %v2700
        %v2702 = vlaneseq
        %v2703 = vshrl.u32 %v2702, 7
        %v2704 = vsub.s32 7, %v2703
        %v2705 = vrot.slane %v2427, %v2704
        %v2706 = vmul.f32 %v2696, %v2701
        %v2707 = vmul.f32 %v2696, %v2705
        %v2708 = vadd.f32 %v2692, %v2706
        %v2709 = vadd.f32 %v2693, %v2707
        %v2710 = vsel %vm578, %v2438, %v2443
        %v2711 = vsel %vm579, %v2435, %v2447
        %s2712 = scalar_lea.vmem %s3, 64
        %v2713 = vld [vmem:[%s2712] sm:$0xff]
        %2715 = vset.pattern.permute.xlu0 0
        %2716 = vperm.xlu0 %2715, %v2713
        %v2717 = vpop.permute.xlu0 %2716
        %v2719 = vlaneseq
        %v2720 = vshrl.u32 %v2719, 7
        %v2721 = vsub.s32 0, %v2720
        %v2722 = vrot.slane %v2710, %v2721
        %v2723 = vlaneseq
        %v2724 = vshrl.u32 %v2723, 7
        %v2725 = vsub.s32 0, %v2724
        %v2726 = vrot.slane %v2711, %v2725
        %v2727 = vmul.f32 %v2717, %v2722
        %v2728 = vmul.f32 %v2717, %v2726
        %v2729 = vadd.f32 %v2708, %v2727
        %v2730 = vadd.f32 %v2709, %v2728
        %2731 = vset.pattern.permute.xlu0 1
        %2732 = vperm.xlu0 %2731, %v2713
        %v2733 = vpop.permute.xlu0 %2732
        %v2735 = vlaneseq
        %v2736 = vshrl.u32 %v2735, 7
        %v2737 = vsub.s32 1, %v2736
        %v2738 = vrot.slane %v2710, %v2737
        %v2739 = vlaneseq
        %v2740 = vshrl.u32 %v2739, 7
        %v2741 = vsub.s32 1, %v2740
        %v2742 = vrot.slane %v2711, %v2741
        %v2743 = vmul.f32 %v2733, %v2738
        %v2744 = vmul.f32 %v2733, %v2742
        %v2745 = vadd.f32 %v2729, %v2743
        %v2746 = vadd.f32 %v2730, %v2744
        %2747 = vset.pattern.permute.xlu0 2
        %2748 = vperm.xlu0 %2747, %v2713
        %v2749 = vpop.permute.xlu0 %2748
        %v2751 = vlaneseq
        %v2752 = vshrl.u32 %v2751, 7
        %v2753 = vsub.s32 2, %v2752
        %v2754 = vrot.slane %v2710, %v2753
        %v2755 = vlaneseq
        %v2756 = vshrl.u32 %v2755, 7
        %v2757 = vsub.s32 2, %v2756
        %v2758 = vrot.slane %v2711, %v2757
        %v2759 = vmul.f32 %v2749, %v2754
        %v2760 = vmul.f32 %v2749, %v2758
        %v2761 = vadd.f32 %v2745, %v2759
        %v2762 = vadd.f32 %v2746, %v2760
        %2763 = vset.pattern.permute.xlu0 3
        %2764 = vperm.xlu0 %2763, %v2713
        %v2765 = vpop.permute.xlu0 %2764
        %v2767 = vlaneseq
        %v2768 = vshrl.u32 %v2767, 7
        %v2769 = vsub.s32 3, %v2768
        %v2770 = vrot.slane %v2710, %v2769
        %v2771 = vlaneseq
        %v2772 = vshrl.u32 %v2771, 7
        %v2773 = vsub.s32 3, %v2772
        %v2774 = vrot.slane %v2711, %v2773
        %v2775 = vmul.f32 %v2765, %v2770
        %v2776 = vmul.f32 %v2765, %v2774
        %v2777 = vadd.f32 %v2761, %v2775
        %v2778 = vadd.f32 %v2762, %v2776
        %2779 = vset.pattern.permute.xlu0 4
        %2780 = vperm.xlu0 %2779, %v2713
        %v2781 = vpop.permute.xlu0 %2780
        %v2783 = vlaneseq
        %v2784 = vshrl.u32 %v2783, 7
        %v2785 = vsub.s32 4, %v2784
        %v2786 = vrot.slane %v2710, %v2785
        %v2787 = vlaneseq
        %v2788 = vshrl.u32 %v2787, 7
        %v2789 = vsub.s32 4, %v2788
        %v2790 = vrot.slane %v2711, %v2789
        %v2791 = vmul.f32 %v2781, %v2786
        %v2792 = vmul.f32 %v2781, %v2790
        %v2793 = vadd.f32 %v2777, %v2791
        %v2794 = vadd.f32 %v2778, %v2792
        %2795 = vset.pattern.permute.xlu0 5
        %2796 = vperm.xlu0 %2795, %v2713
        %v2797 = vpop.permute.xlu0 %2796
        %v2799 = vlaneseq
        %v2800 = vshrl.u32 %v2799, 7
        %v2801 = vsub.s32 5, %v2800
        %v2802 = vrot.slane %v2710, %v2801
        %v2803 = vlaneseq
        %v2804 = vshrl.u32 %v2803, 7
        %v2805 = vsub.s32 5, %v2804
        %v2806 = vrot.slane %v2711, %v2805
        %v2807 = vmul.f32 %v2797, %v2802
        %v2808 = vmul.f32 %v2797, %v2806
        %v2809 = vadd.f32 %v2793, %v2807
        %v2810 = vadd.f32 %v2794, %v2808
        %2811 = vset.pattern.permute.xlu0 6
        %2812 = vperm.xlu0 %2811, %v2713
        %v2813 = vpop.permute.xlu0 %2812
        %v2815 = vlaneseq
        %v2816 = vshrl.u32 %v2815, 7
        %v2817 = vsub.s32 6, %v2816
        %v2818 = vrot.slane %v2710, %v2817
        %v2819 = vlaneseq
        %v2820 = vshrl.u32 %v2819, 7
        %v2821 = vsub.s32 6, %v2820
        %v2822 = vrot.slane %v2711, %v2821
        %v2823 = vmul.f32 %v2813, %v2818
        %v2824 = vmul.f32 %v2813, %v2822
        %v2825 = vadd.f32 %v2809, %v2823
        %v2826 = vadd.f32 %v2810, %v2824
        %2827 = vset.pattern.permute.xlu0 7
        %2828 = vperm.xlu0 %2827, %v2713
        %v2829 = vpop.permute.xlu0 %2828
        %v2831 = vlaneseq
        %v2832 = vshrl.u32 %v2831, 7
        %v2833 = vsub.s32 7, %v2832
        %v2834 = vrot.slane %v2710, %v2833
        %v2835 = vlaneseq
        %v2836 = vshrl.u32 %v2835, 7
        %v2837 = vsub.s32 7, %v2836
        %v2838 = vrot.slane %v2711, %v2837
        %v2839 = vmul.f32 %v2829, %v2834
        %v2840 = vmul.f32 %v2829, %v2838
        %v2841 = vadd.f32 %v2825, %v2839
        %v2842 = vadd.f32 %v2826, %v2840
        %2844 = vset.pattern.permute.xlu0 0
        %2845 = vperm.xlu0 %2844, %v1576
        %v2846 = vpop.permute.xlu0 %2845
        %v2848 = vadd.f32 %v2846, %v2011
        %v2849 = vadd.f32 %v2846, %v2012
        %v2850 = vadd.f32 %v2848, %v2424
        %v2851 = vadd.f32 %v2849, %v2425
        %v2852 = vadd.f32 %v2850, %v2841
        %v2853 = vadd.f32 %v2851, %v2842
        %v2854 = vadd.f32 %v2852, %v2853
        %2855 = vadd.xlane.f32.xlu0 %v2854
        %v2856 = vpop.xlane.xlu0 %2855
        %v2857 = vmul.f32 %v2856, 0.00390625
        %v2858 = vsub.f32 %v2852, %v2857
        %v2859 = vsub.f32 %v2853, %v2857
        %v2860 = vmul.f32 %v2858, %v2858
        %v2861 = vmul.f32 %v2859, %v2859
        %v2862 = vadd.f32 %v2860, %v2861
        %2863 = vadd.xlane.f32.xlu0 %v2862
        %v2864 = vpop.xlane.xlu0 %2863
        %v2865 = vmul.f32 %v2864, 0.00390625
        %v2866 = vadd.f32 %v2865, 1e-05
        %v2867 = vrsqrt.pop %v2866
        %v2868 = vmul.f32 %v2858, %v2867
        %v2869 = vmul.f32 %v2859, %v2867
        %v2870 = vadd.f32 %v223, %v2868
        %v2871 = vadd.f32 %v224, %v2869
        %2872 = vst [vmem:[%s217] sm:$0xff] %v2870
        %2873 = vst [vmem:[%s217 + $0x8] sm:$0xff] %v2871
        %s2874 = sand.u32 %s137, 1
        %s2875 = scalar_lea.sflag [#allocation3], %s2874
        %s2876 = sand.u32 %s137, 1
        %s2877 = smul.addr %s2876, 16
        %s2878 = scalar_lea.vmem [#allocation2], %s2877
        // Predicated region
        $region41: #{tpu_custom_call.1} parent=39 // pred_check
          %p2879 = pneg %p147
        $region42: #{tpu_custom_call.1} parent=39 // pred_check_branch
          %2881 = sbr.rel (%p2879) target = $region44
        $region43: #{tpu_custom_call.1} parent=39 // pred_region
          %s2883 = ssub.s32 256, 256
          %2884 = vsyncadd %s2875, %s2883
          %s2885 = smul.addr %s19, 2
          %s2886 = smul.addr %s2885, 128
          %s2887 = scalar_lea.hbm %s5, %s2886
          %s2889 = sshll.u32 %s2878, 4
          %s2890 = int_to_ptr.vmem [resolvable:$true] %s2889
          %2892 = dma.vmem_to_hbm [thread:$0]  %s2890, 256, %s2887, %s2875
        $region44: #{tpu_custom_call.1} parent=39 // pred_fallthru
          _
      $region40: #{tpu_custom_call.1} parent=5 // pred_fallthru
        _
      %p2893 = scmp.le.s32.totalorder 2, %s14
      // Predicated region
      $region45: #{tpu_custom_call.1} parent=5 // pred_check
        %p2894 = pneg %p2893
      $region46: #{tpu_custom_call.1} parent=5 // pred_check_branch
        %2896 = sbr.rel (%p2894) target = $region48
      $region47: #{tpu_custom_call.1} parent=5 // pred_region
        %s2897 = ssub.s32 %s14, 2
        // Predicated region
        $region49: #{tpu_custom_call.1} parent=47 // pred_check
          %p2898 = pneg %p153
        $region50: #{tpu_custom_call.1} parent=47 // pred_check_branch
          %2900 = sbr.rel (%p2898) target = $region52
        $region51: #{tpu_custom_call.1} parent=47 // pred_region
          %s2901 = sand.u32 %s138, 1
          %s2902 = scalar_lea.sflag [#allocation3], %s2901
          %s2903 = sand.u32 %s138, 1
          %s2904 = smul.addr %s2903, 16
          %s2905 = scalar_lea.vmem [#allocation2], %s2904
          %2906 = dma.done %s2902, 256
        $region52: #{tpu_custom_call.1} parent=47 // pred_fallthru
          _
      $region48: #{tpu_custom_call.1} parent=5 // pred_fallthru
        _
    $region6: #{tpu_custom_call.1} parent=1 // loop_footer
      %s18 = sadd.s32 1, %s14
    $region7: #{tpu_custom_call.1} parent=1 // loop_footer_branch
      %13 = sbr.rel target = $region3
    $region8: #{tpu_custom_call.1} parent=1 // loop_exit
      _
    %2907 = vsyncpa [#allocation3], 1
    %s2908 = scalar_lea.sflag [#allocation3], 1
    %2909 = vsyncpa %s2908, 1

</llo_original>
